<compile_context>
chip_gen: v7x
topology: tpu7x:2x2x1
jax: 0.10.0
libtpu: 0.0.40
codegen_flags: <defaults>
</compile_context>

<pallas_src>
import functools
import math

import jax
import jax.numpy as jnp
from jax import lax
from jax.experimental import pallas as pl
from jax.experimental.pallas import tpu as pltpu

# ---------------- synthetic config (real model: microsoft/kosmos-2-patch14-224) ----------------
DTYPE = jnp.bfloat16
IGNORE_INDEX = -100
EPS = 1e-5
NEG = -1e30

# vision encoder (CLIP-ViT-like, tiny)
IMG = 32
PATCH = 8
NUM_PATCHES = (IMG // PATCH) ** 2          # 16
PATCH_DIM = 3 * PATCH * PATCH              # 192
V_HIDDEN = 128
V_HEADS = 1
V_HEAD_DIM = V_HIDDEN // V_HEADS           # 128 (lane-dense)
V_LAYERS = 2
V_INTER = 256

# text decoder (KOSMOS-2 text transformer, tiny)
HIDDEN = 256
N_HEADS = 2
HEAD_DIM = HIDDEN // N_HEADS               # 128 (lane-dense)
N_LAYERS = 2
INTERMEDIATE = 512
VOCAB = 512
S_TEXT = 16
S_TOTAL = NUM_PATCHES + S_TEXT             # 32  ([image tokens ; text tokens])

ATTN_TILE = 16                             # toy tile; use 128-512 at real S


# ---------------- tile pickers ----------------
def _sublane_tile(n, prefs=(256, 128, 64, 32, 16, 8)):
    for c in prefs:
        if n % c == 0:
            return c
    return n


def _lane_tile(n, prefs=(512, 256, 128)):
    for c in prefs:
        if n % c == 0:
            return c
    return n


# ---------------- generic tiled matmul (+bias): grid (M, N, K), f32 accumulator ----------------
def _linear_kernel(x_ref, w_ref, b_ref, o_ref, acc_ref):
    k = pl.program_id(2)

    @pl.when(k == 0)
    def _():
        acc_ref[...] = jnp.zeros_like(acc_ref)

    acc_ref[...] += jnp.dot(x_ref[...], w_ref[...], preferred_element_type=jnp.float32)

    @pl.when(k == pl.num_programs(2) - 1)
    def _():
        o_ref[...] = (acc_ref[...] + b_ref[...].astype(jnp.float32)).astype(o_ref.dtype)


def linear(x, w, b):
    M, K = x.shape
    N = w.shape[1]
    tm, tn, tk = _sublane_tile(M), _lane_tile(N), _lane_tile(K)
    return pl.pallas_call(
        _linear_kernel,
        grid=(M // tm, N // tn, K // tk),
        in_specs=[
            pl.BlockSpec((tm, tk), lambda i, j, k: (i, k)),
            pl.BlockSpec((tk, tn), lambda i, j, k: (k, j)),
            pl.BlockSpec((1, tn), lambda i, j, k: (0, j)),
        ],
        out_specs=pl.BlockSpec((tm, tn), lambda i, j, k: (i, j)),
        out_shape=jax.ShapeDtypeStruct((M, N), x.dtype),
        scratch_shapes=[pltpu.VMEM((tm, tn), jnp.float32)],
        compiler_params=pltpu.CompilerParams(
            dimension_semantics=("parallel", "parallel", "arbitrary")),
    )(x, w, b.reshape(1, -1))


# ---------------- fused LayerNorm + linear (QKV projection / image->text projection) ----------------
def _ln_linear_kernel(x_ref, g_ref, b_ref, w_ref, bias_ref, o_ref):
    x = x_ref[...].astype(jnp.float32)
    mu = jnp.mean(x, axis=-1, keepdims=True)
    xc = x - mu
    var = jnp.mean(xc * xc, axis=-1, keepdims=True)
    xn = xc * lax.rsqrt(var + EPS) * g_ref[...].astype(jnp.float32) + b_ref[...].astype(jnp.float32)
    y = jnp.dot(xn.astype(w_ref.dtype), w_ref[...], preferred_element_type=jnp.float32)
    o_ref[...] = (y + bias_ref[...].astype(jnp.float32)).astype(o_ref.dtype)


def ln_linear(x, g, b, w, bias):
    M, H = x.shape
    N = w.shape[1]
    tm = _sublane_tile(M)
    return pl.pallas_call(
        _ln_linear_kernel,
        grid=(M // tm,),
        in_specs=[
            pl.BlockSpec((tm, H), lambda i: (i, 0)),
            pl.BlockSpec((1, H), lambda i: (0, 0)),
            pl.BlockSpec((1, H), lambda i: (0, 0)),
            pl.BlockSpec((H, N), lambda i: (0, 0)),
            pl.BlockSpec((1, N), lambda i: (0, 0)),
        ],
        out_specs=pl.BlockSpec((tm, N), lambda i: (i, 0)),
        out_shape=jax.ShapeDtypeStruct((M, N), x.dtype),
        compiler_params=pltpu.CompilerParams(dimension_semantics=("parallel",)),
    )(x, g.reshape(1, -1), b.reshape(1, -1), w, bias.reshape(1, -1))


# ---------------- fused out-projection + residual add ----------------
def _proj_res_kernel(x_ref, w_ref, bias_ref, r_ref, o_ref):
    y = jnp.dot(x_ref[...], w_ref[...], preferred_element_type=jnp.float32)
    y = y + bias_ref[...].astype(jnp.float32) + r_ref[...].astype(jnp.float32)
    o_ref[...] = y.astype(o_ref.dtype)


def proj_residual(x, w, bias, resid):
    M, H = x.shape
    N = w.shape[1]
    tm = _sublane_tile(M)
    return pl.pallas_call(
        _proj_res_kernel,
        grid=(M // tm,),
        in_specs=[
            pl.BlockSpec((tm, H), lambda i: (i, 0)),
            pl.BlockSpec((H, N), lambda i: (0, 0)),
            pl.BlockSpec((1, N), lambda i: (0, 0)),
            pl.BlockSpec((tm, N), lambda i: (i, 0)),
        ],
        out_specs=pl.BlockSpec((tm, N), lambda i: (i, 0)),
        out_shape=jax.ShapeDtypeStruct((M, N), x.dtype),
        compiler_params=pltpu.CompilerParams(dimension_semantics=("parallel",)),
    )(x, w, bias.reshape(1, -1), resid)


# ---------------- fused LayerNorm + GELU MLP + residual ----------------
def _ln_mlp_res_kernel(x_ref, g_ref, b_ref, w1_ref, b1_ref, w2_ref, b2_ref, o_ref):
    x = x_ref[...].astype(jnp.float32)
    mu = jnp.mean(x, axis=-1, keepdims=True)
    xc = x - mu
    var = jnp.mean(xc * xc, axis=-1, keepdims=True)
    xn = xc * lax.rsqrt(var + EPS) * g_ref[...].astype(jnp.float32) + b_ref[...].astype(jnp.float32)
    h = jnp.dot(xn.astype(w1_ref.dtype), w1_ref[...], preferred_element_type=jnp.float32)
    h = jax.nn.gelu(h + b1_ref[...].astype(jnp.float32))        # f32 elementwise (v5e-safe)
    y = jnp.dot(h.astype(w2_ref.dtype), w2_ref[...], preferred_element_type=jnp.float32)
    y = y + b2_ref[...].astype(jnp.float32)
    o_ref[...] = (x + y).astype(o_ref.dtype)                    # residual fused in epilogue


def ln_mlp_residual(x, g, b, w1, b1, w2, b2):
    M, H = x.shape
    I = w1.shape[1]
    tm = _sublane_tile(M)
    return pl.pallas_call(
        _ln_mlp_res_kernel,
        grid=(M // tm,),
        in_specs=[
            pl.BlockSpec((tm, H), lambda i: (i, 0)),
            pl.BlockSpec((1, H), lambda i: (0, 0)),
            pl.BlockSpec((1, H), lambda i: (0, 0)),
            pl.BlockSpec((H, I), lambda i: (0, 0)),
            pl.BlockSpec((1, I), lambda i: (0, 0)),
            pl.BlockSpec((I, H), lambda i: (0, 0)),
            pl.BlockSpec((1, H), lambda i: (0, 0)),
        ],
        out_specs=pl.BlockSpec((tm, H), lambda i: (i, 0)),
        out_shape=jax.ShapeDtypeStruct((M, H), x.dtype),
        compiler_params=pltpu.CompilerParams(dimension_semantics=("parallel",)),
    )(x, g.reshape(1, -1), b.reshape(1, -1), w1, b1.reshape(1, -1), w2, b2.reshape(1, -1))


# ---------------- flash-style attention: in-kernel causal mask + KV-length masking ----------------
def _flash_attn_kernel(lens_ref, q_ref, k_ref, v_ref, o_ref, m_sc, l_sc, acc_sc,
                       *, causal, scale):
    b = pl.program_id(0)
    qi = pl.program_id(2)
    ki = pl.program_id(3)
    tq = q_ref.shape[2]
    tk = k_ref.shape[2]

    @pl.when(ki == 0)
    def _():
        m_sc[...] = jnp.full_like(m_sc, NEG)
        l_sc[...] = jnp.zeros_like(l_sc)
        acc_sc[...] = jnp.zeros_like(acc_sc)

    def update():
        q = q_ref[0, 0]                                   # (tq, D) bf16
        k = k_ref[0, 0]                                   # (tk, D) bf16
        v = v_ref[0, 0]                                   # (tk, D) bf16
        s = lax.dot_general(q, k, (((1,), (1,)), ((), ())),
                            preferred_element_type=jnp.float32) * scale   # (tq, tk) f32
        kvl = lens_ref[b]
        k_pos = ki * tk + lax.broadcasted_iota(jnp.int32, (tq, tk), 1)
        valid = k_pos < kvl                                # key-padding mask (no S^2 HBM mask)
        if causal:
            q_pos = qi * tq + lax.broadcasted_iota(jnp.int32, (tq, tk), 0)
            valid = jnp.logical_and(valid, q_pos >= k_pos)
        s = jnp.where(valid, s, NEG)

        m_new = jnp.maximum(m_sc[...], jnp.max(s, axis=-1, keepdims=True))
        alpha = jnp.exp(m_sc[...] - m_new)
        p = jnp.exp(s - m_new)
        l_sc[...] = alpha * l_sc[...] + jnp.sum(p, axis=-1, keepdims=True)
        acc_sc[...] = alpha * acc_sc[...] + jnp.dot(p.astype(v.dtype), v,
                                                    preferred_element_type=jnp.float32)
        m_sc[...] = m_new

    if causal:
        # skip KV blocks entirely above the diagonal
        @pl.when(ki * tk <= qi * tq + (tq - 1))
        def _():
            update()
    else:
        update()

    @pl.when(ki == pl.num_programs(3) - 1)
    def _():
        inv = pl.reciprocal(l_sc[...], approx=True)
        o_ref[0, 0] = (acc_sc[...] * inv).astype(o_ref.dtype)


def flash_attention(q, k, v, kv_len, *, causal, tq, tk):
    B, NH, S, D = q.shape
    assert S % tq == 0 and S % tk == 0
    scale = 1.0 / math.sqrt(D)
    kernel = functools.partial(_flash_attn_kernel, causal=causal, scale=scale)
    q_spec = pl.BlockSpec((1, 1, tq, D), lambda b, h, qi, ki, lens: (b, h, qi, 0))
    k_spec = pl.BlockSpec((1, 1, tk, D), lambda b, h, qi, ki, lens: (b, h, ki, 0))
    v_spec = pl.BlockSpec((1, 1, tk, D), lambda b, h, qi, ki, lens: (b, h, ki, 0))
    o_spec = pl.BlockSpec((1, 1, tq, D), lambda b, h, qi, ki, lens: (b, h, qi, 0))
    return pl.pallas_call(
        kernel,
        grid_spec=pltpu.PrefetchScalarGridSpec(
            num_scalar_prefetch=1,                   # kv_len (B,) int32 -> SMEM
            grid=(B, NH, S // tq, S // tk),
            in_specs=[q_spec, k_spec, v_spec],
            out_specs=o_spec,
            scratch_shapes=[pltpu.VMEM((tq, 1), jnp.float32),
                            pltpu.VMEM((tq, 1), jnp.float32),
                            pltpu.VMEM((tq, D), jnp.float32)],
        ),
        out_shape=jax.ShapeDtypeStruct((B, NH, S, D), q.dtype),
        compiler_params=pltpu.CompilerParams(
            dimension_semantics=("parallel", "parallel", "parallel", "arbitrary")),
    )(kv_len, q, k, v)


# ---------------- fused final LayerNorm + LM head + shifted cross-entropy (vocab-streamed) ----------------
def _ln_lmhead_ce_kernel(x_ref, g_ref, b_ref, w_ref, lbl_ref, logits_ref, nll_ref,
                         xn_sc, m_sc, l_sc, tgt_sc):
    j = pl.program_id(1)

    @pl.when(j == 0)
    def _():
        x = x_ref[...].astype(jnp.float32)
        mu = jnp.mean(x, axis=-1, keepdims=True)
        xc = x - mu
        var = jnp.mean(xc * xc, axis=-1, keepdims=True)
        xn = xc * lax.rsqrt(var + EPS) * g_ref[...].astype(jnp.float32) + b_ref[...].astype(jnp.float32)
        xn_sc[...] = xn.astype(xn_sc.dtype)
        m_sc[...] = jnp.full_like(m_sc, NEG)
        l_sc[...] = jnp.zeros_like(l_sc)
        tgt_sc[...] = jnp.zeros_like(tgt_sc)

    logits = jnp.dot(xn_sc[...], w_ref[...], preferred_element_type=jnp.float32)  # (tm, tv)
    logits_ref[...] = logits.astype(logits_ref.dtype)       # stream logits tile out

    tv = w_ref.shape[1]
    col = j * tv + lax.broadcasted_iota(jnp.int32, logits.shape, 1)
    lbl = lbl_ref[...]                                       # (tm, 1) int32
    tgt_sc[...] += jnp.sum(jnp.where(col == lbl, logits, 0.0), axis=-1, keepdims=True)

    m_new = jnp.maximum(m_sc[...], jnp.max(logits, axis=-1, keepdims=True))
    l_sc[...] = l_sc[...] * jnp.exp(m_sc[...] - m_new) + \
        jnp.sum(jnp.exp(logits - m_new), axis=-1, keepdims=True)
    m_sc[...] = m_new

    @pl.when(j == pl.num_programs(1) - 1)
    def _():
        valid = (lbl_ref[...] != IGNORE_INDEX).astype(jnp.float32)
        nll_ref[...] = (m_sc[...] + jnp.log(l_sc[...]) - tgt_sc[...]) * valid


def ln_lmhead_ce(x, g, b, w, labels):
    M, H = x.shape
    V = w.shape[1]
    tm = _sublane_tile(M)
    tv = _lane_tile(V, prefs=(256, 128))                    # >=2 vocab tiles in this config
    logits, nll = pl.pallas_call(
        _ln_lmhead_ce_kernel,
        grid=(M // tm, V // tv),
        in_specs=[
            pl.BlockSpec((tm, H), lambda i, j: (i, 0)),
            pl.BlockSpec((1, H), lambda i, j: (0, 0)),
            pl.BlockSpec((1, H), lambda i, j: (0, 0)),
            pl.BlockSpec((H, tv), lambda i, j: (0, j)),
            pl.BlockSpec((tm, 1), lambda i, j: (i, 0)),
        ],
        out_specs=(pl.BlockSpec((tm, tv), lambda i, j: (i, j)),
                   pl.BlockSpec((tm, 1), lambda i, j: (i, 0))),
        out_shape=(jax.ShapeDtypeStruct((M, V), x.dtype),
                   jax.ShapeDtypeStruct((M, 1), jnp.float32)),
        scratch_shapes=[pltpu.VMEM((tm, H), x.dtype),
                        pltpu.VMEM((tm, 1), jnp.float32),
                        pltpu.VMEM((tm, 1), jnp.float32),
                        pltpu.VMEM((tm, 1), jnp.float32)],
        compiler_params=pltpu.CompilerParams(
            dimension_semantics=("parallel", "arbitrary")),
    )(x, g.reshape(1, -1), b.reshape(1, -1), w, labels)
    return logits, nll


# ---------------- model glue ----------------
def transformer_layer(h, layer, *, n_heads, head_dim, kv_len, causal):
    B, S, H = h.shape
    M = B * S
    t = min(S, ATTN_TILE)
    x = h.reshape(M, H)
    qkv = ln_linear(x, layer["ln1_g"], layer["ln1_b"], layer["wqkv"], layer["bqkv"])
    qkv = qkv.reshape(B, S, 3, n_heads, head_dim)
    q = qkv[:, :, 0].transpose(0, 2, 1, 3)                  # (B, NH, S, D)
    k = qkv[:, :, 1].transpose(0, 2, 1, 3)
    v = qkv[:, :, 2].transpose(0, 2, 1, 3)
    attn = flash_attention(q, k, v, kv_len, causal=causal, tq=t, tk=t)
    attn = attn.transpose(0, 2, 1, 3).reshape(M, H)
    h1 = proj_residual(attn, layer["wo"], layer["bo"], x)   # out-proj + residual fused
    h2 = ln_mlp_residual(h1, layer["ln2_g"], layer["ln2_b"],
                         layer["w1"], layer["b1"], layer["w2"], layer["b2"])
    return h2.reshape(B, S, H)


def patchify(pixel_values):
    B = pixel_values.shape[0]
    x = pixel_values.reshape(B, 3, IMG // PATCH, PATCH, IMG // PATCH, PATCH)
    x = x.transpose(0, 2, 4, 1, 3, 5).reshape(B, NUM_PATCHES, PATCH_DIM)
    return x.astype(DTYPE)


def _dense(key, shape, scale=0.02):
    return (scale * jax.random.normal(key, shape, jnp.float32)).astype(DTYPE)


def _layer_params(key, hidden, inter):
    ks = jax.random.split(key, 4)
    return {
        "ln1_g": jnp.ones((hidden,), DTYPE), "ln1_b": jnp.zeros((hidden,), DTYPE),
        "wqkv": _dense(ks[0], (hidden, 3 * hidden)), "bqkv": jnp.zeros((3 * hidden,), DTYPE),
        "wo": _dense(ks[1], (hidden, hidden)), "bo": jnp.zeros((hidden,), DTYPE),
        "ln2_g": jnp.ones((hidden,), DTYPE), "ln2_b": jnp.zeros((hidden,), DTYPE),
        "w1": _dense(ks[2], (hidden, inter)), "b1": jnp.zeros((inter,), DTYPE),
        "w2": _dense(ks[3], (inter, hidden)), "b2": jnp.zeros((hidden,), DTYPE),
    }


def init_params(key):
    kv, kt, kp, kproj, ke, kpe1, kpe2, klm = jax.random.split(key, 8)
    return {
        "vision": {
            "patch_w": _dense(kp, (PATCH_DIM, V_HIDDEN)),
            "patch_b": jnp.zeros((V_HIDDEN,), DTYPE),
            "pos": _dense(kpe1, (NUM_PATCHES, V_HIDDEN)),
            "layers": [_layer_params(k, V_HIDDEN, V_INTER) for k in jax.random.split(kv, V_LAYERS)],
            "post_ln_g": jnp.ones((V_HIDDEN,), DTYPE),
            "post_ln_b": jnp.zeros((V_HIDDEN,), DTYPE),
        },
        "proj_w": _dense(kproj, (V_HIDDEN, HIDDEN)),
        "proj_b": jnp.zeros((HIDDEN,), DTYPE),
        "text": {
            "tok_emb": _dense(ke, (VOCAB, HIDDEN)),
            "pos": _dense(kpe2, (S_TOTAL, HIDDEN)),
            "layers": [_layer_params(k, HIDDEN, INTERMEDIATE) for k in jax.random.split(kt, N_LAYERS)],
            "final_ln_g": jnp.ones((HIDDEN,), DTYPE),
            "final_ln_b": jnp.zeros((HIDDEN,), DTYPE),
            "lm_head": _dense(klm, (HIDDEN, VOCAB)),
        },
    }


def kosmos2_forward(params, input_ids, attention_mask, pixel_values, labels):
    """Mirrors Kosmos2ForConditionalGeneration(input_ids, attention_mask,
    pixel_values, labels) -> (loss, logits)."""
    B = input_ids.shape[0]

    # ---- vision encoder (ViT patch encoder) ----
    patches = patchify(pixel_values)                              # (B, Np, patch_dim)
    v = linear(patches.reshape(B * NUM_PATCHES, PATCH_DIM),
               params["vision"]["patch_w"], params["vision"]["patch_b"])
    v = v.reshape(B, NUM_PATCHES, V_HIDDEN) + params["vision"]["pos"][None]
    vis_len = jnp.full((B,), NUM_PATCHES, jnp.int32)              # no padding on patches
    for layer in params["vision"]["layers"]:
        v = transformer_layer(v, layer, n_heads=V_HEADS, head_dim=V_HEAD_DIM,
                              kv_len=vis_len, causal=False)
    # vision post-LN fused into the image->text projection
    # TODO(synk): real KOSMOS-2 uses a latent-query resampler here; linear projection only.
    img = ln_linear(v.reshape(B * NUM_PATCHES, V_HIDDEN),
                    params["vision"]["post_ln_g"], params["vision"]["post_ln_b"],
                    params["proj_w"], params["proj_b"]).reshape(B, NUM_PATCHES, HIDDEN)

    # ---- causal text decoder over [image tokens ; text tokens] ----
    # TODO(synk): real KOSMOS-2 places image embeds via image_embeds_position_mask and uses
    # sinusoidal positions; here image tokens are prepended and positions are learned.
    tok = params["text"]["tok_emb"][input_ids]                    # (B, S_text, H) gather (glue)
    h = jnp.concatenate([img, tok], axis=1) + params["text"]["pos"][None]
    # right-padding assumed: valid KV length per batch (image tokens always valid)
    kv_len = (NUM_PATCHES + jnp.sum(attention_mask, axis=-1)).astype(jnp.int32)
    for layer in params["text"]["layers"]:
        h = transformer_layer(h, layer, n_heads=N_HEADS, head_dim=HEAD_DIM,
                              kv_len=kv_len, causal=True)

    # ---- fused final LayerNorm + LM head + shifted CE ----
    full_labels = jnp.concatenate(
        [jnp.full((B, NUM_PATCHES), IGNORE_INDEX, jnp.int32), labels.astype(jnp.int32)], axis=1)
    shift_labels = jnp.concatenate(
        [full_labels[:, 1:], jnp.full((B, 1), IGNORE_INDEX, jnp.int32)], axis=1)
    logits, nll = ln_lmhead_ce(h.reshape(B * S_TOTAL, HIDDEN),
                               params["text"]["final_ln_g"], params["text"]["final_ln_b"],
                               params["text"]["lm_head"],
                               shift_labels.reshape(-1, 1))
    count = jnp.sum((shift_labels != IGNORE_INDEX).astype(jnp.float32))
    # NOTE: if every label is IGNORE_INDEX this gives 0.0 where HF would give NaN (0/0).
    loss = jnp.sum(nll) / jnp.maximum(count, 1.0)
    return loss, logits.reshape(B, S_TOTAL, VOCAB)


if __name__ == "__main__":
    key = jax.random.PRNGKey(0)
    pkey, ikey, xkey = jax.random.split(key, 3)
    params = init_params(pkey)

    B = 2
    input_ids = jax.random.randint(ikey, (B, S_TEXT), 0, VOCAB, dtype=jnp.int32)
    attention_mask = jnp.ones((B, S_TEXT), jnp.int32).at[1, -4:].set(0)   # right padding
    pixel_values = jax.random.normal(xkey, (B, 3, IMG, IMG), jnp.float32)
    labels = jnp.where(attention_mask == 1, input_ids, IGNORE_INDEX).astype(jnp.int32)

    loss, logits = jax.jit(kosmos2_forward)(params, input_ids, attention_mask,
                                            pixel_values, labels)
    jax.block_until_ready((loss, logits))

    assert logits.shape == (B, S_TOTAL, VOCAB)
    assert bool(jnp.isfinite(loss))
    # with tiny random weights the CE should sit near ln(VOCAB)
    assert abs(float(loss) - math.log(VOCAB)) < 2.0
    print("KERNEL_OK")
</pallas_src>

<mosaic_0001>
module attributes {stable_mosaic.version = 11 : i64} {
  func.func @_ln_linear_kernel(%arg0: i32, %arg1: memref<32x128xbf16, #tpu.memory_space<vmem>>, %arg2: memref<1x128xbf16, #tpu.memory_space<vmem>>, %arg3: memref<1x128xbf16, #tpu.memory_space<vmem>>, %arg4: memref<128x384xbf16, #tpu.memory_space<vmem>>, %arg5: memref<1x384xbf16, #tpu.memory_space<vmem>>, %arg6: memref<32x384xbf16, #tpu.memory_space<vmem>>) attributes {dimension_semantics = [#tpu.dimension_semantics<parallel>], iteration_bounds = array<i64: 1>, scalar_prefetch = 0 : i64, scratch_operands = 0 : i64, tpu.core_type = #tpu.core_type<tc>, window_params = [{transform_indices = @transform_0, window_bounds = array<i64: 32, 128>}, {pipeline_mode = #tpu.pipeline_mode<synchronous>, transform_indices = @transform_1, window_bounds = array<i64: 1, 128>}, {pipeline_mode = #tpu.pipeline_mode<synchronous>, transform_indices = @transform_2, window_bounds = array<i64: 1, 128>}, {pipeline_mode = #tpu.pipeline_mode<synchronous>, transform_indices = @transform_3, window_bounds = array<i64: 128, 384>}, {pipeline_mode = #tpu.pipeline_mode<synchronous>, transform_indices = @transform_4, window_bounds = array<i64: 1, 384>}, {transform_indices = @transform_5, window_bounds = array<i64: 32, 384>}]} {
    %c0 = arith.constant 0 : index
    %c0_0 = arith.constant 0 : index
    %0 = vector.load %arg1[%c0, %c0_0] : memref<32x128xbf16, #tpu.memory_space<vmem>>, vector<32x128xbf16>
    %1 = arith.extf %0 : vector<32x128xbf16> to vector<32x128xf32>
    %cst = arith.constant dense<0.000000e+00> : vector<32xf32>
    %2 = vector.multi_reduction <add>, %1, %cst [1] : vector<32x128xf32> to vector<32xf32>
    %3 = vector.shape_cast %2 : vector<32xf32> to vector<32x1xf32>
    %cst_1 = arith.constant 1.280000e+02 : f32
    %4 = vector.broadcast %cst_1 : f32 to vector<32x1xf32>
    %5 = arith.divf %3, %4 : vector<32x1xf32>
    %6 = vector.broadcast %5 : vector<32x1xf32> to vector<32x128xf32>
    %7 = arith.subf %1, %6 : vector<32x128xf32>
    %8 = arith.mulf %7, %7 : vector<32x128xf32>
    %cst_2 = arith.constant dense<0.000000e+00> : vector<32xf32>
    %9 = vector.multi_reduction <add>, %8, %cst_2 [1] : vector<32x128xf32> to vector<32xf32>
    %10 = vector.shape_cast %9 : vector<32xf32> to vector<32x1xf32>
    %cst_3 = arith.constant 1.280000e+02 : f32
    %11 = vector.broadcast %cst_3 : f32 to vector<32x1xf32>
    %12 = arith.divf %10, %11 : vector<32x1xf32>
    %cst_4 = arith.constant 9.99999974E-6 : f32
    %13 = vector.broadcast %cst_4 : f32 to vector<32x1xf32>
    %14 = arith.addf %12, %13 : vector<32x1xf32>
    %15 = math.rsqrt %14 : vector<32x1xf32>
    %16 = vector.broadcast %15 : vector<32x1xf32> to vector<32x128xf32>
    %17 = arith.mulf %7, %16 : vector<32x128xf32>
    %c0_5 = arith.constant 0 : index
    %c0_6 = arith.constant 0 : index
    %18 = vector.load %arg2[%c0_5, %c0_6] : memref<1x128xbf16, #tpu.memory_space<vmem>>, vector<1x128xbf16>
    %19 = arith.extf %18 : vector<1x128xbf16> to vector<1x128xf32>
    %20 = vector.broadcast %19 : vector<1x128xf32> to vector<32x128xf32>
    %21 = arith.mulf %17, %20 : vector<32x128xf32>
    %c0_7 = arith.constant 0 : index
    %c0_8 = arith.constant 0 : index
    %22 = vector.load %arg3[%c0_7, %c0_8] : memref<1x128xbf16, #tpu.memory_space<vmem>>, vector<1x128xbf16>
    %23 = arith.extf %22 : vector<1x128xbf16> to vector<1x128xf32>
    %24 = vector.broadcast %23 : vector<1x128xf32> to vector<32x128xf32>
    %25 = arith.addf %21, %24 : vector<32x128xf32>
    %26 = arith.truncf %25 : vector<32x128xf32> to vector<32x128xbf16>
    %c0_9 = arith.constant 0 : index
    %c0_10 = arith.constant 0 : index
    %27 = vector.load %arg4[%c0_9, %c0_10] : memref<128x384xbf16, #tpu.memory_space<vmem>>, vector<128x384xbf16>
    %cst_11 = arith.constant dense<0.000000e+00> : vector<32x384xf32>
    %28 = tpu.matmul %26, %27, %cst_11 {dimension_numbers = #tpu.dot_dimension_numbers<[1], [0], [0], [1], [0, 0, 1, 1], [], []>} : vector<32x128xbf16>, vector<128x384xbf16>, vector<32x384xf32> -> vector<32x384xf32>
    %c0_12 = arith.constant 0 : index
    %c0_13 = arith.constant 0 : index
    %29 = vector.load %arg5[%c0_12, %c0_13] : memref<1x384xbf16, #tpu.memory_space<vmem>>, vector<1x384xbf16>
    %30 = arith.extf %29 : vector<1x384xbf16> to vector<1x384xf32>
    %31 = vector.broadcast %30 : vector<1x384xf32> to vector<32x384xf32>
    %32 = arith.addf %28, %31 : vector<32x384xf32>
    %33 = arith.truncf %32 : vector<32x384xf32> to vector<32x384xbf16>
    %c0_14 = arith.constant 0 : index
    %c0_15 = arith.constant 0 : index
    %34 = vector.load %arg6[%c0_14, %c0_15] : memref<32x384xbf16, #tpu.memory_space<vmem>>, vector<32x384xbf16>
    tpu.vector_store %arg6[%c0_14, %c0_15], %33 {strides = array<i32>} : memref<32x384xbf16, #tpu.memory_space<vmem>>, vector<32x384xbf16>,
    return
  }
  func.func @transform_0(%arg0: i32) -> (i32, i32) {
    %c0_i32 = arith.constant 0 : i32
    %c0_i32_0 = arith.constant 0 : i32
    return %arg0, %c0_i32 : i32, i32
  }
  func.func @transform_1(%arg0: i32) -> (i32, i32) {
    %c0_i32 = arith.constant 0 : i32
    %c0_i32_0 = arith.constant 0 : i32
    %c0_i32_1 = arith.constant 0 : i32
    return %c0_i32, %c0_i32_0 : i32, i32
  }
  func.func @transform_2(%arg0: i32) -> (i32, i32) {
    %c0_i32 = arith.constant 0 : i32
    %c0_i32_0 = arith.constant 0 : i32
    %c0_i32_1 = arith.constant 0 : i32
    return %c0_i32, %c0_i32_0 : i32, i32
  }
  func.func @transform_3(%arg0: i32) -> (i32, i32) {
    %c0_i32 = arith.constant 0 : i32
    %c0_i32_0 = arith.constant 0 : i32
    %c0_i32_1 = arith.constant 0 : i32
    return %c0_i32, %c0_i32_0 : i32, i32
  }
  func.func @transform_4(%arg0: i32) -> (i32, i32) {
    %c0_i32 = arith.constant 0 : i32
    %c0_i32_0 = arith.constant 0 : i32
    %c0_i32_1 = arith.constant 0 : i32
    return %c0_i32, %c0_i32_0 : i32, i32
  }
  func.func @transform_5(%arg0: i32) -> (i32, i32) {
    %c0_i32 = arith.constant 0 : i32
    %c0_i32_0 = arith.constant 0 : i32
    return %arg0, %c0_i32 : i32, i32
  }
}

module attributes {stable_mosaic.version = 11 : i64} {
  func.func @_linear_kernel(%arg0: i32, %arg1: i32, %arg2: i32, %arg3: memref<32x192xbf16, #tpu.memory_space<vmem>>, %arg4: memref<192x128xbf16, #tpu.memory_space<vmem>>, %arg5: memref<1x128xbf16, #tpu.memory_space<vmem>>, %arg6: memref<32x128xbf16, #tpu.memory_space<vmem>>, %arg7: memref<32x128xf32, #tpu.memory_space<vmem>>) attributes {dimension_semantics = [#tpu.dimension_semantics<parallel>, #tpu.dimension_semantics<parallel>, #tpu.dimension_semantics<arbitrary>], iteration_bounds = array<i64: 1, 1, 1>, scalar_prefetch = 0 : i64, scratch_operands = 1 : i64, tpu.core_type = #tpu.core_type<tc>, window_params = [{transform_indices = @transform_0, window_bounds = array<i64: 32, 192>}, {transform_indices = @transform_1, window_bounds = array<i64: 192, 128>}, {transform_indices = @transform_2, window_bounds = array<i64: 1, 128>}, {transform_indices = @transform_3, window_bounds = array<i64: 32, 128>}]} {
    %c0_i32 = arith.constant 0 : i32
    %0 = arith.cmpi eq, %arg2, %c0_i32 : i32
    %1 = arith.extui %0 : i1 to i32
    %c0_i32_0 = arith.constant 0 : i32
    %2 = arith.cmpi ne, %1, %c0_i32_0 : i32
    scf.if %2 {
      %cst_10 = arith.constant 0.000000e+00 : f32
      %12 = vector.broadcast %cst_10 : f32 to vector<32x128xf32>
      %c0_11 = arith.constant 0 : index
      %c0_12 = arith.constant 0 : index
      %13 = vector.load %arg7[%c0_11, %c0_12] : memref<32x128xf32, #tpu.memory_space<vmem>>, vector<32x128xf32>
      tpu.vector_store %arg7[%c0_11, %c0_12], %12 {strides = array<i32>} : memref<32x128xf32, #tpu.memory_space<vmem>>, vector<32x128xf32>,
    } else {
    }
    %c0 = arith.constant 0 : index
    %c0_1 = arith.constant 0 : index
    %3 = vector.load %arg7[%c0, %c0_1] : memref<32x128xf32, #tpu.memory_space<vmem>>, vector<32x128xf32>
    %c0_2 = arith.constant 0 : index
    %c0_3 = arith.constant 0 : index
    %4 = vector.load %arg3[%c0_2, %c0_3] : memref<32x192xbf16, #tpu.memory_space<vmem>>, vector<32x192xbf16>
    %c0_4 = arith.constant 0 : index
    %c0_5 = arith.constant 0 : index
    %5 = vector.load %arg4[%c0_4, %c0_5] : memref<192x128xbf16, #tpu.memory_space<vmem>>, vector<192x128xbf16>
    %cst = arith.constant dense<0.000000e+00> : vector<32x128xf32>
    %6 = tpu.matmul %4, %5, %cst {dimension_numbers = #tpu.dot_dimension_numbers<[1], [0], [0], [1], [0, 0, 1, 1], [], []>} : vector<32x192xbf16>, vector<192x128xbf16>, vector<32x128xf32> -> vector<32x128xf32>
    %7 = arith.addf %3, %6 : vector<32x128xf32>
    %c0_6 = arith.constant 0 : index
    %c0_7 = arith.constant 0 : index
    %8 = vector.load %arg7[%c0_6, %c0_7] : memref<32x128xf32, #tpu.memory_space<vmem>>, vector<32x128xf32>
    tpu.vector_store %arg7[%c0_6, %c0_7], %7 {strides = array<i32>} : memref<32x128xf32, #tpu.memory_space<vmem>>, vector<32x128xf32>,
    %c0_i32_8 = arith.constant 0 : i32
    %9 = arith.cmpi eq, %arg2, %c0_i32_8 : i32
    %10 = arith.extui %9 : i1 to i32
    %c0_i32_9 = arith.constant 0 : i32
    %11 = arith.cmpi ne, %10, %c0_i32_9 : i32
    scf.if %11 {
      %c0_10 = arith.constant 0 : index
      %c0_11 = arith.constant 0 : index
      %12 = vector.load %arg7[%c0_10, %c0_11] : memref<32x128xf32, #tpu.memory_space<vmem>>, vector<32x128xf32>
      %c0_12 = arith.constant 0 : index
      %c0_13 = arith.constant 0 : index
      %13 = vector.load %arg5[%c0_12, %c0_13] : memref<1x128xbf16, #tpu.memory_space<vmem>>, vector<1x128xbf16>
      %14 = arith.extf %13 : vector<1x128xbf16> to vector<1x128xf32>
      %15 = vector.broadcast %14 : vector<1x128xf32> to vector<32x128xf32>
      %16 = arith.addf %12, %15 : vector<32x128xf32>
      %17 = arith.truncf %16 : vector<32x128xf32> to vector<32x128xbf16>
      %c0_14 = arith.constant 0 : index
      %c0_15 = arith.constant 0 : index
      %18 = vector.load %arg6[%c0_14, %c0_15] : memref<32x128xbf16, #tpu.memory_space<vmem>>, vector<32x128xbf16>
      tpu.vector_store %arg6[%c0_14, %c0_15], %17 {strides = array<i32>} : memref<32x128xbf16, #tpu.memory_space<vmem>>, vector<32x128xbf16>,
    } else {
    }
    return
  }
  func.func @transform_0(%arg0: i32, %arg1: i32, %arg2: i32) -> (i32, i32) {
    %c0_i32 = arith.constant 0 : i32
    return %arg0, %arg2 : i32, i32
  }
  func.func @transform_1(%arg0: i32, %arg1: i32, %arg2: i32) -> (i32, i32) {
    %c0_i32 = arith.constant 0 : i32
    return %arg2, %arg1 : i32, i32
  }
  func.func @transform_2(%arg0: i32, %arg1: i32, %arg2: i32) -> (i32, i32) {
    %c0_i32 = arith.constant 0 : i32
    %c0_i32_0 = arith.constant 0 : i32
    return %c0_i32, %arg1 : i32, i32
  }
  func.func @transform_3(%arg0: i32, %arg1: i32, %arg2: i32) -> (i32, i32) {
    %c0_i32 = arith.constant 0 : i32
    return %arg0, %arg1 : i32, i32
  }
}

module attributes {stable_mosaic.version = 11 : i64} {
  func.func @_flash_attn_kernel(%arg0: i32, %arg1: i32, %arg2: i32, %arg3: i32, %arg4: memref<2xi32, #tpu.memory_space<smem>>, %arg5: memref<1x1x16x128xbf16, #tpu.memory_space<vmem>>, %arg6: memref<1x1x16x128xbf16, #tpu.memory_space<vmem>>, %arg7: memref<1x1x16x128xbf16, #tpu.memory_space<vmem>>, %arg8: memref<1x1x16x128xbf16, #tpu.memory_space<vmem>>, %arg9: memref<16x1xf32, #tpu.memory_space<vmem>>, %arg10: memref<16x1xf32, #tpu.memory_space<vmem>>, %arg11: memref<16x128xf32, #tpu.memory_space<vmem>>) attributes {dimension_semantics = [#tpu.dimension_semantics<parallel>, #tpu.dimension_semantics<parallel>, #tpu.dimension_semantics<parallel>, #tpu.dimension_semantics<arbitrary>], iteration_bounds = array<i64: 2, 1, 1, 1>, scalar_prefetch = 1 : i64, scratch_operands = 3 : i64, tpu.core_type = #tpu.core_type<tc>, window_params = [{transform_indices = @transform_0, window_bounds = array<i64: 1, 1, 16, 128>}, {transform_indices = @transform_1, window_bounds = array<i64: 1, 1, 16, 128>}, {transform_indices = @transform_2, window_bounds = array<i64: 1, 1, 16, 128>}, {transform_indices = @transform_3, window_bounds = array<i64: 1, 1, 16, 128>}]} {
    %c0_i32 = arith.constant 0 : i32
    %0 = arith.cmpi eq, %arg3, %c0_i32 : i32
    %1 = arith.extui %0 : i1 to i32
    %c0_i32_0 = arith.constant 0 : i32
    %2 = arith.cmpi ne, %1, %c0_i32_0 : i32
    scf.if %2 {
      %cst_33 = arith.constant -1.000000e+30 : f32
      %49 = vector.broadcast %cst_33 : f32 to vector<16x1xf32>
      %c0_34 = arith.constant 0 : index
      %c0_35 = arith.constant 0 : index
      %50 = vector.load %arg9[%c0_34, %c0_35] : memref<16x1xf32, #tpu.memory_space<vmem>>, vector<16x1xf32>
      tpu.vector_store %arg9[%c0_34, %c0_35], %49 {strides = array<i32>} : memref<16x1xf32, #tpu.memory_space<vmem>>, vector<16x1xf32>,
      %cst_36 = arith.constant 0.000000e+00 : f32
      %51 = vector.broadcast %cst_36 : f32 to vector<16x1xf32>
      %c0_37 = arith.constant 0 : index
      %c0_38 = arith.constant 0 : index
      %52 = vector.load %arg10[%c0_37, %c0_38] : memref<16x1xf32, #tpu.memory_space<vmem>>, vector<16x1xf32>
      tpu.vector_store %arg10[%c0_37, %c0_38], %51 {strides = array<i32>} : memref<16x1xf32, #tpu.memory_space<vmem>>, vector<16x1xf32>,
      %cst_39 = arith.constant 0.000000e+00 : f32
      %53 = vector.broadcast %cst_39 : f32 to vector<16x128xf32>
      %c0_40 = arith.constant 0 : index
      %c0_41 = arith.constant 0 : index
      %54 = vector.load %arg11[%c0_40, %c0_41] : memref<16x128xf32, #tpu.memory_space<vmem>>, vector<16x128xf32>
      tpu.vector_store %arg11[%c0_40, %c0_41], %53 {strides = array<i32>} : memref<16x128xf32, #tpu.memory_space<vmem>>, vector<16x128xf32>,
    } else {
    }
    %c0 = arith.constant 0 : index
    %c0_1 = arith.constant 0 : index
    %c0_2 = arith.constant 0 : index
    %c0_3 = arith.constant 0 : index
    %3 = vector.load %arg5[%c0, %c0_1, %c0_2, %c0_3] : memref<1x1x16x128xbf16, #tpu.memory_space<vmem>>, vector<1x1x16x128xbf16>
    %4 = vector.shape_cast %3 : vector<1x1x16x128xbf16> to vector<16x128xbf16>
    %c0_4 = arith.constant 0 : index
    %c0_5 = arith.constant 0 : index
    %c0_6 = arith.constant 0 : index
    %c0_7 = arith.constant 0 : index
    %5 = vector.load %arg6[%c0_4, %c0_5, %c0_6, %c0_7] : memref<1x1x16x128xbf16, #tpu.memory_space<vmem>>, vector<1x1x16x128xbf16>
    %6 = vector.shape_cast %5 : vector<1x1x16x128xbf16> to vector<16x128xbf16>
    %c0_8 = arith.constant 0 : index
    %c0_9 = arith.constant 0 : index
    %c0_10 = arith.constant 0 : index
    %c0_11 = arith.constant 0 : index
    %7 = vector.load %arg7[%c0_8, %c0_9, %c0_10, %c0_11] : memref<1x1x16x128xbf16, #tpu.memory_space<vmem>>, vector<1x1x16x128xbf16>
    %8 = vector.shape_cast %7 : vector<1x1x16x128xbf16> to vector<16x128xbf16>
    %cst = arith.constant dense<0.000000e+00> : vector<16x16xf32>
    %9 = tpu.matmul %4, %6, %cst {dimension_numbers = #tpu.dot_dimension_numbers<[1], [1], [0], [0], [0, 0, 1, 0], [], []>} : vector<16x128xbf16>, vector<16x128xbf16>, vector<16x16xf32> -> vector<16x16xf32>
    %cst_12 = arith.constant 0.0883883461 : f32
    %10 = vector.broadcast %cst_12 : f32 to vector<16x16xf32>
    %11 = arith.mulf %9, %10 : vector<16x16xf32>
    %12 = arith.index_cast %arg0 : i32 to index
    %13 = memref.load %arg4[%12] : memref<2xi32, #tpu.memory_space<smem>>
    %c16_i32 = arith.constant 16 : i32
    %14 = arith.muli %arg3, %c16_i32 : i32
    %15 = tpu.iota {dimensions = array<i32: 1>} : vector<16x16xi32>
    %16 = vector.broadcast %14 : i32 to vector<16x16xi32>
    %17 = arith.addi %16, %15 : vector<16x16xi32>
    %18 = vector.broadcast %13 : i32 to vector<16x16xi32>
    %19 = arith.cmpi slt, %17, %18 : vector<16x16xi32>
    %cst_13 = arith.constant -1.000000e+30 : f32
    %20 = vector.broadcast %cst_13 : f32 to vector<16x16xf32>
    %21 = arith.select %19, %11, %20 : vector<16x16xi1>, vector<16x16xf32>
    %c0_14 = arith.constant 0 : index
    %c0_15 = arith.constant 0 : index
    %22 = vector.load %arg9[%c0_14, %c0_15] : memref<16x1xf32, #tpu.memory_space<vmem>>, vector<16x1xf32>
    %cst_16 = arith.constant dense<0xFF800000> : vector<16xf32>
    %23 = vector.multi_reduction <maximumf>, %21, %cst_16 [1] : vector<16x16xf32> to vector<16xf32>
    %24 = vector.shape_cast %23 : vector<16xf32> to vector<16x1xf32>
    %25 = arith.maximumf %22, %24 : vector<16x1xf32>
    %c0_17 = arith.constant 0 : index
    %c0_18 = arith.constant 0 : index
    %26 = vector.load %arg9[%c0_17, %c0_18] : memref<16x1xf32, #tpu.memory_space<vmem>>, vector<16x1xf32>
    %27 = arith.subf %26, %25 : vector<16x1xf32>
    %28 = math.exp %27 : vector<16x1xf32>
    %29 = vector.broadcast %25 : vector<16x1xf32> to vector<16x16xf32>
    %30 = arith.subf %21, %29 : vector<16x16xf32>
    %31 = math.exp %30 : vector<16x16xf32>
    %c0_19 = arith.constant 0 : index
    %c0_20 = arith.constant 0 : index
    %32 = vector.load %arg10[%c0_19, %c0_20] : memref<16x1xf32, #tpu.memory_space<vmem>>, vector<16x1xf32>
    %33 = arith.mulf %28, %32 : vector<16x1xf32>
    %cst_21 = arith.constant dense<0.000000e+00> : vector<16xf32>
    %34 = vector.multi_reduction <add>, %31, %cst_21 [1] : vector<16x16xf32> to vector<16xf32>
    %35 = vector.shape_cast %34 : vector<16xf32> to vector<16x1xf32>
    %36 = arith.addf %33, %35 : vector<16x1xf32>
    %c0_22 = arith.constant 0 : index
    %c0_23 = arith.constant 0 : index
    %37 = vector.load %arg10[%c0_22, %c0_23] : memref<16x1xf32, #tpu.memory_space<vmem>>, vector<16x1xf32>
    tpu.vector_store %arg10[%c0_22, %c0_23], %36 {strides = array<i32>} : memref<16x1xf32, #tpu.memory_space<vmem>>, vector<16x1xf32>,
    %c0_24 = arith.constant 0 : index
    %c0_25 = arith.constant 0 : index
    %38 = vector.load %arg11[%c0_24, %c0_25] : memref<16x128xf32, #tpu.memory_space<vmem>>, vector<16x128xf32>
    %39 = vector.broadcast %28 : vector<16x1xf32> to vector<16x128xf32>
    %40 = arith.mulf %39, %38 : vector<16x128xf32>
    %41 = arith.truncf %31 : vector<16x16xf32> to vector<16x16xbf16>
    %cst_26 = arith.constant dense<0.000000e+00> : vector<16x128xf32>
    %42 = tpu.matmul %41, %8, %cst_26 {dimension_numbers = #tpu.dot_dimension_numbers<[1], [0], [0], [1], [0, 0, 1, 1], [], []>} : vector<16x16xbf16>, vector<16x128xbf16>, vector<16x128xf32> -> vector<16x128xf32>
    %43 = arith.addf %40, %42 : vector<16x128xf32>
    %c0_27 = arith.constant 0 : index
    %c0_28 = arith.constant 0 : index
    %44 = vector.load %arg11[%c0_27, %c0_28] : memref<16x128xf32, #tpu.memory_space<vmem>>, vector<16x128xf32>
    tpu.vector_store %arg11[%c0_27, %c0_28], %43 {strides = array<i32>} : memref<16x128xf32, #tpu.memory_space<vmem>>, vector<16x128xf32>,
    %c0_29 = arith.constant 0 : index
    %c0_30 = arith.constant 0 : index
    %45 = vector.load %arg9[%c0_29, %c0_30] : memref<16x1xf32, #tpu.memory_space<vmem>>, vector<16x1xf32>
    tpu.vector_store %arg9[%c0_29, %c0_30], %25 {strides = array<i32>} : memref<16x1xf32, #tpu.memory_space<vmem>>, vector<16x1xf32>,
    %c0_i32_31 = arith.constant 0 : i32
    %46 = arith.cmpi eq, %arg3, %c0_i32_31 : i32
    %47 = arith.extui %46 : i1 to i32
    %c0_i32_32 = arith.constant 0 : i32
    %48 = arith.cmpi ne, %47, %c0_i32_32 : i32
    scf.if %48 {
      %c0_33 = arith.constant 0 : index
      %c0_34 = arith.constant 0 : index
      %49 = vector.load %arg10[%c0_33, %c0_34] : memref<16x1xf32, #tpu.memory_space<vmem>>, vector<16x1xf32>
      %50 = tpu.reciprocal %49 {approx = true} : vector<16x1xf32> -> vector<16x1xf32>
      %c0_35 = arith.constant 0 : index
      %c0_36 = arith.constant 0 : index
      %51 = vector.load %arg11[%c0_35, %c0_36] : memref<16x128xf32, #tpu.memory_space<vmem>>, vector<16x128xf32>
      %52 = vector.broadcast %50 : vector<16x1xf32> to vector<16x128xf32>
      %53 = arith.mulf %51, %52 : vector<16x128xf32>
      %54 = arith.truncf %53 : vector<16x128xf32> to vector<16x128xbf16>
      %c0_37 = arith.constant 0 : index
      %c0_38 = arith.constant 0 : index
      %c0_39 = arith.constant 0 : index
      %c0_40 = arith.constant 0 : index
      %55 = vector.load %arg8[%c0_37, %c0_38, %c0_39, %c0_40] : memref<1x1x16x128xbf16, #tpu.memory_space<vmem>>, vector<1x1x16x128xbf16>
      %56 = vector.shape_cast %55 : vector<1x1x16x128xbf16> to vector<16x128xbf16>
      %57 = vector.shape_cast %54 : vector<16x128xbf16> to vector<1x1x16x128xbf16>
      tpu.vector_store %arg8[%c0_37, %c0_38, %c0_39, %c0_40], %57 {strides = array<i32>} : memref<1x1x16x128xbf16, #tpu.memory_space<vmem>>, vector<1x1x16x128xbf16>,
    } else {
    }
    return
  }
  func.func @transform_0(%arg0: i32, %arg1: i32, %arg2: i32, %arg3: i32, %arg4: memref<2xi32, #tpu.memory_space<smem>>) -> (i32, i32, i32, i32) {
    %c0_i32 = arith.constant 0 : i32
    %c0_i32_0 = arith.constant 0 : i32
    return %arg0, %arg1, %arg2, %c0_i32 : i32, i32, i32, i32
  }
  func.func @transform_1(%arg0: i32, %arg1: i32, %arg2: i32, %arg3: i32, %arg4: memref<2xi32, #tpu.memory_space<smem>>) -> (i32, i32, i32, i32) {
    %c0_i32 = arith.constant 0 : i32
    %c0_i32_0 = arith.constant 0 : i32
    return %arg0, %arg1, %arg3, %c0_i32 : i32, i32, i32, i32
  }
  func.func @transform_2(%arg0: i32, %arg1: i32, %arg2: i32, %arg3: i32, %arg4: memref<2xi32, #tpu.memory_space<smem>>) -> (i32, i32, i32, i32) {
    %c0_i32 = arith.constant 0 : i32
    %c0_i32_0 = arith.constant 0 : i32
    return %arg0, %arg1, %arg3, %c0_i32 : i32, i32, i32, i32
  }
  func.func @transform_3(%arg0: i32, %arg1: i32, %arg2: i32, %arg3: i32, %arg4: memref<2xi32, #tpu.memory_space<smem>>) -> (i32, i32, i32, i32) {
    %c0_i32 = arith.constant 0 : i32
    %c0_i32_0 = arith.constant 0 : i32
    return %arg0, %arg1, %arg2, %c0_i32 : i32, i32, i32, i32
  }
}

module attributes {stable_mosaic.version = 11 : i64} {
  func.func @_proj_res_kernel(%arg0: i32, %arg1: memref<32x128xbf16, #tpu.memory_space<vmem>>, %arg2: memref<128x128xbf16, #tpu.memory_space<vmem>>, %arg3: memref<1x128xbf16, #tpu.memory_space<vmem>>, %arg4: memref<32x128xbf16, #tpu.memory_space<vmem>>, %arg5: memref<32x128xbf16, #tpu.memory_space<vmem>>) attributes {dimension_semantics = [#tpu.dimension_semantics<parallel>], iteration_bounds = array<i64: 1>, scalar_prefetch = 0 : i64, scratch_operands = 0 : i64, tpu.core_type = #tpu.core_type<tc>, window_params = [{transform_indices = @transform_0, window_bounds = array<i64: 32, 128>}, {pipeline_mode = #tpu.pipeline_mode<synchronous>, transform_indices = @transform_1, window_bounds = array<i64: 128, 128>}, {pipeline_mode = #tpu.pipeline_mode<synchronous>, transform_indices = @transform_2, window_bounds = array<i64: 1, 128>}, {transform_indices = @transform_3, window_bounds = array<i64: 32, 128>}, {transform_indices = @transform_4, window_bounds = array<i64: 32, 128>}]} {
    %c0 = arith.constant 0 : index
    %c0_0 = arith.constant 0 : index
    %0 = vector.load %arg1[%c0, %c0_0] : memref<32x128xbf16, #tpu.memory_space<vmem>>, vector<32x128xbf16>
    %c0_1 = arith.constant 0 : index
    %c0_2 = arith.constant 0 : index
    %1 = vector.load %arg2[%c0_1, %c0_2] : memref<128x128xbf16, #tpu.memory_space<vmem>>, vector<128x128xbf16>
    %cst = arith.constant dense<0.000000e+00> : vector<32x128xf32>
    %2 = tpu.matmul %0, %1, %cst {dimension_numbers = #tpu.dot_dimension_numbers<[1], [0], [0], [1], [0, 0, 1, 1], [], []>} : vector<32x128xbf16>, vector<128x128xbf16>, vector<32x128xf32> -> vector<32x128xf32>
    %c0_3 = arith.constant 0 : index
    %c0_4 = arith.constant 0 : index
    %3 = vector.load %arg3[%c0_3, %c0_4] : memref<1x128xbf16, #tpu.memory_space<vmem>>, vector<1x128xbf16>
    %4 = arith.extf %3 : vector<1x128xbf16> to vector<1x128xf32>
    %5 = vector.broadcast %4 : vector<1x128xf32> to vector<32x128xf32>
    %6 = arith.addf %2, %5 : vector<32x128xf32>
    %c0_5 = arith.constant 0 : index
    %c0_6 = arith.constant 0 : index
    %7 = vector.load %arg4[%c0_5, %c0_6] : memref<32x128xbf16, #tpu.memory_space<vmem>>, vector<32x128xbf16>
    %8 = arith.extf %7 : vector<32x128xbf16> to vector<32x128xf32>
    %9 = arith.addf %6, %8 : vector<32x128xf32>
    %10 = arith.truncf %9 : vector<32x128xf32> to vector<32x128xbf16>
    %c0_7 = arith.constant 0 : index
    %c0_8 = arith.constant 0 : index
    %11 = vector.load %arg5[%c0_7, %c0_8] : memref<32x128xbf16, #tpu.memory_space<vmem>>, vector<32x128xbf16>
    tpu.vector_store %arg5[%c0_7, %c0_8], %10 {strides = array<i32>} : memref<32x128xbf16, #tpu.memory_space<vmem>>, vector<32x128xbf16>,
    return
  }
  func.func @transform_0(%arg0: i32) -> (i32, i32) {
    %c0_i32 = arith.constant 0 : i32
    %c0_i32_0 = arith.constant 0 : i32
    return %arg0, %c0_i32 : i32, i32
  }
  func.func @transform_1(%arg0: i32) -> (i32, i32) {
    %c0_i32 = arith.constant 0 : i32
    %c0_i32_0 = arith.constant 0 : i32
    %c0_i32_1 = arith.constant 0 : i32
    return %c0_i32, %c0_i32_0 : i32, i32
  }
  func.func @transform_2(%arg0: i32) -> (i32, i32) {
    %c0_i32 = arith.constant 0 : i32
    %c0_i32_0 = arith.constant 0 : i32
    %c0_i32_1 = arith.constant 0 : i32
    return %c0_i32, %c0_i32_0 : i32, i32
  }
  func.func @transform_3(%arg0: i32) -> (i32, i32) {
    %c0_i32 = arith.constant 0 : i32
    %c0_i32_0 = arith.constant 0 : i32
    return %arg0, %c0_i32 : i32, i32
  }
  func.func @transform_4(%arg0: i32) -> (i32, i32) {
    %c0_i32 = arith.constant 0 : i32
    %c0_i32_0 = arith.constant 0 : i32
    return %arg0, %c0_i32 : i32, i32
  }
}

module attributes {stable_mosaic.version = 11 : i64} {
  func.func @_ln_linear_kernel(%arg0: i32, %arg1: memref<32x128xbf16, #tpu.memory_space<vmem>>, %arg2: memref<1x128xbf16, #tpu.memory_space<vmem>>, %arg3: memref<1x128xbf16, #tpu.memory_space<vmem>>, %arg4: memref<128x256xbf16, #tpu.memory_space<vmem>>, %arg5: memref<1x256xbf16, #tpu.memory_space<vmem>>, %arg6: memref<32x256xbf16, #tpu.memory_space<vmem>>) attributes {dimension_semantics = [#tpu.dimension_semantics<parallel>], iteration_bounds = array<i64: 1>, scalar_prefetch = 0 : i64, scratch_operands = 0 : i64, tpu.core_type = #tpu.core_type<tc>, window_params = [{transform_indices = @transform_0, window_bounds = array<i64: 32, 128>}, {pipeline_mode = #tpu.pipeline_mode<synchronous>, transform_indices = @transform_1, window_bounds = array<i64: 1, 128>}, {pipeline_mode = #tpu.pipeline_mode<synchronous>, transform_indices = @transform_2, window_bounds = array<i64: 1, 128>}, {pipeline_mode = #tpu.pipeline_mode<synchronous>, transform_indices = @transform_3, window_bounds = array<i64: 128, 256>}, {pipeline_mode = #tpu.pipeline_mode<synchronous>, transform_indices = @transform_4, window_bounds = array<i64: 1, 256>}, {transform_indices = @transform_5, window_bounds = array<i64: 32, 256>}]} {
    %c0 = arith.constant 0 : index
    %c0_0 = arith.constant 0 : index
    %0 = vector.load %arg1[%c0, %c0_0] : memref<32x128xbf16, #tpu.memory_space<vmem>>, vector<32x128xbf16>
    %1 = arith.extf %0 : vector<32x128xbf16> to vector<32x128xf32>
    %cst = arith.constant dense<0.000000e+00> : vector<32xf32>
    %2 = vector.multi_reduction <add>, %1, %cst [1] : vector<32x128xf32> to vector<32xf32>
    %3 = vector.shape_cast %2 : vector<32xf32> to vector<32x1xf32>
    %cst_1 = arith.constant 1.280000e+02 : f32
    %4 = vector.broadcast %cst_1 : f32 to vector<32x1xf32>
    %5 = arith.divf %3, %4 : vector<32x1xf32>
    %6 = vector.broadcast %5 : vector<32x1xf32> to vector<32x128xf32>
    %7 = arith.subf %1, %6 : vector<32x128xf32>
    %8 = arith.mulf %7, %7 : vector<32x128xf32>
    %cst_2 = arith.constant dense<0.000000e+00> : vector<32xf32>
    %9 = vector.multi_reduction <add>, %8, %cst_2 [1] : vector<32x128xf32> to vector<32xf32>
    %10 = vector.shape_cast %9 : vector<32xf32> to vector<32x1xf32>
    %cst_3 = arith.constant 1.280000e+02 : f32
    %11 = vector.broadcast %cst_3 : f32 to vector<32x1xf32>
    %12 = arith.divf %10, %11 : vector<32x1xf32>
    %cst_4 = arith.constant 9.99999974E-6 : f32
    %13 = vector.broadcast %cst_4 : f32 to vector<32x1xf32>
    %14 = arith.addf %12, %13 : vector<32x1xf32>
    %15 = math.rsqrt %14 : vector<32x1xf32>
    %16 = vector.broadcast %15 : vector<32x1xf32> to vector<32x128xf32>
    %17 = arith.mulf %7, %16 : vector<32x128xf32>
    %c0_5 = arith.constant 0 : index
    %c0_6 = arith.constant 0 : index
    %18 = vector.load %arg2[%c0_5, %c0_6] : memref<1x128xbf16, #tpu.memory_space<vmem>>, vector<1x128xbf16>
    %19 = arith.extf %18 : vector<1x128xbf16> to vector<1x128xf32>
    %20 = vector.broadcast %19 : vector<1x128xf32> to vector<32x128xf32>
    %21 = arith.mulf %17, %20 : vector<32x128xf32>
    %c0_7 = arith.constant 0 : index
    %c0_8 = arith.constant 0 : index
    %22 = vector.load %arg3[%c0_7, %c0_8] : memref<1x128xbf16, #tpu.memory_space<vmem>>, vector<1x128xbf16>
    %23 = arith.extf %22 : vector<1x128xbf16> to vector<1x128xf32>
    %24 = vector.broadcast %23 : vector<1x128xf32> to vector<32x128xf32>
    %25 = arith.addf %21, %24 : vector<32x128xf32>
    %26 = arith.truncf %25 : vector<32x128xf32> to vector<32x128xbf16>
    %c0_9 = arith.constant 0 : index
    %c0_10 = arith.constant 0 : index
    %27 = vector.load %arg4[%c0_9, %c0_10] : memref<128x256xbf16, #tpu.memory_space<vmem>>, vector<128x256xbf16>
    %cst_11 = arith.constant dense<0.000000e+00> : vector<32x256xf32>
    %28 = tpu.matmul %26, %27, %cst_11 {dimension_numbers = #tpu.dot_dimension_numbers<[1], [0], [0], [1], [0, 0, 1, 1], [], []>} : vector<32x128xbf16>, vector<128x256xbf16>, vector<32x256xf32> -> vector<32x256xf32>
    %c0_12 = arith.constant 0 : index
    %c0_13 = arith.constant 0 : index
    %29 = vector.load %arg5[%c0_12, %c0_13] : memref<1x256xbf16, #tpu.memory_space<vmem>>, vector<1x256xbf16>
    %30 = arith.extf %29 : vector<1x256xbf16> to vector<1x256xf32>
    %31 = vector.broadcast %30 : vector<1x256xf32> to vector<32x256xf32>
    %32 = arith.addf %28, %31 : vector<32x256xf32>
    %33 = arith.truncf %32 : vector<32x256xf32> to vector<32x256xbf16>
    %c0_14 = arith.constant 0 : index
    %c0_15 = arith.constant 0 : index
    %34 = vector.load %arg6[%c0_14, %c0_15] : memref<32x256xbf16, #tpu.memory_space<vmem>>, vector<32x256xbf16>
    tpu.vector_store %arg6[%c0_14, %c0_15], %33 {strides = array<i32>} : memref<32x256xbf16, #tpu.memory_space<vmem>>, vector<32x256xbf16>,
    return
  }
  func.func @transform_0(%arg0: i32) -> (i32, i32) {
    %c0_i32 = arith.constant 0 : i32
    %c0_i32_0 = arith.constant 0 : i32
    return %arg0, %c0_i32 : i32, i32
  }
  func.func @transform_1(%arg0: i32) -> (i32, i32) {
    %c0_i32 = arith.constant 0 : i32
    %c0_i32_0 = arith.constant 0 : i32
    %c0_i32_1 = arith.constant 0 : i32
    return %c0_i32, %c0_i32_0 : i32, i32
  }
  func.func @transform_2(%arg0: i32) -> (i32, i32) {
    %c0_i32 = arith.constant 0 : i32
    %c0_i32_0 = arith.constant 0 : i32
    %c0_i32_1 = arith.constant 0 : i32
    return %c0_i32, %c0_i32_0 : i32, i32
  }
  func.func @transform_3(%arg0: i32) -> (i32, i32) {
    %c0_i32 = arith.constant 0 : i32
    %c0_i32_0 = arith.constant 0 : i32
    %c0_i32_1 = arith.constant 0 : i32
    return %c0_i32, %c0_i32_0 : i32, i32
  }
  func.func @transform_4(%arg0: i32) -> (i32, i32) {
    %c0_i32 = arith.constant 0 : i32
    %c0_i32_0 = arith.constant 0 : i32
    %c0_i32_1 = arith.constant 0 : i32
    return %c0_i32, %c0_i32_0 : i32, i32
  }
  func.func @transform_5(%arg0: i32) -> (i32, i32) {
    %c0_i32 = arith.constant 0 : i32
    %c0_i32_0 = arith.constant 0 : i32
    return %arg0, %c0_i32 : i32, i32
  }
}

module attributes {stable_mosaic.version = 11 : i64} {
  func.func @_ln_mlp_res_kernel(%arg0: i32, %arg1: memref<32x128xbf16, #tpu.memory_space<vmem>>, %arg2: memref<1x128xbf16, #tpu.memory_space<vmem>>, %arg3: memref<1x128xbf16, #tpu.memory_space<vmem>>, %arg4: memref<128x256xbf16, #tpu.memory_space<vmem>>, %arg5: memref<1x256xbf16, #tpu.memory_space<vmem>>, %arg6: memref<256x128xbf16, #tpu.memory_space<vmem>>, %arg7: memref<1x128xbf16, #tpu.memory_space<vmem>>, %arg8: memref<32x128xbf16, #tpu.memory_space<vmem>>) attributes {dimension_semantics = [#tpu.dimension_semantics<parallel>], iteration_bounds = array<i64: 1>, scalar_prefetch = 0 : i64, scratch_operands = 0 : i64, tpu.core_type = #tpu.core_type<tc>, window_params = [{transform_indices = @transform_0, window_bounds = array<i64: 32, 128>}, {pipeline_mode = #tpu.pipeline_mode<synchronous>, transform_indices = @transform_1, window_bounds = array<i64: 1, 128>}, {pipeline_mode = #tpu.pipeline_mode<synchronous>, transform_indices = @transform_2, window_bounds = array<i64: 1, 128>}, {pipeline_mode = #tpu.pipeline_mode<synchronous>, transform_indices = @transform_3, window_bounds = array<i64: 128, 256>}, {pipeline_mode = #tpu.pipeline_mode<synchronous>, transform_indices = @transform_4, window_bounds = array<i64: 1, 256>}, {pipeline_mode = #tpu.pipeline_mode<synchronous>, transform_indices = @transform_5, window_bounds = array<i64: 256, 128>}, {pipeline_mode = #tpu.pipeline_mode<synchronous>, transform_indices = @transform_6, window_bounds = array<i64: 1, 128>}, {transform_indices = @transform_7, window_bounds = array<i64: 32, 128>}]} {
    %c0 = arith.constant 0 : index
    %c0_0 = arith.constant 0 : index
    %0 = vector.load %arg1[%c0, %c0_0] : memref<32x128xbf16, #tpu.memory_space<vmem>>, vector<32x128xbf16>
    %1 = arith.extf %0 : vector<32x128xbf16> to vector<32x128xf32>
    %cst = arith.constant dense<0.000000e+00> : vector<32xf32>
    %2 = vector.multi_reduction <add>, %1, %cst [1] : vector<32x128xf32> to vector<32xf32>
    %3 = vector.shape_cast %2 : vector<32xf32> to vector<32x1xf32>
    %cst_1 = arith.constant 1.280000e+02 : f32
    %4 = vector.broadcast %cst_1 : f32 to vector<32x1xf32>
    %5 = arith.divf %3, %4 : vector<32x1xf32>
    %6 = vector.broadcast %5 : vector<32x1xf32> to vector<32x128xf32>
    %7 = arith.subf %1, %6 : vector<32x128xf32>
    %8 = arith.mulf %7, %7 : vector<32x128xf32>
    %cst_2 = arith.constant dense<0.000000e+00> : vector<32xf32>
    %9 = vector.multi_reduction <add>, %8, %cst_2 [1] : vector<32x128xf32> to vector<32xf32>
    %10 = vector.shape_cast %9 : vector<32xf32> to vector<32x1xf32>
    %cst_3 = arith.constant 1.280000e+02 : f32
    %11 = vector.broadcast %cst_3 : f32 to vector<32x1xf32>
    %12 = arith.divf %10, %11 : vector<32x1xf32>
    %cst_4 = arith.constant 9.99999974E-6 : f32
    %13 = vector.broadcast %cst_4 : f32 to vector<32x1xf32>
    %14 = arith.addf %12, %13 : vector<32x1xf32>
    %15 = math.rsqrt %14 : vector<32x1xf32>
    %16 = vector.broadcast %15 : vector<32x1xf32> to vector<32x128xf32>
    %17 = arith.mulf %7, %16 : vector<32x128xf32>
    %c0_5 = arith.constant 0 : index
    %c0_6 = arith.constant 0 : index
    %18 = vector.load %arg2[%c0_5, %c0_6] : memref<1x128xbf16, #tpu.memory_space<vmem>>, vector<1x128xbf16>
    %19 = arith.extf %18 : vector<1x128xbf16> to vector<1x128xf32>
    %20 = vector.broadcast %19 : vector<1x128xf32> to vector<32x128xf32>
    %21 = arith.mulf %17, %20 : vector<32x128xf32>
    %c0_7 = arith.constant 0 : index
    %c0_8 = arith.constant 0 : index
    %22 = vector.load %arg3[%c0_7, %c0_8] : memref<1x128xbf16, #tpu.memory_space<vmem>>, vector<1x128xbf16>
    %23 = arith.extf %22 : vector<1x128xbf16> to vector<1x128xf32>
    %24 = vector.broadcast %23 : vector<1x128xf32> to vector<32x128xf32>
    %25 = arith.addf %21, %24 : vector<32x128xf32>
    %26 = arith.truncf %25 : vector<32x128xf32> to vector<32x128xbf16>
    %c0_9 = arith.constant 0 : index
    %c0_10 = arith.constant 0 : index
    %27 = vector.load %arg4[%c0_9, %c0_10] : memref<128x256xbf16, #tpu.memory_space<vmem>>, vector<128x256xbf16>
    %cst_11 = arith.constant dense<0.000000e+00> : vector<32x256xf32>
    %28 = tpu.matmul %26, %27, %cst_11 {dimension_numbers = #tpu.dot_dimension_numbers<[1], [0], [0], [1], [0, 0, 1, 1], [], []>} : vector<32x128xbf16>, vector<128x256xbf16>, vector<32x256xf32> -> vector<32x256xf32>
    %c0_12 = arith.constant 0 : index
    %c0_13 = arith.constant 0 : index
    %29 = vector.load %arg5[%c0_12, %c0_13] : memref<1x256xbf16, #tpu.memory_space<vmem>>, vector<1x256xbf16>
    %30 = arith.extf %29 : vector<1x256xbf16> to vector<1x256xf32>
    %31 = vector.broadcast %30 : vector<1x256xf32> to vector<32x256xf32>
    %32 = arith.addf %28, %31 : vector<32x256xf32>
    %33 = arith.mulf %32, %32 : vector<32x256xf32>
    %34 = arith.mulf %32, %33 : vector<32x256xf32>
    %cst_14 = arith.constant 4.471500e-02 : f32
    %35 = vector.broadcast %cst_14 : f32 to vector<32x256xf32>
    %36 = arith.mulf %35, %34 : vector<32x256xf32>
    %37 = arith.addf %32, %36 : vector<32x256xf32>
    %cst_15 = arith.constant 0.797884583 : f32
    %38 = vector.broadcast %cst_15 : f32 to vector<32x256xf32>
    %39 = arith.mulf %38, %37 : vector<32x256xf32>
    %40 = math.tanh %39 : vector<32x256xf32>
    %cst_16 = arith.constant 1.000000e+00 : f32
    %41 = vector.broadcast %cst_16 : f32 to vector<32x256xf32>
    %42 = arith.addf %41, %40 : vector<32x256xf32>
    %cst_17 = arith.constant 5.000000e-01 : f32
    %43 = vector.broadcast %cst_17 : f32 to vector<32x256xf32>
    %44 = arith.mulf %43, %42 : vector<32x256xf32>
    %45 = arith.mulf %32, %44 : vector<32x256xf32>
    %46 = arith.truncf %45 : vector<32x256xf32> to vector<32x256xbf16>
    %c0_18 = arith.constant 0 : index
    %c0_19 = arith.constant 0 : index
    %47 = vector.load %arg6[%c0_18, %c0_19] : memref<256x128xbf16, #tpu.memory_space<vmem>>, vector<256x128xbf16>
    %cst_20 = arith.constant dense<0.000000e+00> : vector<32x128xf32>
    %48 = tpu.matmul %46, %47, %cst_20 {dimension_numbers = #tpu.dot_dimension_numbers<[1], [0], [0], [1], [0, 0, 1, 1], [], []>} : vector<32x256xbf16>, vector<256x128xbf16>, vector<32x128xf32> -> vector<32x128xf32>
    %c0_21 = arith.constant 0 : index
    %c0_22 = arith.constant 0 : index
    %49 = vector.load %arg7[%c0_21, %c0_22] : memref<1x128xbf16, #tpu.memory_space<vmem>>, vector<1x128xbf16>
    %50 = arith.extf %49 : vector<1x128xbf16> to vector<1x128xf32>
    %51 = vector.broadcast %50 : vector<1x128xf32> to vector<32x128xf32>
    %52 = arith.addf %48, %51 : vector<32x128xf32>
    %53 = arith.addf %1, %52 : vector<32x128xf32>
    %54 = arith.truncf %53 : vector<32x128xf32> to vector<32x128xbf16>
    %c0_23 = arith.constant 0 : index
    %c0_24 = arith.constant 0 : index
    %55 = vector.load %arg8[%c0_23, %c0_24] : memref<32x128xbf16, #tpu.memory_space<vmem>>, vector<32x128xbf16>
    tpu.vector_store %arg8[%c0_23, %c0_24], %54 {strides = array<i32>} : memref<32x128xbf16, #tpu.memory_space<vmem>>, vector<32x128xbf16>,
    return
  }
  func.func @transform_0(%arg0: i32) -> (i32, i32) {
    %c0_i32 = arith.constant 0 : i32
    %c0_i32_0 = arith.constant 0 : i32
    return %arg0, %c0_i32 : i32, i32
  }
  func.func @transform_1(%arg0: i32) -> (i32, i32) {
    %c0_i32 = arith.constant 0 : i32
    %c0_i32_0 = arith.constant 0 : i32
    %c0_i32_1 = arith.constant 0 : i32
    return %c0_i32, %c0_i32_0 : i32, i32
  }
  func.func @transform_2(%arg0: i32) -> (i32, i32) {
    %c0_i32 = arith.constant 0 : i32
    %c0_i32_0 = arith.constant 0 : i32
    %c0_i32_1 = arith.constant 0 : i32
    return %c0_i32, %c0_i32_0 : i32, i32
  }
  func.func @transform_3(%arg0: i32) -> (i32, i32) {
    %c0_i32 = arith.constant 0 : i32
    %c0_i32_0 = arith.constant 0 : i32
    %c0_i32_1 = arith.constant 0 : i32
    return %c0_i32, %c0_i32_0 : i32, i32
  }
  func.func @transform_4(%arg0: i32) -> (i32, i32) {
    %c0_i32 = arith.constant 0 : i32
    %c0_i32_0 = arith.constant 0 : i32
    %c0_i32_1 = arith.constant 0 : i32
    return %c0_i32, %c0_i32_0 : i32, i32
  }
  func.func @transform_5(%arg0: i32) -> (i32, i32) {
    %c0_i32 = arith.constant 0 : i32
    %c0_i32_0 = arith.constant 0 : i32
    %c0_i32_1 = arith.constant 0 : i32
    return %c0_i32, %c0_i32_0 : i32, i32
  }
  func.func @transform_6(%arg0: i32) -> (i32, i32) {
    %c0_i32 = arith.constant 0 : i32
    %c0_i32_0 = arith.constant 0 : i32
    %c0_i32_1 = arith.constant 0 : i32
    return %c0_i32, %c0_i32_0 : i32, i32
  }
  func.func @transform_7(%arg0: i32) -> (i32, i32) {
    %c0_i32 = arith.constant 0 : i32
    %c0_i32_0 = arith.constant 0 : i32
    return %arg0, %c0_i32 : i32, i32
  }
}

module attributes {stable_mosaic.version = 11 : i64} {
  func.func @_ln_linear_kernel(%arg0: i32, %arg1: memref<64x256xbf16, #tpu.memory_space<vmem>>, %arg2: memref<1x256xbf16, #tpu.memory_space<vmem>>, %arg3: memref<1x256xbf16, #tpu.memory_space<vmem>>, %arg4: memref<256x768xbf16, #tpu.memory_space<vmem>>, %arg5: memref<1x768xbf16, #tpu.memory_space<vmem>>, %arg6: memref<64x768xbf16, #tpu.memory_space<vmem>>) attributes {dimension_semantics = [#tpu.dimension_semantics<parallel>], iteration_bounds = array<i64: 1>, scalar_prefetch = 0 : i64, scratch_operands = 0 : i64, tpu.core_type = #tpu.core_type<tc>, window_params = [{transform_indices = @transform_0, window_bounds = array<i64: 64, 256>}, {pipeline_mode = #tpu.pipeline_mode<synchronous>, transform_indices = @transform_1, window_bounds = array<i64: 1, 256>}, {pipeline_mode = #tpu.pipeline_mode<synchronous>, transform_indices = @transform_2, window_bounds = array<i64: 1, 256>}, {pipeline_mode = #tpu.pipeline_mode<synchronous>, transform_indices = @transform_3, window_bounds = array<i64: 256, 768>}, {pipeline_mode = #tpu.pipeline_mode<synchronous>, transform_indices = @transform_4, window_bounds = array<i64: 1, 768>}, {transform_indices = @transform_5, window_bounds = array<i64: 64, 768>}]} {
    %c0 = arith.constant 0 : index
    %c0_0 = arith.constant 0 : index
    %0 = vector.load %arg1[%c0, %c0_0] : memref<64x256xbf16, #tpu.memory_space<vmem>>, vector<64x256xbf16>
    %1 = arith.extf %0 : vector<64x256xbf16> to vector<64x256xf32>
    %cst = arith.constant dense<0.000000e+00> : vector<64xf32>
    %2 = vector.multi_reduction <add>, %1, %cst [1] : vector<64x256xf32> to vector<64xf32>
    %3 = vector.shape_cast %2 : vector<64xf32> to vector<64x1xf32>
    %cst_1 = arith.constant 2.560000e+02 : f32
    %4 = vector.broadcast %cst_1 : f32 to vector<64x1xf32>
    %5 = arith.divf %3, %4 : vector<64x1xf32>
    %6 = vector.broadcast %5 : vector<64x1xf32> to vector<64x256xf32>
    %7 = arith.subf %1, %6 : vector<64x256xf32>
    %8 = arith.mulf %7, %7 : vector<64x256xf32>
    %cst_2 = arith.constant dense<0.000000e+00> : vector<64xf32>
    %9 = vector.multi_reduction <add>, %8, %cst_2 [1] : vector<64x256xf32> to vector<64xf32>
    %10 = vector.shape_cast %9 : vector<64xf32> to vector<64x1xf32>
    %cst_3 = arith.constant 2.560000e+02 : f32
    %11 = vector.broadcast %cst_3 : f32 to vector<64x1xf32>
    %12 = arith.divf %10, %11 : vector<64x1xf32>
    %cst_4 = arith.constant 9.99999974E-6 : f32
    %13 = vector.broadcast %cst_4 : f32 to vector<64x1xf32>
    %14 = arith.addf %12, %13 : vector<64x1xf32>
    %15 = math.rsqrt %14 : vector<64x1xf32>
    %16 = vector.broadcast %15 : vector<64x1xf32> to vector<64x256xf32>
    %17 = arith.mulf %7, %16 : vector<64x256xf32>
    %c0_5 = arith.constant 0 : index
    %c0_6 = arith.constant 0 : index
    %18 = vector.load %arg2[%c0_5, %c0_6] : memref<1x256xbf16, #tpu.memory_space<vmem>>, vector<1x256xbf16>
    %19 = arith.extf %18 : vector<1x256xbf16> to vector<1x256xf32>
    %20 = vector.broadcast %19 : vector<1x256xf32> to vector<64x256xf32>
    %21 = arith.mulf %17, %20 : vector<64x256xf32>
    %c0_7 = arith.constant 0 : index
    %c0_8 = arith.constant 0 : index
    %22 = vector.load %arg3[%c0_7, %c0_8] : memref<1x256xbf16, #tpu.memory_space<vmem>>, vector<1x256xbf16>
    %23 = arith.extf %22 : vector<1x256xbf16> to vector<1x256xf32>
    %24 = vector.broadcast %23 : vector<1x256xf32> to vector<64x256xf32>
    %25 = arith.addf %21, %24 : vector<64x256xf32>
    %26 = arith.truncf %25 : vector<64x256xf32> to vector<64x256xbf16>
    %c0_9 = arith.constant 0 : index
    %c0_10 = arith.constant 0 : index
    %27 = vector.load %arg4[%c0_9, %c0_10] : memref<256x768xbf16, #tpu.memory_space<vmem>>, vector<256x768xbf16>
    %cst_11 = arith.constant dense<0.000000e+00> : vector<64x768xf32>
    %28 = tpu.matmul %26, %27, %cst_11 {dimension_numbers = #tpu.dot_dimension_numbers<[1], [0], [0], [1], [0, 0, 1, 1], [], []>} : vector<64x256xbf16>, vector<256x768xbf16>, vector<64x768xf32> -> vector<64x768xf32>
    %c0_12 = arith.constant 0 : index
    %c0_13 = arith.constant 0 : index
    %29 = vector.load %arg5[%c0_12, %c0_13] : memref<1x768xbf16, #tpu.memory_space<vmem>>, vector<1x768xbf16>
    %30 = arith.extf %29 : vector<1x768xbf16> to vector<1x768xf32>
    %31 = vector.broadcast %30 : vector<1x768xf32> to vector<64x768xf32>
    %32 = arith.addf %28, %31 : vector<64x768xf32>
    %33 = arith.truncf %32 : vector<64x768xf32> to vector<64x768xbf16>
    %c0_14 = arith.constant 0 : index
    %c0_15 = arith.constant 0 : index
    %34 = vector.load %arg6[%c0_14, %c0_15] : memref<64x768xbf16, #tpu.memory_space<vmem>>, vector<64x768xbf16>
    tpu.vector_store %arg6[%c0_14, %c0_15], %33 {strides = array<i32>} : memref<64x768xbf16, #tpu.memory_space<vmem>>, vector<64x768xbf16>,
    return
  }
  func.func @transform_0(%arg0: i32) -> (i32, i32) {
    %c0_i32 = arith.constant 0 : i32
    %c0_i32_0 = arith.constant 0 : i32
    return %arg0, %c0_i32 : i32, i32
  }
  func.func @transform_1(%arg0: i32) -> (i32, i32) {
    %c0_i32 = arith.constant 0 : i32
    %c0_i32_0 = arith.constant 0 : i32
    %c0_i32_1 = arith.constant 0 : i32
    return %c0_i32, %c0_i32_0 : i32, i32
  }
  func.func @transform_2(%arg0: i32) -> (i32, i32) {
    %c0_i32 = arith.constant 0 : i32
    %c0_i32_0 = arith.constant 0 : i32
    %c0_i32_1 = arith.constant 0 : i32
    return %c0_i32, %c0_i32_0 : i32, i32
  }
  func.func @transform_3(%arg0: i32) -> (i32, i32) {
    %c0_i32 = arith.constant 0 : i32
    %c0_i32_0 = arith.constant 0 : i32
    %c0_i32_1 = arith.constant 0 : i32
    return %c0_i32, %c0_i32_0 : i32, i32
  }
  func.func @transform_4(%arg0: i32) -> (i32, i32) {
    %c0_i32 = arith.constant 0 : i32
    %c0_i32_0 = arith.constant 0 : i32
    %c0_i32_1 = arith.constant 0 : i32
    return %c0_i32, %c0_i32_0 : i32, i32
  }
  func.func @transform_5(%arg0: i32) -> (i32, i32) {
    %c0_i32 = arith.constant 0 : i32
    %c0_i32_0 = arith.constant 0 : i32
    return %arg0, %c0_i32 : i32, i32
  }
}

module attributes {stable_mosaic.version = 11 : i64} {
  func.func @_proj_res_kernel(%arg0: i32, %arg1: memref<64x256xbf16, #tpu.memory_space<vmem>>, %arg2: memref<256x256xbf16, #tpu.memory_space<vmem>>, %arg3: memref<1x256xbf16, #tpu.memory_space<vmem>>, %arg4: memref<64x256xbf16, #tpu.memory_space<vmem>>, %arg5: memref<64x256xbf16, #tpu.memory_space<vmem>>) attributes {dimension_semantics = [#tpu.dimension_semantics<parallel>], iteration_bounds = array<i64: 1>, scalar_prefetch = 0 : i64, scratch_operands = 0 : i64, tpu.core_type = #tpu.core_type<tc>, window_params = [{transform_indices = @transform_0, window_bounds = array<i64: 64, 256>}, {pipeline_mode = #tpu.pipeline_mode<synchronous>, transform_indices = @transform_1, window_bounds = array<i64: 256, 256>}, {pipeline_mode = #tpu.pipeline_mode<synchronous>, transform_indices = @transform_2, window_bounds = array<i64: 1, 256>}, {transform_indices = @transform_3, window_bounds = array<i64: 64, 256>}, {transform_indices = @transform_4, window_bounds = array<i64: 64, 256>}]} {
    %c0 = arith.constant 0 : index
    %c0_0 = arith.constant 0 : index
    %0 = vector.load %arg1[%c0, %c0_0] : memref<64x256xbf16, #tpu.memory_space<vmem>>, vector<64x256xbf16>
    %c0_1 = arith.constant 0 : index
    %c0_2 = arith.constant 0 : index
    %1 = vector.load %arg2[%c0_1, %c0_2] : memref<256x256xbf16, #tpu.memory_space<vmem>>, vector<256x256xbf16>
    %cst = arith.constant dense<0.000000e+00> : vector<64x256xf32>
    %2 = tpu.matmul %0, %1, %cst {dimension_numbers = #tpu.dot_dimension_numbers<[1], [0], [0], [1], [0, 0, 1, 1], [], []>} : vector<64x256xbf16>, vector<256x256xbf16>, vector<64x256xf32> -> vector<64x256xf32>
    %c0_3 = arith.constant 0 : index
    %c0_4 = arith.constant 0 : index
    %3 = vector.load %arg3[%c0_3, %c0_4] : memref<1x256xbf16, #tpu.memory_space<vmem>>, vector<1x256xbf16>
    %4 = arith.extf %3 : vector<1x256xbf16> to vector<1x256xf32>
    %5 = vector.broadcast %4 : vector<1x256xf32> to vector<64x256xf32>
    %6 = arith.addf %2, %5 : vector<64x256xf32>
    %c0_5 = arith.constant 0 : index
    %c0_6 = arith.constant 0 : index
    %7 = vector.load %arg4[%c0_5, %c0_6] : memref<64x256xbf16, #tpu.memory_space<vmem>>, vector<64x256xbf16>
    %8 = arith.extf %7 : vector<64x256xbf16> to vector<64x256xf32>
    %9 = arith.addf %6, %8 : vector<64x256xf32>
    %10 = arith.truncf %9 : vector<64x256xf32> to vector<64x256xbf16>
    %c0_7 = arith.constant 0 : index
    %c0_8 = arith.constant 0 : index
    %11 = vector.load %arg5[%c0_7, %c0_8] : memref<64x256xbf16, #tpu.memory_space<vmem>>, vector<64x256xbf16>
    tpu.vector_store %arg5[%c0_7, %c0_8], %10 {strides = array<i32>} : memref<64x256xbf16, #tpu.memory_space<vmem>>, vector<64x256xbf16>,
    return
  }
  func.func @transform_0(%arg0: i32) -> (i32, i32) {
    %c0_i32 = arith.constant 0 : i32
    %c0_i32_0 = arith.constant 0 : i32
    return %arg0, %c0_i32 : i32, i32
  }
  func.func @transform_1(%arg0: i32) -> (i32, i32) {
    %c0_i32 = arith.constant 0 : i32
    %c0_i32_0 = arith.constant 0 : i32
    %c0_i32_1 = arith.constant 0 : i32
    return %c0_i32, %c0_i32_0 : i32, i32
  }
  func.func @transform_2(%arg0: i32) -> (i32, i32) {
    %c0_i32 = arith.constant 0 : i32
    %c0_i32_0 = arith.constant 0 : i32
    %c0_i32_1 = arith.constant 0 : i32
    return %c0_i32, %c0_i32_0 : i32, i32
  }
  func.func @transform_3(%arg0: i32) -> (i32, i32) {
    %c0_i32 = arith.constant 0 : i32
    %c0_i32_0 = arith.constant 0 : i32
    return %arg0, %c0_i32 : i32, i32
  }
  func.func @transform_4(%arg0: i32) -> (i32, i32) {
    %c0_i32 = arith.constant 0 : i32
    %c0_i32_0 = arith.constant 0 : i32
    return %arg0, %c0_i32 : i32, i32
  }
}

module attributes {stable_mosaic.version = 11 : i64} {
  func.func @_flash_attn_kernel(%arg0: i32, %arg1: i32, %arg2: i32, %arg3: i32, %arg4: memref<2xi32, #tpu.memory_space<smem>>, %arg5: memref<1x1x16x128xbf16, #tpu.memory_space<vmem>>, %arg6: memref<1x1x16x128xbf16, #tpu.memory_space<vmem>>, %arg7: memref<1x1x16x128xbf16, #tpu.memory_space<vmem>>, %arg8: memref<1x1x16x128xbf16, #tpu.memory_space<vmem>>, %arg9: memref<16x1xf32, #tpu.memory_space<vmem>>, %arg10: memref<16x1xf32, #tpu.memory_space<vmem>>, %arg11: memref<16x128xf32, #tpu.memory_space<vmem>>) attributes {dimension_semantics = [#tpu.dimension_semantics<parallel>, #tpu.dimension_semantics<parallel>, #tpu.dimension_semantics<parallel>, #tpu.dimension_semantics<arbitrary>], iteration_bounds = array<i64: 2, 2, 2, 2>, scalar_prefetch = 1 : i64, scratch_operands = 3 : i64, tpu.core_type = #tpu.core_type<tc>, window_params = [{transform_indices = @transform_0, window_bounds = array<i64: 1, 1, 16, 128>}, {transform_indices = @transform_1, window_bounds = array<i64: 1, 1, 16, 128>}, {transform_indices = @transform_2, window_bounds = array<i64: 1, 1, 16, 128>}, {transform_indices = @transform_3, window_bounds = array<i64: 1, 1, 16, 128>}]} {
    %c0_i32 = arith.constant 0 : i32
    %0 = arith.cmpi eq, %arg3, %c0_i32 : i32
    %1 = arith.extui %0 : i1 to i32
    %c0_i32_0 = arith.constant 0 : i32
    %2 = arith.cmpi ne, %1, %c0_i32_0 : i32
    scf.if %2 {
      %cst = arith.constant -1.000000e+30 : f32
      %12 = vector.broadcast %cst : f32 to vector<16x1xf32>
      %c0 = arith.constant 0 : index
      %c0_4 = arith.constant 0 : index
      %13 = vector.load %arg9[%c0, %c0_4] : memref<16x1xf32, #tpu.memory_space<vmem>>, vector<16x1xf32>
      tpu.vector_store %arg9[%c0, %c0_4], %12 {strides = array<i32>} : memref<16x1xf32, #tpu.memory_space<vmem>>, vector<16x1xf32>,
      %cst_5 = arith.constant 0.000000e+00 : f32
      %14 = vector.broadcast %cst_5 : f32 to vector<16x1xf32>
      %c0_6 = arith.constant 0 : index
      %c0_7 = arith.constant 0 : index
      %15 = vector.load %arg10[%c0_6, %c0_7] : memref<16x1xf32, #tpu.memory_space<vmem>>, vector<16x1xf32>
      tpu.vector_store %arg10[%c0_6, %c0_7], %14 {strides = array<i32>} : memref<16x1xf32, #tpu.memory_space<vmem>>, vector<16x1xf32>,
      %cst_8 = arith.constant 0.000000e+00 : f32
      %16 = vector.broadcast %cst_8 : f32 to vector<16x128xf32>
      %c0_9 = arith.constant 0 : index
      %c0_10 = arith.constant 0 : index
      %17 = vector.load %arg11[%c0_9, %c0_10] : memref<16x128xf32, #tpu.memory_space<vmem>>, vector<16x128xf32>
      tpu.vector_store %arg11[%c0_9, %c0_10], %16 {strides = array<i32>} : memref<16x128xf32, #tpu.memory_space<vmem>>, vector<16x128xf32>,
    } else {
    }
    %c16_i32 = arith.constant 16 : i32
    %3 = arith.muli %arg3, %c16_i32 : i32
    %c16_i32_1 = arith.constant 16 : i32
    %4 = arith.muli %arg2, %c16_i32_1 : i32
    %c15_i32 = arith.constant 15 : i32
    %5 = arith.addi %4, %c15_i32 : i32
    %6 = arith.cmpi sle, %3, %5 : i32
    %7 = arith.extui %6 : i1 to i32
    %c0_i32_2 = arith.constant 0 : i32
    %8 = arith.cmpi ne, %7, %c0_i32_2 : i32
    scf.if %8 {
      %c0 = arith.constant 0 : index
      %c0_4 = arith.constant 0 : index
      %c0_5 = arith.constant 0 : index
      %c0_6 = arith.constant 0 : index
      %12 = vector.load %arg5[%c0, %c0_4, %c0_5, %c0_6] : memref<1x1x16x128xbf16, #tpu.memory_space<vmem>>, vector<1x1x16x128xbf16>
      %13 = vector.shape_cast %12 : vector<1x1x16x128xbf16> to vector<16x128xbf16>
      %c0_7 = arith.constant 0 : index
      %c0_8 = arith.constant 0 : index
      %c0_9 = arith.constant 0 : index
      %c0_10 = arith.constant 0 : index
      %14 = vector.load %arg6[%c0_7, %c0_8, %c0_9, %c0_10] : memref<1x1x16x128xbf16, #tpu.memory_space<vmem>>, vector<1x1x16x128xbf16>
      %15 = vector.shape_cast %14 : vector<1x1x16x128xbf16> to vector<16x128xbf16>
      %c0_11 = arith.constant 0 : index
      %c0_12 = arith.constant 0 : index
      %c0_13 = arith.constant 0 : index
      %c0_14 = arith.constant 0 : index
      %16 = vector.load %arg7[%c0_11, %c0_12, %c0_13, %c0_14] : memref<1x1x16x128xbf16, #tpu.memory_space<vmem>>, vector<1x1x16x128xbf16>
      %17 = vector.shape_cast %16 : vector<1x1x16x128xbf16> to vector<16x128xbf16>
      %cst = arith.constant dense<0.000000e+00> : vector<16x16xf32>
      %18 = tpu.matmul %13, %15, %cst {dimension_numbers = #tpu.dot_dimension_numbers<[1], [1], [0], [0], [0, 0, 1, 0], [], []>} : vector<16x128xbf16>, vector<16x128xbf16>, vector<16x16xf32> -> vector<16x16xf32>
      %cst_15 = arith.constant 0.0883883461 : f32
      %19 = vector.broadcast %cst_15 : f32 to vector<16x16xf32>
      %20 = arith.mulf %18, %19 : vector<16x16xf32>
      %21 = arith.index_cast %arg0 : i32 to index
      %22 = memref.load %arg4[%21] : memref<2xi32, #tpu.memory_space<smem>>
      %c16_i32_16 = arith.constant 16 : i32
      %23 = arith.muli %arg3, %c16_i32_16 : i32
      %24 = tpu.iota {dimensions = array<i32: 1>} : vector<16x16xi32>
      %25 = vector.broadcast %23 : i32 to vector<16x16xi32>
      %26 = arith.addi %25, %24 : vector<16x16xi32>
      %27 = vector.broadcast %22 : i32 to vector<16x16xi32>
      %28 = arith.cmpi slt, %26, %27 : vector<16x16xi32>
      %c16_i32_17 = arith.constant 16 : i32
      %29 = arith.muli %arg2, %c16_i32_17 : i32
      %30 = tpu.iota {dimensions = array<i32: 0>} : vector<16x16xi32>
      %31 = vector.broadcast %29 : i32 to vector<16x16xi32>
      %32 = arith.addi %31, %30 : vector<16x16xi32>
      %33 = arith.cmpi sge, %32, %26 : vector<16x16xi32>
      %34 = arith.andi %28, %33 : vector<16x16xi1>
      %cst_18 = arith.constant -1.000000e+30 : f32
      %35 = vector.broadcast %cst_18 : f32 to vector<16x16xf32>
      %36 = arith.select %34, %20, %35 : vector<16x16xi1>, vector<16x16xf32>
      %c0_19 = arith.constant 0 : index
      %c0_20 = arith.constant 0 : index
      %37 = vector.load %arg9[%c0_19, %c0_20] : memref<16x1xf32, #tpu.memory_space<vmem>>, vector<16x1xf32>
      %cst_21 = arith.constant dense<0xFF800000> : vector<16xf32>
      %38 = vector.multi_reduction <maximumf>, %36, %cst_21 [1] : vector<16x16xf32> to vector<16xf32>
      %39 = vector.shape_cast %38 : vector<16xf32> to vector<16x1xf32>
      %40 = arith.maximumf %37, %39 : vector<16x1xf32>
      %c0_22 = arith.constant 0 : index
      %c0_23 = arith.constant 0 : index
      %41 = vector.load %arg9[%c0_22, %c0_23] : memref<16x1xf32, #tpu.memory_space<vmem>>, vector<16x1xf32>
      %42 = arith.subf %41, %40 : vector<16x1xf32>
      %43 = math.exp %42 : vector<16x1xf32>
      %44 = vector.broadcast %40 : vector<16x1xf32> to vector<16x16xf32>
      %45 = arith.subf %36, %44 : vector<16x16xf32>
      %46 = math.exp %45 : vector<16x16xf32>
      %c0_24 = arith.constant 0 : index
      %c0_25 = arith.constant 0 : index
      %47 = vector.load %arg10[%c0_24, %c0_25] : memref<16x1xf32, #tpu.memory_space<vmem>>, vector<16x1xf32>
      %48 = arith.mulf %43, %47 : vector<16x1xf32>
      %cst_26 = arith.constant dense<0.000000e+00> : vector<16xf32>
      %49 = vector.multi_reduction <add>, %46, %cst_26 [1] : vector<16x16xf32> to vector<16xf32>
      %50 = vector.shape_cast %49 : vector<16xf32> to vector<16x1xf32>
      %51 = arith.addf %48, %50 : vector<16x1xf32>
      %c0_27 = arith.constant 0 : index
      %c0_28 = arith.constant 0 : index
      %52 = vector.load %arg10[%c0_27, %c0_28] : memref<16x1xf32, #tpu.memory_space<vmem>>, vector<16x1xf32>
      tpu.vector_store %arg10[%c0_27, %c0_28], %51 {strides = array<i32>} : memref<16x1xf32, #tpu.memory_space<vmem>>, vector<16x1xf32>,
      %c0_29 = arith.constant 0 : index
      %c0_30 = arith.constant 0 : index
      %53 = vector.load %arg11[%c0_29, %c0_30] : memref<16x128xf32, #tpu.memory_space<vmem>>, vector<16x128xf32>
      %54 = vector.broadcast %43 : vector<16x1xf32> to vector<16x128xf32>
      %55 = arith.mulf %54, %53 : vector<16x128xf32>
      %56 = arith.truncf %46 : vector<16x16xf32> to vector<16x16xbf16>
      %cst_31 = arith.constant dense<0.000000e+00> : vector<16x128xf32>
      %57 = tpu.matmul %56, %17, %cst_31 {dimension_numbers = #tpu.dot_dimension_numbers<[1], [0], [0], [1], [0, 0, 1, 1], [], []>} : vector<16x16xbf16>, vector<16x128xbf16>, vector<16x128xf32> -> vector<16x128xf32>
      %58 = arith.addf %55, %57 : vector<16x128xf32>
      %c0_32 = arith.constant 0 : index
      %c0_33 = arith.constant 0 : index
      %59 = vector.load %arg11[%c0_32, %c0_33] : memref<16x128xf32, #tpu.memory_space<vmem>>, vector<16x128xf32>
      tpu.vector_store %arg11[%c0_32, %c0_33], %58 {strides = array<i32>} : memref<16x128xf32, #tpu.memory_space<vmem>>, vector<16x128xf32>,
      %c0_34 = arith.constant 0 : index
      %c0_35 = arith.constant 0 : index
      %60 = vector.load %arg9[%c0_34, %c0_35] : memref<16x1xf32, #tpu.memory_space<vmem>>, vector<16x1xf32>
      tpu.vector_store %arg9[%c0_34, %c0_35], %40 {strides = array<i32>} : memref<16x1xf32, #tpu.memory_space<vmem>>, vector<16x1xf32>,
    } else {
    }
    %c1_i32 = arith.constant 1 : i32
    %9 = arith.cmpi eq, %arg3, %c1_i32 : i32
    %10 = arith.extui %9 : i1 to i32
    %c0_i32_3 = arith.constant 0 : i32
    %11 = arith.cmpi ne, %10, %c0_i32_3 : i32
    scf.if %11 {
      %c0 = arith.constant 0 : index
      %c0_4 = arith.constant 0 : index
      %12 = vector.load %arg10[%c0, %c0_4] : memref<16x1xf32, #tpu.memory_space<vmem>>, vector<16x1xf32>
      %13 = tpu.reciprocal %12 {approx = true} : vector<16x1xf32> -> vector<16x1xf32>
      %c0_5 = arith.constant 0 : index
      %c0_6 = arith.constant 0 : index
      %14 = vector.load %arg11[%c0_5, %c0_6] : memref<16x128xf32, #tpu.memory_space<vmem>>, vector<16x128xf32>
      %15 = vector.broadcast %13 : vector<16x1xf32> to vector<16x128xf32>
      %16 = arith.mulf %14, %15 : vector<16x128xf32>
      %17 = arith.truncf %16 : vector<16x128xf32> to vector<16x128xbf16>
      %c0_7 = arith.constant 0 : index
      %c0_8 = arith.constant 0 : index
      %c0_9 = arith.constant 0 : index
      %c0_10 = arith.constant 0 : index
      %18 = vector.load %arg8[%c0_7, %c0_8, %c0_9, %c0_10] : memref<1x1x16x128xbf16, #tpu.memory_space<vmem>>, vector<1x1x16x128xbf16>
      %19 = vector.shape_cast %18 : vector<1x1x16x128xbf16> to vector<16x128xbf16>
      %20 = vector.shape_cast %17 : vector<16x128xbf16> to vector<1x1x16x128xbf16>
      tpu.vector_store %arg8[%c0_7, %c0_8, %c0_9, %c0_10], %20 {strides = array<i32>} : memref<1x1x16x128xbf16, #tpu.memory_space<vmem>>, vector<1x1x16x128xbf16>,
    } else {
    }
    return
  }
  func.func @transform_0(%arg0: i32, %arg1: i32, %arg2: i32, %arg3: i32, %arg4: memref<2xi32, #tpu.memory_space<smem>>) -> (i32, i32, i32, i32) {
    %c0_i32 = arith.constant 0 : i32
    %c0_i32_0 = arith.constant 0 : i32
    return %arg0, %arg1, %arg2, %c0_i32 : i32, i32, i32, i32
  }
  func.func @transform_1(%arg0: i32, %arg1: i32, %arg2: i32, %arg3: i32, %arg4: memref<2xi32, #tpu.memory_space<smem>>) -> (i32, i32, i32, i32) {
    %c0_i32 = arith.constant 0 : i32
    %c0_i32_0 = arith.constant 0 : i32
    return %arg0, %arg1, %arg3, %c0_i32 : i32, i32, i32, i32
  }
  func.func @transform_2(%arg0: i32, %arg1: i32, %arg2: i32, %arg3: i32, %arg4: memref<2xi32, #tpu.memory_space<smem>>) -> (i32, i32, i32, i32) {
    %c0_i32 = arith.constant 0 : i32
    %c0_i32_0 = arith.constant 0 : i32
    return %arg0, %arg1, %arg3, %c0_i32 : i32, i32, i32, i32
  }
  func.func @transform_3(%arg0: i32, %arg1: i32, %arg2: i32, %arg3: i32, %arg4: memref<2xi32, #tpu.memory_space<smem>>) -> (i32, i32, i32, i32) {
    %c0_i32 = arith.constant 0 : i32
    %c0_i32_0 = arith.constant 0 : i32
    return %arg0, %arg1, %arg2, %c0_i32 : i32, i32, i32, i32
  }
}

module attributes {stable_mosaic.version = 11 : i64} {
  func.func @_ln_mlp_res_kernel(%arg0: i32, %arg1: memref<64x256xbf16, #tpu.memory_space<vmem>>, %arg2: memref<1x256xbf16, #tpu.memory_space<vmem>>, %arg3: memref<1x256xbf16, #tpu.memory_space<vmem>>, %arg4: memref<256x512xbf16, #tpu.memory_space<vmem>>, %arg5: memref<1x512xbf16, #tpu.memory_space<vmem>>, %arg6: memref<512x256xbf16, #tpu.memory_space<vmem>>, %arg7: memref<1x256xbf16, #tpu.memory_space<vmem>>, %arg8: memref<64x256xbf16, #tpu.memory_space<vmem>>) attributes {dimension_semantics = [#tpu.dimension_semantics<parallel>], iteration_bounds = array<i64: 1>, scalar_prefetch = 0 : i64, scratch_operands = 0 : i64, tpu.core_type = #tpu.core_type<tc>, window_params = [{transform_indices = @transform_0, window_bounds = array<i64: 64, 256>}, {pipeline_mode = #tpu.pipeline_mode<synchronous>, transform_indices = @transform_1, window_bounds = array<i64: 1, 256>}, {pipeline_mode = #tpu.pipeline_mode<synchronous>, transform_indices = @transform_2, window_bounds = array<i64: 1, 256>}, {pipeline_mode = #tpu.pipeline_mode<synchronous>, transform_indices = @transform_3, window_bounds = array<i64: 256, 512>}, {pipeline_mode = #tpu.pipeline_mode<synchronous>, transform_indices = @transform_4, window_bounds = array<i64: 1, 512>}, {pipeline_mode = #tpu.pipeline_mode<synchronous>, transform_indices = @transform_5, window_bounds = array<i64: 512, 256>}, {pipeline_mode = #tpu.pipeline_mode<synchronous>, transform_indices = @transform_6, window_bounds = array<i64: 1, 256>}, {transform_indices = @transform_7, window_bounds = array<i64: 64, 256>}]} {
    %c0 = arith.constant 0 : index
    %c0_0 = arith.constant 0 : index
    %0 = vector.load %arg1[%c0, %c0_0] : memref<64x256xbf16, #tpu.memory_space<vmem>>, vector<64x256xbf16>
    %1 = arith.extf %0 : vector<64x256xbf16> to vector<64x256xf32>
    %cst = arith.constant dense<0.000000e+00> : vector<64xf32>
    %2 = vector.multi_reduction <add>, %1, %cst [1] : vector<64x256xf32> to vector<64xf32>
    %3 = vector.shape_cast %2 : vector<64xf32> to vector<64x1xf32>
    %cst_1 = arith.constant 2.560000e+02 : f32
    %4 = vector.broadcast %cst_1 : f32 to vector<64x1xf32>
    %5 = arith.divf %3, %4 : vector<64x1xf32>
    %6 = vector.broadcast %5 : vector<64x1xf32> to vector<64x256xf32>
    %7 = arith.subf %1, %6 : vector<64x256xf32>
    %8 = arith.mulf %7, %7 : vector<64x256xf32>
    %cst_2 = arith.constant dense<0.000000e+00> : vector<64xf32>
    %9 = vector.multi_reduction <add>, %8, %cst_2 [1] : vector<64x256xf32> to vector<64xf32>
    %10 = vector.shape_cast %9 : vector<64xf32> to vector<64x1xf32>
    %cst_3 = arith.constant 2.560000e+02 : f32
    %11 = vector.broadcast %cst_3 : f32 to vector<64x1xf32>
    %12 = arith.divf %10, %11 : vector<64x1xf32>
    %cst_4 = arith.constant 9.99999974E-6 : f32
    %13 = vector.broadcast %cst_4 : f32 to vector<64x1xf32>
    %14 = arith.addf %12, %13 : vector<64x1xf32>
    %15 = math.rsqrt %14 : vector<64x1xf32>
    %16 = vector.broadcast %15 : vector<64x1xf32> to vector<64x256xf32>
    %17 = arith.mulf %7, %16 : vector<64x256xf32>
    %c0_5 = arith.constant 0 : index
    %c0_6 = arith.constant 0 : index
    %18 = vector.load %arg2[%c0_5, %c0_6] : memref<1x256xbf16, #tpu.memory_space<vmem>>, vector<1x256xbf16>
    %19 = arith.extf %18 : vector<1x256xbf16> to vector<1x256xf32>
    %20 = vector.broadcast %19 : vector<1x256xf32> to vector<64x256xf32>
    %21 = arith.mulf %17, %20 : vector<64x256xf32>
    %c0_7 = arith.constant 0 : index
    %c0_8 = arith.constant 0 : index
    %22 = vector.load %arg3[%c0_7, %c0_8] : memref<1x256xbf16, #tpu.memory_space<vmem>>, vector<1x256xbf16>
    %23 = arith.extf %22 : vector<1x256xbf16> to vector<1x256xf32>
    %24 = vector.broadcast %23 : vector<1x256xf32> to vector<64x256xf32>
    %25 = arith.addf %21, %24 : vector<64x256xf32>
    %26 = arith.truncf %25 : vector<64x256xf32> to vector<64x256xbf16>
    %c0_9 = arith.constant 0 : index
    %c0_10 = arith.constant 0 : index
    %27 = vector.load %arg4[%c0_9, %c0_10] : memref<256x512xbf16, #tpu.memory_space<vmem>>, vector<256x512xbf16>
    %cst_11 = arith.constant dense<0.000000e+00> : vector<64x512xf32>
    %28 = tpu.matmul %26, %27, %cst_11 {dimension_numbers = #tpu.dot_dimension_numbers<[1], [0], [0], [1], [0, 0, 1, 1], [], []>} : vector<64x256xbf16>, vector<256x512xbf16>, vector<64x512xf32> -> vector<64x512xf32>
    %c0_12 = arith.constant 0 : index
    %c0_13 = arith.constant 0 : index
    %29 = vector.load %arg5[%c0_12, %c0_13] : memref<1x512xbf16, #tpu.memory_space<vmem>>, vector<1x512xbf16>
    %30 = arith.extf %29 : vector<1x512xbf16> to vector<1x512xf32>
    %31 = vector.broadcast %30 : vector<1x512xf32> to vector<64x512xf32>
    %32 = arith.addf %28, %31 : vector<64x512xf32>
    %33 = arith.mulf %32, %32 : vector<64x512xf32>
    %34 = arith.mulf %32, %33 : vector<64x512xf32>
    %cst_14 = arith.constant 4.471500e-02 : f32
    %35 = vector.broadcast %cst_14 : f32 to vector<64x512xf32>
    %36 = arith.mulf %35, %34 : vector<64x512xf32>
    %37 = arith.addf %32, %36 : vector<64x512xf32>
    %cst_15 = arith.constant 0.797884583 : f32
    %38 = vector.broadcast %cst_15 : f32 to vector<64x512xf32>
    %39 = arith.mulf %38, %37 : vector<64x512xf32>
    %40 = math.tanh %39 : vector<64x512xf32>
    %cst_16 = arith.constant 1.000000e+00 : f32
    %41 = vector.broadcast %cst_16 : f32 to vector<64x512xf32>
    %42 = arith.addf %41, %40 : vector<64x512xf32>
    %cst_17 = arith.constant 5.000000e-01 : f32
    %43 = vector.broadcast %cst_17 : f32 to vector<64x512xf32>
    %44 = arith.mulf %43, %42 : vector<64x512xf32>
    %45 = arith.mulf %32, %44 : vector<64x512xf32>
    %46 = arith.truncf %45 : vector<64x512xf32> to vector<64x512xbf16>
    %c0_18 = arith.constant 0 : index
    %c0_19 = arith.constant 0 : index
    %47 = vector.load %arg6[%c0_18, %c0_19] : memref<512x256xbf16, #tpu.memory_space<vmem>>, vector<512x256xbf16>
    %cst_20 = arith.constant dense<0.000000e+00> : vector<64x256xf32>
    %48 = tpu.matmul %46, %47, %cst_20 {dimension_numbers = #tpu.dot_dimension_numbers<[1], [0], [0], [1], [0, 0, 1, 1], [], []>} : vector<64x512xbf16>, vector<512x256xbf16>, vector<64x256xf32> -> vector<64x256xf32>
    %c0_21 = arith.constant 0 : index
    %c0_22 = arith.constant 0 : index
    %49 = vector.load %arg7[%c0_21, %c0_22] : memref<1x256xbf16, #tpu.memory_space<vmem>>, vector<1x256xbf16>
    %50 = arith.extf %49 : vector<1x256xbf16> to vector<1x256xf32>
    %51 = vector.broadcast %50 : vector<1x256xf32> to vector<64x256xf32>
    %52 = arith.addf %48, %51 : vector<64x256xf32>
    %53 = arith.addf %1, %52 : vector<64x256xf32>
    %54 = arith.truncf %53 : vector<64x256xf32> to vector<64x256xbf16>
    %c0_23 = arith.constant 0 : index
    %c0_24 = arith.constant 0 : index
    %55 = vector.load %arg8[%c0_23, %c0_24] : memref<64x256xbf16, #tpu.memory_space<vmem>>, vector<64x256xbf16>
    tpu.vector_store %arg8[%c0_23, %c0_24], %54 {strides = array<i32>} : memref<64x256xbf16, #tpu.memory_space<vmem>>, vector<64x256xbf16>,
    return
  }
  func.func @transform_0(%arg0: i32) -> (i32, i32) {
    %c0_i32 = arith.constant 0 : i32
    %c0_i32_0 = arith.constant 0 : i32
    return %arg0, %c0_i32 : i32, i32
  }
  func.func @transform_1(%arg0: i32) -> (i32, i32) {
    %c0_i32 = arith.constant 0 : i32
    %c0_i32_0 = arith.constant 0 : i32
    %c0_i32_1 = arith.constant 0 : i32
    return %c0_i32, %c0_i32_0 : i32, i32
  }
  func.func @transform_2(%arg0: i32) -> (i32, i32) {
    %c0_i32 = arith.constant 0 : i32
    %c0_i32_0 = arith.constant 0 : i32
    %c0_i32_1 = arith.constant 0 : i32
    return %c0_i32, %c0_i32_0 : i32, i32
  }
  func.func @transform_3(%arg0: i32) -> (i32, i32) {
    %c0_i32 = arith.constant 0 : i32
    %c0_i32_0 = arith.constant 0 : i32
    %c0_i32_1 = arith.constant 0 : i32
    return %c0_i32, %c0_i32_0 : i32, i32
  }
  func.func @transform_4(%arg0: i32) -> (i32, i32) {
    %c0_i32 = arith.constant 0 : i32
    %c0_i32_0 = arith.constant 0 : i32
    %c0_i32_1 = arith.constant 0 : i32
    return %c0_i32, %c0_i32_0 : i32, i32
  }
  func.func @transform_5(%arg0: i32) -> (i32, i32) {
    %c0_i32 = arith.constant 0 : i32
    %c0_i32_0 = arith.constant 0 : i32
    %c0_i32_1 = arith.constant 0 : i32
    return %c0_i32, %c0_i32_0 : i32, i32
  }
  func.func @transform_6(%arg0: i32) -> (i32, i32) {
    %c0_i32 = arith.constant 0 : i32
    %c0_i32_0 = arith.constant 0 : i32
    %c0_i32_1 = arith.constant 0 : i32
    return %c0_i32, %c0_i32_0 : i32, i32
  }
  func.func @transform_7(%arg0: i32) -> (i32, i32) {
    %c0_i32 = arith.constant 0 : i32
    %c0_i32_0 = arith.constant 0 : i32
    return %arg0, %c0_i32 : i32, i32
  }
}

module attributes {stable_mosaic.version = 11 : i64} {
  func.func @_ln_lmhead_ce_kernel(%arg0: i32, %arg1: i32, %arg2: memref<64x256xbf16, #tpu.memory_space<vmem>>, %arg3: memref<1x256xbf16, #tpu.memory_space<vmem>>, %arg4: memref<1x256xbf16, #tpu.memory_space<vmem>>, %arg5: memref<256x256xbf16, #tpu.memory_space<vmem>>, %arg6: memref<64x1xi32, #tpu.memory_space<vmem>>, %arg7: memref<64x256xbf16, #tpu.memory_space<vmem>>, %arg8: memref<64x1xf32, #tpu.memory_space<vmem>>, %arg9: memref<64x256xbf16, #tpu.memory_space<vmem>>, %arg10: memref<64x1xf32, #tpu.memory_space<vmem>>, %arg11: memref<64x1xf32, #tpu.memory_space<vmem>>, %arg12: memref<64x1xf32, #tpu.memory_space<vmem>>) attributes {dimension_semantics = [#tpu.dimension_semantics<parallel>, #tpu.dimension_semantics<arbitrary>], iteration_bounds = array<i64: 1, 2>, scalar_prefetch = 0 : i64, scratch_operands = 4 : i64, tpu.core_type = #tpu.core_type<tc>, window_params = [{transform_indices = @transform_0, window_bounds = array<i64: 64, 256>}, {pipeline_mode = #tpu.pipeline_mode<synchronous>, transform_indices = @transform_1, window_bounds = array<i64: 1, 256>}, {pipeline_mode = #tpu.pipeline_mode<synchronous>, transform_indices = @transform_2, window_bounds = array<i64: 1, 256>}, {transform_indices = @transform_3, window_bounds = array<i64: 256, 256>}, {transform_indices = @transform_4, window_bounds = array<i64: 64, 1>}, {transform_indices = @transform_5, window_bounds = array<i64: 64, 256>}, {transform_indices = @transform_6, window_bounds = array<i64: 64, 1>}]} {
    %c0_i32 = arith.constant 0 : i32
    %0 = arith.cmpi eq, %arg1, %c0_i32 : i32
    %1 = arith.extui %0 : i1 to i32
    %c0_i32_0 = arith.constant 0 : i32
    %2 = arith.cmpi ne, %1, %c0_i32_0 : i32
    scf.if %2 {
      %c0_27 = arith.constant 0 : index
      %c0_28 = arith.constant 0 : index
      %42 = vector.load %arg2[%c0_27, %c0_28] : memref<64x256xbf16, #tpu.memory_space<vmem>>, vector<64x256xbf16>
      %43 = arith.extf %42 : vector<64x256xbf16> to vector<64x256xf32>
      %cst_29 = arith.constant dense<0.000000e+00> : vector<64xf32>
      %44 = vector.multi_reduction <add>, %43, %cst_29 [1] : vector<64x256xf32> to vector<64xf32>
      %45 = vector.shape_cast %44 : vector<64xf32> to vector<64x1xf32>
      %cst_30 = arith.constant 2.560000e+02 : f32
      %46 = vector.broadcast %cst_30 : f32 to vector<64x1xf32>
      %47 = arith.divf %45, %46 : vector<64x1xf32>
      %48 = vector.broadcast %47 : vector<64x1xf32> to vector<64x256xf32>
      %49 = arith.subf %43, %48 : vector<64x256xf32>
      %50 = arith.mulf %49, %49 : vector<64x256xf32>
      %cst_31 = arith.constant dense<0.000000e+00> : vector<64xf32>
      %51 = vector.multi_reduction <add>, %50, %cst_31 [1] : vector<64x256xf32> to vector<64xf32>
      %52 = vector.shape_cast %51 : vector<64xf32> to vector<64x1xf32>
      %cst_32 = arith.constant 2.560000e+02 : f32
      %53 = vector.broadcast %cst_32 : f32 to vector<64x1xf32>
      %54 = arith.divf %52, %53 : vector<64x1xf32>
      %cst_33 = arith.constant 9.99999974E-6 : f32
      %55 = vector.broadcast %cst_33 : f32 to vector<64x1xf32>
      %56 = arith.addf %54, %55 : vector<64x1xf32>
      %57 = math.rsqrt %56 : vector<64x1xf32>
      %58 = vector.broadcast %57 : vector<64x1xf32> to vector<64x256xf32>
      %59 = arith.mulf %49, %58 : vector<64x256xf32>
      %c0_34 = arith.constant 0 : index
      %c0_35 = arith.constant 0 : index
      %60 = vector.load %arg3[%c0_34, %c0_35] : memref<1x256xbf16, #tpu.memory_space<vmem>>, vector<1x256xbf16>
      %61 = arith.extf %60 : vector<1x256xbf16> to vector<1x256xf32>
      %62 = vector.broadcast %61 : vector<1x256xf32> to vector<64x256xf32>
      %63 = arith.mulf %59, %62 : vector<64x256xf32>
      %c0_36 = arith.constant 0 : index
      %c0_37 = arith.constant 0 : index
      %64 = vector.load %arg4[%c0_36, %c0_37] : memref<1x256xbf16, #tpu.memory_space<vmem>>, vector<1x256xbf16>
      %65 = arith.extf %64 : vector<1x256xbf16> to vector<1x256xf32>
      %66 = vector.broadcast %65 : vector<1x256xf32> to vector<64x256xf32>
      %67 = arith.addf %63, %66 : vector<64x256xf32>
      %68 = arith.truncf %67 : vector<64x256xf32> to vector<64x256xbf16>
      %c0_38 = arith.constant 0 : index
      %c0_39 = arith.constant 0 : index
      %69 = vector.load %arg9[%c0_38, %c0_39] : memref<64x256xbf16, #tpu.memory_space<vmem>>, vector<64x256xbf16>
      tpu.vector_store %arg9[%c0_38, %c0_39], %68 {strides = array<i32>} : memref<64x256xbf16, #tpu.memory_space<vmem>>, vector<64x256xbf16>,
      %cst_40 = arith.constant -1.000000e+30 : f32
      %70 = vector.broadcast %cst_40 : f32 to vector<64x1xf32>
      %c0_41 = arith.constant 0 : index
      %c0_42 = arith.constant 0 : index
      %71 = vector.load %arg10[%c0_41, %c0_42] : memref<64x1xf32, #tpu.memory_space<vmem>>, vector<64x1xf32>
      tpu.vector_store %arg10[%c0_41, %c0_42], %70 {strides = array<i32>} : memref<64x1xf32, #tpu.memory_space<vmem>>, vector<64x1xf32>,
      %cst_43 = arith.constant 0.000000e+00 : f32
      %72 = vector.broadcast %cst_43 : f32 to vector<64x1xf32>
      %c0_44 = arith.constant 0 : index
      %c0_45 = arith.constant 0 : index
      %73 = vector.load %arg11[%c0_44, %c0_45] : memref<64x1xf32, #tpu.memory_space<vmem>>, vector<64x1xf32>
      tpu.vector_store %arg11[%c0_44, %c0_45], %72 {strides = array<i32>} : memref<64x1xf32, #tpu.memory_space<vmem>>, vector<64x1xf32>,
      %cst_46 = arith.constant 0.000000e+00 : f32
      %74 = vector.broadcast %cst_46 : f32 to vector<64x1xf32>
      %c0_47 = arith.constant 0 : index
      %c0_48 = arith.constant 0 : index
      %75 = vector.load %arg12[%c0_47, %c0_48] : memref<64x1xf32, #tpu.memory_space<vmem>>, vector<64x1xf32>
      tpu.vector_store %arg12[%c0_47, %c0_48], %74 {strides = array<i32>} : memref<64x1xf32, #tpu.memory_space<vmem>>, vector<64x1xf32>,
    } else {
    }
    %c0 = arith.constant 0 : index
    %c0_1 = arith.constant 0 : index
    %3 = vector.load %arg9[%c0, %c0_1] : memref<64x256xbf16, #tpu.memory_space<vmem>>, vector<64x256xbf16>
    %c0_2 = arith.constant 0 : index
    %c0_3 = arith.constant 0 : index
    %4 = vector.load %arg5[%c0_2, %c0_3] : memref<256x256xbf16, #tpu.memory_space<vmem>>, vector<256x256xbf16>
    %cst = arith.constant dense<0.000000e+00> : vector<64x256xf32>
    %5 = tpu.matmul %3, %4, %cst {dimension_numbers = #tpu.dot_dimension_numbers<[1], [0], [0], [1], [0, 0, 1, 1], [], []>} : vector<64x256xbf16>, vector<256x256xbf16>, vector<64x256xf32> -> vector<64x256xf32>
    %6 = arith.truncf %5 : vector<64x256xf32> to vector<64x256xbf16>
    %c0_4 = arith.constant 0 : index
    %c0_5 = arith.constant 0 : index
    %7 = vector.load %arg7[%c0_4, %c0_5] : memref<64x256xbf16, #tpu.memory_space<vmem>>, vector<64x256xbf16>
    tpu.vector_store %arg7[%c0_4, %c0_5], %6 {strides = array<i32>} : memref<64x256xbf16, #tpu.memory_space<vmem>>, vector<64x256xbf16>,
    %c256_i32 = arith.constant 256 : i32
    %8 = arith.muli %arg1, %c256_i32 : i32
    %9 = tpu.iota {dimensions = array<i32: 1>} : vector<64x256xi32>
    %10 = vector.broadcast %8 : i32 to vector<64x256xi32>
    %11 = arith.addi %10, %9 : vector<64x256xi32>
    %c0_6 = arith.constant 0 : index
    %c0_7 = arith.constant 0 : index
    %12 = vector.load %arg6[%c0_6, %c0_7] : memref<64x1xi32, #tpu.memory_space<vmem>>, vector<64x1xi32>
    %c0_8 = arith.constant 0 : index
    %c0_9 = arith.constant 0 : index
    %13 = vector.load %arg12[%c0_8, %c0_9] : memref<64x1xf32, #tpu.memory_space<vmem>>, vector<64x1xf32>
    %14 = vector.broadcast %12 : vector<64x1xi32> to vector<64x256xi32>
    %15 = arith.cmpi eq, %11, %14 : vector<64x256xi32>
    %cst_10 = arith.constant 0.000000e+00 : f32
    %16 = vector.broadcast %cst_10 : f32 to vector<64x256xf32>
    %17 = arith.select %15, %5, %16 : vector<64x256xi1>, vector<64x256xf32>
    %cst_11 = arith.constant dense<0.000000e+00> : vector<64xf32>
    %18 = vector.multi_reduction <add>, %17, %cst_11 [1] : vector<64x256xf32> to vector<64xf32>
    %19 = vector.shape_cast %18 : vector<64xf32> to vector<64x1xf32>
    %20 = arith.addf %13, %19 : vector<64x1xf32>
    %c0_12 = arith.constant 0 : index
    %c0_13 = arith.constant 0 : index
    %21 = vector.load %arg12[%c0_12, %c0_13] : memref<64x1xf32, #tpu.memory_space<vmem>>, vector<64x1xf32>
    tpu.vector_store %arg12[%c0_12, %c0_13], %20 {strides = array<i32>} : memref<64x1xf32, #tpu.memory_space<vmem>>, vector<64x1xf32>,
    %c0_14 = arith.constant 0 : index
    %c0_15 = arith.constant 0 : index
    %22 = vector.load %arg10[%c0_14, %c0_15] : memref<64x1xf32, #tpu.memory_space<vmem>>, vector<64x1xf32>
    %cst_16 = arith.constant dense<0xFF800000> : vector<64xf32>
    %23 = vector.multi_reduction <maximumf>, %5, %cst_16 [1] : vector<64x256xf32> to vector<64xf32>
    %24 = vector.shape_cast %23 : vector<64xf32> to vector<64x1xf32>
    %25 = arith.maximumf %22, %24 : vector<64x1xf32>
    %c0_17 = arith.constant 0 : index
    %c0_18 = arith.constant 0 : index
    %26 = vector.load %arg11[%c0_17, %c0_18] : memref<64x1xf32, #tpu.memory_space<vmem>>, vector<64x1xf32>
    %c0_19 = arith.constant 0 : index
    %c0_20 = arith.constant 0 : index
    %27 = vector.load %arg10[%c0_19, %c0_20] : memref<64x1xf32, #tpu.memory_space<vmem>>, vector<64x1xf32>
    %28 = arith.subf %27, %25 : vector<64x1xf32>
    %29 = math.exp %28 : vector<64x1xf32>
    %30 = arith.mulf %26, %29 : vector<64x1xf32>
    %31 = vector.broadcast %25 : vector<64x1xf32> to vector<64x256xf32>
    %32 = arith.subf %5, %31 : vector<64x256xf32>
    %33 = math.exp %32 : vector<64x256xf32>
    %cst_21 = arith.constant dense<0.000000e+00> : vector<64xf32>
    %34 = vector.multi_reduction <add>, %33, %cst_21 [1] : vector<64x256xf32> to vector<64xf32>
    %35 = vector.shape_cast %34 : vector<64xf32> to vector<64x1xf32>
    %36 = arith.addf %30, %35 : vector<64x1xf32>
    %c0_22 = arith.constant 0 : index
    %c0_23 = arith.constant 0 : index
    %37 = vector.load %arg11[%c0_22, %c0_23] : memref<64x1xf32, #tpu.memory_space<vmem>>, vector<64x1xf32>
    tpu.vector_store %arg11[%c0_22, %c0_23], %36 {strides = array<i32>} : memref<64x1xf32, #tpu.memory_space<vmem>>, vector<64x1xf32>,
    %c0_24 = arith.constant 0 : index
    %c0_25 = arith.constant 0 : index
    %38 = vector.load %arg10[%c0_24, %c0_25] : memref<64x1xf32, #tpu.memory_space<vmem>>, vector<64x1xf32>
    tpu.vector_store %arg10[%c0_24, %c0_25], %25 {strides = array<i32>} : memref<64x1xf32, #tpu.memory_space<vmem>>, vector<64x1xf32>,
    %c1_i32 = arith.constant 1 : i32
    %39 = arith.cmpi eq, %arg1, %c1_i32 : i32
    %40 = arith.extui %39 : i1 to i32
    %c0_i32_26 = arith.constant 0 : i32
    %41 = arith.cmpi ne, %40, %c0_i32_26 : i32
    scf.if %41 {
      %c0_27 = arith.constant 0 : index
      %c0_28 = arith.constant 0 : index
      %42 = vector.load %arg6[%c0_27, %c0_28] : memref<64x1xi32, #tpu.memory_space<vmem>>, vector<64x1xi32>
      %c-100_i32 = arith.constant -100 : i32
      %43 = vector.broadcast %c-100_i32 : i32 to vector<64x1xi32>
      %44 = arith.cmpi ne, %42, %43 : vector<64x1xi32>
      %45 = arith.extui %44 : vector<64x1xi1> to vector<64x1xi32>
      %46 = arith.sitofp %45 : vector<64x1xi32> to vector<64x1xf32>
      %c0_29 = arith.constant 0 : index
      %c0_30 = arith.constant 0 : index
      %47 = vector.load %arg10[%c0_29, %c0_30] : memref<64x1xf32, #tpu.memory_space<vmem>>, vector<64x1xf32>
      %c0_31 = arith.constant 0 : index
      %c0_32 = arith.constant 0 : index
      %48 = vector.load %arg11[%c0_31, %c0_32] : memref<64x1xf32, #tpu.memory_space<vmem>>, vector<64x1xf32>
      %49 = math.log %48 : vector<64x1xf32>
      %50 = arith.addf %47, %49 : vector<64x1xf32>
      %c0_33 = arith.constant 0 : index
      %c0_34 = arith.constant 0 : index
      %51 = vector.load %arg12[%c0_33, %c0_34] : memref<64x1xf32, #tpu.memory_space<vmem>>, vector<64x1xf32>
      %52 = arith.subf %50, %51 : vector<64x1xf32>
      %53 = arith.mulf %52, %46 : vector<64x1xf32>
      %c0_35 = arith.constant 0 : index
      %c0_36 = arith.constant 0 : index
      %54 = vector.load %arg8[%c0_35, %c0_36] : memref<64x1xf32, #tpu.memory_space<vmem>>, vector<64x1xf32>
      tpu.vector_store %arg8[%c0_35, %c0_36], %53 {strides = array<i32>} : memref<64x1xf32, #tpu.memory_space<vmem>>, vector<64x1xf32>,
    } else {
    }
    return
  }
  func.func @transform_0(%arg0: i32, %arg1: i32) -> (i32, i32) {
    %c0_i32 = arith.constant 0 : i32
    %c0_i32_0 = arith.constant 0 : i32
    return %arg0, %c0_i32 : i32, i32
  }
  func.func @transform_1(%arg0: i32, %arg1: i32) -> (i32, i32) {
    %c0_i32 = arith.constant 0 : i32
    %c0_i32_0 = arith.constant 0 : i32
    %c0_i32_1 = arith.constant 0 : i32
    return %c0_i32, %c0_i32_0 : i32, i32
  }
  func.func @transform_2(%arg0: i32, %arg1: i32) -> (i32, i32) {
    %c0_i32 = arith.constant 0 : i32
    %c0_i32_0 = arith.constant 0 : i32
    %c0_i32_1 = arith.constant 0 : i32
    return %c0_i32, %c0_i32_0 : i32, i32
  }
  func.func @transform_3(%arg0: i32, %arg1: i32) -> (i32, i32) {
    %c0_i32 = arith.constant 0 : i32
    %c0_i32_0 = arith.constant 0 : i32
    return %c0_i32, %arg1 : i32, i32
  }
  func.func @transform_4(%arg0: i32, %arg1: i32) -> (i32, i32) {
    %c0_i32 = arith.constant 0 : i32
    %c0_i32_0 = arith.constant 0 : i32
    return %arg0, %c0_i32 : i32, i32
  }
  func.func @transform_5(%arg0: i32, %arg1: i32) -> (i32, i32) {
    %c0_i32 = arith.constant 0 : i32
    return %arg0, %arg1 : i32, i32
  }
  func.func @transform_6(%arg0: i32, %arg1: i32) -> (i32, i32) {
    %c0_i32 = arith.constant 0 : i32
    %c0_i32_0 = arith.constant 0 : i32
    return %arg0, %c0_i32 : i32, i32
  }
}

</mosaic_0001>

<llo_original>
// kernel: kosmos2_forward.20
$region0: #{kosmos2_forward.20}
  #allocation0 [shape = 'u32[]', space=smem, size = 0x4, offset = 0x4, fixed_abs, tag = 'smem constant byte address 0x4 - core index']
  #allocation1 [shape = 'u32[144,128]{1,0:T(1,128)}', space=vmem, size = 0x12000, scoped, tag = 'internal scratch']
  %s0 = inlined_call_operand.vmem [shape: bf16[32,128], index: 0, kind: input, shape index: {}]
  %s1 = inlined_call_operand.vmem [shape: bf16[1,128], index: 1, kind: input, shape index: {}]
  %s2 = inlined_call_operand.vmem [shape: bf16[1,128], index: 2, kind: input, shape index: {}]
  %s3 = inlined_call_operand.vmem [shape: bf16[128,384], index: 3, kind: input, shape index: {}]
  %s4 = inlined_call_operand.vmem [shape: bf16[1,384], index: 4, kind: input, shape index: {}]
  %s5 = inlined_call_operand.vmem [shape: bf16[32,384], index: 5, kind: output, shape index: {}]
  %s6 = sld [smem:[#allocation0]]
  $region30: #{kosmos2_forward.20} parent=0
    _
  %s8 = ssub.s32 1, %s6
  %s9 = scalar_select 0, %s8, %s6
  // Predicated region
  $region2: #{kosmos2_forward.20} parent=0 // pred_check
    _
  $region3: #{kosmos2_forward.20} parent=0 // pred_check_branch
    %11 = sbr.rel (0) target = $region5
  $region4: #{kosmos2_forward.20} parent=0 // pred_region
    _
  $region5: #{kosmos2_forward.20} parent=0 // pred_fallthru
    _
  // Predicated region
  $region6: #{kosmos2_forward.20} parent=0 // pred_check
    _
  $region7: #{kosmos2_forward.20} parent=0 // pred_check_branch
    %13 = sbr.rel (0) target = $region9
  $region8: #{kosmos2_forward.20} parent=0 // pred_region
    _
  $region9: #{kosmos2_forward.20} parent=0 // pred_fallthru
    _
  // Predicated region
  $region10: #{kosmos2_forward.20} parent=0 // pred_check
    _
  $region11: #{kosmos2_forward.20} parent=0 // pred_check_branch
    %15 = sbr.rel (0) target = $region13
  $region12: #{kosmos2_forward.20} parent=0 // pred_region
    _
  $region13: #{kosmos2_forward.20} parent=0 // pred_fallthru
    _
  // Predicated region
  $region14: #{kosmos2_forward.20} parent=0 // pred_check
    _
  $region15: #{kosmos2_forward.20} parent=0 // pred_check_branch
    %17 = sbr.rel (0) target = $region17
  $region16: #{kosmos2_forward.20} parent=0 // pred_region
    _
  $region17: #{kosmos2_forward.20} parent=0 // pred_fallthru
    _
  // Predicated region
  $region18: #{kosmos2_forward.20} parent=0 // pred_check
    _
  $region19: #{kosmos2_forward.20} parent=0 // pred_check_branch
    %19 = sbr.rel (0) target = $region21
  $region20: #{kosmos2_forward.20} parent=0 // pred_region
    _
  $region21: #{kosmos2_forward.20} parent=0 // pred_fallthru
    _
  %v21 = vld [vmem:[%s0] sm:$0xf]
  %v22 = vld [vmem:[%s0 + $0x4] sm:$0xf]
  %v23 = vld [vmem:[%s0 + $0x8] sm:$0xf]
  %v24 = vld [vmem:[%s0 + $0xc] sm:$0xf]
  %v25 = vunpack.c.l.bf16 %v21
  %v26 = vunpack.c.l.bf16 %v22
  %v27 = vunpack.c.l.bf16 %v23
  %v28 = vunpack.c.l.bf16 %v24
  %29 = vadd.xlane.f32.xlu0 %v25
  %v30 = vpop.xlane.xlu0 %29
  %31 = vadd.xlane.f32.xlu0 %v26
  %v32 = vpop.xlane.xlu0 %31
  %33 = vadd.xlane.f32.xlu0 %v27
  %v34 = vpop.xlane.xlu0 %33
  %35 = vadd.xlane.f32.xlu0 %v28
  %v36 = vpop.xlane.xlu0 %35
  %v37 = vrcp.pop 128.0
  %v38 = vmul.f32 %v30, %v37
  %v39 = vmul.f32 %v32, %v37
  %v40 = vmul.f32 %v34, %v37
  %v41 = vmul.f32 %v36, %v37
  %v42 = vsub.f32 %v25, %v38
  %v43 = vsub.f32 %v26, %v39
  %v44 = vsub.f32 %v27, %v40
  %v45 = vsub.f32 %v28, %v41
  %v46 = vmul.f32 %v42, %v42
  %v47 = vmul.f32 %v43, %v43
  %v48 = vmul.f32 %v44, %v44
  %v49 = vmul.f32 %v45, %v45
  %50 = vadd.xlane.f32.xlu0 %v46
  %v51 = vpop.xlane.xlu0 %50
  %52 = vadd.xlane.f32.xlu0 %v47
  %v53 = vpop.xlane.xlu0 %52
  %54 = vadd.xlane.f32.xlu0 %v48
  %v55 = vpop.xlane.xlu0 %54
  %56 = vadd.xlane.f32.xlu0 %v49
  %v57 = vpop.xlane.xlu0 %56
  %v58 = vmul.f32 %v51, %v37
  %v59 = vmul.f32 %v53, %v37
  %v60 = vmul.f32 %v55, %v37
  %v61 = vmul.f32 %v57, %v37
  %v62 = vadd.f32 %v58, 1e-05
  %v63 = vadd.f32 %v59, 1e-05
  %v64 = vadd.f32 %v60, 1e-05
  %v65 = vadd.f32 %v61, 1e-05
  %v66 = vrsqrt.pop %v62
  %v67 = vrsqrt.pop %v63
  %v68 = vrsqrt.pop %v64
  %v69 = vrsqrt.pop %v65
  %v70 = vmul.f32 %v42, %v66
  %v71 = vmul.f32 %v43, %v67
  %v72 = vmul.f32 %v44, %v68
  %v73 = vmul.f32 %v45, %v69
  %v74 = vld [vmem:[%s1] sm:$0x1]
  %v75 = vunpack.c.l.bf16 %v74
  %v76 = vlaneseq
  %v77 = vshrl.u32 %v76, 7
  %v78 = vsub.s32 0, %v77
  %v79 = vrot.slane %v75, %v78
  %v80 = vmul.f32 %v70, %v79
  %v81 = vmul.f32 %v71, %v79
  %v82 = vmul.f32 %v72, %v79
  %v83 = vmul.f32 %v73, %v79
  %v84 = vld [vmem:[%s2] sm:$0x1]
  %v85 = vunpack.c.l.bf16 %v84
  %v86 = vlaneseq
  %v87 = vshrl.u32 %v86, 7
  %v88 = vsub.s32 0, %v87
  %v89 = vrot.slane %v85, %v88
  %v90 = vadd.f32 %v80, %v89
  %v91 = vadd.f32 %v81, %v89
  %v92 = vadd.f32 %v82, %v89
  %v93 = vadd.f32 %v83, %v89
  %v94 = vpack.c.bf16 %v91, %v90
  %v95 = vpack.c.bf16 %v93, %v92
  %v96 = vld [vmem:[%s3] sm:$0xff]
  %v97 = vld [vmem:[%s3 + $0x8] sm:$0xf]
  %v98 = vld [vmem:[%s3 + $0xc] sm:$0xff]
  %v99 = vld [vmem:[%s3 + $0x14] sm:$0xf]
  %v100 = vld [vmem:[%s3 + $0x18] sm:$0xff]
  %v101 = vld [vmem:[%s3 + $0x20] sm:$0xf]
  %v102 = vld [vmem:[%s3 + $0x24] sm:$0xff]
  %v103 = vld [vmem:[%s3 + $0x2c] sm:$0xf]
  %v104 = vld [vmem:[%s3 + $0x30] sm:$0xff]
  %v105 = vld [vmem:[%s3 + $0x38] sm:$0xf]
  %v106 = vld [vmem:[%s3 + $0x3c] sm:$0xff]
  %v107 = vld [vmem:[%s3 + $0x44] sm:$0xf]
  %v108 = vld [vmem:[%s3 + $0x48] sm:$0xff]
  %v109 = vld [vmem:[%s3 + $0x50] sm:$0xf]
  %v110 = vld [vmem:[%s3 + $0x54] sm:$0xff]
  %v111 = vld [vmem:[%s3 + $0x5c] sm:$0xf]
  %v112 = vld [vmem:[%s3 + $0x60] sm:$0xff]
  %v113 = vld [vmem:[%s3 + $0x68] sm:$0xf]
  %v114 = vld [vmem:[%s3 + $0x6c] sm:$0xff]
  %v115 = vld [vmem:[%s3 + $0x74] sm:$0xf]
  %v116 = vld [vmem:[%s3 + $0x78] sm:$0xff]
  %v117 = vld [vmem:[%s3 + $0x80] sm:$0xf]
  %v118 = vld [vmem:[%s3 + $0x84] sm:$0xff]
  %v119 = vld [vmem:[%s3 + $0x8c] sm:$0xf]
  %v120 = vld [vmem:[%s3 + $0x90] sm:$0xff]
  %v121 = vld [vmem:[%s3 + $0x98] sm:$0xf]
  %v122 = vld [vmem:[%s3 + $0x9c] sm:$0xff]
  %v123 = vld [vmem:[%s3 + $0xa4] sm:$0xf]
  %v124 = vld [vmem:[%s3 + $0xa8] sm:$0xff]
  %v125 = vld [vmem:[%s3 + $0xb0] sm:$0xf]
  %v126 = vld [vmem:[%s3 + $0xb4] sm:$0xff]
  %v127 = vld [vmem:[%s3 + $0xbc] sm:$0xf]
  %v128 = vld [vmem:[%s4] sm:$0x7]
  %v129 = vunpack.c.l.bf16 %v128
  %v131 = vlaneseq
  %v132 = vshrl.u32 %v131, 7
  %v133 = vsub.s32 0, %v132
  %v134 = vrot.slane %v129, %v133
  %v135 = vlaneseq
  %v136 = vshrl.u32 %v135, 7
  %v137 = vsub.s32 2, %v136
  %v138 = vrot.slane %v129, %v137
  %v139 = vlaneseq
  %v140 = vshrl.u32 %v139, 7
  %v141 = vsub.s32 4, %v140
  %v142 = vrot.slane %v129, %v141
  %v146 = vlaneseq
  %v147 = vshrl.u32 %v146, 7
  %v148 = vsub.s32 0, %v147
  %v149 = vrot.slane %v134, %v148
  %v150 = vlaneseq
  %v151 = vshrl.u32 %v150, 7
  %v152 = vsub.s32 0, %v151
  %v153 = vrot.slane %v138, %v152
  %v154 = vlaneseq
  %v155 = vshrl.u32 %v154, 7
  %v156 = vsub.s32 0, %v155
  %v157 = vrot.slane %v142, %v156
  %v190 = vunpack.c.l.b16 %v96
  %v191 = vunpack.c.h.b16 %v96
  %v192 = vunpack.c.l.b16 %v97
  %v193 = vunpack.c.l.b16 %v98
  %v194 = vunpack.c.h.b16 %v98
  %v195 = vunpack.c.l.b16 %v99
  %v196 = vunpack.c.l.b16 %v100
  %v197 = vunpack.c.h.b16 %v100
  %v198 = vunpack.c.l.b16 %v101
  %v199 = vunpack.c.l.b16 %v102
  %v200 = vunpack.c.h.b16 %v102
  %v201 = vunpack.c.l.b16 %v103
  %v202 = vunpack.c.l.b16 %v104
  %v203 = vunpack.c.h.b16 %v104
  %v204 = vunpack.c.l.b16 %v105
  %v205 = vunpack.c.l.b16 %v106
  %v206 = vunpack.c.h.b16 %v106
  %v207 = vunpack.c.l.b16 %v107
  %v208 = vunpack.c.l.b16 %v108
  %v209 = vunpack.c.h.b16 %v108
  %v210 = vunpack.c.l.b16 %v109
  %v211 = vunpack.c.l.b16 %v110
  %v212 = vunpack.c.h.b16 %v110
  %v213 = vunpack.c.l.b16 %v111
  %v214 = vunpack.c.l.b16 %v112
  %v215 = vunpack.c.h.b16 %v112
  %v216 = vunpack.c.l.b16 %v113
  %v217 = vunpack.c.l.b16 %v114
  %v218 = vunpack.c.h.b16 %v114
  %v219 = vunpack.c.l.b16 %v115
  %v220 = vunpack.c.l.b16 %v116
  %v221 = vunpack.c.h.b16 %v116
  %v222 = vunpack.c.l.b16 %v117
  %v223 = vunpack.c.l.b16 %v118
  %v224 = vunpack.c.h.b16 %v118
  %v225 = vunpack.c.l.b16 %v119
  %v226 = vunpack.c.l.b16 %v120
  %v227 = vunpack.c.h.b16 %v120
  %v228 = vunpack.c.l.b16 %v121
  %v229 = vunpack.c.l.b16 %v122
  %v230 = vunpack.c.h.b16 %v122
  %v231 = vunpack.c.l.b16 %v123
  %v232 = vunpack.c.l.b16 %v124
  %v233 = vunpack.c.h.b16 %v124
  %v234 = vunpack.c.l.b16 %v125
  %v235 = vunpack.c.l.b16 %v126
  %v236 = vunpack.c.h.b16 %v126
  %v237 = vunpack.c.l.b16 %v127
  %v238 = vpack.c.b16 %v193, %v190
  %v239 = vpack.c.b16 %v194, %v191
  %v240 = vpack.c.b16 %v195, %v192
  %v241 = vpack.c.b16 %v199, %v196
  %v242 = vpack.c.b16 %v200, %v197
  %v243 = vpack.c.b16 %v201, %v198
  %v244 = vpack.c.b16 %v205, %v202
  %v245 = vpack.c.b16 %v206, %v203
  %v246 = vpack.c.b16 %v207, %v204
  %v247 = vpack.c.b16 %v211, %v208
  %v248 = vpack.c.b16 %v212, %v209
  %v249 = vpack.c.b16 %v213, %v210
  %v250 = vpack.c.b16 %v217, %v214
  %v251 = vpack.c.b16 %v218, %v215
  %v252 = vpack.c.b16 %v219, %v216
  %v253 = vpack.c.b16 %v223, %v220
  %v254 = vpack.c.b16 %v224, %v221
  %v255 = vpack.c.b16 %v225, %v222
  %v256 = vpack.c.b16 %v229, %v226
  %v257 = vpack.c.b16 %v230, %v227
  %v258 = vpack.c.b16 %v231, %v228
  %v259 = vpack.c.b16 %v235, %v232
  %v260 = vpack.c.b16 %v236, %v233
  %v261 = vpack.c.b16 %v237, %v234
  %286 = vmatprep.subr.bf16.mxu0 %v239
  %287 = vmatpush1.bf16.msra.mxu0 %v238
  %288 = vmatprep.subr.bf16.mxu0 %v242
  %289 = vmatpush1.bf16.msra.mxu0 %v241
  %290 = vmatprep.subr.bf16.mxu0 %v245
  %291 = vmatpush1.bf16.msra.mxu0 %v244
  %292 = vmatprep.subr.bf16.mxu0 %v248
  %293 = vmatpush1.bf16.msra.mxu0 %v247
  %294 = vmatprep.subr.bf16.mxu0 %v251
  %295 = vmatpush1.bf16.msra.mxu0 %v250
  %296 = vmatprep.subr.bf16.mxu0 %v254
  %297 = vmatpush1.bf16.msra.mxu0 %v253
  %298 = vmatprep.subr.bf16.mxu0 %v257
  %299 = vmatpush1.bf16.msra.mxu0 %v256
  %300 = vmatprep.subr.bf16.mxu0 %v260
  %301 = vmatpush1.bf16.msra.mxu0 %v259
  %302 = vmatprep.subr.bf16.mxu0 0
  %303 = vmatpush1.bf16.msra.mxu0 0
  %304 = vmatprep.subr.bf16.mxu0 0
  %305 = vmatpush1.bf16.msra.mxu0 0
  %306 = vmatprep.subr.bf16.mxu0 0
  %307 = vmatpush1.bf16.msra.mxu0 0
  %308 = vmatprep.subr.bf16.mxu0 0
  %309 = vmatpush1.bf16.msra.mxu0 0
  %310 = vmatprep.subr.bf16.mxu0 0
  %311 = vmatpush1.bf16.msra.mxu0 0
  %312 = vmatprep.subr.bf16.mxu0 0
  %313 = vmatpush1.bf16.msra.mxu0 0
  %314 = vmatprep.subr.bf16.mxu0 0
  %315 = vmatpush1.bf16.msra.mxu0 0
  %316 = vmatprep.subr.bf16.mxu0 0
  %317 = vmatpush1.bf16.msra.mxu0 0
  %318 = vmatprep.mubr.bf16.mxu0 0
  %319 = vmatmul.mubr.bf16.gmra.mrb[0].mxu0 %v94
  %v320 = vpop.f32.mrb[0].mxu0
  %v321 = vadd.f32 %v149, %v320
  %v322 = vpop.f32.mrb[0].mxu0
  %v323 = vadd.f32 %v153, %v322
  %v324 = vpop.f32.mrb[0].mxu0
  %v325 = vadd.f32 %v149, %v324
  %v326 = vpop.f32.mrb[0].mxu0
  %v327 = vadd.f32 %v153, %v326
  %328 = vmatprep.mubr.bf16.mxu0 0
  %329 = vmatmul.mubr.bf16.gmra.mrb[0].mxu0 %v95
  %v330 = vpop.f32.mrb[0].mxu0
  %v331 = vadd.f32 %v149, %v330
  %v332 = vpop.f32.mrb[0].mxu0
  %v333 = vadd.f32 %v153, %v332
  %v334 = vpop.f32.mrb[0].mxu0
  %v335 = vadd.f32 %v149, %v334
  %v336 = vpop.f32.mrb[0].mxu0
  %v337 = vadd.f32 %v153, %v336
  %338 = vdwg.mxu0
  %339 = vmatprep.subr.bf16.mxu0 0
  %340 = vmatpush1.bf16.msra.mxu0 %v240
  %341 = vmatprep.subr.bf16.mxu0 0
  %342 = vmatpush1.bf16.msra.mxu0 %v243
  %343 = vmatprep.subr.bf16.mxu0 0
  %344 = vmatpush1.bf16.msra.mxu0 %v246
  %345 = vmatprep.subr.bf16.mxu0 0
  %346 = vmatpush1.bf16.msra.mxu0 %v249
  %347 = vmatprep.subr.bf16.mxu0 0
  %348 = vmatpush1.bf16.msra.mxu0 %v252
  %349 = vmatprep.subr.bf16.mxu0 0
  %350 = vmatpush1.bf16.msra.mxu0 %v255
  %351 = vmatprep.subr.bf16.mxu0 0
  %352 = vmatpush1.bf16.msra.mxu0 %v258
  %353 = vmatprep.subr.bf16.mxu0 0
  %354 = vmatpush1.bf16.msra.mxu0 %v261
  %355 = vmatprep.subr.bf16.mxu0 0
  %356 = vmatpush1.bf16.msra.mxu0 0
  %357 = vmatprep.subr.bf16.mxu0 0
  %358 = vmatpush1.bf16.msra.mxu0 0
  %359 = vmatprep.subr.bf16.mxu0 0
  %360 = vmatpush1.bf16.msra.mxu0 0
  %361 = vmatprep.subr.bf16.mxu0 0
  %362 = vmatpush1.bf16.msra.mxu0 0
  %363 = vmatprep.subr.bf16.mxu0 0
  %364 = vmatpush1.bf16.msra.mxu0 0
  %365 = vmatprep.subr.bf16.mxu0 0
  %366 = vmatpush1.bf16.msra.mxu0 0
  %367 = vmatprep.subr.bf16.mxu0 0
  %368 = vmatpush1.bf16.msra.mxu0 0
  %369 = vmatprep.subr.bf16.mxu0 0
  %370 = vmatpush1.bf16.msra.mxu0 0
  %371 = vmatprep.mubr.bf16.mxu0 0
  %372 = vmatmul.mubr.bf16.gmra.mrb[0].mxu0 %v94
  %v373 = vpop.f32.mrb[0].mxu0
  %v374 = vadd.f32 %v157, %v373
  %v375 = vpop.f32.mrb[0].mxu0
  %v376 = vpop.f32.mrb[0].mxu0
  %v377 = vadd.f32 %v157, %v376
  %v378 = vpop.f32.mrb[0].mxu0
  %379 = vmatprep.mubr.bf16.mxu0 0
  %380 = vmatmul.mubr.bf16.gmra.mrb[0].mxu0 %v95
  %v381 = vpop.f32.mrb[0].mxu0
  %v382 = vadd.f32 %v157, %v381
  %v383 = vpop.f32.mrb[0].mxu0
  %v384 = vpop.f32.mrb[0].mxu0
  %v385 = vadd.f32 %v157, %v384
  %v386 = vpop.f32.mrb[0].mxu0
  %387 = vdwg.mxu0
  %v388 = vpack.c.bf16 %v325, %v321
  %v389 = vpack.c.bf16 %v327, %v323
  %v390 = vpack.c.bf16 %v377, %v374
  %v391 = vpack.c.bf16 %v335, %v331
  %v392 = vpack.c.bf16 %v337, %v333
  %v393 = vpack.c.bf16 %v385, %v382
  %v400 = vunpack.c.l.b16 %v388
  %v401 = vunpack.c.l.b16 %v389
  %v402 = vunpack.c.l.b16 %v390
  %v403 = vunpack.c.h.b16 %v388
  %v404 = vunpack.c.h.b16 %v389
  %v405 = vunpack.c.h.b16 %v390
  %v406 = vunpack.c.l.b16 %v391
  %v407 = vunpack.c.l.b16 %v392
  %v408 = vunpack.c.l.b16 %v393
  %v409 = vunpack.c.h.b16 %v391
  %v410 = vunpack.c.h.b16 %v392
  %v411 = vunpack.c.h.b16 %v393
  %v412 = vpack.c.b16 %v401, %v400
  %v413 = vpack.c.b16 %v402, %v402
  %v414 = vpack.c.b16 %v404, %v403
  %v415 = vpack.c.b16 %v405, %v405
  %v416 = vpack.c.b16 %v407, %v406
  %v417 = vpack.c.b16 %v408, %v408
  %v418 = vpack.c.b16 %v410, %v409
  %v419 = vpack.c.b16 %v411, %v411
  %428 = vst [vmem:[%s5] sm:$0xff] %v412
  %429 = vst [vmem:[%s5 + $0x8] sm:$0xf] %v413
  %430 = vst [vmem:[%s5 + $0xc] sm:$0xff] %v414
  %431 = vst [vmem:[%s5 + $0x14] sm:$0xf] %v415
  %432 = vst [vmem:[%s5 + $0x18] sm:$0xff] %v416
  %433 = vst [vmem:[%s5 + $0x20] sm:$0xf] %v417
  %434 = vst [vmem:[%s5 + $0x24] sm:$0xff] %v418
  %435 = vst [vmem:[%s5 + $0x2c] sm:$0xf] %v419
  // Predicated region
  $region22: #{kosmos2_forward.20} parent=0 // pred_check
    _
  $region23: #{kosmos2_forward.20} parent=0 // pred_check_branch
    %437 = sbr.rel (0) target = $region25
  $region24: #{kosmos2_forward.20} parent=0 // pred_region
    _
  $region25: #{kosmos2_forward.20} parent=0 // pred_fallthru
    _
  // Predicated region
  $region26: #{kosmos2_forward.20} parent=0 // pred_check
    _
  $region27: #{kosmos2_forward.20} parent=0 // pred_check_branch
    %439 = sbr.rel (0) target = $region29
  $region28: #{kosmos2_forward.20} parent=0 // pred_region
    _
  $region29: #{kosmos2_forward.20} parent=0 // pred_fallthru
    _

// kernel: kosmos2_forward.19
$region0: #{kosmos2_forward.19}
  #allocation0 [shape = 'u32[]', space=smem, size = 0x4, offset = 0x4, fixed_abs, tag = 'smem constant byte address 0x4 - core index']
  #allocation1 [shape = 'u32[144,128]{1,0:T(1,128)}', space=vmem, size = 0x12000, scoped, tag = 'internal scratch']
  #allocation2 [shape = 'f32[32,128]{1,0:T(8,128)}', space=vmem, size = 0x4000, scoped, tag = 'scratch operand']
  %s0 = inlined_call_operand.vmem [shape: bf16[32,192], index: 0, kind: input, shape index: {}]
  %s1 = inlined_call_operand.vmem [shape: bf16[192,128], index: 1, kind: input, shape index: {}]
  %s2 = inlined_call_operand.vmem [shape: bf16[1,128], index: 2, kind: input, shape index: {}]
  %s3 = inlined_call_operand.vmem [shape: bf16[32,128], index: 3, kind: output, shape index: {}]
  %s4 = sld [smem:[#allocation0]]
  $region30: #{kosmos2_forward.19} parent=0
    _
  %s6 = ssub.s32 1, %s4
  %s7 = scalar_select 0, %s6, %s4
  // Predicated region
  $region2: #{kosmos2_forward.19} parent=0 // pred_check
    _
  $region3: #{kosmos2_forward.19} parent=0 // pred_check_branch
    %9 = sbr.rel (0) target = $region5
  $region4: #{kosmos2_forward.19} parent=0 // pred_region
    _
  $region5: #{kosmos2_forward.19} parent=0 // pred_fallthru
    _
  // Predicated region
  $region6: #{kosmos2_forward.19} parent=0 // pred_check
    _
  $region7: #{kosmos2_forward.19} parent=0 // pred_check_branch
    %11 = sbr.rel (0) target = $region9
  $region8: #{kosmos2_forward.19} parent=0 // pred_region
    _
  $region9: #{kosmos2_forward.19} parent=0 // pred_fallthru
    _
  // Predicated region
  $region10: #{kosmos2_forward.19} parent=0 // pred_check
    _
  $region11: #{kosmos2_forward.19} parent=0 // pred_check_branch
    %13 = sbr.rel (0) target = $region13
  $region12: #{kosmos2_forward.19} parent=0 // pred_region
    _
  $region13: #{kosmos2_forward.19} parent=0 // pred_fallthru
    _
  %p15 = scmp.eq.s32.totalorder 0, 0
  // Predicated region
  $region14: #{kosmos2_forward.19} parent=0 // pred_check
    %p16 = pneg %p15
  $region15: #{kosmos2_forward.19} parent=0 // pred_check_branch
    %18 = sbr.rel (%p16) target = $region17
  $region16: #{kosmos2_forward.19} parent=0 // pred_region
    %19 = vst [vmem:[#allocation2] sm:$0xff] 0.0
    %20 = vst [vmem:[#allocation2 + $0x8] sm:$0xff] 0.0
    %21 = vst [vmem:[#allocation2 + $0x10] sm:$0xff] 0.0
    %22 = vst [vmem:[#allocation2 + $0x18] sm:$0xff] 0.0
  $region17: #{kosmos2_forward.19} parent=0 // pred_fallthru
    _
  %v23 = vld [vmem:[#allocation2] sm:$0xff]
  %v24 = vld [vmem:[#allocation2 + $0x8] sm:$0xff]
  %v25 = vld [vmem:[#allocation2 + $0x10] sm:$0xff]
  %v26 = vld [vmem:[#allocation2 + $0x18] sm:$0xff]
  %v27 = vld [vmem:[%s0] sm:$0xff]
  %v28 = vld [vmem:[%s0 + $0x8] sm:$0xff]
  %v29 = vld [vmem:[%s0 + $0x10] sm:$0xff]
  %v30 = vld [vmem:[%s0 + $0x18] sm:$0xff]
  %v31 = vld [vmem:[%s1] sm:$0xf]
  %v32 = vld [vmem:[%s1 + $0x4] sm:$0xf]
  %v33 = vld [vmem:[%s1 + $0x8] sm:$0xf]
  %v34 = vld [vmem:[%s1 + $0xc] sm:$0xf]
  %v35 = vld [vmem:[%s1 + $0x10] sm:$0xf]
  %v36 = vld [vmem:[%s1 + $0x14] sm:$0xf]
  %v37 = vld [vmem:[%s1 + $0x18] sm:$0xf]
  %v38 = vld [vmem:[%s1 + $0x1c] sm:$0xf]
  %v39 = vld [vmem:[%s1 + $0x20] sm:$0xf]
  %v40 = vld [vmem:[%s1 + $0x24] sm:$0xf]
  %v41 = vld [vmem:[%s1 + $0x28] sm:$0xf]
  %v42 = vld [vmem:[%s1 + $0x2c] sm:$0xf]
  %v43 = vld [vmem:[%s1 + $0x30] sm:$0xf]
  %v44 = vld [vmem:[%s1 + $0x34] sm:$0xf]
  %v45 = vld [vmem:[%s1 + $0x38] sm:$0xf]
  %v46 = vld [vmem:[%s1 + $0x3c] sm:$0xf]
  %v47 = vld [vmem:[%s1 + $0x40] sm:$0xf]
  %v48 = vld [vmem:[%s1 + $0x44] sm:$0xf]
  %v49 = vld [vmem:[%s1 + $0x48] sm:$0xf]
  %v50 = vld [vmem:[%s1 + $0x4c] sm:$0xf]
  %v51 = vld [vmem:[%s1 + $0x50] sm:$0xf]
  %v52 = vld [vmem:[%s1 + $0x54] sm:$0xf]
  %v53 = vld [vmem:[%s1 + $0x58] sm:$0xf]
  %v54 = vld [vmem:[%s1 + $0x5c] sm:$0xf]
  %v59 = vunpack.c.l.b16 %v27
  %v60 = vunpack.c.h.b16 %v27
  %v61 = vunpack.c.l.b16 %v28
  %v62 = vunpack.c.h.b16 %v28
  %v63 = vunpack.c.l.b16 %v29
  %v64 = vunpack.c.h.b16 %v29
  %v65 = vunpack.c.l.b16 %v30
  %v66 = vunpack.c.h.b16 %v30
  %v67 = vpack.c.b16 %v61, %v59
  %v68 = vpack.c.b16 %v62, %v60
  %v69 = vpack.c.b16 %v65, %v63
  %v70 = vpack.c.b16 %v66, %v64
  %v97 = vunpack.c.l.b16 %v31
  %v98 = vunpack.c.l.b16 %v32
  %v99 = vunpack.c.l.b16 %v33
  %v100 = vunpack.c.l.b16 %v34
  %v101 = vunpack.c.l.b16 %v35
  %v102 = vunpack.c.l.b16 %v36
  %v103 = vunpack.c.l.b16 %v37
  %v104 = vunpack.c.l.b16 %v38
  %v105 = vunpack.c.l.b16 %v39
  %v106 = vunpack.c.l.b16 %v40
  %v107 = vunpack.c.l.b16 %v41
  %v108 = vunpack.c.l.b16 %v42
  %v109 = vunpack.c.l.b16 %v43
  %v110 = vunpack.c.l.b16 %v44
  %v111 = vunpack.c.l.b16 %v45
  %v112 = vunpack.c.l.b16 %v46
  %v113 = vunpack.c.l.b16 %v47
  %v114 = vunpack.c.l.b16 %v48
  %v115 = vunpack.c.l.b16 %v49
  %v116 = vunpack.c.l.b16 %v50
  %v117 = vunpack.c.l.b16 %v51
  %v118 = vunpack.c.l.b16 %v52
  %v119 = vunpack.c.l.b16 %v53
  %v120 = vunpack.c.l.b16 %v54
  %v121 = vpack.c.b16 %v98, %v97
  %v122 = vpack.c.b16 %v100, %v99
  %v123 = vpack.c.b16 %v102, %v101
  %v124 = vpack.c.b16 %v104, %v103
  %v125 = vpack.c.b16 %v106, %v105
  %v126 = vpack.c.b16 %v108, %v107
  %v127 = vpack.c.b16 %v110, %v109
  %v128 = vpack.c.b16 %v112, %v111
  %v129 = vpack.c.b16 %v114, %v113
  %v130 = vpack.c.b16 %v116, %v115
  %v131 = vpack.c.b16 %v118, %v117
  %v132 = vpack.c.b16 %v120, %v119
  %vm145 = vcmask 523264
  %v147 = vsel %vm145, %v68, 0
  %v150 = vsel %vm145, %v70, 0
  %152 = vmatprep.subr.bf16.mxu0 0
  %153 = vmatpush1.bf16.msra.mxu0 %v121
  %154 = vmatprep.subr.bf16.mxu0 0
  %155 = vmatpush1.bf16.msra.mxu0 %v122
  %156 = vmatprep.subr.bf16.mxu0 0
  %157 = vmatpush1.bf16.msra.mxu0 %v123
  %158 = vmatprep.subr.bf16.mxu0 0
  %159 = vmatpush1.bf16.msra.mxu0 %v124
  %160 = vmatprep.subr.bf16.mxu0 0
  %161 = vmatpush1.bf16.msra.mxu0 %v125
  %162 = vmatprep.subr.bf16.mxu0 0
  %163 = vmatpush1.bf16.msra.mxu0 %v126
  %164 = vmatprep.subr.bf16.mxu0 0
  %165 = vmatpush1.bf16.msra.mxu0 %v127
  %166 = vmatprep.subr.bf16.mxu0 0
  %167 = vmatpush1.bf16.msra.mxu0 %v128
  %168 = vmatprep.subr.bf16.mxu0 0
  %169 = vmatpush1.bf16.msra.mxu0 %v129
  %170 = vmatprep.subr.bf16.mxu0 0
  %171 = vmatpush1.bf16.msra.mxu0 %v130
  %172 = vmatprep.subr.bf16.mxu0 0
  %173 = vmatpush1.bf16.msra.mxu0 %v131
  %174 = vmatprep.subr.bf16.mxu0 0
  %175 = vmatpush1.bf16.msra.mxu0 %v132
  %176 = vmatprep.subr.bf16.mxu0 0
  %177 = vmatpush1.bf16.msra.mxu0 0
  %178 = vmatprep.subr.bf16.mxu0 0
  %179 = vmatpush1.bf16.msra.mxu0 0
  %180 = vmatprep.subr.bf16.mxu0 0
  %181 = vmatpush1.bf16.msra.mxu0 0
  %182 = vmatprep.subr.bf16.mxu0 0
  %183 = vmatpush1.bf16.msra.mxu0 0
  %184 = vmatprep.mubr.bf16.mxu0 %v147
  %185 = vmatmul.mubr.bf16.gmra.mrb[0].mxu0 %v67
  %v186 = vpop.f32.mrb[0].mxu0
  %v187 = vadd.f32 0.0, %v186
  %v188 = vpop.f32.mrb[0].mxu0
  %v189 = vpop.f32.mrb[0].mxu0
  %v190 = vadd.f32 0.0, %v189
  %v191 = vpop.f32.mrb[0].mxu0
  %192 = vmatprep.mubr.bf16.mxu0 %v150
  %193 = vmatmul.mubr.bf16.gmra.mrb[0].mxu0 %v69
  %v194 = vpop.f32.mrb[0].mxu0
  %v195 = vadd.f32 0.0, %v194
  %v196 = vpop.f32.mrb[0].mxu0
  %v197 = vpop.f32.mrb[0].mxu0
  %v198 = vadd.f32 0.0, %v197
  %v199 = vpop.f32.mrb[0].mxu0
  %200 = vdwg.mxu0
  %v201 = vadd.f32 %v23, %v187
  %v202 = vadd.f32 %v24, %v190
  %v203 = vadd.f32 %v25, %v195
  %v204 = vadd.f32 %v26, %v198
  %205 = vst [vmem:[#allocation2] sm:$0xff] %v201
  %206 = vst [vmem:[#allocation2 + $0x8] sm:$0xff] %v202
  %207 = vst [vmem:[#allocation2 + $0x10] sm:$0xff] %v203
  %208 = vst [vmem:[#allocation2 + $0x18] sm:$0xff] %v204
  // Predicated region
  $region18: #{kosmos2_forward.19} parent=0 // pred_check
    %p209 = pneg %p15
  $region19: #{kosmos2_forward.19} parent=0 // pred_check_branch
    %211 = sbr.rel (%p209) target = $region21
  $region20: #{kosmos2_forward.19} parent=0 // pred_region
    %v212 = vld [vmem:[#allocation2] sm:$0xff]
    %v213 = vld [vmem:[#allocation2 + $0x8] sm:$0xff]
    %v214 = vld [vmem:[#allocation2 + $0x10] sm:$0xff]
    %v215 = vld [vmem:[#allocation2 + $0x18] sm:$0xff]
    %v216 = vld [vmem:[%s2] sm:$0x1]
    %v217 = vunpack.c.l.bf16 %v216
    %v218 = vlaneseq
    %v219 = vshrl.u32 %v218, 7
    %v220 = vsub.s32 0, %v219
    %v221 = vrot.slane %v217, %v220
    %v222 = vadd.f32 %v212, %v221
    %v223 = vadd.f32 %v213, %v221
    %v224 = vadd.f32 %v214, %v221
    %v225 = vadd.f32 %v215, %v221
    %v226 = vpack.c.bf16 %v223, %v222
    %v227 = vpack.c.bf16 %v225, %v224
    %v230 = vunpack.c.l.b16 %v226
    %v231 = vunpack.c.h.b16 %v226
    %v232 = vunpack.c.l.b16 %v227
    %v233 = vunpack.c.h.b16 %v227
    %v234 = vpack.c.b16 %v230, %v230
    %v235 = vpack.c.b16 %v231, %v231
    %v236 = vpack.c.b16 %v232, %v232
    %v237 = vpack.c.b16 %v233, %v233
    %242 = vst [vmem:[%s3] sm:$0xf] %v234
    %243 = vst [vmem:[%s3 + $0x4] sm:$0xf] %v235
    %244 = vst [vmem:[%s3 + $0x8] sm:$0xf] %v236
    %245 = vst [vmem:[%s3 + $0xc] sm:$0xf] %v237
  $region21: #{kosmos2_forward.19} parent=0 // pred_fallthru
    _
  // Predicated region
  $region22: #{kosmos2_forward.19} parent=0 // pred_check
    _
  $region23: #{kosmos2_forward.19} parent=0 // pred_check_branch
    %247 = sbr.rel (0) target = $region25
  $region24: #{kosmos2_forward.19} parent=0 // pred_region
    _
  $region25: #{kosmos2_forward.19} parent=0 // pred_fallthru
    _
  // Predicated region
  $region26: #{kosmos2_forward.19} parent=0 // pred_check
    _
  $region27: #{kosmos2_forward.19} parent=0 // pred_check_branch
    %249 = sbr.rel (0) target = $region29
  $region28: #{kosmos2_forward.19} parent=0 // pred_region
    _
  $region29: #{kosmos2_forward.19} parent=0 // pred_fallthru
    _

// kernel: kosmos2_forward.22
$region0: #{kosmos2_forward.22}
  #allocation0 [shape = 'u32[]', space=smem, size = 0x4, offset = 0x4, fixed_abs, tag = 'smem constant byte address 0x4 - core index']
  #allocation1 [shape = 'u32[144,128]{1,0:T(1,128)}', space=vmem, size = 0x12000, scoped, tag = 'internal scratch']
  %s0 = inlined_call_operand.vmem [shape: bf16[32,128], index: 0, kind: input, shape index: {}]
  %s1 = inlined_call_operand.vmem [shape: bf16[128,128], index: 1, kind: input, shape index: {}]
  %s2 = inlined_call_operand.vmem [shape: bf16[1,128], index: 2, kind: input, shape index: {}]
  %s3 = inlined_call_operand.vmem [shape: bf16[32,128], index: 3, kind: input, shape index: {}]
  %s4 = inlined_call_operand.vmem [shape: bf16[32,128], index: 4, kind: output, shape index: {}]
  %s5 = sld [smem:[#allocation0]]
  $region26: #{kosmos2_forward.22} parent=0
    _
  %s7 = ssub.s32 1, %s5
  %s8 = scalar_select 0, %s7, %s5
  // Predicated region
  $region2: #{kosmos2_forward.22} parent=0 // pred_check
    _
  $region3: #{kosmos2_forward.22} parent=0 // pred_check_branch
    %10 = sbr.rel (0) target = $region5
  $region4: #{kosmos2_forward.22} parent=0 // pred_region
    _
  $region5: #{kosmos2_forward.22} parent=0 // pred_fallthru
    _
  // Predicated region
  $region6: #{kosmos2_forward.22} parent=0 // pred_check
    _
  $region7: #{kosmos2_forward.22} parent=0 // pred_check_branch
    %12 = sbr.rel (0) target = $region9
  $region8: #{kosmos2_forward.22} parent=0 // pred_region
    _
  $region9: #{kosmos2_forward.22} parent=0 // pred_fallthru
    _
  // Predicated region
  $region10: #{kosmos2_forward.22} parent=0 // pred_check
    _
  $region11: #{kosmos2_forward.22} parent=0 // pred_check_branch
    %14 = sbr.rel (0) target = $region13
  $region12: #{kosmos2_forward.22} parent=0 // pred_region
    _
  $region13: #{kosmos2_forward.22} parent=0 // pred_fallthru
    _
  // Predicated region
  $region14: #{kosmos2_forward.22} parent=0 // pred_check
    _
  $region15: #{kosmos2_forward.22} parent=0 // pred_check_branch
    %16 = sbr.rel (0) target = $region17
  $region16: #{kosmos2_forward.22} parent=0 // pred_region
    _
  $region17: #{kosmos2_forward.22} parent=0 // pred_fallthru
    _
  %v18 = vld [vmem:[%s0] sm:$0xf]
  %v19 = vld [vmem:[%s0 + $0x4] sm:$0xf]
  %v20 = vld [vmem:[%s0 + $0x8] sm:$0xf]
  %v21 = vld [vmem:[%s0 + $0xc] sm:$0xf]
  %v22 = vld [vmem:[%s1] sm:$0xf]
  %v23 = vld [vmem:[%s1 + $0x4] sm:$0xf]
  %v24 = vld [vmem:[%s1 + $0x8] sm:$0xf]
  %v25 = vld [vmem:[%s1 + $0xc] sm:$0xf]
  %v26 = vld [vmem:[%s1 + $0x10] sm:$0xf]
  %v27 = vld [vmem:[%s1 + $0x14] sm:$0xf]
  %v28 = vld [vmem:[%s1 + $0x18] sm:$0xf]
  %v29 = vld [vmem:[%s1 + $0x1c] sm:$0xf]
  %v30 = vld [vmem:[%s1 + $0x20] sm:$0xf]
  %v31 = vld [vmem:[%s1 + $0x24] sm:$0xf]
  %v32 = vld [vmem:[%s1 + $0x28] sm:$0xf]
  %v33 = vld [vmem:[%s1 + $0x2c] sm:$0xf]
  %v34 = vld [vmem:[%s1 + $0x30] sm:$0xf]
  %v35 = vld [vmem:[%s1 + $0x34] sm:$0xf]
  %v36 = vld [vmem:[%s1 + $0x38] sm:$0xf]
  %v37 = vld [vmem:[%s1 + $0x3c] sm:$0xf]
  %v38 = vld [vmem:[%s2] sm:$0x1]
  %v39 = vunpack.c.l.bf16 %v38
  %v40 = vlaneseq
  %v41 = vshrl.u32 %v40, 7
  %v42 = vsub.s32 0, %v41
  %v43 = vrot.slane %v39, %v42
  %v48 = vunpack.c.l.b16 %v18
  %v49 = vunpack.c.l.b16 %v19
  %v50 = vunpack.c.l.b16 %v20
  %v51 = vunpack.c.l.b16 %v21
  %v52 = vpack.c.b16 %v49, %v48
  %v53 = vpack.c.b16 %v51, %v50
  %v72 = vunpack.c.l.b16 %v22
  %v73 = vunpack.c.l.b16 %v23
  %v74 = vunpack.c.l.b16 %v24
  %v75 = vunpack.c.l.b16 %v25
  %v76 = vunpack.c.l.b16 %v26
  %v77 = vunpack.c.l.b16 %v27
  %v78 = vunpack.c.l.b16 %v28
  %v79 = vunpack.c.l.b16 %v29
  %v80 = vunpack.c.l.b16 %v30
  %v81 = vunpack.c.l.b16 %v31
  %v82 = vunpack.c.l.b16 %v32
  %v83 = vunpack.c.l.b16 %v33
  %v84 = vunpack.c.l.b16 %v34
  %v85 = vunpack.c.l.b16 %v35
  %v86 = vunpack.c.l.b16 %v36
  %v87 = vunpack.c.l.b16 %v37
  %v88 = vpack.c.b16 %v73, %v72
  %v89 = vpack.c.b16 %v75, %v74
  %v90 = vpack.c.b16 %v77, %v76
  %v91 = vpack.c.b16 %v79, %v78
  %v92 = vpack.c.b16 %v81, %v80
  %v93 = vpack.c.b16 %v83, %v82
  %v94 = vpack.c.b16 %v85, %v84
  %v95 = vpack.c.b16 %v87, %v86
  %104 = vmatprep.subr.bf16.mxu0 0
  %105 = vmatpush1.bf16.msra.mxu0 %v88
  %106 = vmatprep.subr.bf16.mxu0 0
  %107 = vmatpush1.bf16.msra.mxu0 %v89
  %108 = vmatprep.subr.bf16.mxu0 0
  %109 = vmatpush1.bf16.msra.mxu0 %v90
  %110 = vmatprep.subr.bf16.mxu0 0
  %111 = vmatpush1.bf16.msra.mxu0 %v91
  %112 = vmatprep.subr.bf16.mxu0 0
  %113 = vmatpush1.bf16.msra.mxu0 %v92
  %114 = vmatprep.subr.bf16.mxu0 0
  %115 = vmatpush1.bf16.msra.mxu0 %v93
  %116 = vmatprep.subr.bf16.mxu0 0
  %117 = vmatpush1.bf16.msra.mxu0 %v94
  %118 = vmatprep.subr.bf16.mxu0 0
  %119 = vmatpush1.bf16.msra.mxu0 %v95
  %120 = vmatprep.subr.bf16.mxu0 0
  %121 = vmatpush1.bf16.msra.mxu0 0
  %122 = vmatprep.subr.bf16.mxu0 0
  %123 = vmatpush1.bf16.msra.mxu0 0
  %124 = vmatprep.subr.bf16.mxu0 0
  %125 = vmatpush1.bf16.msra.mxu0 0
  %126 = vmatprep.subr.bf16.mxu0 0
  %127 = vmatpush1.bf16.msra.mxu0 0
  %128 = vmatprep.subr.bf16.mxu0 0
  %129 = vmatpush1.bf16.msra.mxu0 0
  %130 = vmatprep.subr.bf16.mxu0 0
  %131 = vmatpush1.bf16.msra.mxu0 0
  %132 = vmatprep.subr.bf16.mxu0 0
  %133 = vmatpush1.bf16.msra.mxu0 0
  %134 = vmatprep.subr.bf16.mxu0 0
  %135 = vmatpush1.bf16.msra.mxu0 0
  %136 = vmatprep.mubr.bf16.mxu0 0
  %137 = vmatmul.mubr.bf16.gmra.mrb[0].mxu0 %v52
  %v138 = vpop.f32.mrb[0].mxu0
  %v139 = vadd.f32 %v43, %v138
  %v140 = vpop.f32.mrb[0].mxu0
  %v141 = vpop.f32.mrb[0].mxu0
  %v142 = vadd.f32 %v43, %v141
  %v143 = vpop.f32.mrb[0].mxu0
  %144 = vmatprep.mubr.bf16.mxu0 0
  %145 = vmatmul.mubr.bf16.gmra.mrb[0].mxu0 %v53
  %v146 = vpop.f32.mrb[0].mxu0
  %v147 = vadd.f32 %v43, %v146
  %v148 = vpop.f32.mrb[0].mxu0
  %v149 = vpop.f32.mrb[0].mxu0
  %v150 = vadd.f32 %v43, %v149
  %v151 = vpop.f32.mrb[0].mxu0
  %152 = vdwg.mxu0
  %v153 = vld [vmem:[%s3] sm:$0xf]
  %v154 = vld [vmem:[%s3 + $0x4] sm:$0xf]
  %v155 = vld [vmem:[%s3 + $0x8] sm:$0xf]
  %v156 = vld [vmem:[%s3 + $0xc] sm:$0xf]
  %v157 = vunpack.c.l.bf16 %v153
  %v158 = vunpack.c.l.bf16 %v154
  %v159 = vunpack.c.l.bf16 %v155
  %v160 = vunpack.c.l.bf16 %v156
  %v161 = vadd.f32 %v139, %v157
  %v162 = vadd.f32 %v142, %v158
  %v163 = vadd.f32 %v147, %v159
  %v164 = vadd.f32 %v150, %v160
  %v165 = vpack.c.bf16 %v162, %v161
  %v166 = vpack.c.bf16 %v164, %v163
  %v169 = vunpack.c.l.b16 %v165
  %v170 = vunpack.c.h.b16 %v165
  %v171 = vunpack.c.l.b16 %v166
  %v172 = vunpack.c.h.b16 %v166
  %v173 = vpack.c.b16 %v169, %v169
  %v174 = vpack.c.b16 %v170, %v170
  %v175 = vpack.c.b16 %v171, %v171
  %v176 = vpack.c.b16 %v172, %v172
  %181 = vst [vmem:[%s4] sm:$0xf] %v173
  %182 = vst [vmem:[%s4 + $0x4] sm:$0xf] %v174
  %183 = vst [vmem:[%s4 + $0x8] sm:$0xf] %v175
  %184 = vst [vmem:[%s4 + $0xc] sm:$0xf] %v176
  // Predicated region
  $region18: #{kosmos2_forward.22} parent=0 // pred_check
    _
  $region19: #{kosmos2_forward.22} parent=0 // pred_check_branch
    %186 = sbr.rel (0) target = $region21
  $region20: #{kosmos2_forward.22} parent=0 // pred_region
    _
  $region21: #{kosmos2_forward.22} parent=0 // pred_fallthru
    _
  // Predicated region
  $region22: #{kosmos2_forward.22} parent=0 // pred_check
    _
  $region23: #{kosmos2_forward.22} parent=0 // pred_check_branch
    %188 = sbr.rel (0) target = $region25
  $region24: #{kosmos2_forward.22} parent=0 // pred_region
    _
  $region25: #{kosmos2_forward.22} parent=0 // pred_fallthru
    _

// kernel: kosmos2_forward.21
$region0: #{kosmos2_forward.21}
  #allocation0 [shape = 'u32[]', space=smem, size = 0x4, offset = 0x4, fixed_abs, tag = 'smem constant byte address 0x4 - core index']
  #allocation1 [shape = 'u32[144,128]{1,0:T(1,128)}', space=vmem, size = 0x12000, scoped, tag = 'internal scratch']
  #allocation2 [shape = 'f32[16,1]{1,0:T(8,128)}', space=vmem, size = 0x2000, scoped, tag = 'scratch operand']
  #allocation3 [shape = 'f32[16,1]{1,0:T(8,128)}', space=vmem, size = 0x2000, scoped, tag = 'scratch operand']
  #allocation4 [shape = 'f32[16,128]{1,0:T(8,128)}', space=vmem, size = 0x2000, scoped, tag = 'scratch operand']
  #allocation5 [shape = 's32[1]{0}', space=sflag, size = 0x4, scoped, tag = 'scoped memory for kosmos2_forward.21']
  #allocation6 [shape = 'u8[512]{0}', space=smem, size = 0x200, scoped, tag = 'prefetched SMEM operand 0']
  %s0 = inlined_call_operand.vmem [shape: s32[2], index: 0, kind: input, shape index: {}]
  %s1 = inlined_call_operand.vmem [shape: bf16[2,1,16,128], index: 1, kind: input, shape index: {}]
  %s2 = inlined_call_operand.vmem [shape: bf16[2,1,16,128], index: 2, kind: input, shape index: {}]
  %s3 = inlined_call_operand.vmem [shape: bf16[2,1,16,128], index: 3, kind: input, shape index: {}]
  %s4 = inlined_call_operand.vmem [shape: bf16[2,1,16,128], index: 4, kind: output, shape index: {}]
  %s5 = sld [smem:[#allocation0]]
  $region53: #{kosmos2_forward.21} parent=0
    _
  %s7 = ssub.s32 1, %s5
  %s8 = scalar_select 0, %s7, %s5
  %s9 = sshll.u32 %s0, 4
  %s10 = int_to_ptr.vmem [resolvable:$true] %s9
  %12 = dma.vmem_to_smem %s10, 16, [#allocation6], [#allocation5]
  %13 = dma.done [#allocation5], 16
  %14 = sfence
  loop: start=0, step=1, limit=4
  $region2: #{kosmos2_forward.21} parent=0 // loop_pre_header
    _
  $region3: #{kosmos2_forward.21} parent=0 // loop_header
    %s16 = sphi 0, %s20
    %p17 = scmp.ge.s32.totalorder %s16, 4
    %s23 = sphi 0, %s49
    %s24 = sphi 0, %s45
    %s25 = sphi 0, %s41
    %s26 = sphi 0, %s37
    %s27 = sphi 0, %s23
    %s28 = sphi 0, %s24
    %s29 = sphi 0, %s25
    %s30 = sphi 0, %s26
    %s31 = sphi 0, %s27
    %s32 = sphi 0, %s28
    %s33 = sphi 0, %s29
    %s34 = sphi 0, %s30
    %s56 = sphi 0, %s58
    %s59 = sphi 0, %s56
    %s60 = sphi 0, %s59
    %s76 = sphi 0, %s60
    %s86 = sphi 0, %s88
    %s89 = sphi 0, %s86
    %s90 = sphi 0, %s89
    %s106 = sphi 0, %s90
    %s116 = sphi 0, %s118
    %s119 = sphi 0, %s116
    %s120 = sphi 0, %s119
    %s136 = sphi 0, %s120
    %s146 = sphi 0, %s148
    %s149 = sphi 0, %s146
    %s150 = sphi 0, %s149
    %s166 = sphi 0, %s150
  $region4: #{kosmos2_forward.21} parent=0 // loop_header_branch
    %19 = sbr.rel (%p17) target = $region8
  $region5: #{kosmos2_forward.21} parent=0 // loop_body
    %s21 = ssub.s32 %s16, 1
    %s22 = ssub.s32 %s16, 2
    %s35 = sadd.s32 1, %s26
    %p36 = scmp.ge.s32.totalorder %s35, 1
    %s37 = scalar_select %p36, 0, %s35
    %s38 = sadd.s32 1, %s25
    %s39 = scalar_select %p36, %s38, %s25
    %p40 = scmp.ge.s32.totalorder %s39, 1
    %s41 = scalar_select %p40, 0, %s39
    %s42 = sadd.s32 1, %s24
    %s43 = scalar_select %p40, %s42, %s24
    %p44 = scmp.ge.s32.totalorder %s43, 1
    %s45 = scalar_select %p44, 0, %s43
    %s46 = sadd.s32 1, %s23
    %s47 = scalar_select %p44, %s46, %s23
    %p48 = scmp.ge.s32.totalorder %s47, 2
    %s49 = scalar_select %p48, 0, %s47
    %s50 = ssub.s32 %s23, %s49
    %s51 = ssub.s32 %s24, %s45
    %s52 = sor.u32 %s50, %s51
    %s53 = ssub.s32 %s25, %s41
    %s54 = sor.u32 %s52, %s53
    %p55 = scmp.eq.s32.totalorder %s54, 0
    %s57 = sadd.s32 %s56, 1
    %s58 = scalar_select %p55, %s56, %s57
    %p61 = pneg %p55
    %p62 = scmp.eq.s32.totalorder %s16, 1
    %p63 = por %p61, %p62
    %p64 = scmp.ne.s32.totalorder %s56, %s59
    %p65 = scmp.eq.s32.totalorder %s16, 0
    %p66 = por %p64, %p65
    %p67 = scmp.ne.s32.totalorder %s56, %s59
    %p68 = scmp.eq.s32.totalorder %s21, 1
    %p69 = por %p67, %p68
    %p70 = scmp.ne.s32.totalorder %s59, %s60
    %p71 = scmp.eq.s32.totalorder %s21, 0
    %p72 = por %p70, %p71
    %p73 = scmp.ne.s32.totalorder %s59, %s60
    %p74 = scmp.eq.s32.totalorder %s22, 1
    %p75 = por %p73, %p74
    %p77 = scmp.ne.s32.totalorder %s60, %s76
    %p78 = scmp.eq.s32.totalorder %s22, 0
    %p79 = por %p77, %p78
    %s80 = ssub.s32 %s23, %s49
    %s81 = ssub.s32 %s24, %s45
    %s82 = sor.u32 %s80, %s81
    %s83 = ssub.s32 %s26, %s37
    %s84 = sor.u32 %s82, %s83
    %p85 = scmp.eq.s32.totalorder %s84, 0
    %s87 = sadd.s32 %s86, 1
    %s88 = scalar_select %p85, %s86, %s87
    %p91 = pneg %p85
    %p92 = scmp.eq.s32.totalorder %s16, 1
    %p93 = por %p91, %p92
    %p94 = scmp.ne.s32.totalorder %s86, %s89
    %p95 = scmp.eq.s32.totalorder %s16, 0
    %p96 = por %p94, %p95
    %p97 = scmp.ne.s32.totalorder %s86, %s89
    %p98 = scmp.eq.s32.totalorder %s21, 1
    %p99 = por %p97, %p98
    %p100 = scmp.ne.s32.totalorder %s89, %s90
    %p101 = scmp.eq.s32.totalorder %s21, 0
    %p102 = por %p100, %p101
    %p103 = scmp.ne.s32.totalorder %s89, %s90
    %p104 = scmp.eq.s32.totalorder %s22, 1
    %p105 = por %p103, %p104
    %p107 = scmp.ne.s32.totalorder %s90, %s106
    %p108 = scmp.eq.s32.totalorder %s22, 0
    %p109 = por %p107, %p108
    %s110 = ssub.s32 %s23, %s49
    %s111 = ssub.s32 %s24, %s45
    %s112 = sor.u32 %s110, %s111
    %s113 = ssub.s32 %s26, %s37
    %s114 = sor.u32 %s112, %s113
    %p115 = scmp.eq.s32.totalorder %s114, 0
    %s117 = sadd.s32 %s116, 1
    %s118 = scalar_select %p115, %s116, %s117
    %p121 = pneg %p115
    %p122 = scmp.eq.s32.totalorder %s16, 1
    %p123 = por %p121, %p122
    %p124 = scmp.ne.s32.totalorder %s116, %s119
    %p125 = scmp.eq.s32.totalorder %s16, 0
    %p126 = por %p124, %p125
    %p127 = scmp.ne.s32.totalorder %s116, %s119
    %p128 = scmp.eq.s32.totalorder %s21, 1
    %p129 = por %p127, %p128
    %p130 = scmp.ne.s32.totalorder %s119, %s120
    %p131 = scmp.eq.s32.totalorder %s21, 0
    %p132 = por %p130, %p131
    %p133 = scmp.ne.s32.totalorder %s119, %s120
    %p134 = scmp.eq.s32.totalorder %s22, 1
    %p135 = por %p133, %p134
    %p137 = scmp.ne.s32.totalorder %s120, %s136
    %p138 = scmp.eq.s32.totalorder %s22, 0
    %p139 = por %p137, %p138
    %s140 = ssub.s32 %s23, %s49
    %s141 = ssub.s32 %s24, %s45
    %s142 = sor.u32 %s140, %s141
    %s143 = ssub.s32 %s25, %s41
    %s144 = sor.u32 %s142, %s143
    %p145 = scmp.eq.s32.totalorder %s144, 0
    %s147 = sadd.s32 %s146, 1
    %s148 = scalar_select %p145, %s146, %s147
    %p151 = pneg %p145
    %p152 = scmp.eq.s32.totalorder %s16, 1
    %p153 = por %p151, %p152
    %p154 = scmp.ne.s32.totalorder %s146, %s149
    %p155 = scmp.eq.s32.totalorder %s16, 0
    %p156 = por %p154, %p155
    %p157 = scmp.ne.s32.totalorder %s146, %s149
    %p158 = scmp.eq.s32.totalorder %s21, 1
    %p159 = por %p157, %p158
    %p160 = scmp.ne.s32.totalorder %s149, %s150
    %p161 = scmp.eq.s32.totalorder %s21, 0
    %p162 = por %p160, %p161
    %p163 = scmp.ne.s32.totalorder %s149, %s150
    %p164 = scmp.eq.s32.totalorder %s22, 1
    %p165 = por %p163, %p164
    %p167 = scmp.ne.s32.totalorder %s150, %s166
    %p168 = scmp.eq.s32.totalorder %s22, 0
    %p169 = por %p167, %p168
    %p170 = scmp.le.s32.totalorder 1, %s16
    %p171 = scmp.lt.s32.totalorder %s16, 3
    %p172 = pnand %p170, %p171
    %p173 = pneg %p172
    // Predicated region
    $region9: #{kosmos2_forward.21} parent=5 // pred_check
      _
    $region10: #{kosmos2_forward.21} parent=5 // pred_check_branch
      %175 = sbr.rel (%p172) target = $region12
    $region11: #{kosmos2_forward.21} parent=5 // pred_region
      %s176 = ssub.s32 %s16, 1
    $region12: #{kosmos2_forward.21} parent=5 // pred_fallthru
      _
    %p177 = scmp.lt.s32.totalorder %s16, 2
    // Predicated region
    $region13: #{kosmos2_forward.21} parent=5 // pred_check
      %p178 = pneg %p177
    $region14: #{kosmos2_forward.21} parent=5 // pred_check_branch
      %180 = sbr.rel (%p178) target = $region16
    $region15: #{kosmos2_forward.21} parent=5 // pred_region
      // Predicated region
      $region17: #{kosmos2_forward.21} parent=15 // pred_check
        %p181 = pneg %p66
      $region18: #{kosmos2_forward.21} parent=15 // pred_check_branch
        %183 = sbr.rel (%p181) target = $region20
      $region19: #{kosmos2_forward.21} parent=15 // pred_region
        %s184 = smul.u32 2, %s25
        %p185 = scmp.lt.s32.totalorder %s23, 1
        %s186 = scalar_select %p185, %s23, 1
        %p187 = scmp.lt.s32.totalorder %s24, 0
        %s188 = scalar_select %p187, %s24, 0
        %p189 = scmp.lt.s32.totalorder %s184, 1
        %s190 = scalar_select %p189, %s184, 1
        %s191 = smul.addr %s188, 2
        %s192 = sadd.s32 %s190, %s191
        %s193 = smul.addr %s186, 2
        %s194 = sadd.s32 %s192, %s193
        %s195 = smul.addr %s194, 4
        %s196 = scalar_lea.vmem %s1, %s195
        %s197 = smul.u32 2, %s25
      $region20: #{kosmos2_forward.21} parent=15 // pred_fallthru
        _
      // Predicated region
      $region21: #{kosmos2_forward.21} parent=15 // pred_check
        %p198 = pneg %p96
      $region22: #{kosmos2_forward.21} parent=15 // pred_check_branch
        %200 = sbr.rel (%p198) target = $region24
      $region23: #{kosmos2_forward.21} parent=15 // pred_region
        %s201 = smul.u32 2, %s26
        %p202 = scmp.lt.s32.totalorder %s23, 1
        %s203 = scalar_select %p202, %s23, 1
        %p204 = scmp.lt.s32.totalorder %s24, 0
        %s205 = scalar_select %p204, %s24, 0
        %p206 = scmp.lt.s32.totalorder %s201, 1
        %s207 = scalar_select %p206, %s201, 1
        %s208 = smul.addr %s205, 2
        %s209 = sadd.s32 %s207, %s208
        %s210 = smul.addr %s203, 2
        %s211 = sadd.s32 %s209, %s210
        %s212 = smul.addr %s211, 4
        %s213 = scalar_lea.vmem %s2, %s212
        %s214 = smul.u32 2, %s26
      $region24: #{kosmos2_forward.21} parent=15 // pred_fallthru
        _
      // Predicated region
      $region25: #{kosmos2_forward.21} parent=15 // pred_check
        %p215 = pneg %p126
      $region26: #{kosmos2_forward.21} parent=15 // pred_check_branch
        %217 = sbr.rel (%p215) target = $region28
      $region27: #{kosmos2_forward.21} parent=15 // pred_region
        %s218 = smul.u32 2, %s26
        %p219 = scmp.lt.s32.totalorder %s23, 1
        %s220 = scalar_select %p219, %s23, 1
        %p221 = scmp.lt.s32.totalorder %s24, 0
        %s222 = scalar_select %p221, %s24, 0
        %p223 = scmp.lt.s32.totalorder %s218, 1
        %s224 = scalar_select %p223, %s218, 1
        %s225 = smul.addr %s222, 2
        %s226 = sadd.s32 %s224, %s225
        %s227 = smul.addr %s220, 2
        %s228 = sadd.s32 %s226, %s227
        %s229 = smul.addr %s228, 4
        %s230 = scalar_lea.vmem %s3, %s229
        %s231 = smul.u32 2, %s26
      $region28: #{kosmos2_forward.21} parent=15 // pred_fallthru
        _
    $region16: #{kosmos2_forward.21} parent=5 // pred_fallthru
      _
    %p232 = scmp.le.s32.totalorder 1, %s16
    %p233 = scmp.lt.s32.totalorder %s16, 3
    %p234 = pnand %p232, %p233
    %p235 = pneg %p234
    // Predicated region
    $region29: #{kosmos2_forward.21} parent=5 // pred_check
      _
    $region30: #{kosmos2_forward.21} parent=5 // pred_check_branch
      %237 = sbr.rel (%p234) target = $region32
    $region31: #{kosmos2_forward.21} parent=5 // pred_region
      %s238 = ssub.s32 %s16, 1
      %s239 = smul.u32 2, %s29
      %p240 = scmp.lt.s32.totalorder %s27, 1
      %s241 = scalar_select %p240, %s27, 1
      %p242 = scmp.lt.s32.totalorder %s28, 0
      %s243 = scalar_select %p242, %s28, 0
      %p244 = scmp.lt.s32.totalorder %s239, 1
      %s245 = scalar_select %p244, %s239, 1
      %s246 = smul.addr %s243, 2
      %s247 = sadd.s32 %s245, %s246
      %s248 = smul.addr %s241, 2
      %s249 = sadd.s32 %s247, %s248
      %s250 = smul.addr %s249, 4
      %s251 = scalar_lea.vmem %s1, %s250
      %p252 = pneg %p72
      %p253 = pneg %p69
      %s254 = smul.u32 2, %s30
      %p255 = scmp.lt.s32.totalorder %s27, 1
      %s256 = scalar_select %p255, %s27, 1
      %p257 = scmp.lt.s32.totalorder %s28, 0
      %s258 = scalar_select %p257, %s28, 0
      %p259 = scmp.lt.s32.totalorder %s254, 1
      %s260 = scalar_select %p259, %s254, 1
      %s261 = smul.addr %s258, 2
      %s262 = sadd.s32 %s260, %s261
      %s263 = smul.addr %s256, 2
      %s264 = sadd.s32 %s262, %s263
      %s265 = smul.addr %s264, 4
      %s266 = scalar_lea.vmem %s2, %s265
      %p267 = pneg %p102
      %p268 = pneg %p99
      %s269 = smul.u32 2, %s30
      %p270 = scmp.lt.s32.totalorder %s27, 1
      %s271 = scalar_select %p270, %s27, 1
      %p272 = scmp.lt.s32.totalorder %s28, 0
      %s273 = scalar_select %p272, %s28, 0
      %p274 = scmp.lt.s32.totalorder %s269, 1
      %s275 = scalar_select %p274, %s269, 1
      %s276 = smul.addr %s273, 2
      %s277 = sadd.s32 %s275, %s276
      %s278 = smul.addr %s271, 2
      %s279 = sadd.s32 %s277, %s278
      %s280 = smul.addr %s279, 4
      %s281 = scalar_lea.vmem %s3, %s280
      %p282 = pneg %p132
      %p283 = pneg %p129
      %p284 = pneg %p162
      %p285 = pneg %p159
      %s286 = smul.u32 2, %s29
      %p287 = scmp.lt.s32.totalorder %s27, 1
      %s288 = scalar_select %p287, %s27, 1
      %p289 = scmp.lt.s32.totalorder %s28, 0
      %s290 = scalar_select %p289, %s28, 0
      %p291 = scmp.lt.s32.totalorder %s286, 1
      %s292 = scalar_select %p291, %s286, 1
      %s293 = smul.addr %s290, 2
      %s294 = sadd.s32 %s292, %s293
      %s295 = smul.addr %s288, 2
      %s296 = sadd.s32 %s294, %s295
      %s297 = smul.addr %s296, 4
      %s298 = scalar_lea.vmem %s4, %s297
      %s299 = smul.u32 2, %s29
      %p300 = scmp.lt.s32.totalorder %s27, 1
      %s301 = scalar_select %p300, %s27, 1
      %p302 = scmp.lt.s32.totalorder %s28, 0
      %s303 = scalar_select %p302, %s28, 0
      %p304 = scmp.lt.s32.totalorder %s299, 1
      %s305 = scalar_select %p304, %s299, 1
      %s306 = smul.addr %s303, 2
      %s307 = sadd.s32 %s305, %s306
      %s308 = smul.addr %s301, 2
      %s309 = sadd.s32 %s307, %s308
      %s310 = smul.addr %s309, 4
      %s311 = scalar_lea.vmem %s1, %s310
      %s312 = smul.u32 2, %s29
      %s313 = smul.u32 2, %s30
      %p314 = scmp.lt.s32.totalorder %s27, 1
      %s315 = scalar_select %p314, %s27, 1
      %p316 = scmp.lt.s32.totalorder %s28, 0
      %s317 = scalar_select %p316, %s28, 0
      %p318 = scmp.lt.s32.totalorder %s313, 1
      %s319 = scalar_select %p318, %s313, 1
      %s320 = smul.addr %s317, 2
      %s321 = sadd.s32 %s319, %s320
      %s322 = smul.addr %s315, 2
      %s323 = sadd.s32 %s321, %s322
      %s324 = smul.addr %s323, 4
      %s325 = scalar_lea.vmem %s2, %s324
      %s326 = smul.u32 2, %s30
      %s327 = smul.u32 2, %s30
      %p328 = scmp.lt.s32.totalorder %s27, 1
      %s329 = scalar_select %p328, %s27, 1
      %p330 = scmp.lt.s32.totalorder %s28, 0
      %s331 = scalar_select %p330, %s28, 0
      %p332 = scmp.lt.s32.totalorder %s327, 1
      %s333 = scalar_select %p332, %s327, 1
      %s334 = smul.addr %s331, 2
      %s335 = sadd.s32 %s333, %s334
      %s336 = smul.addr %s329, 2
      %s337 = sadd.s32 %s335, %s336
      %s338 = smul.addr %s337, 4
      %s339 = scalar_lea.vmem %s3, %s338
      %s340 = smul.u32 2, %s30
      %s341 = smul.u32 2, %s29
      %p342 = scmp.lt.s32.totalorder %s27, 1
      %s343 = scalar_select %p342, %s27, 1
      %p344 = scmp.lt.s32.totalorder %s28, 0
      %s345 = scalar_select %p344, %s28, 0
      %p346 = scmp.lt.s32.totalorder %s341, 1
      %s347 = scalar_select %p346, %s341, 1
      %s348 = smul.addr %s345, 2
      %s349 = sadd.s32 %s347, %s348
      %s350 = smul.addr %s343, 2
      %s351 = sadd.s32 %s349, %s350
      %s352 = smul.addr %s351, 4
      %s353 = scalar_lea.vmem %s4, %s352
      %s354 = smul.u32 2, %s29
      %p356 = scmp.eq.s32.totalorder %s30, 0
      // Predicated region
      $region33: #{kosmos2_forward.21} parent=31 // pred_check
        %p357 = pneg %p356
      $region34: #{kosmos2_forward.21} parent=31 // pred_check_branch
        %359 = sbr.rel (%p357) target = $region36
      $region35: #{kosmos2_forward.21} parent=31 // pred_region
        %vm360 = vcmask 7168
        %361 = vst.msk [vmem:[#allocation2] sm:$0xff] %vm360, -1e+30
        %362 = vst.msk [vmem:[#allocation2 + $0x8] sm:$0xff] %vm360, -1e+30
        %363 = vst.msk [vmem:[#allocation3] sm:$0xff] %vm360, 0.0
        %364 = vst.msk [vmem:[#allocation3 + $0x8] sm:$0xff] %vm360, 0.0
        %365 = vst [vmem:[#allocation4] sm:$0xff] 0.0
        %366 = vst [vmem:[#allocation4 + $0x8] sm:$0xff] 0.0
      $region36: #{kosmos2_forward.21} parent=31 // pred_fallthru
        _
      %v367 = vld [vmem:[%s311] sm:$0xf]
      %v368 = vld [vmem:[%s311 + $0x4] sm:$0xf]
      %v369 = vld [vmem:[%s325] sm:$0xf]
      %v370 = vld [vmem:[%s325 + $0x4] sm:$0xf]
      %v371 = vld [vmem:[%s339] sm:$0xf]
      %v372 = vld [vmem:[%s339 + $0x4] sm:$0xf]
      %v375 = vunpack.c.l.b16 %v367
      %v376 = vunpack.c.l.b16 %v368
      %v377 = vpack.c.b16 %v376, %v375
      %v381 = vunpack.c.l.b16 %v369
      %v382 = vunpack.c.l.b16 %v370
      %v383 = vpack.c.b16 %v382, %v381
      %385 = vmatprep.subr.bf16.mxu0 0
      %386 = vmatpush1.bf16.xpose.msra.mxu0 %v383
      %387 = vmatprep.subr.bf16.mxu0 0
      %388 = vmatpush1.bf16.xpose.msra.mxu0 0
      %389 = vmatprep.subr.bf16.mxu0 0
      %390 = vmatpush1.bf16.xpose.msra.mxu0 0
      %391 = vmatprep.subr.bf16.mxu0 0
      %392 = vmatpush1.bf16.xpose.msra.mxu0 0
      %393 = vmatprep.subr.bf16.mxu0 0
      %394 = vmatpush1.bf16.xpose.msra.mxu0 0
      %395 = vmatprep.subr.bf16.mxu0 0
      %396 = vmatpush1.bf16.xpose.msra.mxu0 0
      %397 = vmatprep.subr.bf16.mxu0 0
      %398 = vmatpush1.bf16.xpose.msra.mxu0 0
      %399 = vmatprep.subr.bf16.mxu0 0
      %400 = vmatpush1.bf16.xpose.msra.mxu0 0
      %401 = vmatprep.subr.bf16.mxu0 0
      %402 = vmatpush1.bf16.xpose.msra.mxu0 0
      %403 = vmatprep.subr.bf16.mxu0 0
      %404 = vmatpush1.bf16.xpose.msra.mxu0 0
      %405 = vmatprep.subr.bf16.mxu0 0
      %406 = vmatpush1.bf16.xpose.msra.mxu0 0
      %407 = vmatprep.subr.bf16.mxu0 0
      %408 = vmatpush1.bf16.xpose.msra.mxu0 0
      %409 = vmatprep.subr.bf16.mxu0 0
      %410 = vmatpush1.bf16.xpose.msra.mxu0 0
      %411 = vmatprep.subr.bf16.mxu0 0
      %412 = vmatpush1.bf16.xpose.msra.mxu0 0
      %413 = vmatprep.subr.bf16.mxu0 0
      %414 = vmatpush1.bf16.xpose.msra.mxu0 0
      %415 = vmatprep.subr.bf16.mxu0 0
      %416 = vmatpush1.bf16.xpose.msra.mxu0 0
      %417 = vmatprep.mubr.bf16.mxu0 0
      %418 = vmatmul.mubr.bf16.gmra.mrb[0].mxu0 %v377
      %v419 = vpop.f32.mrb[0].mxu0
      %v420 = vadd.f32 0.0, %v419
      %v421 = vpop.f32.mrb[0].mxu0
      %v422 = vpop.f32.mrb[0].mxu0
      %v423 = vadd.f32 0.0, %v422
      %v424 = vpop.f32.mrb[0].mxu0
      %425 = vdwg.mxu0
      %v426 = vmul.f32 %v420, 0.088388346
      %v427 = vmul.f32 %v423, 0.088388346
      %s428 = sld [smem:[#allocation6 + %s27]]
      %s429 = smul.u32 %s30, 16
      %v430 = vlaneseq
      %v431 = vand.u32 %v430, 127
      %v432 = vstv %s429
      %v433 = vadd.s32 %v432, %v431
      %v434 = vstv %s428
      %vm435 = vcmp.lt.s32.totalorder %v433, %v434
      %v436 = vsel %vm435, %v426, -1e+30
      %v437 = vsel %vm435, %v427, -1e+30
      %v438 = vld [vmem:[#allocation2] sm:$0xff]
      %v439 = vld [vmem:[#allocation2 + $0x8] sm:$0xff]
      %vm440 = vcmask 130048
      %v441 = vsel %vm440, %v436, -inf
      %442 = vmax.xlane.f32.xlu0 %v441
      %v443 = vpop.xlane.xlu0 %442
      %v444 = vsel %vm440, %v437, -inf
      %445 = vmax.xlane.f32.xlu0 %v444
      %v446 = vpop.xlane.xlu0 %445
      %v447 = vmax.f32 %v438, %v443
      %v448 = vmax.f32 %v439, %v446
      %v449 = vsub.f32 %v438, %v447
      %v450 = vsub.f32 %v439, %v448
      %v451 = vmul.f32 %v449, 1.442695
      %v452 = vpow.pop %v451
      %v453 = vmul.f32 %v450, 1.442695
      %v454 = vpow.pop %v453
      %456 = vset.pattern.permute.xlu0 0
      %457 = vperm.xlu0 %456, %v447
      %v458 = vpop.permute.xlu0 %457
      %461 = vset.pattern.permute.xlu0 0
      %462 = vperm.xlu0 %461, %v448
      %v463 = vpop.permute.xlu0 %462
      %v465 = vsub.f32 %v436, %v458
      %v466 = vsub.f32 %v437, %v463
      %v467 = vmul.f32 %v465, 1.442695
      %v468 = vpow.pop %v467
      %v469 = vmul.f32 %v466, 1.442695
      %v470 = vpow.pop %v469
      %v471 = vld [vmem:[#allocation3] sm:$0xff]
      %v472 = vld [vmem:[#allocation3 + $0x8] sm:$0xff]
      %v473 = vmul.f32 %v452, %v471
      %v474 = vmul.f32 %v454, %v472
      %v475 = vsel %vm440, %v468, 0.0
      %476 = vadd.xlane.f32.xlu0 %v475
      %v477 = vpop.xlane.xlu0 %476
      %v478 = vsel %vm440, %v470, 0.0
      %479 = vadd.xlane.f32.xlu0 %v478
      %v480 = vpop.xlane.xlu0 %479
      %v481 = vadd.f32 %v473, %v477
      %v482 = vadd.f32 %v474, %v480
      %vm483 = vcmask 7168
      %484 = vst.msk [vmem:[#allocation3] sm:$0xff] %vm483, %v481
      %485 = vst.msk [vmem:[#allocation3 + $0x8] sm:$0xff] %vm483, %v482
      %v486 = vld [vmem:[#allocation4] sm:$0xff]
      %v487 = vld [vmem:[#allocation4 + $0x8] sm:$0xff]
      %489 = vset.pattern.permute.xlu0 0
      %490 = vperm.xlu0 %489, %v452
      %v491 = vpop.permute.xlu0 %490
      %494 = vset.pattern.permute.xlu0 0
      %495 = vperm.xlu0 %494, %v454
      %v496 = vpop.permute.xlu0 %495
      %v498 = vmul.f32 %v491, %v486
      %v499 = vmul.f32 %v496, %v487
      %v500 = vpack.c.bf16 %v470, %v468
      %v503 = vunpack.c.l.b16 %v371
      %v504 = vunpack.c.l.b16 %v372
      %v505 = vpack.c.b16 %v504, %v503
      %v508 = vsel %vm440, %v500, 0
      %510 = vmatprep.subr.bf16.mxu0 0
      %511 = vmatpush1.bf16.msra.mxu0 %v505
      %512 = vmatprep.subr.bf16.mxu0 0
      %513 = vmatpush1.bf16.msra.mxu0 0
      %514 = vmatprep.subr.bf16.mxu0 0
      %515 = vmatpush1.bf16.msra.mxu0 0
      %516 = vmatprep.subr.bf16.mxu0 0
      %517 = vmatpush1.bf16.msra.mxu0 0
      %518 = vmatprep.subr.bf16.mxu0 0
      %519 = vmatpush1.bf16.msra.mxu0 0
      %520 = vmatprep.subr.bf16.mxu0 0
      %521 = vmatpush1.bf16.msra.mxu0 0
      %522 = vmatprep.subr.bf16.mxu0 0
      %523 = vmatpush1.bf16.msra.mxu0 0
      %524 = vmatprep.subr.bf16.mxu0 0
      %525 = vmatpush1.bf16.msra.mxu0 0
      %526 = vmatprep.subr.bf16.mxu0 0
      %527 = vmatpush1.bf16.msra.mxu0 0
      %528 = vmatprep.subr.bf16.mxu0 0
      %529 = vmatpush1.bf16.msra.mxu0 0
      %530 = vmatprep.subr.bf16.mxu0 0
      %531 = vmatpush1.bf16.msra.mxu0 0
      %532 = vmatprep.subr.bf16.mxu0 0
      %533 = vmatpush1.bf16.msra.mxu0 0
      %534 = vmatprep.subr.bf16.mxu0 0
      %535 = vmatpush1.bf16.msra.mxu0 0
      %536 = vmatprep.subr.bf16.mxu0 0
      %537 = vmatpush1.bf16.msra.mxu0 0
      %538 = vmatprep.subr.bf16.mxu0 0
      %539 = vmatpush1.bf16.msra.mxu0 0
      %540 = vmatprep.subr.bf16.mxu0 0
      %541 = vmatpush1.bf16.msra.mxu0 0
      %542 = vmatprep.mubr.bf16.mxu0 0
      %543 = vmatmul.mubr.bf16.gmra.mrb[0].mxu0 %v508
      %v544 = vpop.f32.mrb[0].mxu0
      %v545 = vadd.f32 0.0, %v544
      %v546 = vpop.f32.mrb[0].mxu0
      %v547 = vpop.f32.mrb[0].mxu0
      %v548 = vadd.f32 0.0, %v547
      %v549 = vpop.f32.mrb[0].mxu0
      %550 = vdwg.mxu0
      %v551 = vadd.f32 %v498, %v545
      %v552 = vadd.f32 %v499, %v548
      %553 = vst [vmem:[#allocation4] sm:$0xff] %v551
      %554 = vst [vmem:[#allocation4 + $0x8] sm:$0xff] %v552
      %555 = vst.msk [vmem:[#allocation2] sm:$0xff] %vm483, %v447
      %556 = vst.msk [vmem:[#allocation2 + $0x8] sm:$0xff] %vm483, %v448
      // Predicated region
      $region37: #{kosmos2_forward.21} parent=31 // pred_check
        %p557 = pneg %p356
      $region38: #{kosmos2_forward.21} parent=31 // pred_check_branch
        %559 = sbr.rel (%p557) target = $region40
      $region39: #{kosmos2_forward.21} parent=31 // pred_region
        %v560 = vld [vmem:[#allocation3] sm:$0xff]
        %v561 = vld [vmem:[#allocation3 + $0x8] sm:$0xff]
        %v562 = vrcp.pop %v560
        %v563 = vrcp.pop %v561
        %v564 = vld [vmem:[#allocation4] sm:$0xff]
        %v565 = vld [vmem:[#allocation4 + $0x8] sm:$0xff]
        %567 = vset.pattern.permute.xlu0 0
        %568 = vperm.xlu0 %567, %v562
        %v569 = vpop.permute.xlu0 %568
        %572 = vset.pattern.permute.xlu0 0
        %573 = vperm.xlu0 %572, %v563
        %v574 = vpop.permute.xlu0 %573
        %v576 = vmul.f32 %v564, %v569
        %v577 = vmul.f32 %v565, %v574
        %v578 = vpack.c.bf16 %v577, %v576
        %v580 = vunpack.c.l.b16 %v578
        %v581 = vunpack.c.h.b16 %v578
        %v582 = vpack.c.b16 %v580, %v580
        %v583 = vpack.c.b16 %v581, %v581
        %586 = vst [vmem:[%s353] sm:$0xf] %v582
        %587 = vst [vmem:[%s353 + $0x4] sm:$0xf] %v583
      $region40: #{kosmos2_forward.21} parent=31 // pred_fallthru
        _
      %s588 = smul.u32 2, %s29
      %p589 = scmp.lt.s32.totalorder %s27, 1
      %s590 = scalar_select %p589, %s27, 1
      %p591 = scmp.lt.s32.totalorder %s28, 0
      %s592 = scalar_select %p591, %s28, 0
      %p593 = scmp.lt.s32.totalorder %s588, 1
      %s594 = scalar_select %p593, %s588, 1
      %s595 = smul.addr %s592, 2
      %s596 = sadd.s32 %s594, %s595
      %s597 = smul.addr %s590, 2
      %s598 = sadd.s32 %s596, %s597
      %s599 = smul.addr %s598, 4
      %s600 = scalar_lea.vmem %s4, %s599
      // Predicated region
      $region41: #{kosmos2_forward.21} parent=31 // pred_check
        %p601 = pneg %p159
      $region42: #{kosmos2_forward.21} parent=31 // pred_check_branch
        %603 = sbr.rel (%p601) target = $region44
      $region43: #{kosmos2_forward.21} parent=31 // pred_region
        %s604 = smul.u32 2, %s29
      $region44: #{kosmos2_forward.21} parent=31 // pred_fallthru
        _
    $region32: #{kosmos2_forward.21} parent=5 // pred_fallthru
      _
    %p605 = scmp.le.s32.totalorder 2, %s16
    // Predicated region
    $region45: #{kosmos2_forward.21} parent=5 // pred_check
      %p606 = pneg %p605
    $region46: #{kosmos2_forward.21} parent=5 // pred_check_branch
      %608 = sbr.rel (%p606) target = $region48
    $region47: #{kosmos2_forward.21} parent=5 // pred_region
      %s609 = ssub.s32 %s16, 2
      // Predicated region
      $region49: #{kosmos2_forward.21} parent=47 // pred_check
        %p610 = pneg %p165
      $region50: #{kosmos2_forward.21} parent=47 // pred_check_branch
        %612 = sbr.rel (%p610) target = $region52
      $region51: #{kosmos2_forward.21} parent=47 // pred_region
        %s613 = smul.u32 2, %s33
        %p614 = scmp.lt.s32.totalorder %s31, 1
        %s615 = scalar_select %p614, %s31, 1
        %p616 = scmp.lt.s32.totalorder %s32, 0
        %s617 = scalar_select %p616, %s32, 0
        %p618 = scmp.lt.s32.totalorder %s613, 1
        %s619 = scalar_select %p618, %s613, 1
        %s620 = smul.addr %s617, 2
        %s621 = sadd.s32 %s619, %s620
        %s622 = smul.addr %s615, 2
        %s623 = sadd.s32 %s621, %s622
        %s624 = smul.addr %s623, 4
        %s625 = scalar_lea.vmem %s4, %s624
      $region52: #{kosmos2_forward.21} parent=47 // pred_fallthru
        _
    $region48: #{kosmos2_forward.21} parent=5 // pred_fallthru
      _
  $region6: #{kosmos2_forward.21} parent=0 // loop_footer
    %s20 = sadd.s32 1, %s16
  $region7: #{kosmos2_forward.21} parent=0 // loop_footer_branch
    %15 = sbr.rel target = $region3
  $region8: #{kosmos2_forward.21} parent=0 // loop_exit
    _

// kernel: kosmos2_forward.28
$region0: #{kosmos2_forward.28}
  #allocation0 [shape = 'u32[]', space=smem, size = 0x4, offset = 0x4, fixed_abs, tag = 'smem constant byte address 0x4 - core index']
  #allocation1 [shape = 'u32[144,128]{1,0:T(1,128)}', space=vmem, size = 0x12000, scoped, tag = 'internal scratch']
  %s0 = inlined_call_operand.vmem [shape: bf16[32,128], index: 0, kind: input, shape index: {}]
  %s1 = inlined_call_operand.vmem [shape: bf16[1,128], index: 1, kind: input, shape index: {}]
  %s2 = inlined_call_operand.vmem [shape: bf16[1,128], index: 2, kind: input, shape index: {}]
  %s3 = inlined_call_operand.vmem [shape: bf16[128,256], index: 3, kind: input, shape index: {}]
  %s4 = inlined_call_operand.vmem [shape: bf16[1,256], index: 4, kind: input, shape index: {}]
  %s5 = inlined_call_operand.vmem [shape: bf16[32,256], index: 5, kind: output, shape index: {}]
  %s6 = sld [smem:[#allocation0]]
  $region30: #{kosmos2_forward.28} parent=0
    _
  %s8 = ssub.s32 1, %s6
  %s9 = scalar_select 0, %s8, %s6
  // Predicated region
  $region2: #{kosmos2_forward.28} parent=0 // pred_check
    _
  $region3: #{kosmos2_forward.28} parent=0 // pred_check_branch
    %11 = sbr.rel (0) target = $region5
  $region4: #{kosmos2_forward.28} parent=0 // pred_region
    _
  $region5: #{kosmos2_forward.28} parent=0 // pred_fallthru
    _
  // Predicated region
  $region6: #{kosmos2_forward.28} parent=0 // pred_check
    _
  $region7: #{kosmos2_forward.28} parent=0 // pred_check_branch
    %13 = sbr.rel (0) target = $region9
  $region8: #{kosmos2_forward.28} parent=0 // pred_region
    _
  $region9: #{kosmos2_forward.28} parent=0 // pred_fallthru
    _
  // Predicated region
  $region10: #{kosmos2_forward.28} parent=0 // pred_check
    _
  $region11: #{kosmos2_forward.28} parent=0 // pred_check_branch
    %15 = sbr.rel (0) target = $region13
  $region12: #{kosmos2_forward.28} parent=0 // pred_region
    _
  $region13: #{kosmos2_forward.28} parent=0 // pred_fallthru
    _
  // Predicated region
  $region14: #{kosmos2_forward.28} parent=0 // pred_check
    _
  $region15: #{kosmos2_forward.28} parent=0 // pred_check_branch
    %17 = sbr.rel (0) target = $region17
  $region16: #{kosmos2_forward.28} parent=0 // pred_region
    _
  $region17: #{kosmos2_forward.28} parent=0 // pred_fallthru
    _
  // Predicated region
  $region18: #{kosmos2_forward.28} parent=0 // pred_check
    _
  $region19: #{kosmos2_forward.28} parent=0 // pred_check_branch
    %19 = sbr.rel (0) target = $region21
  $region20: #{kosmos2_forward.28} parent=0 // pred_region
    _
  $region21: #{kosmos2_forward.28} parent=0 // pred_fallthru
    _
  %v21 = vld [vmem:[%s0] sm:$0xf]
  %v22 = vld [vmem:[%s0 + $0x4] sm:$0xf]
  %v23 = vld [vmem:[%s0 + $0x8] sm:$0xf]
  %v24 = vld [vmem:[%s0 + $0xc] sm:$0xf]
  %v25 = vunpack.c.l.bf16 %v21
  %v26 = vunpack.c.l.bf16 %v22
  %v27 = vunpack.c.l.bf16 %v23
  %v28 = vunpack.c.l.bf16 %v24
  %29 = vadd.xlane.f32.xlu0 %v25
  %v30 = vpop.xlane.xlu0 %29
  %31 = vadd.xlane.f32.xlu0 %v26
  %v32 = vpop.xlane.xlu0 %31
  %33 = vadd.xlane.f32.xlu0 %v27
  %v34 = vpop.xlane.xlu0 %33
  %35 = vadd.xlane.f32.xlu0 %v28
  %v36 = vpop.xlane.xlu0 %35
  %v37 = vrcp.pop 128.0
  %v38 = vmul.f32 %v30, %v37
  %v39 = vmul.f32 %v32, %v37
  %v40 = vmul.f32 %v34, %v37
  %v41 = vmul.f32 %v36, %v37
  %v42 = vsub.f32 %v25, %v38
  %v43 = vsub.f32 %v26, %v39
  %v44 = vsub.f32 %v27, %v40
  %v45 = vsub.f32 %v28, %v41
  %v46 = vmul.f32 %v42, %v42
  %v47 = vmul.f32 %v43, %v43
  %v48 = vmul.f32 %v44, %v44
  %v49 = vmul.f32 %v45, %v45
  %50 = vadd.xlane.f32.xlu0 %v46
  %v51 = vpop.xlane.xlu0 %50
  %52 = vadd.xlane.f32.xlu0 %v47
  %v53 = vpop.xlane.xlu0 %52
  %54 = vadd.xlane.f32.xlu0 %v48
  %v55 = vpop.xlane.xlu0 %54
  %56 = vadd.xlane.f32.xlu0 %v49
  %v57 = vpop.xlane.xlu0 %56
  %v58 = vmul.f32 %v51, %v37
  %v59 = vmul.f32 %v53, %v37
  %v60 = vmul.f32 %v55, %v37
  %v61 = vmul.f32 %v57, %v37
  %v62 = vadd.f32 %v58, 1e-05
  %v63 = vadd.f32 %v59, 1e-05
  %v64 = vadd.f32 %v60, 1e-05
  %v65 = vadd.f32 %v61, 1e-05
  %v66 = vrsqrt.pop %v62
  %v67 = vrsqrt.pop %v63
  %v68 = vrsqrt.pop %v64
  %v69 = vrsqrt.pop %v65
  %v70 = vmul.f32 %v42, %v66
  %v71 = vmul.f32 %v43, %v67
  %v72 = vmul.f32 %v44, %v68
  %v73 = vmul.f32 %v45, %v69
  %v74 = vld [vmem:[%s1] sm:$0x1]
  %v75 = vunpack.c.l.bf16 %v74
  %v76 = vlaneseq
  %v77 = vshrl.u32 %v76, 7
  %v78 = vsub.s32 0, %v77
  %v79 = vrot.slane %v75, %v78
  %v80 = vmul.f32 %v70, %v79
  %v81 = vmul.f32 %v71, %v79
  %v82 = vmul.f32 %v72, %v79
  %v83 = vmul.f32 %v73, %v79
  %v84 = vld [vmem:[%s2] sm:$0x1]
  %v85 = vunpack.c.l.bf16 %v84
  %v86 = vlaneseq
  %v87 = vshrl.u32 %v86, 7
  %v88 = vsub.s32 0, %v87
  %v89 = vrot.slane %v85, %v88
  %v90 = vadd.f32 %v80, %v89
  %v91 = vadd.f32 %v81, %v89
  %v92 = vadd.f32 %v82, %v89
  %v93 = vadd.f32 %v83, %v89
  %v94 = vpack.c.bf16 %v91, %v90
  %v95 = vpack.c.bf16 %v93, %v92
  %v96 = vld [vmem:[%s3] sm:$0xff]
  %v97 = vld [vmem:[%s3 + $0x8] sm:$0xff]
  %v98 = vld [vmem:[%s3 + $0x10] sm:$0xff]
  %v99 = vld [vmem:[%s3 + $0x18] sm:$0xff]
  %v100 = vld [vmem:[%s3 + $0x20] sm:$0xff]
  %v101 = vld [vmem:[%s3 + $0x28] sm:$0xff]
  %v102 = vld [vmem:[%s3 + $0x30] sm:$0xff]
  %v103 = vld [vmem:[%s3 + $0x38] sm:$0xff]
  %v104 = vld [vmem:[%s3 + $0x40] sm:$0xff]
  %v105 = vld [vmem:[%s3 + $0x48] sm:$0xff]
  %v106 = vld [vmem:[%s3 + $0x50] sm:$0xff]
  %v107 = vld [vmem:[%s3 + $0x58] sm:$0xff]
  %v108 = vld [vmem:[%s3 + $0x60] sm:$0xff]
  %v109 = vld [vmem:[%s3 + $0x68] sm:$0xff]
  %v110 = vld [vmem:[%s3 + $0x70] sm:$0xff]
  %v111 = vld [vmem:[%s3 + $0x78] sm:$0xff]
  %v112 = vld [vmem:[%s4] sm:$0x3]
  %v113 = vunpack.c.l.bf16 %v112
  %v115 = vlaneseq
  %v116 = vshrl.u32 %v115, 7
  %v117 = vsub.s32 0, %v116
  %v118 = vrot.slane %v113, %v117
  %v119 = vlaneseq
  %v120 = vshrl.u32 %v119, 7
  %v121 = vsub.s32 2, %v120
  %v122 = vrot.slane %v113, %v121
  %v125 = vlaneseq
  %v126 = vshrl.u32 %v125, 7
  %v127 = vsub.s32 0, %v126
  %v128 = vrot.slane %v118, %v127
  %v129 = vlaneseq
  %v130 = vshrl.u32 %v129, 7
  %v131 = vsub.s32 0, %v130
  %v132 = vrot.slane %v122, %v131
  %v149 = vunpack.c.l.b16 %v96
  %v150 = vunpack.c.h.b16 %v96
  %v151 = vunpack.c.l.b16 %v97
  %v152 = vunpack.c.h.b16 %v97
  %v153 = vunpack.c.l.b16 %v98
  %v154 = vunpack.c.h.b16 %v98
  %v155 = vunpack.c.l.b16 %v99
  %v156 = vunpack.c.h.b16 %v99
  %v157 = vunpack.c.l.b16 %v100
  %v158 = vunpack.c.h.b16 %v100
  %v159 = vunpack.c.l.b16 %v101
  %v160 = vunpack.c.h.b16 %v101
  %v161 = vunpack.c.l.b16 %v102
  %v162 = vunpack.c.h.b16 %v102
  %v163 = vunpack.c.l.b16 %v103
  %v164 = vunpack.c.h.b16 %v103
  %v165 = vunpack.c.l.b16 %v104
  %v166 = vunpack.c.h.b16 %v104
  %v167 = vunpack.c.l.b16 %v105
  %v168 = vunpack.c.h.b16 %v105
  %v169 = vunpack.c.l.b16 %v106
  %v170 = vunpack.c.h.b16 %v106
  %v171 = vunpack.c.l.b16 %v107
  %v172 = vunpack.c.h.b16 %v107
  %v173 = vunpack.c.l.b16 %v108
  %v174 = vunpack.c.h.b16 %v108
  %v175 = vunpack.c.l.b16 %v109
  %v176 = vunpack.c.h.b16 %v109
  %v177 = vunpack.c.l.b16 %v110
  %v178 = vunpack.c.h.b16 %v110
  %v179 = vunpack.c.l.b16 %v111
  %v180 = vunpack.c.h.b16 %v111
  %v181 = vpack.c.b16 %v151, %v149
  %v182 = vpack.c.b16 %v152, %v150
  %v183 = vpack.c.b16 %v155, %v153
  %v184 = vpack.c.b16 %v156, %v154
  %v185 = vpack.c.b16 %v159, %v157
  %v186 = vpack.c.b16 %v160, %v158
  %v187 = vpack.c.b16 %v163, %v161
  %v188 = vpack.c.b16 %v164, %v162
  %v189 = vpack.c.b16 %v167, %v165
  %v190 = vpack.c.b16 %v168, %v166
  %v191 = vpack.c.b16 %v171, %v169
  %v192 = vpack.c.b16 %v172, %v170
  %v193 = vpack.c.b16 %v175, %v173
  %v194 = vpack.c.b16 %v176, %v174
  %v195 = vpack.c.b16 %v179, %v177
  %v196 = vpack.c.b16 %v180, %v178
  %213 = vmatprep.subr.bf16.mxu0 %v182
  %214 = vmatpush1.bf16.msra.mxu0 %v181
  %215 = vmatprep.subr.bf16.mxu0 %v184
  %216 = vmatpush1.bf16.msra.mxu0 %v183
  %217 = vmatprep.subr.bf16.mxu0 %v186
  %218 = vmatpush1.bf16.msra.mxu0 %v185
  %219 = vmatprep.subr.bf16.mxu0 %v188
  %220 = vmatpush1.bf16.msra.mxu0 %v187
  %221 = vmatprep.subr.bf16.mxu0 %v190
  %222 = vmatpush1.bf16.msra.mxu0 %v189
  %223 = vmatprep.subr.bf16.mxu0 %v192
  %224 = vmatpush1.bf16.msra.mxu0 %v191
  %225 = vmatprep.subr.bf16.mxu0 %v194
  %226 = vmatpush1.bf16.msra.mxu0 %v193
  %227 = vmatprep.subr.bf16.mxu0 %v196
  %228 = vmatpush1.bf16.msra.mxu0 %v195
  %229 = vmatprep.subr.bf16.mxu0 0
  %230 = vmatpush1.bf16.msra.mxu0 0
  %231 = vmatprep.subr.bf16.mxu0 0
  %232 = vmatpush1.bf16.msra.mxu0 0
  %233 = vmatprep.subr.bf16.mxu0 0
  %234 = vmatpush1.bf16.msra.mxu0 0
  %235 = vmatprep.subr.bf16.mxu0 0
  %236 = vmatpush1.bf16.msra.mxu0 0
  %237 = vmatprep.subr.bf16.mxu0 0
  %238 = vmatpush1.bf16.msra.mxu0 0
  %239 = vmatprep.subr.bf16.mxu0 0
  %240 = vmatpush1.bf16.msra.mxu0 0
  %241 = vmatprep.subr.bf16.mxu0 0
  %242 = vmatpush1.bf16.msra.mxu0 0
  %243 = vmatprep.subr.bf16.mxu0 0
  %244 = vmatpush1.bf16.msra.mxu0 0
  %245 = vmatprep.mubr.bf16.mxu0 0
  %246 = vmatmul.mubr.bf16.gmra.mrb[0].mxu0 %v94
  %v247 = vpop.f32.mrb[0].mxu0
  %v248 = vadd.f32 %v128, %v247
  %v249 = vpop.f32.mrb[0].mxu0
  %v250 = vadd.f32 %v132, %v249
  %v251 = vpop.f32.mrb[0].mxu0
  %v252 = vadd.f32 %v128, %v251
  %v253 = vpop.f32.mrb[0].mxu0
  %v254 = vadd.f32 %v132, %v253
  %255 = vmatprep.mubr.bf16.mxu0 0
  %256 = vmatmul.mubr.bf16.gmra.mrb[0].mxu0 %v95
  %v257 = vpop.f32.mrb[0].mxu0
  %v258 = vadd.f32 %v128, %v257
  %v259 = vpop.f32.mrb[0].mxu0
  %v260 = vadd.f32 %v132, %v259
  %v261 = vpop.f32.mrb[0].mxu0
  %v262 = vadd.f32 %v128, %v261
  %v263 = vpop.f32.mrb[0].mxu0
  %v264 = vadd.f32 %v132, %v263
  %265 = vdwg.mxu0
  %v266 = vpack.c.bf16 %v252, %v248
  %v267 = vpack.c.bf16 %v254, %v250
  %v268 = vpack.c.bf16 %v262, %v258
  %v269 = vpack.c.bf16 %v264, %v260
  %v274 = vunpack.c.l.b16 %v266
  %v275 = vunpack.c.l.b16 %v267
  %v276 = vunpack.c.h.b16 %v266
  %v277 = vunpack.c.h.b16 %v267
  %v278 = vunpack.c.l.b16 %v268
  %v279 = vunpack.c.l.b16 %v269
  %v280 = vunpack.c.h.b16 %v268
  %v281 = vunpack.c.h.b16 %v269
  %v282 = vpack.c.b16 %v275, %v274
  %v283 = vpack.c.b16 %v277, %v276
  %v284 = vpack.c.b16 %v279, %v278
  %v285 = vpack.c.b16 %v281, %v280
  %290 = vst [vmem:[%s5] sm:$0xff] %v282
  %291 = vst [vmem:[%s5 + $0x8] sm:$0xff] %v283
  %292 = vst [vmem:[%s5 + $0x10] sm:$0xff] %v284
  %293 = vst [vmem:[%s5 + $0x18] sm:$0xff] %v285
  // Predicated region
  $region22: #{kosmos2_forward.28} parent=0 // pred_check
    _
  $region23: #{kosmos2_forward.28} parent=0 // pred_check_branch
    %295 = sbr.rel (0) target = $region25
  $region24: #{kosmos2_forward.28} parent=0 // pred_region
    _
  $region25: #{kosmos2_forward.28} parent=0 // pred_fallthru
    _
  // Predicated region
  $region26: #{kosmos2_forward.28} parent=0 // pred_check
    _
  $region27: #{kosmos2_forward.28} parent=0 // pred_check_branch
    %297 = sbr.rel (0) target = $region29
  $region28: #{kosmos2_forward.28} parent=0 // pred_region
    _
  $region29: #{kosmos2_forward.28} parent=0 // pred_fallthru
    _

// kernel: kosmos2_forward.23
$region0: #{kosmos2_forward.23}
  #allocation0 [shape = 'u32[]', space=smem, size = 0x4, offset = 0x4, fixed_abs, tag = 'smem constant byte address 0x4 - core index']
  #allocation1 [shape = 'u32[144,128]{1,0:T(1,128)}', space=vmem, size = 0x12000, scoped, tag = 'internal scratch']
  %s0 = inlined_call_operand.vmem [shape: bf16[32,128], index: 0, kind: input, shape index: {}]
  %s1 = inlined_call_operand.vmem [shape: bf16[1,128], index: 1, kind: input, shape index: {}]
  %s2 = inlined_call_operand.vmem [shape: bf16[1,128], index: 2, kind: input, shape index: {}]
  %s3 = inlined_call_operand.vmem [shape: bf16[128,256], index: 3, kind: input, shape index: {}]
  %s4 = inlined_call_operand.vmem [shape: bf16[1,256], index: 4, kind: input, shape index: {}]
  %s5 = inlined_call_operand.vmem [shape: bf16[256,128], index: 5, kind: input, shape index: {}]
  %s6 = inlined_call_operand.vmem [shape: bf16[1,128], index: 6, kind: input, shape index: {}]
  %s7 = inlined_call_operand.vmem [shape: bf16[32,128], index: 7, kind: output, shape index: {}]
  %s8 = sld [smem:[#allocation0]]
  $region38: #{kosmos2_forward.23} parent=0
    _
  %s10 = ssub.s32 1, %s8
  %s11 = scalar_select 0, %s10, %s8
  // Predicated region
  $region2: #{kosmos2_forward.23} parent=0 // pred_check
    _
  $region3: #{kosmos2_forward.23} parent=0 // pred_check_branch
    %13 = sbr.rel (0) target = $region5
  $region4: #{kosmos2_forward.23} parent=0 // pred_region
    _
  $region5: #{kosmos2_forward.23} parent=0 // pred_fallthru
    _
  // Predicated region
  $region6: #{kosmos2_forward.23} parent=0 // pred_check
    _
  $region7: #{kosmos2_forward.23} parent=0 // pred_check_branch
    %15 = sbr.rel (0) target = $region9
  $region8: #{kosmos2_forward.23} parent=0 // pred_region
    _
  $region9: #{kosmos2_forward.23} parent=0 // pred_fallthru
    _
  // Predicated region
  $region10: #{kosmos2_forward.23} parent=0 // pred_check
    _
  $region11: #{kosmos2_forward.23} parent=0 // pred_check_branch
    %17 = sbr.rel (0) target = $region13
  $region12: #{kosmos2_forward.23} parent=0 // pred_region
    _
  $region13: #{kosmos2_forward.23} parent=0 // pred_fallthru
    _
  // Predicated region
  $region14: #{kosmos2_forward.23} parent=0 // pred_check
    _
  $region15: #{kosmos2_forward.23} parent=0 // pred_check_branch
    %19 = sbr.rel (0) target = $region17
  $region16: #{kosmos2_forward.23} parent=0 // pred_region
    _
  $region17: #{kosmos2_forward.23} parent=0 // pred_fallthru
    _
  // Predicated region
  $region18: #{kosmos2_forward.23} parent=0 // pred_check
    _
  $region19: #{kosmos2_forward.23} parent=0 // pred_check_branch
    %21 = sbr.rel (0) target = $region21
  $region20: #{kosmos2_forward.23} parent=0 // pred_region
    _
  $region21: #{kosmos2_forward.23} parent=0 // pred_fallthru
    _
  // Predicated region
  $region22: #{kosmos2_forward.23} parent=0 // pred_check
    _
  $region23: #{kosmos2_forward.23} parent=0 // pred_check_branch
    %23 = sbr.rel (0) target = $region25
  $region24: #{kosmos2_forward.23} parent=0 // pred_region
    _
  $region25: #{kosmos2_forward.23} parent=0 // pred_fallthru
    _
  // Predicated region
  $region26: #{kosmos2_forward.23} parent=0 // pred_check
    _
  $region27: #{kosmos2_forward.23} parent=0 // pred_check_branch
    %25 = sbr.rel (0) target = $region29
  $region28: #{kosmos2_forward.23} parent=0 // pred_region
    _
  $region29: #{kosmos2_forward.23} parent=0 // pred_fallthru
    _
  %v27 = vld [vmem:[%s0] sm:$0xf]
  %v28 = vld [vmem:[%s0 + $0x4] sm:$0xf]
  %v29 = vld [vmem:[%s0 + $0x8] sm:$0xf]
  %v30 = vld [vmem:[%s0 + $0xc] sm:$0xf]
  %v31 = vunpack.c.l.bf16 %v27
  %v32 = vunpack.c.l.bf16 %v28
  %v33 = vunpack.c.l.bf16 %v29
  %v34 = vunpack.c.l.bf16 %v30
  %35 = vadd.xlane.f32.xlu0 %v31
  %v36 = vpop.xlane.xlu0 %35
  %37 = vadd.xlane.f32.xlu0 %v32
  %v38 = vpop.xlane.xlu0 %37
  %39 = vadd.xlane.f32.xlu0 %v33
  %v40 = vpop.xlane.xlu0 %39
  %41 = vadd.xlane.f32.xlu0 %v34
  %v42 = vpop.xlane.xlu0 %41
  %v43 = vrcp.pop 128.0
  %v44 = vmul.f32 %v36, %v43
  %v45 = vmul.f32 %v38, %v43
  %v46 = vmul.f32 %v40, %v43
  %v47 = vmul.f32 %v42, %v43
  %v48 = vsub.f32 %v31, %v44
  %v49 = vsub.f32 %v32, %v45
  %v50 = vsub.f32 %v33, %v46
  %v51 = vsub.f32 %v34, %v47
  %v52 = vmul.f32 %v48, %v48
  %v53 = vmul.f32 %v49, %v49
  %v54 = vmul.f32 %v50, %v50
  %v55 = vmul.f32 %v51, %v51
  %56 = vadd.xlane.f32.xlu0 %v52
  %v57 = vpop.xlane.xlu0 %56
  %58 = vadd.xlane.f32.xlu0 %v53
  %v59 = vpop.xlane.xlu0 %58
  %60 = vadd.xlane.f32.xlu0 %v54
  %v61 = vpop.xlane.xlu0 %60
  %62 = vadd.xlane.f32.xlu0 %v55
  %v63 = vpop.xlane.xlu0 %62
  %v64 = vmul.f32 %v57, %v43
  %v65 = vmul.f32 %v59, %v43
  %v66 = vmul.f32 %v61, %v43
  %v67 = vmul.f32 %v63, %v43
  %v68 = vadd.f32 %v64, 1e-05
  %v69 = vadd.f32 %v65, 1e-05
  %v70 = vadd.f32 %v66, 1e-05
  %v71 = vadd.f32 %v67, 1e-05
  %v72 = vrsqrt.pop %v68
  %v73 = vrsqrt.pop %v69
  %v74 = vrsqrt.pop %v70
  %v75 = vrsqrt.pop %v71
  %v76 = vmul.f32 %v48, %v72
  %v77 = vmul.f32 %v49, %v73
  %v78 = vmul.f32 %v50, %v74
  %v79 = vmul.f32 %v51, %v75
  %v80 = vld [vmem:[%s1] sm:$0x1]
  %v81 = vunpack.c.l.bf16 %v80
  %v82 = vlaneseq
  %v83 = vshrl.u32 %v82, 7
  %v84 = vsub.s32 0, %v83
  %v85 = vrot.slane %v81, %v84
  %v86 = vmul.f32 %v76, %v85
  %v87 = vmul.f32 %v77, %v85
  %v88 = vmul.f32 %v78, %v85
  %v89 = vmul.f32 %v79, %v85
  %v90 = vld [vmem:[%s2] sm:$0x1]
  %v91 = vunpack.c.l.bf16 %v90
  %v92 = vlaneseq
  %v93 = vshrl.u32 %v92, 7
  %v94 = vsub.s32 0, %v93
  %v95 = vrot.slane %v91, %v94
  %v96 = vadd.f32 %v86, %v95
  %v97 = vadd.f32 %v87, %v95
  %v98 = vadd.f32 %v88, %v95
  %v99 = vadd.f32 %v89, %v95
  %v100 = vpack.c.bf16 %v97, %v96
  %v101 = vpack.c.bf16 %v99, %v98
  %v102 = vld [vmem:[%s3] sm:$0xff]
  %v103 = vld [vmem:[%s3 + $0x8] sm:$0xff]
  %v104 = vld [vmem:[%s3 + $0x10] sm:$0xff]
  %v105 = vld [vmem:[%s3 + $0x18] sm:$0xff]
  %v106 = vld [vmem:[%s3 + $0x20] sm:$0xff]
  %v107 = vld [vmem:[%s3 + $0x28] sm:$0xff]
  %v108 = vld [vmem:[%s3 + $0x30] sm:$0xff]
  %v109 = vld [vmem:[%s3 + $0x38] sm:$0xff]
  %v110 = vld [vmem:[%s3 + $0x40] sm:$0xff]
  %v111 = vld [vmem:[%s3 + $0x48] sm:$0xff]
  %v112 = vld [vmem:[%s3 + $0x50] sm:$0xff]
  %v113 = vld [vmem:[%s3 + $0x58] sm:$0xff]
  %v114 = vld [vmem:[%s3 + $0x60] sm:$0xff]
  %v115 = vld [vmem:[%s3 + $0x68] sm:$0xff]
  %v116 = vld [vmem:[%s3 + $0x70] sm:$0xff]
  %v117 = vld [vmem:[%s3 + $0x78] sm:$0xff]
  %v118 = vld [vmem:[%s4] sm:$0x3]
  %v119 = vunpack.c.l.bf16 %v118
  %v121 = vlaneseq
  %v122 = vshrl.u32 %v121, 7
  %v123 = vsub.s32 0, %v122
  %v124 = vrot.slane %v119, %v123
  %v125 = vlaneseq
  %v126 = vshrl.u32 %v125, 7
  %v127 = vsub.s32 2, %v126
  %v128 = vrot.slane %v119, %v127
  %v131 = vlaneseq
  %v132 = vshrl.u32 %v131, 7
  %v133 = vsub.s32 0, %v132
  %v134 = vrot.slane %v124, %v133
  %v135 = vlaneseq
  %v136 = vshrl.u32 %v135, 7
  %v137 = vsub.s32 0, %v136
  %v138 = vrot.slane %v128, %v137
  %v155 = vunpack.c.l.b16 %v102
  %v156 = vunpack.c.h.b16 %v102
  %v157 = vunpack.c.l.b16 %v103
  %v158 = vunpack.c.h.b16 %v103
  %v159 = vunpack.c.l.b16 %v104
  %v160 = vunpack.c.h.b16 %v104
  %v161 = vunpack.c.l.b16 %v105
  %v162 = vunpack.c.h.b16 %v105
  %v163 = vunpack.c.l.b16 %v106
  %v164 = vunpack.c.h.b16 %v106
  %v165 = vunpack.c.l.b16 %v107
  %v166 = vunpack.c.h.b16 %v107
  %v167 = vunpack.c.l.b16 %v108
  %v168 = vunpack.c.h.b16 %v108
  %v169 = vunpack.c.l.b16 %v109
  %v170 = vunpack.c.h.b16 %v109
  %v171 = vunpack.c.l.b16 %v110
  %v172 = vunpack.c.h.b16 %v110
  %v173 = vunpack.c.l.b16 %v111
  %v174 = vunpack.c.h.b16 %v111
  %v175 = vunpack.c.l.b16 %v112
  %v176 = vunpack.c.h.b16 %v112
  %v177 = vunpack.c.l.b16 %v113
  %v178 = vunpack.c.h.b16 %v113
  %v179 = vunpack.c.l.b16 %v114
  %v180 = vunpack.c.h.b16 %v114
  %v181 = vunpack.c.l.b16 %v115
  %v182 = vunpack.c.h.b16 %v115
  %v183 = vunpack.c.l.b16 %v116
  %v184 = vunpack.c.h.b16 %v116
  %v185 = vunpack.c.l.b16 %v117
  %v186 = vunpack.c.h.b16 %v117
  %v187 = vpack.c.b16 %v157, %v155
  %v188 = vpack.c.b16 %v158, %v156
  %v189 = vpack.c.b16 %v161, %v159
  %v190 = vpack.c.b16 %v162, %v160
  %v191 = vpack.c.b16 %v165, %v163
  %v192 = vpack.c.b16 %v166, %v164
  %v193 = vpack.c.b16 %v169, %v167
  %v194 = vpack.c.b16 %v170, %v168
  %v195 = vpack.c.b16 %v173, %v171
  %v196 = vpack.c.b16 %v174, %v172
  %v197 = vpack.c.b16 %v177, %v175
  %v198 = vpack.c.b16 %v178, %v176
  %v199 = vpack.c.b16 %v181, %v179
  %v200 = vpack.c.b16 %v182, %v180
  %v201 = vpack.c.b16 %v185, %v183
  %v202 = vpack.c.b16 %v186, %v184
  %219 = vmatprep.subr.bf16.mxu0 %v188
  %220 = vmatpush1.bf16.msra.mxu0 %v187
  %221 = vmatprep.subr.bf16.mxu0 %v190
  %222 = vmatpush1.bf16.msra.mxu0 %v189
  %223 = vmatprep.subr.bf16.mxu0 %v192
  %224 = vmatpush1.bf16.msra.mxu0 %v191
  %225 = vmatprep.subr.bf16.mxu0 %v194
  %226 = vmatpush1.bf16.msra.mxu0 %v193
  %227 = vmatprep.subr.bf16.mxu0 %v196
  %228 = vmatpush1.bf16.msra.mxu0 %v195
  %229 = vmatprep.subr.bf16.mxu0 %v198
  %230 = vmatpush1.bf16.msra.mxu0 %v197
  %231 = vmatprep.subr.bf16.mxu0 %v200
  %232 = vmatpush1.bf16.msra.mxu0 %v199
  %233 = vmatprep.subr.bf16.mxu0 %v202
  %234 = vmatpush1.bf16.msra.mxu0 %v201
  %235 = vmatprep.subr.bf16.mxu0 0
  %236 = vmatpush1.bf16.msra.mxu0 0
  %237 = vmatprep.subr.bf16.mxu0 0
  %238 = vmatpush1.bf16.msra.mxu0 0
  %239 = vmatprep.subr.bf16.mxu0 0
  %240 = vmatpush1.bf16.msra.mxu0 0
  %241 = vmatprep.subr.bf16.mxu0 0
  %242 = vmatpush1.bf16.msra.mxu0 0
  %243 = vmatprep.subr.bf16.mxu0 0
  %244 = vmatpush1.bf16.msra.mxu0 0
  %245 = vmatprep.subr.bf16.mxu0 0
  %246 = vmatpush1.bf16.msra.mxu0 0
  %247 = vmatprep.subr.bf16.mxu0 0
  %248 = vmatpush1.bf16.msra.mxu0 0
  %249 = vmatprep.subr.bf16.mxu0 0
  %250 = vmatpush1.bf16.msra.mxu0 0
  %251 = vmatprep.mubr.bf16.mxu0 0
  %252 = vmatmul.mubr.bf16.gmra.mrb[0].mxu0 %v100
  %v253 = vpop.f32.mrb[0].mxu0
  %v254 = vadd.f32 %v134, %v253
  %v255 = vpop.f32.mrb[0].mxu0
  %v256 = vadd.f32 %v138, %v255
  %v257 = vpop.f32.mrb[0].mxu0
  %v258 = vadd.f32 %v134, %v257
  %v259 = vpop.f32.mrb[0].mxu0
  %v260 = vadd.f32 %v138, %v259
  %261 = vmatprep.mubr.bf16.mxu0 0
  %262 = vmatmul.mubr.bf16.gmra.mrb[0].mxu0 %v101
  %v263 = vpop.f32.mrb[0].mxu0
  %v264 = vadd.f32 %v134, %v263
  %v265 = vpop.f32.mrb[0].mxu0
  %v266 = vadd.f32 %v138, %v265
  %v267 = vpop.f32.mrb[0].mxu0
  %v268 = vadd.f32 %v134, %v267
  %v269 = vpop.f32.mrb[0].mxu0
  %v270 = vadd.f32 %v138, %v269
  %271 = vdwg.mxu0
  %v272 = vmul.f32 %v254, %v254
  %v273 = vmul.f32 %v256, %v256
  %v274 = vmul.f32 %v258, %v258
  %v275 = vmul.f32 %v260, %v260
  %v276 = vmul.f32 %v264, %v264
  %v277 = vmul.f32 %v266, %v266
  %v278 = vmul.f32 %v268, %v268
  %v279 = vmul.f32 %v270, %v270
  %v280 = vmul.f32 %v254, %v272
  %v281 = vmul.f32 %v256, %v273
  %v282 = vmul.f32 %v258, %v274
  %v283 = vmul.f32 %v260, %v275
  %v284 = vmul.f32 %v264, %v276
  %v285 = vmul.f32 %v266, %v277
  %v286 = vmul.f32 %v268, %v278
  %v287 = vmul.f32 %v270, %v279
  %v288 = vmul.f32 %v280, 0.044715
  %v289 = vmul.f32 %v281, 0.044715
  %v290 = vmul.f32 %v282, 0.044715
  %v291 = vmul.f32 %v283, 0.044715
  %v292 = vmul.f32 %v284, 0.044715
  %v293 = vmul.f32 %v285, 0.044715
  %v294 = vmul.f32 %v286, 0.044715
  %v295 = vmul.f32 %v287, 0.044715
  %v296 = vadd.f32 %v254, %v288
  %v297 = vadd.f32 %v256, %v289
  %v298 = vadd.f32 %v258, %v290
  %v299 = vadd.f32 %v260, %v291
  %v300 = vadd.f32 %v264, %v292
  %v301 = vadd.f32 %v266, %v293
  %v302 = vadd.f32 %v268, %v294
  %v303 = vadd.f32 %v270, %v295
  %v304 = vmul.f32 %v296, 0.7978846
  %v305 = vmul.f32 %v297, 0.7978846
  %v306 = vmul.f32 %v298, 0.7978846
  %v307 = vmul.f32 %v299, 0.7978846
  %v308 = vmul.f32 %v300, 0.7978846
  %v309 = vmul.f32 %v301, 0.7978846
  %v310 = vmul.f32 %v302, 0.7978846
  %v311 = vmul.f32 %v303, 0.7978846
  %v312 = vtanh.pop %v304
  %v313 = vtanh.pop %v305
  %v314 = vtanh.pop %v306
  %v315 = vtanh.pop %v307
  %v316 = vtanh.pop %v308
  %v317 = vtanh.pop %v309
  %v318 = vtanh.pop %v310
  %v319 = vtanh.pop %v311
  %v320 = vadd.f32 %v312, 1.0
  %v321 = vadd.f32 %v313, 1.0
  %v322 = vadd.f32 %v314, 1.0
  %v323 = vadd.f32 %v315, 1.0
  %v324 = vadd.f32 %v316, 1.0
  %v325 = vadd.f32 %v317, 1.0
  %v326 = vadd.f32 %v318, 1.0
  %v327 = vadd.f32 %v319, 1.0
  %v328 = vmul.f32 %v320, 0.5
  %v329 = vmul.f32 %v321, 0.5
  %v330 = vmul.f32 %v322, 0.5
  %v331 = vmul.f32 %v323, 0.5
  %v332 = vmul.f32 %v324, 0.5
  %v333 = vmul.f32 %v325, 0.5
  %v334 = vmul.f32 %v326, 0.5
  %v335 = vmul.f32 %v327, 0.5
  %v336 = vmul.f32 %v254, %v328
  %v337 = vmul.f32 %v256, %v329
  %v338 = vmul.f32 %v258, %v330
  %v339 = vmul.f32 %v260, %v331
  %v340 = vmul.f32 %v264, %v332
  %v341 = vmul.f32 %v266, %v333
  %v342 = vmul.f32 %v268, %v334
  %v343 = vmul.f32 %v270, %v335
  %v344 = vpack.c.bf16 %v338, %v336
  %v345 = vpack.c.bf16 %v339, %v337
  %v346 = vpack.c.bf16 %v342, %v340
  %v347 = vpack.c.bf16 %v343, %v341
  %v348 = vld [vmem:[%s5] sm:$0xf]
  %v349 = vld [vmem:[%s5 + $0x4] sm:$0xf]
  %v350 = vld [vmem:[%s5 + $0x8] sm:$0xf]
  %v351 = vld [vmem:[%s5 + $0xc] sm:$0xf]
  %v352 = vld [vmem:[%s5 + $0x10] sm:$0xf]
  %v353 = vld [vmem:[%s5 + $0x14] sm:$0xf]
  %v354 = vld [vmem:[%s5 + $0x18] sm:$0xf]
  %v355 = vld [vmem:[%s5 + $0x1c] sm:$0xf]
  %v356 = vld [vmem:[%s5 + $0x20] sm:$0xf]
  %v357 = vld [vmem:[%s5 + $0x24] sm:$0xf]
  %v358 = vld [vmem:[%s5 + $0x28] sm:$0xf]
  %v359 = vld [vmem:[%s5 + $0x2c] sm:$0xf]
  %v360 = vld [vmem:[%s5 + $0x30] sm:$0xf]
  %v361 = vld [vmem:[%s5 + $0x34] sm:$0xf]
  %v362 = vld [vmem:[%s5 + $0x38] sm:$0xf]
  %v363 = vld [vmem:[%s5 + $0x3c] sm:$0xf]
  %v364 = vld [vmem:[%s5 + $0x40] sm:$0xf]
  %v365 = vld [vmem:[%s5 + $0x44] sm:$0xf]
  %v366 = vld [vmem:[%s5 + $0x48] sm:$0xf]
  %v367 = vld [vmem:[%s5 + $0x4c] sm:$0xf]
  %v368 = vld [vmem:[%s5 + $0x50] sm:$0xf]
  %v369 = vld [vmem:[%s5 + $0x54] sm:$0xf]
  %v370 = vld [vmem:[%s5 + $0x58] sm:$0xf]
  %v371 = vld [vmem:[%s5 + $0x5c] sm:$0xf]
  %v372 = vld [vmem:[%s5 + $0x60] sm:$0xf]
  %v373 = vld [vmem:[%s5 + $0x64] sm:$0xf]
  %v374 = vld [vmem:[%s5 + $0x68] sm:$0xf]
  %v375 = vld [vmem:[%s5 + $0x6c] sm:$0xf]
  %v376 = vld [vmem:[%s5 + $0x70] sm:$0xf]
  %v377 = vld [vmem:[%s5 + $0x74] sm:$0xf]
  %v378 = vld [vmem:[%s5 + $0x78] sm:$0xf]
  %v379 = vld [vmem:[%s5 + $0x7c] sm:$0xf]
  %v380 = vld [vmem:[%s6] sm:$0x1]
  %v381 = vunpack.c.l.bf16 %v380
  %v382 = vlaneseq
  %v383 = vshrl.u32 %v382, 7
  %v384 = vsub.s32 0, %v383
  %v385 = vrot.slane %v381, %v384
  %v418 = vunpack.c.l.b16 %v348
  %v419 = vunpack.c.l.b16 %v349
  %v420 = vunpack.c.l.b16 %v350
  %v421 = vunpack.c.l.b16 %v351
  %v422 = vunpack.c.l.b16 %v352
  %v423 = vunpack.c.l.b16 %v353
  %v424 = vunpack.c.l.b16 %v354
  %v425 = vunpack.c.l.b16 %v355
  %v426 = vunpack.c.l.b16 %v356
  %v427 = vunpack.c.l.b16 %v357
  %v428 = vunpack.c.l.b16 %v358
  %v429 = vunpack.c.l.b16 %v359
  %v430 = vunpack.c.l.b16 %v360
  %v431 = vunpack.c.l.b16 %v361
  %v432 = vunpack.c.l.b16 %v362
  %v433 = vunpack.c.l.b16 %v363
  %v434 = vunpack.c.l.b16 %v364
  %v435 = vunpack.c.l.b16 %v365
  %v436 = vunpack.c.l.b16 %v366
  %v437 = vunpack.c.l.b16 %v367
  %v438 = vunpack.c.l.b16 %v368
  %v439 = vunpack.c.l.b16 %v369
  %v440 = vunpack.c.l.b16 %v370
  %v441 = vunpack.c.l.b16 %v371
  %v442 = vunpack.c.l.b16 %v372
  %v443 = vunpack.c.l.b16 %v373
  %v444 = vunpack.c.l.b16 %v374
  %v445 = vunpack.c.l.b16 %v375
  %v446 = vunpack.c.l.b16 %v376
  %v447 = vunpack.c.l.b16 %v377
  %v448 = vunpack.c.l.b16 %v378
  %v449 = vunpack.c.l.b16 %v379
  %v450 = vpack.c.b16 %v419, %v418
  %v451 = vpack.c.b16 %v421, %v420
  %v452 = vpack.c.b16 %v423, %v422
  %v453 = vpack.c.b16 %v425, %v424
  %v454 = vpack.c.b16 %v427, %v426
  %v455 = vpack.c.b16 %v429, %v428
  %v456 = vpack.c.b16 %v431, %v430
  %v457 = vpack.c.b16 %v433, %v432
  %v458 = vpack.c.b16 %v435, %v434
  %v459 = vpack.c.b16 %v437, %v436
  %v460 = vpack.c.b16 %v439, %v438
  %v461 = vpack.c.b16 %v441, %v440
  %v462 = vpack.c.b16 %v443, %v442
  %v463 = vpack.c.b16 %v445, %v444
  %v464 = vpack.c.b16 %v447, %v446
  %v465 = vpack.c.b16 %v449, %v448
  %482 = vmatprep.subr.bf16.mxu0 0
  %483 = vmatpush1.bf16.msra.mxu0 %v450
  %484 = vmatprep.subr.bf16.mxu0 0
  %485 = vmatpush1.bf16.msra.mxu0 %v451
  %486 = vmatprep.subr.bf16.mxu0 0
  %487 = vmatpush1.bf16.msra.mxu0 %v452
  %488 = vmatprep.subr.bf16.mxu0 0
  %489 = vmatpush1.bf16.msra.mxu0 %v453
  %490 = vmatprep.subr.bf16.mxu0 0
  %491 = vmatpush1.bf16.msra.mxu0 %v454
  %492 = vmatprep.subr.bf16.mxu0 0
  %493 = vmatpush1.bf16.msra.mxu0 %v455
  %494 = vmatprep.subr.bf16.mxu0 0
  %495 = vmatpush1.bf16.msra.mxu0 %v456
  %496 = vmatprep.subr.bf16.mxu0 0
  %497 = vmatpush1.bf16.msra.mxu0 %v457
  %498 = vmatprep.subr.bf16.mxu0 0
  %499 = vmatpush1.bf16.msra.mxu0 %v458
  %500 = vmatprep.subr.bf16.mxu0 0
  %501 = vmatpush1.bf16.msra.mxu0 %v459
  %502 = vmatprep.subr.bf16.mxu0 0
  %503 = vmatpush1.bf16.msra.mxu0 %v460
  %504 = vmatprep.subr.bf16.mxu0 0
  %505 = vmatpush1.bf16.msra.mxu0 %v461
  %506 = vmatprep.subr.bf16.mxu0 0
  %507 = vmatpush1.bf16.msra.mxu0 %v462
  %508 = vmatprep.subr.bf16.mxu0 0
  %509 = vmatpush1.bf16.msra.mxu0 %v463
  %510 = vmatprep.subr.bf16.mxu0 0
  %511 = vmatpush1.bf16.msra.mxu0 %v464
  %512 = vmatprep.subr.bf16.mxu0 0
  %513 = vmatpush1.bf16.msra.mxu0 %v465
  %514 = vmatprep.mubr.bf16.mxu0 %v345
  %515 = vmatmul.mubr.bf16.gmra.mrb[0].mxu0 %v344
  %v516 = vpop.f32.mrb[0].mxu0
  %v517 = vadd.f32 %v385, %v516
  %v518 = vpop.f32.mrb[0].mxu0
  %v519 = vpop.f32.mrb[0].mxu0
  %v520 = vadd.f32 %v385, %v519
  %v521 = vpop.f32.mrb[0].mxu0
  %522 = vmatprep.mubr.bf16.mxu0 %v347
  %523 = vmatmul.mubr.bf16.gmra.mrb[0].mxu0 %v346
  %v524 = vpop.f32.mrb[0].mxu0
  %v525 = vadd.f32 %v385, %v524
  %v526 = vpop.f32.mrb[0].mxu0
  %v527 = vpop.f32.mrb[0].mxu0
  %v528 = vadd.f32 %v385, %v527
  %v529 = vpop.f32.mrb[0].mxu0
  %530 = vdwg.mxu0
  %v531 = vadd.f32 %v31, %v517
  %v532 = vadd.f32 %v32, %v520
  %v533 = vadd.f32 %v33, %v525
  %v534 = vadd.f32 %v34, %v528
  %v535 = vpack.c.bf16 %v532, %v531
  %v536 = vpack.c.bf16 %v534, %v533
  %v539 = vunpack.c.l.b16 %v535
  %v540 = vunpack.c.h.b16 %v535
  %v541 = vunpack.c.l.b16 %v536
  %v542 = vunpack.c.h.b16 %v536
  %v543 = vpack.c.b16 %v539, %v539
  %v544 = vpack.c.b16 %v540, %v540
  %v545 = vpack.c.b16 %v541, %v541
  %v546 = vpack.c.b16 %v542, %v542
  %551 = vst [vmem:[%s7] sm:$0xf] %v543
  %552 = vst [vmem:[%s7 + $0x4] sm:$0xf] %v544
  %553 = vst [vmem:[%s7 + $0x8] sm:$0xf] %v545
  %554 = vst [vmem:[%s7 + $0xc] sm:$0xf] %v546
  // Predicated region
  $region30: #{kosmos2_forward.23} parent=0 // pred_check
    _
  $region31: #{kosmos2_forward.23} parent=0 // pred_check_branch
    %556 = sbr.rel (0) target = $region33
  $region32: #{kosmos2_forward.23} parent=0 // pred_region
    _
  $region33: #{kosmos2_forward.23} parent=0 // pred_fallthru
    _
  // Predicated region
  $region34: #{kosmos2_forward.23} parent=0 // pred_check
    _
  $region35: #{kosmos2_forward.23} parent=0 // pred_check_branch
    %558 = sbr.rel (0) target = $region37
  $region36: #{kosmos2_forward.23} parent=0 // pred_region
    _
  $region37: #{kosmos2_forward.23} parent=0 // pred_fallthru
    _

// kernel: kosmos2_forward.29
$region0: #{kosmos2_forward.29}
  #allocation0 [shape = 'u32[]', space=smem, size = 0x4, offset = 0x4, fixed_abs, tag = 'smem constant byte address 0x4 - core index']
  #allocation1 [shape = 'u32[144,128]{1,0:T(1,128)}', space=vmem, size = 0x12000, scoped, tag = 'internal scratch']
  %s0 = inlined_call_operand.vmem [shape: bf16[64,256], index: 0, kind: input, shape index: {}]
  %s1 = inlined_call_operand.vmem [shape: bf16[1,256], index: 1, kind: input, shape index: {}]
  %s2 = inlined_call_operand.vmem [shape: bf16[1,256], index: 2, kind: input, shape index: {}]
  %s3 = inlined_call_operand.vmem [shape: bf16[256,768], index: 3, kind: input, shape index: {}]
  %s4 = inlined_call_operand.vmem [shape: bf16[1,768], index: 4, kind: input, shape index: {}]
  %s5 = inlined_call_operand.vmem [shape: bf16[64,768], index: 5, kind: output, shape index: {}]
  %s6 = sld [smem:[#allocation0]]
  $region30: #{kosmos2_forward.29} parent=0
    _
  %s8 = ssub.s32 1, %s6
  %s9 = scalar_select 0, %s8, %s6
  // Predicated region
  $region2: #{kosmos2_forward.29} parent=0 // pred_check
    _
  $region3: #{kosmos2_forward.29} parent=0 // pred_check_branch
    %11 = sbr.rel (0) target = $region5
  $region4: #{kosmos2_forward.29} parent=0 // pred_region
    _
  $region5: #{kosmos2_forward.29} parent=0 // pred_fallthru
    _
  // Predicated region
  $region6: #{kosmos2_forward.29} parent=0 // pred_check
    _
  $region7: #{kosmos2_forward.29} parent=0 // pred_check_branch
    %13 = sbr.rel (0) target = $region9
  $region8: #{kosmos2_forward.29} parent=0 // pred_region
    _
  $region9: #{kosmos2_forward.29} parent=0 // pred_fallthru
    _
  // Predicated region
  $region10: #{kosmos2_forward.29} parent=0 // pred_check
    _
  $region11: #{kosmos2_forward.29} parent=0 // pred_check_branch
    %15 = sbr.rel (0) target = $region13
  $region12: #{kosmos2_forward.29} parent=0 // pred_region
    _
  $region13: #{kosmos2_forward.29} parent=0 // pred_fallthru
    _
  // Predicated region
  $region14: #{kosmos2_forward.29} parent=0 // pred_check
    _
  $region15: #{kosmos2_forward.29} parent=0 // pred_check_branch
    %17 = sbr.rel (0) target = $region17
  $region16: #{kosmos2_forward.29} parent=0 // pred_region
    _
  $region17: #{kosmos2_forward.29} parent=0 // pred_fallthru
    _
  // Predicated region
  $region18: #{kosmos2_forward.29} parent=0 // pred_check
    _
  $region19: #{kosmos2_forward.29} parent=0 // pred_check_branch
    %19 = sbr.rel (0) target = $region21
  $region20: #{kosmos2_forward.29} parent=0 // pred_region
    _
  $region21: #{kosmos2_forward.29} parent=0 // pred_fallthru
    _
  %v20 = vld [vmem:[%s0] sm:$0xff]
  %v21 = vld [vmem:[%s0 + $0x8] sm:$0xff]
  %v22 = vld [vmem:[%s0 + $0x10] sm:$0xff]
  %v23 = vld [vmem:[%s0 + $0x18] sm:$0xff]
  %v24 = vld [vmem:[%s0 + $0x20] sm:$0xff]
  %v25 = vld [vmem:[%s0 + $0x28] sm:$0xff]
  %v26 = vld [vmem:[%s0 + $0x30] sm:$0xff]
  %v27 = vld [vmem:[%s0 + $0x38] sm:$0xff]
  %v28 = vunpack.c.l.bf16 %v20
  %v29 = vunpack.c.h.bf16 %v20
  %v30 = vunpack.c.l.bf16 %v21
  %v31 = vunpack.c.h.bf16 %v21
  %v32 = vunpack.c.l.bf16 %v22
  %v33 = vunpack.c.h.bf16 %v22
  %v34 = vunpack.c.l.bf16 %v23
  %v35 = vunpack.c.h.bf16 %v23
  %v36 = vunpack.c.l.bf16 %v24
  %v37 = vunpack.c.h.bf16 %v24
  %v38 = vunpack.c.l.bf16 %v25
  %v39 = vunpack.c.h.bf16 %v25
  %v40 = vunpack.c.l.bf16 %v26
  %v41 = vunpack.c.h.bf16 %v26
  %v42 = vunpack.c.l.bf16 %v27
  %v43 = vunpack.c.h.bf16 %v27
  %v44 = vadd.f32 %v28, %v29
  %45 = vadd.xlane.f32.xlu0 %v44
  %v46 = vpop.xlane.xlu0 %45
  %v47 = vadd.f32 %v30, %v31
  %48 = vadd.xlane.f32.xlu0 %v47
  %v49 = vpop.xlane.xlu0 %48
  %v50 = vadd.f32 %v32, %v33
  %51 = vadd.xlane.f32.xlu0 %v50
  %v52 = vpop.xlane.xlu0 %51
  %v53 = vadd.f32 %v34, %v35
  %54 = vadd.xlane.f32.xlu0 %v53
  %v55 = vpop.xlane.xlu0 %54
  %v56 = vadd.f32 %v36, %v37
  %57 = vadd.xlane.f32.xlu0 %v56
  %v58 = vpop.xlane.xlu0 %57
  %v59 = vadd.f32 %v38, %v39
  %60 = vadd.xlane.f32.xlu0 %v59
  %v61 = vpop.xlane.xlu0 %60
  %v62 = vadd.f32 %v40, %v41
  %63 = vadd.xlane.f32.xlu0 %v62
  %v64 = vpop.xlane.xlu0 %63
  %v65 = vadd.f32 %v42, %v43
  %66 = vadd.xlane.f32.xlu0 %v65
  %v67 = vpop.xlane.xlu0 %66
  %v68 = vrcp.pop 256.0
  %v69 = vmul.f32 %v46, %v68
  %v70 = vmul.f32 %v49, %v68
  %v71 = vmul.f32 %v52, %v68
  %v72 = vmul.f32 %v55, %v68
  %v73 = vmul.f32 %v58, %v68
  %v74 = vmul.f32 %v61, %v68
  %v75 = vmul.f32 %v64, %v68
  %v76 = vmul.f32 %v67, %v68
  %v77 = vsub.f32 %v28, %v69
  %v78 = vsub.f32 %v29, %v69
  %v79 = vsub.f32 %v30, %v70
  %v80 = vsub.f32 %v31, %v70
  %v81 = vsub.f32 %v32, %v71
  %v82 = vsub.f32 %v33, %v71
  %v83 = vsub.f32 %v34, %v72
  %v84 = vsub.f32 %v35, %v72
  %v85 = vsub.f32 %v36, %v73
  %v86 = vsub.f32 %v37, %v73
  %v87 = vsub.f32 %v38, %v74
  %v88 = vsub.f32 %v39, %v74
  %v89 = vsub.f32 %v40, %v75
  %v90 = vsub.f32 %v41, %v75
  %v91 = vsub.f32 %v42, %v76
  %v92 = vsub.f32 %v43, %v76
  %v93 = vmul.f32 %v77, %v77
  %v94 = vmul.f32 %v78, %v78
  %v95 = vmul.f32 %v79, %v79
  %v96 = vmul.f32 %v80, %v80
  %v97 = vmul.f32 %v81, %v81
  %v98 = vmul.f32 %v82, %v82
  %v99 = vmul.f32 %v83, %v83
  %v100 = vmul.f32 %v84, %v84
  %v101 = vmul.f32 %v85, %v85
  %v102 = vmul.f32 %v86, %v86
  %v103 = vmul.f32 %v87, %v87
  %v104 = vmul.f32 %v88, %v88
  %v105 = vmul.f32 %v89, %v89
  %v106 = vmul.f32 %v90, %v90
  %v107 = vmul.f32 %v91, %v91
  %v108 = vmul.f32 %v92, %v92
  %v109 = vadd.f32 %v93, %v94
  %110 = vadd.xlane.f32.xlu0 %v109
  %v111 = vpop.xlane.xlu0 %110
  %v112 = vadd.f32 %v95, %v96
  %113 = vadd.xlane.f32.xlu0 %v112
  %v114 = vpop.xlane.xlu0 %113
  %v115 = vadd.f32 %v97, %v98
  %116 = vadd.xlane.f32.xlu0 %v115
  %v117 = vpop.xlane.xlu0 %116
  %v118 = vadd.f32 %v99, %v100
  %119 = vadd.xlane.f32.xlu0 %v118
  %v120 = vpop.xlane.xlu0 %119
  %v121 = vadd.f32 %v101, %v102
  %122 = vadd.xlane.f32.xlu0 %v121
  %v123 = vpop.xlane.xlu0 %122
  %v124 = vadd.f32 %v103, %v104
  %125 = vadd.xlane.f32.xlu0 %v124
  %v126 = vpop.xlane.xlu0 %125
  %v127 = vadd.f32 %v105, %v106
  %128 = vadd.xlane.f32.xlu0 %v127
  %v129 = vpop.xlane.xlu0 %128
  %v130 = vadd.f32 %v107, %v108
  %131 = vadd.xlane.f32.xlu0 %v130
  %v132 = vpop.xlane.xlu0 %131
  %v133 = vmul.f32 %v111, %v68
  %v134 = vmul.f32 %v114, %v68
  %v135 = vmul.f32 %v117, %v68
  %v136 = vmul.f32 %v120, %v68
  %v137 = vmul.f32 %v123, %v68
  %v138 = vmul.f32 %v126, %v68
  %v139 = vmul.f32 %v129, %v68
  %v140 = vmul.f32 %v132, %v68
  %v141 = vadd.f32 %v133, 1e-05
  %v142 = vadd.f32 %v134, 1e-05
  %v143 = vadd.f32 %v135, 1e-05
  %v144 = vadd.f32 %v136, 1e-05
  %v145 = vadd.f32 %v137, 1e-05
  %v146 = vadd.f32 %v138, 1e-05
  %v147 = vadd.f32 %v139, 1e-05
  %v148 = vadd.f32 %v140, 1e-05
  %v149 = vrsqrt.pop %v141
  %v150 = vrsqrt.pop %v142
  %v151 = vrsqrt.pop %v143
  %v152 = vrsqrt.pop %v144
  %v153 = vrsqrt.pop %v145
  %v154 = vrsqrt.pop %v146
  %v155 = vrsqrt.pop %v147
  %v156 = vrsqrt.pop %v148
  %v157 = vmul.f32 %v77, %v149
  %v158 = vmul.f32 %v78, %v149
  %v159 = vmul.f32 %v79, %v150
  %v160 = vmul.f32 %v80, %v150
  %v161 = vmul.f32 %v81, %v151
  %v162 = vmul.f32 %v82, %v151
  %v163 = vmul.f32 %v83, %v152
  %v164 = vmul.f32 %v84, %v152
  %v165 = vmul.f32 %v85, %v153
  %v166 = vmul.f32 %v86, %v153
  %v167 = vmul.f32 %v87, %v154
  %v168 = vmul.f32 %v88, %v154
  %v169 = vmul.f32 %v89, %v155
  %v170 = vmul.f32 %v90, %v155
  %v171 = vmul.f32 %v91, %v156
  %v172 = vmul.f32 %v92, %v156
  %v173 = vld [vmem:[%s1] sm:$0x3]
  %v174 = vunpack.c.l.bf16 %v173
  %v176 = vlaneseq
  %v177 = vshrl.u32 %v176, 7
  %v178 = vsub.s32 0, %v177
  %v179 = vrot.slane %v174, %v178
  %v180 = vlaneseq
  %v181 = vshrl.u32 %v180, 7
  %v182 = vsub.s32 2, %v181
  %v183 = vrot.slane %v174, %v182
  %v186 = vlaneseq
  %v187 = vshrl.u32 %v186, 7
  %v188 = vsub.s32 0, %v187
  %v189 = vrot.slane %v179, %v188
  %v190 = vlaneseq
  %v191 = vshrl.u32 %v190, 7
  %v192 = vsub.s32 0, %v191
  %v193 = vrot.slane %v183, %v192
  %v194 = vmul.f32 %v157, %v189
  %v195 = vmul.f32 %v158, %v193
  %v196 = vmul.f32 %v159, %v189
  %v197 = vmul.f32 %v160, %v193
  %v198 = vmul.f32 %v161, %v189
  %v199 = vmul.f32 %v162, %v193
  %v200 = vmul.f32 %v163, %v189
  %v201 = vmul.f32 %v164, %v193
  %v202 = vmul.f32 %v165, %v189
  %v203 = vmul.f32 %v166, %v193
  %v204 = vmul.f32 %v167, %v189
  %v205 = vmul.f32 %v168, %v193
  %v206 = vmul.f32 %v169, %v189
  %v207 = vmul.f32 %v170, %v193
  %v208 = vmul.f32 %v171, %v189
  %v209 = vmul.f32 %v172, %v193
  %v210 = vld [vmem:[%s2] sm:$0x3]
  %v211 = vunpack.c.l.bf16 %v210
  %v213 = vlaneseq
  %v214 = vshrl.u32 %v213, 7
  %v215 = vsub.s32 0, %v214
  %v216 = vrot.slane %v211, %v215
  %v217 = vlaneseq
  %v218 = vshrl.u32 %v217, 7
  %v219 = vsub.s32 2, %v218
  %v220 = vrot.slane %v211, %v219
  %v223 = vlaneseq
  %v224 = vshrl.u32 %v223, 7
  %v225 = vsub.s32 0, %v224
  %v226 = vrot.slane %v216, %v225
  %v227 = vlaneseq
  %v228 = vshrl.u32 %v227, 7
  %v229 = vsub.s32 0, %v228
  %v230 = vrot.slane %v220, %v229
  %v231 = vadd.f32 %v194, %v226
  %v232 = vadd.f32 %v195, %v230
  %v233 = vadd.f32 %v196, %v226
  %v234 = vadd.f32 %v197, %v230
  %v235 = vadd.f32 %v198, %v226
  %v236 = vadd.f32 %v199, %v230
  %v237 = vadd.f32 %v200, %v226
  %v238 = vadd.f32 %v201, %v230
  %v239 = vadd.f32 %v202, %v226
  %v240 = vadd.f32 %v203, %v230
  %v241 = vadd.f32 %v204, %v226
  %v242 = vadd.f32 %v205, %v230
  %v243 = vadd.f32 %v206, %v226
  %v244 = vadd.f32 %v207, %v230
  %v245 = vadd.f32 %v208, %v226
  %v246 = vadd.f32 %v209, %v230
  %v247 = vpack.c.bf16 %v233, %v231
  %v248 = vpack.c.bf16 %v234, %v232
  %v249 = vpack.c.bf16 %v237, %v235
  %v250 = vpack.c.bf16 %v238, %v236
  %v251 = vpack.c.bf16 %v241, %v239
  %v252 = vpack.c.bf16 %v242, %v240
  %v253 = vpack.c.bf16 %v245, %v243
  %v254 = vpack.c.bf16 %v246, %v244
  %v255 = vld [vmem:[%s3] sm:$0xff]
  %v256 = vld [vmem:[%s3 + $0x8] sm:$0xff]
  %v257 = vld [vmem:[%s3 + $0x10] sm:$0xff]
  %v258 = vld [vmem:[%s3 + $0x18] sm:$0xff]
  %v259 = vld [vmem:[%s3 + $0x20] sm:$0xff]
  %v260 = vld [vmem:[%s3 + $0x28] sm:$0xff]
  %v261 = vld [vmem:[%s3 + $0x30] sm:$0xff]
  %v262 = vld [vmem:[%s3 + $0x38] sm:$0xff]
  %v263 = vld [vmem:[%s3 + $0x40] sm:$0xff]
  %v264 = vld [vmem:[%s3 + $0x48] sm:$0xff]
  %v265 = vld [vmem:[%s3 + $0x50] sm:$0xff]
  %v266 = vld [vmem:[%s3 + $0x58] sm:$0xff]
  %v267 = vld [vmem:[%s3 + $0x60] sm:$0xff]
  %v268 = vld [vmem:[%s3 + $0x68] sm:$0xff]
  %v269 = vld [vmem:[%s3 + $0x70] sm:$0xff]
  %v270 = vld [vmem:[%s3 + $0x78] sm:$0xff]
  %v271 = vld [vmem:[%s3 + $0x80] sm:$0xff]
  %v272 = vld [vmem:[%s3 + $0x88] sm:$0xff]
  %v273 = vld [vmem:[%s3 + $0x90] sm:$0xff]
  %v274 = vld [vmem:[%s3 + $0x98] sm:$0xff]
  %v275 = vld [vmem:[%s3 + $0xa0] sm:$0xff]
  %v276 = vld [vmem:[%s3 + $0xa8] sm:$0xff]
  %v277 = vld [vmem:[%s3 + $0xb0] sm:$0xff]
  %v278 = vld [vmem:[%s3 + $0xb8] sm:$0xff]
  %v279 = vld [vmem:[%s3 + $0xc0] sm:$0xff]
  %v280 = vld [vmem:[%s3 + $0xc8] sm:$0xff]
  %v281 = vld [vmem:[%s3 + $0xd0] sm:$0xff]
  %v282 = vld [vmem:[%s3 + $0xd8] sm:$0xff]
  %v283 = vld [vmem:[%s3 + $0xe0] sm:$0xff]
  %v284 = vld [vmem:[%s3 + $0xe8] sm:$0xff]
  %v285 = vld [vmem:[%s3 + $0xf0] sm:$0xff]
  %v286 = vld [vmem:[%s3 + $0xf8] sm:$0xff]
  %v287 = vld [vmem:[%s3 + $0x100] sm:$0xff]
  %v288 = vld [vmem:[%s3 + $0x108] sm:$0xff]
  %v289 = vld [vmem:[%s3 + $0x110] sm:$0xff]
  %v290 = vld [vmem:[%s3 + $0x118] sm:$0xff]
  %v291 = vld [vmem:[%s3 + $0x120] sm:$0xff]
  %v292 = vld [vmem:[%s3 + $0x128] sm:$0xff]
  %v293 = vld [vmem:[%s3 + $0x130] sm:$0xff]
  %v294 = vld [vmem:[%s3 + $0x138] sm:$0xff]
  %v295 = vld [vmem:[%s3 + $0x140] sm:$0xff]
  %v296 = vld [vmem:[%s3 + $0x148] sm:$0xff]
  %v297 = vld [vmem:[%s3 + $0x150] sm:$0xff]
  %v298 = vld [vmem:[%s3 + $0x158] sm:$0xff]
  %v299 = vld [vmem:[%s3 + $0x160] sm:$0xff]
  %v300 = vld [vmem:[%s3 + $0x168] sm:$0xff]
  %v301 = vld [vmem:[%s3 + $0x170] sm:$0xff]
  %v302 = vld [vmem:[%s3 + $0x178] sm:$0xff]
  %v303 = vld [vmem:[%s3 + $0x180] sm:$0xff]
  %v304 = vld [vmem:[%s3 + $0x188] sm:$0xff]
  %v305 = vld [vmem:[%s3 + $0x190] sm:$0xff]
  %v306 = vld [vmem:[%s3 + $0x198] sm:$0xff]
  %v307 = vld [vmem:[%s3 + $0x1a0] sm:$0xff]
  %v308 = vld [vmem:[%s3 + $0x1a8] sm:$0xff]
  %v309 = vld [vmem:[%s3 + $0x1b0] sm:$0xff]
  %v310 = vld [vmem:[%s3 + $0x1b8] sm:$0xff]
  %v311 = vld [vmem:[%s3 + $0x1c0] sm:$0xff]
  %v312 = vld [vmem:[%s3 + $0x1c8] sm:$0xff]
  %v313 = vld [vmem:[%s3 + $0x1d0] sm:$0xff]
  %v314 = vld [vmem:[%s3 + $0x1d8] sm:$0xff]
  %v315 = vld [vmem:[%s3 + $0x1e0] sm:$0xff]
  %v316 = vld [vmem:[%s3 + $0x1e8] sm:$0xff]
  %v317 = vld [vmem:[%s3 + $0x1f0] sm:$0xff]
  %v318 = vld [vmem:[%s3 + $0x1f8] sm:$0xff]
  %v319 = vld [vmem:[%s3 + $0x200] sm:$0xff]
  %v320 = vld [vmem:[%s3 + $0x208] sm:$0xff]
  %v321 = vld [vmem:[%s3 + $0x210] sm:$0xff]
  %v322 = vld [vmem:[%s3 + $0x218] sm:$0xff]
  %v323 = vld [vmem:[%s3 + $0x220] sm:$0xff]
  %v324 = vld [vmem:[%s3 + $0x228] sm:$0xff]
  %v325 = vld [vmem:[%s3 + $0x230] sm:$0xff]
  %v326 = vld [vmem:[%s3 + $0x238] sm:$0xff]
  %v327 = vld [vmem:[%s3 + $0x240] sm:$0xff]
  %v328 = vld [vmem:[%s3 + $0x248] sm:$0xff]
  %v329 = vld [vmem:[%s3 + $0x250] sm:$0xff]
  %v330 = vld [vmem:[%s3 + $0x258] sm:$0xff]
  %v331 = vld [vmem:[%s3 + $0x260] sm:$0xff]
  %v332 = vld [vmem:[%s3 + $0x268] sm:$0xff]
  %v333 = vld [vmem:[%s3 + $0x270] sm:$0xff]
  %v334 = vld [vmem:[%s3 + $0x278] sm:$0xff]
  %v335 = vld [vmem:[%s3 + $0x280] sm:$0xff]
  %v336 = vld [vmem:[%s3 + $0x288] sm:$0xff]
  %v337 = vld [vmem:[%s3 + $0x290] sm:$0xff]
  %v338 = vld [vmem:[%s3 + $0x298] sm:$0xff]
  %v339 = vld [vmem:[%s3 + $0x2a0] sm:$0xff]
  %v340 = vld [vmem:[%s3 + $0x2a8] sm:$0xff]
  %v341 = vld [vmem:[%s3 + $0x2b0] sm:$0xff]
  %v342 = vld [vmem:[%s3 + $0x2b8] sm:$0xff]
  %v343 = vld [vmem:[%s3 + $0x2c0] sm:$0xff]
  %v344 = vld [vmem:[%s3 + $0x2c8] sm:$0xff]
  %v345 = vld [vmem:[%s3 + $0x2d0] sm:$0xff]
  %v346 = vld [vmem:[%s3 + $0x2d8] sm:$0xff]
  %v347 = vld [vmem:[%s3 + $0x2e0] sm:$0xff]
  %v348 = vld [vmem:[%s3 + $0x2e8] sm:$0xff]
  %v349 = vld [vmem:[%s3 + $0x2f0] sm:$0xff]
  %v350 = vld [vmem:[%s3 + $0x2f8] sm:$0xff]
  %v351 = vld [vmem:[%s4] sm:$0x3f]
  %v352 = vunpack.c.l.bf16 %v351
  %v353 = vunpack.c.h.bf16 %v351
  %v356 = vlaneseq
  %v357 = vshrl.u32 %v356, 7
  %v358 = vsub.s32 0, %v357
  %v359 = vrot.slane %v352, %v358
  %v360 = vlaneseq
  %v361 = vshrl.u32 %v360, 7
  %v362 = vsub.s32 2, %v361
  %v363 = vrot.slane %v352, %v362
  %v364 = vlaneseq
  %v365 = vshrl.u32 %v364, 7
  %v366 = vsub.s32 4, %v365
  %v367 = vrot.slane %v352, %v366
  %v368 = vlaneseq
  %v369 = vshrl.u32 %v368, 7
  %v370 = vsub.s32 6, %v369
  %v371 = vrot.slane %v352, %v370
  %v372 = vlaneseq
  %v373 = vshrl.u32 %v372, 7
  %v374 = vsub.s32 0, %v373
  %v375 = vrot.slane %v353, %v374
  %v376 = vlaneseq
  %v377 = vshrl.u32 %v376, 7
  %v378 = vsub.s32 2, %v377
  %v379 = vrot.slane %v353, %v378
  %v386 = vlaneseq
  %v387 = vshrl.u32 %v386, 7
  %v388 = vsub.s32 0, %v387
  %v389 = vrot.slane %v359, %v388
  %v390 = vlaneseq
  %v391 = vshrl.u32 %v390, 7
  %v392 = vsub.s32 0, %v391
  %v393 = vrot.slane %v363, %v392
  %v394 = vlaneseq
  %v395 = vshrl.u32 %v394, 7
  %v396 = vsub.s32 0, %v395
  %v397 = vrot.slane %v367, %v396
  %v398 = vlaneseq
  %v399 = vshrl.u32 %v398, 7
  %v400 = vsub.s32 0, %v399
  %v401 = vrot.slane %v371, %v400
  %v402 = vlaneseq
  %v403 = vshrl.u32 %v402, 7
  %v404 = vsub.s32 0, %v403
  %v405 = vrot.slane %v375, %v404
  %v406 = vlaneseq
  %v407 = vshrl.u32 %v406, 7
  %v408 = vsub.s32 0, %v407
  %v409 = vrot.slane %v379, %v408
  %v506 = vunpack.c.l.b16 %v255
  %v507 = vunpack.c.h.b16 %v255
  %v508 = vunpack.c.l.b16 %v256
  %v509 = vunpack.c.h.b16 %v256
  %v510 = vunpack.c.l.b16 %v257
  %v511 = vunpack.c.h.b16 %v257
  %v512 = vunpack.c.l.b16 %v258
  %v513 = vunpack.c.h.b16 %v258
  %v514 = vunpack.c.l.b16 %v259
  %v515 = vunpack.c.h.b16 %v259
  %v516 = vunpack.c.l.b16 %v260
  %v517 = vunpack.c.h.b16 %v260
  %v518 = vunpack.c.l.b16 %v261
  %v519 = vunpack.c.h.b16 %v261
  %v520 = vunpack.c.l.b16 %v262
  %v521 = vunpack.c.h.b16 %v262
  %v522 = vunpack.c.l.b16 %v263
  %v523 = vunpack.c.h.b16 %v263
  %v524 = vunpack.c.l.b16 %v264
  %v525 = vunpack.c.h.b16 %v264
  %v526 = vunpack.c.l.b16 %v265
  %v527 = vunpack.c.h.b16 %v265
  %v528 = vunpack.c.l.b16 %v266
  %v529 = vunpack.c.h.b16 %v266
  %v530 = vunpack.c.l.b16 %v267
  %v531 = vunpack.c.h.b16 %v267
  %v532 = vunpack.c.l.b16 %v268
  %v533 = vunpack.c.h.b16 %v268
  %v534 = vunpack.c.l.b16 %v269
  %v535 = vunpack.c.h.b16 %v269
  %v536 = vunpack.c.l.b16 %v270
  %v537 = vunpack.c.h.b16 %v270
  %v538 = vunpack.c.l.b16 %v271
  %v539 = vunpack.c.h.b16 %v271
  %v540 = vunpack.c.l.b16 %v272
  %v541 = vunpack.c.h.b16 %v272
  %v542 = vunpack.c.l.b16 %v273
  %v543 = vunpack.c.h.b16 %v273
  %v544 = vunpack.c.l.b16 %v274
  %v545 = vunpack.c.h.b16 %v274
  %v546 = vunpack.c.l.b16 %v275
  %v547 = vunpack.c.h.b16 %v275
  %v548 = vunpack.c.l.b16 %v276
  %v549 = vunpack.c.h.b16 %v276
  %v550 = vunpack.c.l.b16 %v277
  %v551 = vunpack.c.h.b16 %v277
  %v552 = vunpack.c.l.b16 %v278
  %v553 = vunpack.c.h.b16 %v278
  %v554 = vunpack.c.l.b16 %v279
  %v555 = vunpack.c.h.b16 %v279
  %v556 = vunpack.c.l.b16 %v280
  %v557 = vunpack.c.h.b16 %v280
  %v558 = vunpack.c.l.b16 %v281
  %v559 = vunpack.c.h.b16 %v281
  %v560 = vunpack.c.l.b16 %v282
  %v561 = vunpack.c.h.b16 %v282
  %v562 = vunpack.c.l.b16 %v283
  %v563 = vunpack.c.h.b16 %v283
  %v564 = vunpack.c.l.b16 %v284
  %v565 = vunpack.c.h.b16 %v284
  %v566 = vunpack.c.l.b16 %v285
  %v567 = vunpack.c.h.b16 %v285
  %v568 = vunpack.c.l.b16 %v286
  %v569 = vunpack.c.h.b16 %v286
  %v570 = vunpack.c.l.b16 %v287
  %v571 = vunpack.c.h.b16 %v287
  %v572 = vunpack.c.l.b16 %v288
  %v573 = vunpack.c.h.b16 %v288
  %v574 = vunpack.c.l.b16 %v289
  %v575 = vunpack.c.h.b16 %v289
  %v576 = vunpack.c.l.b16 %v290
  %v577 = vunpack.c.h.b16 %v290
  %v578 = vunpack.c.l.b16 %v291
  %v579 = vunpack.c.h.b16 %v291
  %v580 = vunpack.c.l.b16 %v292
  %v581 = vunpack.c.h.b16 %v292
  %v582 = vunpack.c.l.b16 %v293
  %v583 = vunpack.c.h.b16 %v293
  %v584 = vunpack.c.l.b16 %v294
  %v585 = vunpack.c.h.b16 %v294
  %v586 = vunpack.c.l.b16 %v295
  %v587 = vunpack.c.h.b16 %v295
  %v588 = vunpack.c.l.b16 %v296
  %v589 = vunpack.c.h.b16 %v296
  %v590 = vunpack.c.l.b16 %v297
  %v591 = vunpack.c.h.b16 %v297
  %v592 = vunpack.c.l.b16 %v298
  %v593 = vunpack.c.h.b16 %v298
  %v594 = vunpack.c.l.b16 %v299
  %v595 = vunpack.c.h.b16 %v299
  %v596 = vunpack.c.l.b16 %v300
  %v597 = vunpack.c.h.b16 %v300
  %v598 = vunpack.c.l.b16 %v301
  %v599 = vunpack.c.h.b16 %v301
  %v600 = vunpack.c.l.b16 %v302
  %v601 = vunpack.c.h.b16 %v302
  %v602 = vunpack.c.l.b16 %v303
  %v603 = vunpack.c.h.b16 %v303
  %v604 = vunpack.c.l.b16 %v304
  %v605 = vunpack.c.h.b16 %v304
  %v606 = vunpack.c.l.b16 %v305
  %v607 = vunpack.c.h.b16 %v305
  %v608 = vunpack.c.l.b16 %v306
  %v609 = vunpack.c.h.b16 %v306
  %v610 = vunpack.c.l.b16 %v307
  %v611 = vunpack.c.h.b16 %v307
  %v612 = vunpack.c.l.b16 %v308
  %v613 = vunpack.c.h.b16 %v308
  %v614 = vunpack.c.l.b16 %v309
  %v615 = vunpack.c.h.b16 %v309
  %v616 = vunpack.c.l.b16 %v310
  %v617 = vunpack.c.h.b16 %v310
  %v618 = vunpack.c.l.b16 %v311
  %v619 = vunpack.c.h.b16 %v311
  %v620 = vunpack.c.l.b16 %v312
  %v621 = vunpack.c.h.b16 %v312
  %v622 = vunpack.c.l.b16 %v313
  %v623 = vunpack.c.h.b16 %v313
  %v624 = vunpack.c.l.b16 %v314
  %v625 = vunpack.c.h.b16 %v314
  %v626 = vunpack.c.l.b16 %v315
  %v627 = vunpack.c.h.b16 %v315
  %v628 = vunpack.c.l.b16 %v316
  %v629 = vunpack.c.h.b16 %v316
  %v630 = vunpack.c.l.b16 %v317
  %v631 = vunpack.c.h.b16 %v317
  %v632 = vunpack.c.l.b16 %v318
  %v633 = vunpack.c.h.b16 %v318
  %v634 = vunpack.c.l.b16 %v319
  %v635 = vunpack.c.h.b16 %v319
  %v636 = vunpack.c.l.b16 %v320
  %v637 = vunpack.c.h.b16 %v320
  %v638 = vunpack.c.l.b16 %v321
  %v639 = vunpack.c.h.b16 %v321
  %v640 = vunpack.c.l.b16 %v322
  %v641 = vunpack.c.h.b16 %v322
  %v642 = vunpack.c.l.b16 %v323
  %v643 = vunpack.c.h.b16 %v323
  %v644 = vunpack.c.l.b16 %v324
  %v645 = vunpack.c.h.b16 %v324
  %v646 = vunpack.c.l.b16 %v325
  %v647 = vunpack.c.h.b16 %v325
  %v648 = vunpack.c.l.b16 %v326
  %v649 = vunpack.c.h.b16 %v326
  %v650 = vunpack.c.l.b16 %v327
  %v651 = vunpack.c.h.b16 %v327
  %v652 = vunpack.c.l.b16 %v328
  %v653 = vunpack.c.h.b16 %v328
  %v654 = vunpack.c.l.b16 %v329
  %v655 = vunpack.c.h.b16 %v329
  %v656 = vunpack.c.l.b16 %v330
  %v657 = vunpack.c.h.b16 %v330
  %v658 = vunpack.c.l.b16 %v331
  %v659 = vunpack.c.h.b16 %v331
  %v660 = vunpack.c.l.b16 %v332
  %v661 = vunpack.c.h.b16 %v332
  %v662 = vunpack.c.l.b16 %v333
  %v663 = vunpack.c.h.b16 %v333
  %v664 = vunpack.c.l.b16 %v334
  %v665 = vunpack.c.h.b16 %v334
  %v666 = vunpack.c.l.b16 %v335
  %v667 = vunpack.c.h.b16 %v335
  %v668 = vunpack.c.l.b16 %v336
  %v669 = vunpack.c.h.b16 %v336
  %v670 = vunpack.c.l.b16 %v337
  %v671 = vunpack.c.h.b16 %v337
  %v672 = vunpack.c.l.b16 %v338
  %v673 = vunpack.c.h.b16 %v338
  %v674 = vunpack.c.l.b16 %v339
  %v675 = vunpack.c.h.b16 %v339
  %v676 = vunpack.c.l.b16 %v340
  %v677 = vunpack.c.h.b16 %v340
  %v678 = vunpack.c.l.b16 %v341
  %v679 = vunpack.c.h.b16 %v341
  %v680 = vunpack.c.l.b16 %v342
  %v681 = vunpack.c.h.b16 %v342
  %v682 = vunpack.c.l.b16 %v343
  %v683 = vunpack.c.h.b16 %v343
  %v684 = vunpack.c.l.b16 %v344
  %v685 = vunpack.c.h.b16 %v344
  %v686 = vunpack.c.l.b16 %v345
  %v687 = vunpack.c.h.b16 %v345
  %v688 = vunpack.c.l.b16 %v346
  %v689 = vunpack.c.h.b16 %v346
  %v690 = vunpack.c.l.b16 %v347
  %v691 = vunpack.c.h.b16 %v347
  %v692 = vunpack.c.l.b16 %v348
  %v693 = vunpack.c.h.b16 %v348
  %v694 = vunpack.c.l.b16 %v349
  %v695 = vunpack.c.h.b16 %v349
  %v696 = vunpack.c.l.b16 %v350
  %v697 = vunpack.c.h.b16 %v350
  %v698 = vpack.c.b16 %v512, %v506
  %v699 = vpack.c.b16 %v513, %v507
  %v700 = vpack.c.b16 %v514, %v508
  %v701 = vpack.c.b16 %v515, %v509
  %v702 = vpack.c.b16 %v516, %v510
  %v703 = vpack.c.b16 %v517, %v511
  %v704 = vpack.c.b16 %v524, %v518
  %v705 = vpack.c.b16 %v525, %v519
  %v706 = vpack.c.b16 %v526, %v520
  %v707 = vpack.c.b16 %v527, %v521
  %v708 = vpack.c.b16 %v528, %v522
  %v709 = vpack.c.b16 %v529, %v523
  %v710 = vpack.c.b16 %v536, %v530
  %v711 = vpack.c.b16 %v537, %v531
  %v712 = vpack.c.b16 %v538, %v532
  %v713 = vpack.c.b16 %v539, %v533
  %v714 = vpack.c.b16 %v540, %v534
  %v715 = vpack.c.b16 %v541, %v535
  %v716 = vpack.c.b16 %v548, %v542
  %v717 = vpack.c.b16 %v549, %v543
  %v718 = vpack.c.b16 %v550, %v544
  %v719 = vpack.c.b16 %v551, %v545
  %v720 = vpack.c.b16 %v552, %v546
  %v721 = vpack.c.b16 %v553, %v547
  %v722 = vpack.c.b16 %v560, %v554
  %v723 = vpack.c.b16 %v561, %v555
  %v724 = vpack.c.b16 %v562, %v556
  %v725 = vpack.c.b16 %v563, %v557
  %v726 = vpack.c.b16 %v564, %v558
  %v727 = vpack.c.b16 %v565, %v559
  %v728 = vpack.c.b16 %v572, %v566
  %v729 = vpack.c.b16 %v573, %v567
  %v730 = vpack.c.b16 %v574, %v568
  %v731 = vpack.c.b16 %v575, %v569
  %v732 = vpack.c.b16 %v576, %v570
  %v733 = vpack.c.b16 %v577, %v571
  %v734 = vpack.c.b16 %v584, %v578
  %v735 = vpack.c.b16 %v585, %v579
  %v736 = vpack.c.b16 %v586, %v580
  %v737 = vpack.c.b16 %v587, %v581
  %v738 = vpack.c.b16 %v588, %v582
  %v739 = vpack.c.b16 %v589, %v583
  %v740 = vpack.c.b16 %v596, %v590
  %v741 = vpack.c.b16 %v597, %v591
  %v742 = vpack.c.b16 %v598, %v592
  %v743 = vpack.c.b16 %v599, %v593
  %v744 = vpack.c.b16 %v600, %v594
  %v745 = vpack.c.b16 %v601, %v595
  %v746 = vpack.c.b16 %v608, %v602
  %v747 = vpack.c.b16 %v609, %v603
  %v748 = vpack.c.b16 %v610, %v604
  %v749 = vpack.c.b16 %v611, %v605
  %v750 = vpack.c.b16 %v612, %v606
  %v751 = vpack.c.b16 %v613, %v607
  %v752 = vpack.c.b16 %v620, %v614
  %v753 = vpack.c.b16 %v621, %v615
  %v754 = vpack.c.b16 %v622, %v616
  %v755 = vpack.c.b16 %v623, %v617
  %v756 = vpack.c.b16 %v624, %v618
  %v757 = vpack.c.b16 %v625, %v619
  %v758 = vpack.c.b16 %v632, %v626
  %v759 = vpack.c.b16 %v633, %v627
  %v760 = vpack.c.b16 %v634, %v628
  %v761 = vpack.c.b16 %v635, %v629
  %v762 = vpack.c.b16 %v636, %v630
  %v763 = vpack.c.b16 %v637, %v631
  %v764 = vpack.c.b16 %v644, %v638
  %v765 = vpack.c.b16 %v645, %v639
  %v766 = vpack.c.b16 %v646, %v640
  %v767 = vpack.c.b16 %v647, %v641
  %v768 = vpack.c.b16 %v648, %v642
  %v769 = vpack.c.b16 %v649, %v643
  %v770 = vpack.c.b16 %v656, %v650
  %v771 = vpack.c.b16 %v657, %v651
  %v772 = vpack.c.b16 %v658, %v652
  %v773 = vpack.c.b16 %v659, %v653
  %v774 = vpack.c.b16 %v660, %v654
  %v775 = vpack.c.b16 %v661, %v655
  %v776 = vpack.c.b16 %v668, %v662
  %v777 = vpack.c.b16 %v669, %v663
  %v778 = vpack.c.b16 %v670, %v664
  %v779 = vpack.c.b16 %v671, %v665
  %v780 = vpack.c.b16 %v672, %v666
  %v781 = vpack.c.b16 %v673, %v667
  %v782 = vpack.c.b16 %v680, %v674
  %v783 = vpack.c.b16 %v681, %v675
  %v784 = vpack.c.b16 %v682, %v676
  %v785 = vpack.c.b16 %v683, %v677
  %v786 = vpack.c.b16 %v684, %v678
  %v787 = vpack.c.b16 %v685, %v679
  %v788 = vpack.c.b16 %v692, %v686
  %v789 = vpack.c.b16 %v693, %v687
  %v790 = vpack.c.b16 %v694, %v688
  %v791 = vpack.c.b16 %v695, %v689
  %v792 = vpack.c.b16 %v696, %v690
  %v793 = vpack.c.b16 %v697, %v691
  %890 = vmatprep.subr.bf16.mxu0 %v699
  %891 = vmatpush1.bf16.msra.mxu0 %v698
  %892 = vmatprep.subr.bf16.mxu0 %v705
  %893 = vmatpush1.bf16.msra.mxu0 %v704
  %894 = vmatprep.subr.bf16.mxu0 %v711
  %895 = vmatpush1.bf16.msra.mxu0 %v710
  %896 = vmatprep.subr.bf16.mxu0 %v717
  %897 = vmatpush1.bf16.msra.mxu0 %v716
  %898 = vmatprep.subr.bf16.mxu0 %v723
  %899 = vmatpush1.bf16.msra.mxu0 %v722
  %900 = vmatprep.subr.bf16.mxu0 %v729
  %901 = vmatpush1.bf16.msra.mxu0 %v728
  %902 = vmatprep.subr.bf16.mxu0 %v735
  %903 = vmatpush1.bf16.msra.mxu0 %v734
  %904 = vmatprep.subr.bf16.mxu0 %v741
  %905 = vmatpush1.bf16.msra.mxu0 %v740
  %906 = vmatprep.subr.bf16.mxu0 %v747
  %907 = vmatpush1.bf16.msra.mxu0 %v746
  %908 = vmatprep.subr.bf16.mxu0 %v753
  %909 = vmatpush1.bf16.msra.mxu0 %v752
  %910 = vmatprep.subr.bf16.mxu0 %v759
  %911 = vmatpush1.bf16.msra.mxu0 %v758
  %912 = vmatprep.subr.bf16.mxu0 %v765
  %913 = vmatpush1.bf16.msra.mxu0 %v764
  %914 = vmatprep.subr.bf16.mxu0 %v771
  %915 = vmatpush1.bf16.msra.mxu0 %v770
  %916 = vmatprep.subr.bf16.mxu0 %v777
  %917 = vmatpush1.bf16.msra.mxu0 %v776
  %918 = vmatprep.subr.bf16.mxu0 %v783
  %919 = vmatpush1.bf16.msra.mxu0 %v782
  %920 = vmatprep.subr.bf16.mxu0 %v789
  %921 = vmatpush1.bf16.msra.mxu0 %v788
  %922 = vmatprep.mubr.bf16.mxu0 %v248
  %923 = vmatmul.mubr.bf16.gmra.mrb[0].mxu0 %v247
  %v924 = vpop.f32.mrb[0].mxu0
  %v925 = vadd.f32 %v389, %v924
  %v926 = vpop.f32.mrb[0].mxu0
  %v927 = vadd.f32 %v393, %v926
  %v928 = vpop.f32.mrb[0].mxu0
  %v929 = vadd.f32 %v389, %v928
  %v930 = vpop.f32.mrb[0].mxu0
  %v931 = vadd.f32 %v393, %v930
  %932 = vmatprep.mubr.bf16.mxu0 %v250
  %933 = vmatmul.mubr.bf16.gmra.mrb[0].mxu0 %v249
  %v934 = vpop.f32.mrb[0].mxu0
  %v935 = vadd.f32 %v389, %v934
  %v936 = vpop.f32.mrb[0].mxu0
  %v937 = vadd.f32 %v393, %v936
  %v938 = vpop.f32.mrb[0].mxu0
  %v939 = vadd.f32 %v389, %v938
  %v940 = vpop.f32.mrb[0].mxu0
  %v941 = vadd.f32 %v393, %v940
  %942 = vmatprep.mubr.bf16.mxu0 %v252
  %943 = vmatmul.mubr.bf16.gmra.mrb[0].mxu0 %v251
  %v944 = vpop.f32.mrb[0].mxu0
  %v945 = vadd.f32 %v389, %v944
  %v946 = vpop.f32.mrb[0].mxu0
  %v947 = vadd.f32 %v393, %v946
  %v948 = vpop.f32.mrb[0].mxu0
  %v949 = vadd.f32 %v389, %v948
  %v950 = vpop.f32.mrb[0].mxu0
  %v951 = vadd.f32 %v393, %v950
  %952 = vmatprep.mubr.bf16.mxu0 %v254
  %953 = vmatmul.mubr.bf16.gmra.mrb[0].mxu0 %v253
  %v954 = vpop.f32.mrb[0].mxu0
  %v955 = vadd.f32 %v389, %v954
  %v956 = vpop.f32.mrb[0].mxu0
  %v957 = vadd.f32 %v393, %v956
  %v958 = vpop.f32.mrb[0].mxu0
  %v959 = vadd.f32 %v389, %v958
  %v960 = vpop.f32.mrb[0].mxu0
  %v961 = vadd.f32 %v393, %v960
  %962 = vdwg.mxu0
  %963 = vmatprep.subr.bf16.mxu0 %v701
  %964 = vmatpush1.bf16.msra.mxu0 %v700
  %965 = vmatprep.subr.bf16.mxu0 %v707
  %966 = vmatpush1.bf16.msra.mxu0 %v706
  %967 = vmatprep.subr.bf16.mxu0 %v713
  %968 = vmatpush1.bf16.msra.mxu0 %v712
  %969 = vmatprep.subr.bf16.mxu0 %v719
  %970 = vmatpush1.bf16.msra.mxu0 %v718
  %971 = vmatprep.subr.bf16.mxu0 %v725
  %972 = vmatpush1.bf16.msra.mxu0 %v724
  %973 = vmatprep.subr.bf16.mxu0 %v731
  %974 = vmatpush1.bf16.msra.mxu0 %v730
  %975 = vmatprep.subr.bf16.mxu0 %v737
  %976 = vmatpush1.bf16.msra.mxu0 %v736
  %977 = vmatprep.subr.bf16.mxu0 %v743
  %978 = vmatpush1.bf16.msra.mxu0 %v742
  %979 = vmatprep.subr.bf16.mxu0 %v749
  %980 = vmatpush1.bf16.msra.mxu0 %v748
  %981 = vmatprep.subr.bf16.mxu0 %v755
  %982 = vmatpush1.bf16.msra.mxu0 %v754
  %983 = vmatprep.subr.bf16.mxu0 %v761
  %984 = vmatpush1.bf16.msra.mxu0 %v760
  %985 = vmatprep.subr.bf16.mxu0 %v767
  %986 = vmatpush1.bf16.msra.mxu0 %v766
  %987 = vmatprep.subr.bf16.mxu0 %v773
  %988 = vmatpush1.bf16.msra.mxu0 %v772
  %989 = vmatprep.subr.bf16.mxu0 %v779
  %990 = vmatpush1.bf16.msra.mxu0 %v778
  %991 = vmatprep.subr.bf16.mxu0 %v785
  %992 = vmatpush1.bf16.msra.mxu0 %v784
  %993 = vmatprep.subr.bf16.mxu0 %v791
  %994 = vmatpush1.bf16.msra.mxu0 %v790
  %995 = vmatprep.mubr.bf16.mxu0 %v248
  %996 = vmatmul.mubr.bf16.gmra.mrb[0].mxu0 %v247
  %v997 = vpop.f32.mrb[0].mxu0
  %v998 = vadd.f32 %v397, %v997
  %v999 = vpop.f32.mrb[0].mxu0
  %v1000 = vadd.f32 %v401, %v999
  %v1001 = vpop.f32.mrb[0].mxu0
  %v1002 = vadd.f32 %v397, %v1001
  %v1003 = vpop.f32.mrb[0].mxu0
  %v1004 = vadd.f32 %v401, %v1003
  %1005 = vmatprep.mubr.bf16.mxu0 %v250
  %1006 = vmatmul.mubr.bf16.gmra.mrb[0].mxu0 %v249
  %v1007 = vpop.f32.mrb[0].mxu0
  %v1008 = vadd.f32 %v397, %v1007
  %v1009 = vpop.f32.mrb[0].mxu0
  %v1010 = vadd.f32 %v401, %v1009
  %v1011 = vpop.f32.mrb[0].mxu0
  %v1012 = vadd.f32 %v397, %v1011
  %v1013 = vpop.f32.mrb[0].mxu0
  %v1014 = vadd.f32 %v401, %v1013
  %1015 = vmatprep.mubr.bf16.mxu0 %v252
  %1016 = vmatmul.mubr.bf16.gmra.mrb[0].mxu0 %v251
  %v1017 = vpop.f32.mrb[0].mxu0
  %v1018 = vadd.f32 %v397, %v1017
  %v1019 = vpop.f32.mrb[0].mxu0
  %v1020 = vadd.f32 %v401, %v1019
  %v1021 = vpop.f32.mrb[0].mxu0
  %v1022 = vadd.f32 %v397, %v1021
  %v1023 = vpop.f32.mrb[0].mxu0
  %v1024 = vadd.f32 %v401, %v1023
  %1025 = vmatprep.mubr.bf16.mxu0 %v254
  %1026 = vmatmul.mubr.bf16.gmra.mrb[0].mxu0 %v253
  %v1027 = vpop.f32.mrb[0].mxu0
  %v1028 = vadd.f32 %v397, %v1027
  %v1029 = vpop.f32.mrb[0].mxu0
  %v1030 = vadd.f32 %v401, %v1029
  %v1031 = vpop.f32.mrb[0].mxu0
  %v1032 = vadd.f32 %v397, %v1031
  %v1033 = vpop.f32.mrb[0].mxu0
  %v1034 = vadd.f32 %v401, %v1033
  %1035 = vdwg.mxu0
  %1036 = vmatprep.subr.bf16.mxu0 %v703
  %1037 = vmatpush1.bf16.msra.mxu0 %v702
  %1038 = vmatprep.subr.bf16.mxu0 %v709
  %1039 = vmatpush1.bf16.msra.mxu0 %v708
  %1040 = vmatprep.subr.bf16.mxu0 %v715
  %1041 = vmatpush1.bf16.msra.mxu0 %v714
  %1042 = vmatprep.subr.bf16.mxu0 %v721
  %1043 = vmatpush1.bf16.msra.mxu0 %v720
  %1044 = vmatprep.subr.bf16.mxu0 %v727
  %1045 = vmatpush1.bf16.msra.mxu0 %v726
  %1046 = vmatprep.subr.bf16.mxu0 %v733
  %1047 = vmatpush1.bf16.msra.mxu0 %v732
  %1048 = vmatprep.subr.bf16.mxu0 %v739
  %1049 = vmatpush1.bf16.msra.mxu0 %v738
  %1050 = vmatprep.subr.bf16.mxu0 %v745
  %1051 = vmatpush1.bf16.msra.mxu0 %v744
  %1052 = vmatprep.subr.bf16.mxu0 %v751
  %1053 = vmatpush1.bf16.msra.mxu0 %v750
  %1054 = vmatprep.subr.bf16.mxu0 %v757
  %1055 = vmatpush1.bf16.msra.mxu0 %v756
  %1056 = vmatprep.subr.bf16.mxu0 %v763
  %1057 = vmatpush1.bf16.msra.mxu0 %v762
  %1058 = vmatprep.subr.bf16.mxu0 %v769
  %1059 = vmatpush1.bf16.msra.mxu0 %v768
  %1060 = vmatprep.subr.bf16.mxu0 %v775
  %1061 = vmatpush1.bf16.msra.mxu0 %v774
  %1062 = vmatprep.subr.bf16.mxu0 %v781
  %1063 = vmatpush1.bf16.msra.mxu0 %v780
  %1064 = vmatprep.subr.bf16.mxu0 %v787
  %1065 = vmatpush1.bf16.msra.mxu0 %v786
  %1066 = vmatprep.subr.bf16.mxu0 %v793
  %1067 = vmatpush1.bf16.msra.mxu0 %v792
  %1068 = vmatprep.mubr.bf16.mxu0 %v248
  %1069 = vmatmul.mubr.bf16.gmra.mrb[0].mxu0 %v247
  %v1070 = vpop.f32.mrb[0].mxu0
  %v1071 = vadd.f32 %v405, %v1070
  %v1072 = vpop.f32.mrb[0].mxu0
  %v1073 = vadd.f32 %v409, %v1072
  %v1074 = vpop.f32.mrb[0].mxu0
  %v1075 = vadd.f32 %v405, %v1074
  %v1076 = vpop.f32.mrb[0].mxu0
  %v1077 = vadd.f32 %v409, %v1076
  %1078 = vmatprep.mubr.bf16.mxu0 %v250
  %1079 = vmatmul.mubr.bf16.gmra.mrb[0].mxu0 %v249
  %v1080 = vpop.f32.mrb[0].mxu0
  %v1081 = vadd.f32 %v405, %v1080
  %v1082 = vpop.f32.mrb[0].mxu0
  %v1083 = vadd.f32 %v409, %v1082
  %v1084 = vpop.f32.mrb[0].mxu0
  %v1085 = vadd.f32 %v405, %v1084
  %v1086 = vpop.f32.mrb[0].mxu0
  %v1087 = vadd.f32 %v409, %v1086
  %1088 = vmatprep.mubr.bf16.mxu0 %v252
  %1089 = vmatmul.mubr.bf16.gmra.mrb[0].mxu0 %v251
  %v1090 = vpop.f32.mrb[0].mxu0
  %v1091 = vadd.f32 %v405, %v1090
  %v1092 = vpop.f32.mrb[0].mxu0
  %v1093 = vadd.f32 %v409, %v1092
  %v1094 = vpop.f32.mrb[0].mxu0
  %v1095 = vadd.f32 %v405, %v1094
  %v1096 = vpop.f32.mrb[0].mxu0
  %v1097 = vadd.f32 %v409, %v1096
  %1098 = vmatprep.mubr.bf16.mxu0 %v254
  %1099 = vmatmul.mubr.bf16.gmra.mrb[0].mxu0 %v253
  %v1100 = vpop.f32.mrb[0].mxu0
  %v1101 = vadd.f32 %v405, %v1100
  %v1102 = vpop.f32.mrb[0].mxu0
  %v1103 = vadd.f32 %v409, %v1102
  %v1104 = vpop.f32.mrb[0].mxu0
  %v1105 = vadd.f32 %v405, %v1104
  %v1106 = vpop.f32.mrb[0].mxu0
  %v1107 = vadd.f32 %v409, %v1106
  %1108 = vdwg.mxu0
  %v1109 = vpack.c.bf16 %v929, %v925
  %v1110 = vpack.c.bf16 %v931, %v927
  %v1111 = vpack.c.bf16 %v1002, %v998
  %v1112 = vpack.c.bf16 %v1004, %v1000
  %v1113 = vpack.c.bf16 %v1075, %v1071
  %v1114 = vpack.c.bf16 %v1077, %v1073
  %v1115 = vpack.c.bf16 %v939, %v935
  %v1116 = vpack.c.bf16 %v941, %v937
  %v1117 = vpack.c.bf16 %v1012, %v1008
  %v1118 = vpack.c.bf16 %v1014, %v1010
  %v1119 = vpack.c.bf16 %v1085, %v1081
  %v1120 = vpack.c.bf16 %v1087, %v1083
  %v1121 = vpack.c.bf16 %v949, %v945
  %v1122 = vpack.c.bf16 %v951, %v947
  %v1123 = vpack.c.bf16 %v1022, %v1018
  %v1124 = vpack.c.bf16 %v1024, %v1020
  %v1125 = vpack.c.bf16 %v1095, %v1091
  %v1126 = vpack.c.bf16 %v1097, %v1093
  %v1127 = vpack.c.bf16 %v959, %v955
  %v1128 = vpack.c.bf16 %v961, %v957
  %v1129 = vpack.c.bf16 %v1032, %v1028
  %v1130 = vpack.c.bf16 %v1034, %v1030
  %v1131 = vpack.c.bf16 %v1105, %v1101
  %v1132 = vpack.c.bf16 %v1107, %v1103
  %v1157 = vunpack.c.l.b16 %v1109
  %v1158 = vunpack.c.l.b16 %v1110
  %v1159 = vunpack.c.l.b16 %v1111
  %v1160 = vunpack.c.l.b16 %v1112
  %v1161 = vunpack.c.l.b16 %v1113
  %v1162 = vunpack.c.l.b16 %v1114
  %v1163 = vunpack.c.h.b16 %v1109
  %v1164 = vunpack.c.h.b16 %v1110
  %v1165 = vunpack.c.h.b16 %v1111
  %v1166 = vunpack.c.h.b16 %v1112
  %v1167 = vunpack.c.h.b16 %v1113
  %v1168 = vunpack.c.h.b16 %v1114
  %v1169 = vunpack.c.l.b16 %v1115
  %v1170 = vunpack.c.l.b16 %v1116
  %v1171 = vunpack.c.l.b16 %v1117
  %v1172 = vunpack.c.l.b16 %v1118
  %v1173 = vunpack.c.l.b16 %v1119
  %v1174 = vunpack.c.l.b16 %v1120
  %v1175 = vunpack.c.h.b16 %v1115
  %v1176 = vunpack.c.h.b16 %v1116
  %v1177 = vunpack.c.h.b16 %v1117
  %v1178 = vunpack.c.h.b16 %v1118
  %v1179 = vunpack.c.h.b16 %v1119
  %v1180 = vunpack.c.h.b16 %v1120
  %v1181 = vunpack.c.l.b16 %v1121
  %v1182 = vunpack.c.l.b16 %v1122
  %v1183 = vunpack.c.l.b16 %v1123
  %v1184 = vunpack.c.l.b16 %v1124
  %v1185 = vunpack.c.l.b16 %v1125
  %v1186 = vunpack.c.l.b16 %v1126
  %v1187 = vunpack.c.h.b16 %v1121
  %v1188 = vunpack.c.h.b16 %v1122
  %v1189 = vunpack.c.h.b16 %v1123
  %v1190 = vunpack.c.h.b16 %v1124
  %v1191 = vunpack.c.h.b16 %v1125
  %v1192 = vunpack.c.h.b16 %v1126
  %v1193 = vunpack.c.l.b16 %v1127
  %v1194 = vunpack.c.l.b16 %v1128
  %v1195 = vunpack.c.l.b16 %v1129
  %v1196 = vunpack.c.l.b16 %v1130
  %v1197 = vunpack.c.l.b16 %v1131
  %v1198 = vunpack.c.l.b16 %v1132
  %v1199 = vunpack.c.h.b16 %v1127
  %v1200 = vunpack.c.h.b16 %v1128
  %v1201 = vunpack.c.h.b16 %v1129
  %v1202 = vunpack.c.h.b16 %v1130
  %v1203 = vunpack.c.h.b16 %v1131
  %v1204 = vunpack.c.h.b16 %v1132
  %v1205 = vpack.c.b16 %v1158, %v1157
  %v1206 = vpack.c.b16 %v1160, %v1159
  %v1207 = vpack.c.b16 %v1162, %v1161
  %v1208 = vpack.c.b16 %v1164, %v1163
  %v1209 = vpack.c.b16 %v1166, %v1165
  %v1210 = vpack.c.b16 %v1168, %v1167
  %v1211 = vpack.c.b16 %v1170, %v1169
  %v1212 = vpack.c.b16 %v1172, %v1171
  %v1213 = vpack.c.b16 %v1174, %v1173
  %v1214 = vpack.c.b16 %v1176, %v1175
  %v1215 = vpack.c.b16 %v1178, %v1177
  %v1216 = vpack.c.b16 %v1180, %v1179
  %v1217 = vpack.c.b16 %v1182, %v1181
  %v1218 = vpack.c.b16 %v1184, %v1183
  %v1219 = vpack.c.b16 %v1186, %v1185
  %v1220 = vpack.c.b16 %v1188, %v1187
  %v1221 = vpack.c.b16 %v1190, %v1189
  %v1222 = vpack.c.b16 %v1192, %v1191
  %v1223 = vpack.c.b16 %v1194, %v1193
  %v1224 = vpack.c.b16 %v1196, %v1195
  %v1225 = vpack.c.b16 %v1198, %v1197
  %v1226 = vpack.c.b16 %v1200, %v1199
  %v1227 = vpack.c.b16 %v1202, %v1201
  %v1228 = vpack.c.b16 %v1204, %v1203
  %1253 = vst [vmem:[%s5] sm:$0xff] %v1205
  %1254 = vst [vmem:[%s5 + $0x8] sm:$0xff] %v1206
  %1255 = vst [vmem:[%s5 + $0x10] sm:$0xff] %v1207
  %1256 = vst [vmem:[%s5 + $0x18] sm:$0xff] %v1208
  %1257 = vst [vmem:[%s5 + $0x20] sm:$0xff] %v1209
  %1258 = vst [vmem:[%s5 + $0x28] sm:$0xff] %v1210
  %1259 = vst [vmem:[%s5 + $0x30] sm:$0xff] %v1211
  %1260 = vst [vmem:[%s5 + $0x38] sm:$0xff] %v1212
  %1261 = vst [vmem:[%s5 + $0x40] sm:$0xff] %v1213
  %1262 = vst [vmem:[%s5 + $0x48] sm:$0xff] %v1214
  %1263 = vst [vmem:[%s5 + $0x50] sm:$0xff] %v1215
  %1264 = vst [vmem:[%s5 + $0x58] sm:$0xff] %v1216
  %1265 = vst [vmem:[%s5 + $0x60] sm:$0xff] %v1217
  %1266 = vst [vmem:[%s5 + $0x68] sm:$0xff] %v1218
  %1267 = vst [vmem:[%s5 + $0x70] sm:$0xff] %v1219
  %1268 = vst [vmem:[%s5 + $0x78] sm:$0xff] %v1220
  %1269 = vst [vmem:[%s5 + $0x80] sm:$0xff] %v1221
  %1270 = vst [vmem:[%s5 + $0x88] sm:$0xff] %v1222
  %1271 = vst [vmem:[%s5 + $0x90] sm:$0xff] %v1223
  %1272 = vst [vmem:[%s5 + $0x98] sm:$0xff] %v1224
  %1273 = vst [vmem:[%s5 + $0xa0] sm:$0xff] %v1225
  %1274 = vst [vmem:[%s5 + $0xa8] sm:$0xff] %v1226
  %1275 = vst [vmem:[%s5 + $0xb0] sm:$0xff] %v1227
  %1276 = vst [vmem:[%s5 + $0xb8] sm:$0xff] %v1228
  // Predicated region
  $region22: #{kosmos2_forward.29} parent=0 // pred_check
    _
  $region23: #{kosmos2_forward.29} parent=0 // pred_check_branch
    %1278 = sbr.rel (0) target = $region25
  $region24: #{kosmos2_forward.29} parent=0 // pred_region
    _
  $region25: #{kosmos2_forward.29} parent=0 // pred_fallthru
    _
  // Predicated region
  $region26: #{kosmos2_forward.29} parent=0 // pred_check
    _
  $region27: #{kosmos2_forward.29} parent=0 // pred_check_branch
    %1280 = sbr.rel (0) target = $region29
  $region28: #{kosmos2_forward.29} parent=0 // pred_region
    _
  $region29: #{kosmos2_forward.29} parent=0 // pred_fallthru
    _

// kernel: kosmos2_forward.31
$region0: #{kosmos2_forward.31}
  #allocation0 [shape = 'u32[]', space=smem, size = 0x4, offset = 0x4, fixed_abs, tag = 'smem constant byte address 0x4 - core index']
  #allocation1 [shape = 'u32[144,128]{1,0:T(1,128)}', space=vmem, size = 0x12000, scoped, tag = 'internal scratch']
  %s0 = inlined_call_operand.vmem [shape: bf16[64,256], index: 0, kind: input, shape index: {}]
  %s1 = inlined_call_operand.vmem [shape: bf16[256,256], index: 1, kind: input, shape index: {}]
  %s2 = inlined_call_operand.vmem [shape: bf16[1,256], index: 2, kind: input, shape index: {}]
  %s3 = inlined_call_operand.vmem [shape: bf16[64,256], index: 3, kind: input, shape index: {}]
  %s4 = inlined_call_operand.vmem [shape: bf16[64,256], index: 4, kind: output, shape index: {}]
  %s5 = sld [smem:[#allocation0]]
  $region26: #{kosmos2_forward.31} parent=0
    _
  %s7 = ssub.s32 1, %s5
  %s8 = scalar_select 0, %s7, %s5
  // Predicated region
  $region2: #{kosmos2_forward.31} parent=0 // pred_check
    _
  $region3: #{kosmos2_forward.31} parent=0 // pred_check_branch
    %10 = sbr.rel (0) target = $region5
  $region4: #{kosmos2_forward.31} parent=0 // pred_region
    _
  $region5: #{kosmos2_forward.31} parent=0 // pred_fallthru
    _
  // Predicated region
  $region6: #{kosmos2_forward.31} parent=0 // pred_check
    _
  $region7: #{kosmos2_forward.31} parent=0 // pred_check_branch
    %12 = sbr.rel (0) target = $region9
  $region8: #{kosmos2_forward.31} parent=0 // pred_region
    _
  $region9: #{kosmos2_forward.31} parent=0 // pred_fallthru
    _
  // Predicated region
  $region10: #{kosmos2_forward.31} parent=0 // pred_check
    _
  $region11: #{kosmos2_forward.31} parent=0 // pred_check_branch
    %14 = sbr.rel (0) target = $region13
  $region12: #{kosmos2_forward.31} parent=0 // pred_region
    _
  $region13: #{kosmos2_forward.31} parent=0 // pred_fallthru
    _
  // Predicated region
  $region14: #{kosmos2_forward.31} parent=0 // pred_check
    _
  $region15: #{kosmos2_forward.31} parent=0 // pred_check_branch
    %16 = sbr.rel (0) target = $region17
  $region16: #{kosmos2_forward.31} parent=0 // pred_region
    _
  $region17: #{kosmos2_forward.31} parent=0 // pred_fallthru
    _
  %v17 = vld [vmem:[%s0] sm:$0xff]
  %v18 = vld [vmem:[%s0 + $0x8] sm:$0xff]
  %v19 = vld [vmem:[%s0 + $0x10] sm:$0xff]
  %v20 = vld [vmem:[%s0 + $0x18] sm:$0xff]
  %v21 = vld [vmem:[%s0 + $0x20] sm:$0xff]
  %v22 = vld [vmem:[%s0 + $0x28] sm:$0xff]
  %v23 = vld [vmem:[%s0 + $0x30] sm:$0xff]
  %v24 = vld [vmem:[%s0 + $0x38] sm:$0xff]
  %v25 = vld [vmem:[%s1] sm:$0xff]
  %v26 = vld [vmem:[%s1 + $0x8] sm:$0xff]
  %v27 = vld [vmem:[%s1 + $0x10] sm:$0xff]
  %v28 = vld [vmem:[%s1 + $0x18] sm:$0xff]
  %v29 = vld [vmem:[%s1 + $0x20] sm:$0xff]
  %v30 = vld [vmem:[%s1 + $0x28] sm:$0xff]
  %v31 = vld [vmem:[%s1 + $0x30] sm:$0xff]
  %v32 = vld [vmem:[%s1 + $0x38] sm:$0xff]
  %v33 = vld [vmem:[%s1 + $0x40] sm:$0xff]
  %v34 = vld [vmem:[%s1 + $0x48] sm:$0xff]
  %v35 = vld [vmem:[%s1 + $0x50] sm:$0xff]
  %v36 = vld [vmem:[%s1 + $0x58] sm:$0xff]
  %v37 = vld [vmem:[%s1 + $0x60] sm:$0xff]
  %v38 = vld [vmem:[%s1 + $0x68] sm:$0xff]
  %v39 = vld [vmem:[%s1 + $0x70] sm:$0xff]
  %v40 = vld [vmem:[%s1 + $0x78] sm:$0xff]
  %v41 = vld [vmem:[%s1 + $0x80] sm:$0xff]
  %v42 = vld [vmem:[%s1 + $0x88] sm:$0xff]
  %v43 = vld [vmem:[%s1 + $0x90] sm:$0xff]
  %v44 = vld [vmem:[%s1 + $0x98] sm:$0xff]
  %v45 = vld [vmem:[%s1 + $0xa0] sm:$0xff]
  %v46 = vld [vmem:[%s1 + $0xa8] sm:$0xff]
  %v47 = vld [vmem:[%s1 + $0xb0] sm:$0xff]
  %v48 = vld [vmem:[%s1 + $0xb8] sm:$0xff]
  %v49 = vld [vmem:[%s1 + $0xc0] sm:$0xff]
  %v50 = vld [vmem:[%s1 + $0xc8] sm:$0xff]
  %v51 = vld [vmem:[%s1 + $0xd0] sm:$0xff]
  %v52 = vld [vmem:[%s1 + $0xd8] sm:$0xff]
  %v53 = vld [vmem:[%s1 + $0xe0] sm:$0xff]
  %v54 = vld [vmem:[%s1 + $0xe8] sm:$0xff]
  %v55 = vld [vmem:[%s1 + $0xf0] sm:$0xff]
  %v56 = vld [vmem:[%s1 + $0xf8] sm:$0xff]
  %v57 = vld [vmem:[%s2] sm:$0x3]
  %v58 = vunpack.c.l.bf16 %v57
  %v60 = vlaneseq
  %v61 = vshrl.u32 %v60, 7
  %v62 = vsub.s32 0, %v61
  %v63 = vrot.slane %v58, %v62
  %v64 = vlaneseq
  %v65 = vshrl.u32 %v64, 7
  %v66 = vsub.s32 2, %v65
  %v67 = vrot.slane %v58, %v66
  %v70 = vlaneseq
  %v71 = vshrl.u32 %v70, 7
  %v72 = vsub.s32 0, %v71
  %v73 = vrot.slane %v63, %v72
  %v74 = vlaneseq
  %v75 = vshrl.u32 %v74, 7
  %v76 = vsub.s32 0, %v75
  %v77 = vrot.slane %v67, %v76
  %v86 = vunpack.c.l.b16 %v17
  %v87 = vunpack.c.h.b16 %v17
  %v88 = vunpack.c.l.b16 %v18
  %v89 = vunpack.c.h.b16 %v18
  %v90 = vunpack.c.l.b16 %v19
  %v91 = vunpack.c.h.b16 %v19
  %v92 = vunpack.c.l.b16 %v20
  %v93 = vunpack.c.h.b16 %v20
  %v94 = vunpack.c.l.b16 %v21
  %v95 = vunpack.c.h.b16 %v21
  %v96 = vunpack.c.l.b16 %v22
  %v97 = vunpack.c.h.b16 %v22
  %v98 = vunpack.c.l.b16 %v23
  %v99 = vunpack.c.h.b16 %v23
  %v100 = vunpack.c.l.b16 %v24
  %v101 = vunpack.c.h.b16 %v24
  %v102 = vpack.c.b16 %v88, %v86
  %v103 = vpack.c.b16 %v89, %v87
  %v104 = vpack.c.b16 %v92, %v90
  %v105 = vpack.c.b16 %v93, %v91
  %v106 = vpack.c.b16 %v96, %v94
  %v107 = vpack.c.b16 %v97, %v95
  %v108 = vpack.c.b16 %v100, %v98
  %v109 = vpack.c.b16 %v101, %v99
  %v150 = vunpack.c.l.b16 %v25
  %v151 = vunpack.c.h.b16 %v25
  %v152 = vunpack.c.l.b16 %v26
  %v153 = vunpack.c.h.b16 %v26
  %v154 = vunpack.c.l.b16 %v27
  %v155 = vunpack.c.h.b16 %v27
  %v156 = vunpack.c.l.b16 %v28
  %v157 = vunpack.c.h.b16 %v28
  %v158 = vunpack.c.l.b16 %v29
  %v159 = vunpack.c.h.b16 %v29
  %v160 = vunpack.c.l.b16 %v30
  %v161 = vunpack.c.h.b16 %v30
  %v162 = vunpack.c.l.b16 %v31
  %v163 = vunpack.c.h.b16 %v31
  %v164 = vunpack.c.l.b16 %v32
  %v165 = vunpack.c.h.b16 %v32
  %v166 = vunpack.c.l.b16 %v33
  %v167 = vunpack.c.h.b16 %v33
  %v168 = vunpack.c.l.b16 %v34
  %v169 = vunpack.c.h.b16 %v34
  %v170 = vunpack.c.l.b16 %v35
  %v171 = vunpack.c.h.b16 %v35
  %v172 = vunpack.c.l.b16 %v36
  %v173 = vunpack.c.h.b16 %v36
  %v174 = vunpack.c.l.b16 %v37
  %v175 = vunpack.c.h.b16 %v37
  %v176 = vunpack.c.l.b16 %v38
  %v177 = vunpack.c.h.b16 %v38
  %v178 = vunpack.c.l.b16 %v39
  %v179 = vunpack.c.h.b16 %v39
  %v180 = vunpack.c.l.b16 %v40
  %v181 = vunpack.c.h.b16 %v40
  %v182 = vunpack.c.l.b16 %v41
  %v183 = vunpack.c.h.b16 %v41
  %v184 = vunpack.c.l.b16 %v42
  %v185 = vunpack.c.h.b16 %v42
  %v186 = vunpack.c.l.b16 %v43
  %v187 = vunpack.c.h.b16 %v43
  %v188 = vunpack.c.l.b16 %v44
  %v189 = vunpack.c.h.b16 %v44
  %v190 = vunpack.c.l.b16 %v45
  %v191 = vunpack.c.h.b16 %v45
  %v192 = vunpack.c.l.b16 %v46
  %v193 = vunpack.c.h.b16 %v46
  %v194 = vunpack.c.l.b16 %v47
  %v195 = vunpack.c.h.b16 %v47
  %v196 = vunpack.c.l.b16 %v48
  %v197 = vunpack.c.h.b16 %v48
  %v198 = vunpack.c.l.b16 %v49
  %v199 = vunpack.c.h.b16 %v49
  %v200 = vunpack.c.l.b16 %v50
  %v201 = vunpack.c.h.b16 %v50
  %v202 = vunpack.c.l.b16 %v51
  %v203 = vunpack.c.h.b16 %v51
  %v204 = vunpack.c.l.b16 %v52
  %v205 = vunpack.c.h.b16 %v52
  %v206 = vunpack.c.l.b16 %v53
  %v207 = vunpack.c.h.b16 %v53
  %v208 = vunpack.c.l.b16 %v54
  %v209 = vunpack.c.h.b16 %v54
  %v210 = vunpack.c.l.b16 %v55
  %v211 = vunpack.c.h.b16 %v55
  %v212 = vunpack.c.l.b16 %v56
  %v213 = vunpack.c.h.b16 %v56
  %v214 = vpack.c.b16 %v152, %v150
  %v215 = vpack.c.b16 %v153, %v151
  %v216 = vpack.c.b16 %v156, %v154
  %v217 = vpack.c.b16 %v157, %v155
  %v218 = vpack.c.b16 %v160, %v158
  %v219 = vpack.c.b16 %v161, %v159
  %v220 = vpack.c.b16 %v164, %v162
  %v221 = vpack.c.b16 %v165, %v163
  %v222 = vpack.c.b16 %v168, %v166
  %v223 = vpack.c.b16 %v169, %v167
  %v224 = vpack.c.b16 %v172, %v170
  %v225 = vpack.c.b16 %v173, %v171
  %v226 = vpack.c.b16 %v176, %v174
  %v227 = vpack.c.b16 %v177, %v175
  %v228 = vpack.c.b16 %v180, %v178
  %v229 = vpack.c.b16 %v181, %v179
  %v230 = vpack.c.b16 %v184, %v182
  %v231 = vpack.c.b16 %v185, %v183
  %v232 = vpack.c.b16 %v188, %v186
  %v233 = vpack.c.b16 %v189, %v187
  %v234 = vpack.c.b16 %v192, %v190
  %v235 = vpack.c.b16 %v193, %v191
  %v236 = vpack.c.b16 %v196, %v194
  %v237 = vpack.c.b16 %v197, %v195
  %v238 = vpack.c.b16 %v200, %v198
  %v239 = vpack.c.b16 %v201, %v199
  %v240 = vpack.c.b16 %v204, %v202
  %v241 = vpack.c.b16 %v205, %v203
  %v242 = vpack.c.b16 %v208, %v206
  %v243 = vpack.c.b16 %v209, %v207
  %v244 = vpack.c.b16 %v212, %v210
  %v245 = vpack.c.b16 %v213, %v211
  %278 = vmatprep.subr.bf16.mxu0 %v215
  %279 = vmatpush1.bf16.msra.mxu0 %v214
  %280 = vmatprep.subr.bf16.mxu0 %v217
  %281 = vmatpush1.bf16.msra.mxu0 %v216
  %282 = vmatprep.subr.bf16.mxu0 %v219
  %283 = vmatpush1.bf16.msra.mxu0 %v218
  %284 = vmatprep.subr.bf16.mxu0 %v221
  %285 = vmatpush1.bf16.msra.mxu0 %v220
  %286 = vmatprep.subr.bf16.mxu0 %v223
  %287 = vmatpush1.bf16.msra.mxu0 %v222
  %288 = vmatprep.subr.bf16.mxu0 %v225
  %289 = vmatpush1.bf16.msra.mxu0 %v224
  %290 = vmatprep.subr.bf16.mxu0 %v227
  %291 = vmatpush1.bf16.msra.mxu0 %v226
  %292 = vmatprep.subr.bf16.mxu0 %v229
  %293 = vmatpush1.bf16.msra.mxu0 %v228
  %294 = vmatprep.subr.bf16.mxu0 %v231
  %295 = vmatpush1.bf16.msra.mxu0 %v230
  %296 = vmatprep.subr.bf16.mxu0 %v233
  %297 = vmatpush1.bf16.msra.mxu0 %v232
  %298 = vmatprep.subr.bf16.mxu0 %v235
  %299 = vmatpush1.bf16.msra.mxu0 %v234
  %300 = vmatprep.subr.bf16.mxu0 %v237
  %301 = vmatpush1.bf16.msra.mxu0 %v236
  %302 = vmatprep.subr.bf16.mxu0 %v239
  %303 = vmatpush1.bf16.msra.mxu0 %v238
  %304 = vmatprep.subr.bf16.mxu0 %v241
  %305 = vmatpush1.bf16.msra.mxu0 %v240
  %306 = vmatprep.subr.bf16.mxu0 %v243
  %307 = vmatpush1.bf16.msra.mxu0 %v242
  %308 = vmatprep.subr.bf16.mxu0 %v245
  %309 = vmatpush1.bf16.msra.mxu0 %v244
  %310 = vmatprep.mubr.bf16.mxu0 %v103
  %311 = vmatmul.mubr.bf16.gmra.mrb[0].mxu0 %v102
  %v312 = vpop.f32.mrb[0].mxu0
  %v313 = vadd.f32 %v73, %v312
  %v314 = vpop.f32.mrb[0].mxu0
  %v315 = vadd.f32 %v77, %v314
  %v316 = vpop.f32.mrb[0].mxu0
  %v317 = vadd.f32 %v73, %v316
  %v318 = vpop.f32.mrb[0].mxu0
  %v319 = vadd.f32 %v77, %v318
  %320 = vmatprep.mubr.bf16.mxu0 %v105
  %321 = vmatmul.mubr.bf16.gmra.mrb[0].mxu0 %v104
  %v322 = vpop.f32.mrb[0].mxu0
  %v323 = vadd.f32 %v73, %v322
  %v324 = vpop.f32.mrb[0].mxu0
  %v325 = vadd.f32 %v77, %v324
  %v326 = vpop.f32.mrb[0].mxu0
  %v327 = vadd.f32 %v73, %v326
  %v328 = vpop.f32.mrb[0].mxu0
  %v329 = vadd.f32 %v77, %v328
  %330 = vmatprep.mubr.bf16.mxu0 %v107
  %331 = vmatmul.mubr.bf16.gmra.mrb[0].mxu0 %v106
  %v332 = vpop.f32.mrb[0].mxu0
  %v333 = vadd.f32 %v73, %v332
  %v334 = vpop.f32.mrb[0].mxu0
  %v335 = vadd.f32 %v77, %v334
  %v336 = vpop.f32.mrb[0].mxu0
  %v337 = vadd.f32 %v73, %v336
  %v338 = vpop.f32.mrb[0].mxu0
  %v339 = vadd.f32 %v77, %v338
  %340 = vmatprep.mubr.bf16.mxu0 %v109
  %341 = vmatmul.mubr.bf16.gmra.mrb[0].mxu0 %v108
  %v342 = vpop.f32.mrb[0].mxu0
  %v343 = vadd.f32 %v73, %v342
  %v344 = vpop.f32.mrb[0].mxu0
  %v345 = vadd.f32 %v77, %v344
  %v346 = vpop.f32.mrb[0].mxu0
  %v347 = vadd.f32 %v73, %v346
  %v348 = vpop.f32.mrb[0].mxu0
  %v349 = vadd.f32 %v77, %v348
  %350 = vdwg.mxu0
  %v351 = vld [vmem:[%s3] sm:$0xff]
  %v352 = vld [vmem:[%s3 + $0x8] sm:$0xff]
  %v353 = vld [vmem:[%s3 + $0x10] sm:$0xff]
  %v354 = vld [vmem:[%s3 + $0x18] sm:$0xff]
  %v355 = vld [vmem:[%s3 + $0x20] sm:$0xff]
  %v356 = vld [vmem:[%s3 + $0x28] sm:$0xff]
  %v357 = vld [vmem:[%s3 + $0x30] sm:$0xff]
  %v358 = vld [vmem:[%s3 + $0x38] sm:$0xff]
  %v359 = vunpack.c.l.bf16 %v351
  %v360 = vunpack.c.h.bf16 %v351
  %v361 = vunpack.c.l.bf16 %v352
  %v362 = vunpack.c.h.bf16 %v352
  %v363 = vunpack.c.l.bf16 %v353
  %v364 = vunpack.c.h.bf16 %v353
  %v365 = vunpack.c.l.bf16 %v354
  %v366 = vunpack.c.h.bf16 %v354
  %v367 = vunpack.c.l.bf16 %v355
  %v368 = vunpack.c.h.bf16 %v355
  %v369 = vunpack.c.l.bf16 %v356
  %v370 = vunpack.c.h.bf16 %v356
  %v371 = vunpack.c.l.bf16 %v357
  %v372 = vunpack.c.h.bf16 %v357
  %v373 = vunpack.c.l.bf16 %v358
  %v374 = vunpack.c.h.bf16 %v358
  %v375 = vadd.f32 %v313, %v359
  %v376 = vadd.f32 %v315, %v360
  %v377 = vadd.f32 %v317, %v361
  %v378 = vadd.f32 %v319, %v362
  %v379 = vadd.f32 %v323, %v363
  %v380 = vadd.f32 %v325, %v364
  %v381 = vadd.f32 %v327, %v365
  %v382 = vadd.f32 %v329, %v366
  %v383 = vadd.f32 %v333, %v367
  %v384 = vadd.f32 %v335, %v368
  %v385 = vadd.f32 %v337, %v369
  %v386 = vadd.f32 %v339, %v370
  %v387 = vadd.f32 %v343, %v371
  %v388 = vadd.f32 %v345, %v372
  %v389 = vadd.f32 %v347, %v373
  %v390 = vadd.f32 %v349, %v374
  %v391 = vpack.c.bf16 %v377, %v375
  %v392 = vpack.c.bf16 %v378, %v376
  %v393 = vpack.c.bf16 %v381, %v379
  %v394 = vpack.c.bf16 %v382, %v380
  %v395 = vpack.c.bf16 %v385, %v383
  %v396 = vpack.c.bf16 %v386, %v384
  %v397 = vpack.c.bf16 %v389, %v387
  %v398 = vpack.c.bf16 %v390, %v388
  %v407 = vunpack.c.l.b16 %v391
  %v408 = vunpack.c.l.b16 %v392
  %v409 = vunpack.c.h.b16 %v391
  %v410 = vunpack.c.h.b16 %v392
  %v411 = vunpack.c.l.b16 %v393
  %v412 = vunpack.c.l.b16 %v394
  %v413 = vunpack.c.h.b16 %v393
  %v414 = vunpack.c.h.b16 %v394
  %v415 = vunpack.c.l.b16 %v395
  %v416 = vunpack.c.l.b16 %v396
  %v417 = vunpack.c.h.b16 %v395
  %v418 = vunpack.c.h.b16 %v396
  %v419 = vunpack.c.l.b16 %v397
  %v420 = vunpack.c.l.b16 %v398
  %v421 = vunpack.c.h.b16 %v397
  %v422 = vunpack.c.h.b16 %v398
  %v423 = vpack.c.b16 %v408, %v407
  %v424 = vpack.c.b16 %v410, %v409
  %v425 = vpack.c.b16 %v412, %v411
  %v426 = vpack.c.b16 %v414, %v413
  %v427 = vpack.c.b16 %v416, %v415
  %v428 = vpack.c.b16 %v418, %v417
  %v429 = vpack.c.b16 %v420, %v419
  %v430 = vpack.c.b16 %v422, %v421
  %439 = vst [vmem:[%s4] sm:$0xff] %v423
  %440 = vst [vmem:[%s4 + $0x8] sm:$0xff] %v424
  %441 = vst [vmem:[%s4 + $0x10] sm:$0xff] %v425
  %442 = vst [vmem:[%s4 + $0x18] sm:$0xff] %v426
  %443 = vst [vmem:[%s4 + $0x20] sm:$0xff] %v427
  %444 = vst [vmem:[%s4 + $0x28] sm:$0xff] %v428
  %445 = vst [vmem:[%s4 + $0x30] sm:$0xff] %v429
  %446 = vst [vmem:[%s4 + $0x38] sm:$0xff] %v430
  // Predicated region
  $region18: #{kosmos2_forward.31} parent=0 // pred_check
    _
  $region19: #{kosmos2_forward.31} parent=0 // pred_check_branch
    %448 = sbr.rel (0) target = $region21
  $region20: #{kosmos2_forward.31} parent=0 // pred_region
    _
  $region21: #{kosmos2_forward.31} parent=0 // pred_fallthru
    _
  // Predicated region
  $region22: #{kosmos2_forward.31} parent=0 // pred_check
    _
  $region23: #{kosmos2_forward.31} parent=0 // pred_check_branch
    %450 = sbr.rel (0) target = $region25
  $region24: #{kosmos2_forward.31} parent=0 // pred_region
    _
  $region25: #{kosmos2_forward.31} parent=0 // pred_fallthru
    _

// kernel: kosmos2_forward.30
$region0: #{kosmos2_forward.30}
  #allocation0 [shape = 'u32[]', space=smem, size = 0x4, offset = 0x4, fixed_abs, tag = 'smem constant byte address 0x4 - core index']
  #allocation1 [shape = 'u32[144,128]{1,0:T(1,128)}', space=vmem, size = 0x12000, scoped, tag = 'internal scratch']
  #allocation2 [shape = 'f32[16,1]{1,0:T(8,128)}', space=vmem, size = 0x2000, scoped, tag = 'scratch operand']
  #allocation3 [shape = 'f32[16,1]{1,0:T(8,128)}', space=vmem, size = 0x2000, scoped, tag = 'scratch operand']
  #allocation4 [shape = 'f32[16,128]{1,0:T(8,128)}', space=vmem, size = 0x2000, scoped, tag = 'scratch operand']
  #allocation5 [shape = 's32[1]{0}', space=sflag, size = 0x4, scoped, tag = 'scoped memory for kosmos2_forward.30']
  #allocation6 [shape = 'u8[512]{0}', space=smem, size = 0x200, scoped, tag = 'prefetched SMEM operand 0']
  %s0 = inlined_call_operand.vmem [shape: s32[2], index: 0, kind: input, shape index: {}]
  %s1 = inlined_call_operand.vmem [shape: bf16[2,2,32,128], index: 1, kind: input, shape index: {}]
  %s2 = inlined_call_operand.vmem [shape: bf16[2,2,32,128], index: 2, kind: input, shape index: {}]
  %s3 = inlined_call_operand.vmem [shape: bf16[2,2,32,128], index: 3, kind: input, shape index: {}]
  %s4 = inlined_call_operand.vmem [shape: bf16[2,2,32,128], index: 4, kind: output, shape index: {}]
  %s5 = sld [smem:[#allocation0]]
  $region57: #{kosmos2_forward.30} parent=0
    _
  %s7 = ssub.s32 1, %s5
  %s8 = scalar_select 0, %s7, %s5
  %s9 = sshll.u32 %s0, 4
  %s10 = int_to_ptr.vmem [resolvable:$true] %s9
  %12 = dma.vmem_to_smem %s10, 16, [#allocation6], [#allocation5]
  %13 = dma.done [#allocation5], 16
  %14 = sfence
  loop: start=0, step=1, limit=18
  $region2: #{kosmos2_forward.30} parent=0 // loop_pre_header
    _
  $region3: #{kosmos2_forward.30} parent=0 // loop_header
    %s16 = sphi 0, %s20
    %p17 = scmp.ge.s32.totalorder %s16, 18
    %s23 = sphi 0, %s49
    %s24 = sphi 0, %s45
    %s25 = sphi 0, %s41
    %s26 = sphi 0, %s37
    %s27 = sphi 0, %s23
    %s28 = sphi 0, %s24
    %s29 = sphi 0, %s25
    %s30 = sphi 0, %s26
    %s31 = sphi 0, %s27
    %s32 = sphi 0, %s28
    %s33 = sphi 0, %s29
    %s34 = sphi 0, %s30
    %s56 = sphi 0, %s58
    %s59 = sphi 0, %s56
    %s60 = sphi 0, %s59
    %s76 = sphi 0, %s60
    %s86 = sphi 0, %s88
    %s89 = sphi 0, %s86
    %s90 = sphi 0, %s89
    %s106 = sphi 0, %s90
    %s116 = sphi 0, %s118
    %s119 = sphi 0, %s116
    %s120 = sphi 0, %s119
    %s136 = sphi 0, %s120
    %s146 = sphi 0, %s148
    %s149 = sphi 0, %s146
    %s150 = sphi 0, %s149
    %s166 = sphi 0, %s150
  $region4: #{kosmos2_forward.30} parent=0 // loop_header_branch
    %19 = sbr.rel (%p17) target = $region8
  $region5: #{kosmos2_forward.30} parent=0 // loop_body
    %s21 = ssub.s32 %s16, 1
    %s22 = ssub.s32 %s16, 2
    %s35 = sadd.s32 1, %s26
    %p36 = scmp.ge.s32.totalorder %s35, 2
    %s37 = scalar_select %p36, 0, %s35
    %s38 = sadd.s32 1, %s25
    %s39 = scalar_select %p36, %s38, %s25
    %p40 = scmp.ge.s32.totalorder %s39, 2
    %s41 = scalar_select %p40, 0, %s39
    %s42 = sadd.s32 1, %s24
    %s43 = scalar_select %p40, %s42, %s24
    %p44 = scmp.ge.s32.totalorder %s43, 2
    %s45 = scalar_select %p44, 0, %s43
    %s46 = sadd.s32 1, %s23
    %s47 = scalar_select %p44, %s46, %s23
    %p48 = scmp.ge.s32.totalorder %s47, 2
    %s49 = scalar_select %p48, 0, %s47
    %s50 = ssub.s32 %s23, %s49
    %s51 = ssub.s32 %s24, %s45
    %s52 = sor.u32 %s50, %s51
    %s53 = ssub.s32 %s25, %s41
    %s54 = sor.u32 %s52, %s53
    %p55 = scmp.eq.s32.totalorder %s54, 0
    %s57 = sadd.s32 %s56, 1
    %s58 = scalar_select %p55, %s56, %s57
    %p61 = pneg %p55
    %p62 = scmp.eq.s32.totalorder %s16, 15
    %p63 = por %p61, %p62
    %p64 = scmp.ne.s32.totalorder %s56, %s59
    %p65 = scmp.eq.s32.totalorder %s16, 0
    %p66 = por %p64, %p65
    %p67 = scmp.ne.s32.totalorder %s56, %s59
    %p68 = scmp.eq.s32.totalorder %s21, 15
    %p69 = por %p67, %p68
    %p70 = scmp.ne.s32.totalorder %s59, %s60
    %p71 = scmp.eq.s32.totalorder %s21, 0
    %p72 = por %p70, %p71
    %p73 = scmp.ne.s32.totalorder %s59, %s60
    %p74 = scmp.eq.s32.totalorder %s22, 15
    %p75 = por %p73, %p74
    %p77 = scmp.ne.s32.totalorder %s60, %s76
    %p78 = scmp.eq.s32.totalorder %s22, 0
    %p79 = por %p77, %p78
    %s80 = ssub.s32 %s23, %s49
    %s81 = ssub.s32 %s24, %s45
    %s82 = sor.u32 %s80, %s81
    %s83 = ssub.s32 %s26, %s37
    %s84 = sor.u32 %s82, %s83
    %p85 = scmp.eq.s32.totalorder %s84, 0
    %s87 = sadd.s32 %s86, 1
    %s88 = scalar_select %p85, %s86, %s87
    %p91 = pneg %p85
    %p92 = scmp.eq.s32.totalorder %s16, 15
    %p93 = por %p91, %p92
    %p94 = scmp.ne.s32.totalorder %s86, %s89
    %p95 = scmp.eq.s32.totalorder %s16, 0
    %p96 = por %p94, %p95
    %p97 = scmp.ne.s32.totalorder %s86, %s89
    %p98 = scmp.eq.s32.totalorder %s21, 15
    %p99 = por %p97, %p98
    %p100 = scmp.ne.s32.totalorder %s89, %s90
    %p101 = scmp.eq.s32.totalorder %s21, 0
    %p102 = por %p100, %p101
    %p103 = scmp.ne.s32.totalorder %s89, %s90
    %p104 = scmp.eq.s32.totalorder %s22, 15
    %p105 = por %p103, %p104
    %p107 = scmp.ne.s32.totalorder %s90, %s106
    %p108 = scmp.eq.s32.totalorder %s22, 0
    %p109 = por %p107, %p108
    %s110 = ssub.s32 %s23, %s49
    %s111 = ssub.s32 %s24, %s45
    %s112 = sor.u32 %s110, %s111
    %s113 = ssub.s32 %s26, %s37
    %s114 = sor.u32 %s112, %s113
    %p115 = scmp.eq.s32.totalorder %s114, 0
    %s117 = sadd.s32 %s116, 1
    %s118 = scalar_select %p115, %s116, %s117
    %p121 = pneg %p115
    %p122 = scmp.eq.s32.totalorder %s16, 15
    %p123 = por %p121, %p122
    %p124 = scmp.ne.s32.totalorder %s116, %s119
    %p125 = scmp.eq.s32.totalorder %s16, 0
    %p126 = por %p124, %p125
    %p127 = scmp.ne.s32.totalorder %s116, %s119
    %p128 = scmp.eq.s32.totalorder %s21, 15
    %p129 = por %p127, %p128
    %p130 = scmp.ne.s32.totalorder %s119, %s120
    %p131 = scmp.eq.s32.totalorder %s21, 0
    %p132 = por %p130, %p131
    %p133 = scmp.ne.s32.totalorder %s119, %s120
    %p134 = scmp.eq.s32.totalorder %s22, 15
    %p135 = por %p133, %p134
    %p137 = scmp.ne.s32.totalorder %s120, %s136
    %p138 = scmp.eq.s32.totalorder %s22, 0
    %p139 = por %p137, %p138
    %s140 = ssub.s32 %s23, %s49
    %s141 = ssub.s32 %s24, %s45
    %s142 = sor.u32 %s140, %s141
    %s143 = ssub.s32 %s25, %s41
    %s144 = sor.u32 %s142, %s143
    %p145 = scmp.eq.s32.totalorder %s144, 0
    %s147 = sadd.s32 %s146, 1
    %s148 = scalar_select %p145, %s146, %s147
    %p151 = pneg %p145
    %p152 = scmp.eq.s32.totalorder %s16, 15
    %p153 = por %p151, %p152
    %p154 = scmp.ne.s32.totalorder %s146, %s149
    %p155 = scmp.eq.s32.totalorder %s16, 0
    %p156 = por %p154, %p155
    %p157 = scmp.ne.s32.totalorder %s146, %s149
    %p158 = scmp.eq.s32.totalorder %s21, 15
    %p159 = por %p157, %p158
    %p160 = scmp.ne.s32.totalorder %s149, %s150
    %p161 = scmp.eq.s32.totalorder %s21, 0
    %p162 = por %p160, %p161
    %p163 = scmp.ne.s32.totalorder %s149, %s150
    %p164 = scmp.eq.s32.totalorder %s22, 15
    %p165 = por %p163, %p164
    %p167 = scmp.ne.s32.totalorder %s150, %s166
    %p168 = scmp.eq.s32.totalorder %s22, 0
    %p169 = por %p167, %p168
    %p170 = scmp.le.s32.totalorder 1, %s16
    %p171 = scmp.lt.s32.totalorder %s16, 17
    %p172 = pnand %p170, %p171
    %p173 = pneg %p172
    // Predicated region
    $region9: #{kosmos2_forward.30} parent=5 // pred_check
      _
    $region10: #{kosmos2_forward.30} parent=5 // pred_check_branch
      %175 = sbr.rel (%p172) target = $region12
    $region11: #{kosmos2_forward.30} parent=5 // pred_region
      %s176 = ssub.s32 %s16, 1
    $region12: #{kosmos2_forward.30} parent=5 // pred_fallthru
      _
    %p177 = scmp.lt.s32.totalorder %s16, 16
    // Predicated region
    $region13: #{kosmos2_forward.30} parent=5 // pred_check
      %p178 = pneg %p177
    $region14: #{kosmos2_forward.30} parent=5 // pred_check_branch
      %180 = sbr.rel (%p178) target = $region16
    $region15: #{kosmos2_forward.30} parent=5 // pred_region
      // Predicated region
      $region17: #{kosmos2_forward.30} parent=15 // pred_check
        %p181 = pneg %p66
      $region18: #{kosmos2_forward.30} parent=15 // pred_check_branch
        %183 = sbr.rel (%p181) target = $region20
      $region19: #{kosmos2_forward.30} parent=15 // pred_region
        %s184 = smul.u32 2, %s25
        %p185 = scmp.lt.s32.totalorder %s23, 1
        %s186 = scalar_select %p185, %s23, 1
        %p187 = scmp.lt.s32.totalorder %s24, 1
        %s188 = scalar_select %p187, %s24, 1
        %p189 = scmp.lt.s32.totalorder %s184, 3
        %s190 = scalar_select %p189, %s184, 3
        %s191 = smul.addr %s188, 4
        %s192 = sadd.s32 %s190, %s191
        %s193 = smul.addr %s186, 8
        %s194 = sadd.s32 %s192, %s193
        %s195 = smul.addr %s194, 4
        %s196 = scalar_lea.vmem %s1, %s195
        %s197 = smul.u32 2, %s25
      $region20: #{kosmos2_forward.30} parent=15 // pred_fallthru
        _
      // Predicated region
      $region21: #{kosmos2_forward.30} parent=15 // pred_check
        %p198 = pneg %p96
      $region22: #{kosmos2_forward.30} parent=15 // pred_check_branch
        %200 = sbr.rel (%p198) target = $region24
      $region23: #{kosmos2_forward.30} parent=15 // pred_region
        %s201 = smul.u32 2, %s26
        %p202 = scmp.lt.s32.totalorder %s23, 1
        %s203 = scalar_select %p202, %s23, 1
        %p204 = scmp.lt.s32.totalorder %s24, 1
        %s205 = scalar_select %p204, %s24, 1
        %p206 = scmp.lt.s32.totalorder %s201, 3
        %s207 = scalar_select %p206, %s201, 3
        %s208 = smul.addr %s205, 4
        %s209 = sadd.s32 %s207, %s208
        %s210 = smul.addr %s203, 8
        %s211 = sadd.s32 %s209, %s210
        %s212 = smul.addr %s211, 4
        %s213 = scalar_lea.vmem %s2, %s212
        %s214 = smul.u32 2, %s26
      $region24: #{kosmos2_forward.30} parent=15 // pred_fallthru
        _
      // Predicated region
      $region25: #{kosmos2_forward.30} parent=15 // pred_check
        %p215 = pneg %p126
      $region26: #{kosmos2_forward.30} parent=15 // pred_check_branch
        %217 = sbr.rel (%p215) target = $region28
      $region27: #{kosmos2_forward.30} parent=15 // pred_region
        %s218 = smul.u32 2, %s26
        %p219 = scmp.lt.s32.totalorder %s23, 1
        %s220 = scalar_select %p219, %s23, 1
        %p221 = scmp.lt.s32.totalorder %s24, 1
        %s222 = scalar_select %p221, %s24, 1
        %p223 = scmp.lt.s32.totalorder %s218, 3
        %s224 = scalar_select %p223, %s218, 3
        %s225 = smul.addr %s222, 4
        %s226 = sadd.s32 %s224, %s225
        %s227 = smul.addr %s220, 8
        %s228 = sadd.s32 %s226, %s227
        %s229 = smul.addr %s228, 4
        %s230 = scalar_lea.vmem %s3, %s229
        %s231 = smul.u32 2, %s26
      $region28: #{kosmos2_forward.30} parent=15 // pred_fallthru
        _
    $region16: #{kosmos2_forward.30} parent=5 // pred_fallthru
      _
    %p232 = scmp.le.s32.totalorder 1, %s16
    %p233 = scmp.lt.s32.totalorder %s16, 17
    %p234 = pnand %p232, %p233
    %p235 = pneg %p234
    // Predicated region
    $region29: #{kosmos2_forward.30} parent=5 // pred_check
      _
    $region30: #{kosmos2_forward.30} parent=5 // pred_check_branch
      %237 = sbr.rel (%p234) target = $region32
    $region31: #{kosmos2_forward.30} parent=5 // pred_region
      %s238 = ssub.s32 %s16, 1
      %s239 = smul.u32 2, %s29
      %p240 = scmp.lt.s32.totalorder %s27, 1
      %s241 = scalar_select %p240, %s27, 1
      %p242 = scmp.lt.s32.totalorder %s28, 1
      %s243 = scalar_select %p242, %s28, 1
      %p244 = scmp.lt.s32.totalorder %s239, 3
      %s245 = scalar_select %p244, %s239, 3
      %s246 = smul.addr %s243, 4
      %s247 = sadd.s32 %s245, %s246
      %s248 = smul.addr %s241, 8
      %s249 = sadd.s32 %s247, %s248
      %s250 = smul.addr %s249, 4
      %s251 = scalar_lea.vmem %s1, %s250
      %p252 = pneg %p72
      %p253 = pneg %p69
      %s254 = smul.u32 2, %s30
      %p255 = scmp.lt.s32.totalorder %s27, 1
      %s256 = scalar_select %p255, %s27, 1
      %p257 = scmp.lt.s32.totalorder %s28, 1
      %s258 = scalar_select %p257, %s28, 1
      %p259 = scmp.lt.s32.totalorder %s254, 3
      %s260 = scalar_select %p259, %s254, 3
      %s261 = smul.addr %s258, 4
      %s262 = sadd.s32 %s260, %s261
      %s263 = smul.addr %s256, 8
      %s264 = sadd.s32 %s262, %s263
      %s265 = smul.addr %s264, 4
      %s266 = scalar_lea.vmem %s2, %s265
      %p267 = pneg %p102
      %p268 = pneg %p99
      %s269 = smul.u32 2, %s30
      %p270 = scmp.lt.s32.totalorder %s27, 1
      %s271 = scalar_select %p270, %s27, 1
      %p272 = scmp.lt.s32.totalorder %s28, 1
      %s273 = scalar_select %p272, %s28, 1
      %p274 = scmp.lt.s32.totalorder %s269, 3
      %s275 = scalar_select %p274, %s269, 3
      %s276 = smul.addr %s273, 4
      %s277 = sadd.s32 %s275, %s276
      %s278 = smul.addr %s271, 8
      %s279 = sadd.s32 %s277, %s278
      %s280 = smul.addr %s279, 4
      %s281 = scalar_lea.vmem %s3, %s280
      %p282 = pneg %p132
      %p283 = pneg %p129
      %p284 = pneg %p162
      %p285 = pneg %p159
      %s286 = smul.u32 2, %s29
      %p287 = scmp.lt.s32.totalorder %s27, 1
      %s288 = scalar_select %p287, %s27, 1
      %p289 = scmp.lt.s32.totalorder %s28, 1
      %s290 = scalar_select %p289, %s28, 1
      %p291 = scmp.lt.s32.totalorder %s286, 3
      %s292 = scalar_select %p291, %s286, 3
      %s293 = smul.addr %s290, 4
      %s294 = sadd.s32 %s292, %s293
      %s295 = smul.addr %s288, 8
      %s296 = sadd.s32 %s294, %s295
      %s297 = smul.addr %s296, 4
      %s298 = scalar_lea.vmem %s4, %s297
      %s299 = smul.u32 2, %s29
      %p300 = scmp.lt.s32.totalorder %s27, 1
      %s301 = scalar_select %p300, %s27, 1
      %p302 = scmp.lt.s32.totalorder %s28, 1
      %s303 = scalar_select %p302, %s28, 1
      %p304 = scmp.lt.s32.totalorder %s299, 3
      %s305 = scalar_select %p304, %s299, 3
      %s306 = smul.addr %s303, 4
      %s307 = sadd.s32 %s305, %s306
      %s308 = smul.addr %s301, 8
      %s309 = sadd.s32 %s307, %s308
      %s310 = smul.addr %s309, 4
      %s311 = scalar_lea.vmem %s1, %s310
      %s312 = smul.u32 2, %s29
      %s313 = smul.u32 2, %s30
      %p314 = scmp.lt.s32.totalorder %s27, 1
      %s315 = scalar_select %p314, %s27, 1
      %p316 = scmp.lt.s32.totalorder %s28, 1
      %s317 = scalar_select %p316, %s28, 1
      %p318 = scmp.lt.s32.totalorder %s313, 3
      %s319 = scalar_select %p318, %s313, 3
      %s320 = smul.addr %s317, 4
      %s321 = sadd.s32 %s319, %s320
      %s322 = smul.addr %s315, 8
      %s323 = sadd.s32 %s321, %s322
      %s324 = smul.addr %s323, 4
      %s325 = scalar_lea.vmem %s2, %s324
      %s326 = smul.u32 2, %s30
      %s327 = smul.u32 2, %s30
      %p328 = scmp.lt.s32.totalorder %s27, 1
      %s329 = scalar_select %p328, %s27, 1
      %p330 = scmp.lt.s32.totalorder %s28, 1
      %s331 = scalar_select %p330, %s28, 1
      %p332 = scmp.lt.s32.totalorder %s327, 3
      %s333 = scalar_select %p332, %s327, 3
      %s334 = smul.addr %s331, 4
      %s335 = sadd.s32 %s333, %s334
      %s336 = smul.addr %s329, 8
      %s337 = sadd.s32 %s335, %s336
      %s338 = smul.addr %s337, 4
      %s339 = scalar_lea.vmem %s3, %s338
      %s340 = smul.u32 2, %s30
      %s341 = smul.u32 2, %s29
      %p342 = scmp.lt.s32.totalorder %s27, 1
      %s343 = scalar_select %p342, %s27, 1
      %p344 = scmp.lt.s32.totalorder %s28, 1
      %s345 = scalar_select %p344, %s28, 1
      %p346 = scmp.lt.s32.totalorder %s341, 3
      %s347 = scalar_select %p346, %s341, 3
      %s348 = smul.addr %s345, 4
      %s349 = sadd.s32 %s347, %s348
      %s350 = smul.addr %s343, 8
      %s351 = sadd.s32 %s349, %s350
      %s352 = smul.addr %s351, 4
      %s353 = scalar_lea.vmem %s4, %s352
      %s354 = smul.u32 2, %s29
      %p356 = scmp.eq.s32.totalorder %s30, 0
      // Predicated region
      $region33: #{kosmos2_forward.30} parent=31 // pred_check
        %p357 = pneg %p356
      $region34: #{kosmos2_forward.30} parent=31 // pred_check_branch
        %359 = sbr.rel (%p357) target = $region36
      $region35: #{kosmos2_forward.30} parent=31 // pred_region
        %vm360 = vcmask 7168
        %361 = vst.msk [vmem:[#allocation2] sm:$0xff] %vm360, -1e+30
        %362 = vst.msk [vmem:[#allocation2 + $0x8] sm:$0xff] %vm360, -1e+30
        %363 = vst.msk [vmem:[#allocation3] sm:$0xff] %vm360, 0.0
        %364 = vst.msk [vmem:[#allocation3 + $0x8] sm:$0xff] %vm360, 0.0
        %365 = vst [vmem:[#allocation4] sm:$0xff] 0.0
        %366 = vst [vmem:[#allocation4 + $0x8] sm:$0xff] 0.0
      $region36: #{kosmos2_forward.30} parent=31 // pred_fallthru
        _
      %s367 = smul.u32 %s30, 16
      %s368 = smul.u32 %s29, 16
      %s369 = sadd.s32 %s368, 15
      %p370 = scmp.le.s32.totalorder %s367, %s369
      // Predicated region
      $region37: #{kosmos2_forward.30} parent=31 // pred_check
        %p371 = pneg %p370
      $region38: #{kosmos2_forward.30} parent=31 // pred_check_branch
        %373 = sbr.rel (%p371) target = $region40
      $region39: #{kosmos2_forward.30} parent=31 // pred_region
        %v374 = vld [vmem:[%s311] sm:$0xf]
        %v375 = vld [vmem:[%s311 + $0x4] sm:$0xf]
        %v376 = vld [vmem:[%s325] sm:$0xf]
        %v377 = vld [vmem:[%s325 + $0x4] sm:$0xf]
        %v378 = vld [vmem:[%s339] sm:$0xf]
        %v379 = vld [vmem:[%s339 + $0x4] sm:$0xf]
        %v382 = vunpack.c.l.b16 %v374
        %v383 = vunpack.c.l.b16 %v375
        %v384 = vpack.c.b16 %v383, %v382
        %v388 = vunpack.c.l.b16 %v376
        %v389 = vunpack.c.l.b16 %v377
        %v390 = vpack.c.b16 %v389, %v388
        %392 = vmatprep.subr.bf16.mxu0 0
        %393 = vmatpush1.bf16.xpose.msra.mxu0 %v390
        %394 = vmatprep.subr.bf16.mxu0 0
        %395 = vmatpush1.bf16.xpose.msra.mxu0 0
        %396 = vmatprep.subr.bf16.mxu0 0
        %397 = vmatpush1.bf16.xpose.msra.mxu0 0
        %398 = vmatprep.subr.bf16.mxu0 0
        %399 = vmatpush1.bf16.xpose.msra.mxu0 0
        %400 = vmatprep.subr.bf16.mxu0 0
        %401 = vmatpush1.bf16.xpose.msra.mxu0 0
        %402 = vmatprep.subr.bf16.mxu0 0
        %403 = vmatpush1.bf16.xpose.msra.mxu0 0
        %404 = vmatprep.subr.bf16.mxu0 0
        %405 = vmatpush1.bf16.xpose.msra.mxu0 0
        %406 = vmatprep.subr.bf16.mxu0 0
        %407 = vmatpush1.bf16.xpose.msra.mxu0 0
        %408 = vmatprep.subr.bf16.mxu0 0
        %409 = vmatpush1.bf16.xpose.msra.mxu0 0
        %410 = vmatprep.subr.bf16.mxu0 0
        %411 = vmatpush1.bf16.xpose.msra.mxu0 0
        %412 = vmatprep.subr.bf16.mxu0 0
        %413 = vmatpush1.bf16.xpose.msra.mxu0 0
        %414 = vmatprep.subr.bf16.mxu0 0
        %415 = vmatpush1.bf16.xpose.msra.mxu0 0
        %416 = vmatprep.subr.bf16.mxu0 0
        %417 = vmatpush1.bf16.xpose.msra.mxu0 0
        %418 = vmatprep.subr.bf16.mxu0 0
        %419 = vmatpush1.bf16.xpose.msra.mxu0 0
        %420 = vmatprep.subr.bf16.mxu0 0
        %421 = vmatpush1.bf16.xpose.msra.mxu0 0
        %422 = vmatprep.subr.bf16.mxu0 0
        %423 = vmatpush1.bf16.xpose.msra.mxu0 0
        %424 = vmatprep.mubr.bf16.mxu0 0
        %425 = vmatmul.mubr.bf16.gmra.mrb[0].mxu0 %v384
        %v426 = vpop.f32.mrb[0].mxu0
        %v427 = vadd.f32 0.0, %v426
        %v428 = vpop.f32.mrb[0].mxu0
        %v429 = vpop.f32.mrb[0].mxu0
        %v430 = vadd.f32 0.0, %v429
        %v431 = vpop.f32.mrb[0].mxu0
        %432 = vdwg.mxu0
        %v433 = vmul.f32 %v427, 0.088388346
        %v434 = vmul.f32 %v430, 0.088388346
        %s435 = sld [smem:[#allocation6 + %s27]]
        %v436 = vlaneseq
        %v437 = vand.u32 %v436, 127
        %v438 = vstv %s367
        %v439 = vadd.s32 %v438, %v437
        %v440 = vstv %s435
        %vm441 = vcmp.lt.s32.totalorder %v439, %v440
        %v442 = vlaneseq
        %v443 = vshrl.u32 %v442, 7
        %v444 = vadd.s32 %v443, 8
        %v445 = vstv %s368
        %v446 = vadd.s32 %v445, %v443
        %v447 = vadd.s32 %v445, %v444
        %vm448 = vcmp.ge.s32.totalorder %v446, %v439
        %vm449 = vcmp.ge.s32.totalorder %v447, %v439
        %vm450 = vmand %vm441, %vm448
        %vm451 = vmand %vm441, %vm449
        %v452 = vsel %vm450, %v433, -1e+30
        %v453 = vsel %vm451, %v434, -1e+30
        %v454 = vld [vmem:[#allocation2] sm:$0xff]
        %v455 = vld [vmem:[#allocation2 + $0x8] sm:$0xff]
        %vm456 = vcmask 130048
        %v457 = vsel %vm456, %v452, -inf
        %458 = vmax.xlane.f32.xlu0 %v457
        %v459 = vpop.xlane.xlu0 %458
        %v460 = vsel %vm456, %v453, -inf
        %461 = vmax.xlane.f32.xlu0 %v460
        %v462 = vpop.xlane.xlu0 %461
        %v463 = vmax.f32 %v454, %v459
        %v464 = vmax.f32 %v455, %v462
        %v465 = vsub.f32 %v454, %v463
        %v466 = vsub.f32 %v455, %v464
        %v467 = vmul.f32 %v465, 1.442695
        %v468 = vpow.pop %v467
        %v469 = vmul.f32 %v466, 1.442695
        %v470 = vpow.pop %v469
        %472 = vset.pattern.permute.xlu0 0
        %473 = vperm.xlu0 %472, %v463
        %v474 = vpop.permute.xlu0 %473
        %477 = vset.pattern.permute.xlu0 0
        %478 = vperm.xlu0 %477, %v464
        %v479 = vpop.permute.xlu0 %478
        %v481 = vsub.f32 %v452, %v474
        %v482 = vsub.f32 %v453, %v479
        %v483 = vmul.f32 %v481, 1.442695
        %v484 = vpow.pop %v483
        %v485 = vmul.f32 %v482, 1.442695
        %v486 = vpow.pop %v485
        %v487 = vld [vmem:[#allocation3] sm:$0xff]
        %v488 = vld [vmem:[#allocation3 + $0x8] sm:$0xff]
        %v489 = vmul.f32 %v468, %v487
        %v490 = vmul.f32 %v470, %v488
        %v491 = vsel %vm456, %v484, 0.0
        %492 = vadd.xlane.f32.xlu0 %v491
        %v493 = vpop.xlane.xlu0 %492
        %v494 = vsel %vm456, %v486, 0.0
        %495 = vadd.xlane.f32.xlu0 %v494
        %v496 = vpop.xlane.xlu0 %495
        %v497 = vadd.f32 %v489, %v493
        %v498 = vadd.f32 %v490, %v496
        %vm499 = vcmask 7168
        %500 = vst.msk [vmem:[#allocation3] sm:$0xff] %vm499, %v497
        %501 = vst.msk [vmem:[#allocation3 + $0x8] sm:$0xff] %vm499, %v498
        %v502 = vld [vmem:[#allocation4] sm:$0xff]
        %v503 = vld [vmem:[#allocation4 + $0x8] sm:$0xff]
        %505 = vset.pattern.permute.xlu0 0
        %506 = vperm.xlu0 %505, %v468
        %v507 = vpop.permute.xlu0 %506
        %510 = vset.pattern.permute.xlu0 0
        %511 = vperm.xlu0 %510, %v470
        %v512 = vpop.permute.xlu0 %511
        %v514 = vmul.f32 %v507, %v502
        %v515 = vmul.f32 %v512, %v503
        %v516 = vpack.c.bf16 %v486, %v484
        %v519 = vunpack.c.l.b16 %v378
        %v520 = vunpack.c.l.b16 %v379
        %v521 = vpack.c.b16 %v520, %v519
        %v524 = vsel %vm456, %v516, 0
        %526 = vmatprep.subr.bf16.mxu0 0
        %527 = vmatpush1.bf16.msra.mxu0 %v521
        %528 = vmatprep.subr.bf16.mxu0 0
        %529 = vmatpush1.bf16.msra.mxu0 0
        %530 = vmatprep.subr.bf16.mxu0 0
        %531 = vmatpush1.bf16.msra.mxu0 0
        %532 = vmatprep.subr.bf16.mxu0 0
        %533 = vmatpush1.bf16.msra.mxu0 0
        %534 = vmatprep.subr.bf16.mxu0 0
        %535 = vmatpush1.bf16.msra.mxu0 0
        %536 = vmatprep.subr.bf16.mxu0 0
        %537 = vmatpush1.bf16.msra.mxu0 0
        %538 = vmatprep.subr.bf16.mxu0 0
        %539 = vmatpush1.bf16.msra.mxu0 0
        %540 = vmatprep.subr.bf16.mxu0 0
        %541 = vmatpush1.bf16.msra.mxu0 0
        %542 = vmatprep.subr.bf16.mxu0 0
        %543 = vmatpush1.bf16.msra.mxu0 0
        %544 = vmatprep.subr.bf16.mxu0 0
        %545 = vmatpush1.bf16.msra.mxu0 0
        %546 = vmatprep.subr.bf16.mxu0 0
        %547 = vmatpush1.bf16.msra.mxu0 0
        %548 = vmatprep.subr.bf16.mxu0 0
        %549 = vmatpush1.bf16.msra.mxu0 0
        %550 = vmatprep.subr.bf16.mxu0 0
        %551 = vmatpush1.bf16.msra.mxu0 0
        %552 = vmatprep.subr.bf16.mxu0 0
        %553 = vmatpush1.bf16.msra.mxu0 0
        %554 = vmatprep.subr.bf16.mxu0 0
        %555 = vmatpush1.bf16.msra.mxu0 0
        %556 = vmatprep.subr.bf16.mxu0 0
        %557 = vmatpush1.bf16.msra.mxu0 0
        %558 = vmatprep.mubr.bf16.mxu0 0
        %559 = vmatmul.mubr.bf16.gmra.mrb[0].mxu0 %v524
        %v560 = vpop.f32.mrb[0].mxu0
        %v561 = vadd.f32 0.0, %v560
        %v562 = vpop.f32.mrb[0].mxu0
        %v563 = vpop.f32.mrb[0].mxu0
        %v564 = vadd.f32 0.0, %v563
        %v565 = vpop.f32.mrb[0].mxu0
        %566 = vdwg.mxu0
        %v567 = vadd.f32 %v514, %v561
        %v568 = vadd.f32 %v515, %v564
        %569 = vst [vmem:[#allocation4] sm:$0xff] %v567
        %570 = vst [vmem:[#allocation4 + $0x8] sm:$0xff] %v568
        %571 = vst.msk [vmem:[#allocation2] sm:$0xff] %vm499, %v463
        %572 = vst.msk [vmem:[#allocation2 + $0x8] sm:$0xff] %vm499, %v464
      $region40: #{kosmos2_forward.30} parent=31 // pred_fallthru
        _
      %p573 = scmp.eq.s32.totalorder %s30, 1
      // Predicated region
      $region41: #{kosmos2_forward.30} parent=31 // pred_check
        %p574 = pneg %p573
      $region42: #{kosmos2_forward.30} parent=31 // pred_check_branch
        %576 = sbr.rel (%p574) target = $region44
      $region43: #{kosmos2_forward.30} parent=31 // pred_region
        %v577 = vld [vmem:[#allocation3] sm:$0xff]
        %v578 = vld [vmem:[#allocation3 + $0x8] sm:$0xff]
        %v579 = vrcp.pop %v577
        %v580 = vrcp.pop %v578
        %v581 = vld [vmem:[#allocation4] sm:$0xff]
        %v582 = vld [vmem:[#allocation4 + $0x8] sm:$0xff]
        %584 = vset.pattern.permute.xlu0 0
        %585 = vperm.xlu0 %584, %v579
        %v586 = vpop.permute.xlu0 %585
        %589 = vset.pattern.permute.xlu0 0
        %590 = vperm.xlu0 %589, %v580
        %v591 = vpop.permute.xlu0 %590
        %v593 = vmul.f32 %v581, %v586
        %v594 = vmul.f32 %v582, %v591
        %v595 = vpack.c.bf16 %v594, %v593
        %v597 = vunpack.c.l.b16 %v595
        %v598 = vunpack.c.h.b16 %v595
        %v599 = vpack.c.b16 %v597, %v597
        %v600 = vpack.c.b16 %v598, %v598
        %603 = vst [vmem:[%s353] sm:$0xf] %v599
        %604 = vst [vmem:[%s353 + $0x4] sm:$0xf] %v600
      $region44: #{kosmos2_forward.30} parent=31 // pred_fallthru
        _
      %s605 = smul.u32 2, %s29
      %p606 = scmp.lt.s32.totalorder %s27, 1
      %s607 = scalar_select %p606, %s27, 1
      %p608 = scmp.lt.s32.totalorder %s28, 1
      %s609 = scalar_select %p608, %s28, 1
      %p610 = scmp.lt.s32.totalorder %s605, 3
      %s611 = scalar_select %p610, %s605, 3
      %s612 = smul.addr %s609, 4
      %s613 = sadd.s32 %s611, %s612
      %s614 = smul.addr %s607, 8
      %s615 = sadd.s32 %s613, %s614
      %s616 = smul.addr %s615, 4
      %s617 = scalar_lea.vmem %s4, %s616
      // Predicated region
      $region45: #{kosmos2_forward.30} parent=31 // pred_check
        %p618 = pneg %p159
      $region46: #{kosmos2_forward.30} parent=31 // pred_check_branch
        %620 = sbr.rel (%p618) target = $region48
      $region47: #{kosmos2_forward.30} parent=31 // pred_region
        %s621 = smul.u32 2, %s29
      $region48: #{kosmos2_forward.30} parent=31 // pred_fallthru
        _
    $region32: #{kosmos2_forward.30} parent=5 // pred_fallthru
      _
    %p622 = scmp.le.s32.totalorder 2, %s16
    // Predicated region
    $region49: #{kosmos2_forward.30} parent=5 // pred_check
      %p623 = pneg %p622
    $region50: #{kosmos2_forward.30} parent=5 // pred_check_branch
      %625 = sbr.rel (%p623) target = $region52
    $region51: #{kosmos2_forward.30} parent=5 // pred_region
      %s626 = ssub.s32 %s16, 2
      // Predicated region
      $region53: #{kosmos2_forward.30} parent=51 // pred_check
        %p627 = pneg %p165
      $region54: #{kosmos2_forward.30} parent=51 // pred_check_branch
        %629 = sbr.rel (%p627) target = $region56
      $region55: #{kosmos2_forward.30} parent=51 // pred_region
        %s630 = smul.u32 2, %s33
        %p631 = scmp.lt.s32.totalorder %s31, 1
        %s632 = scalar_select %p631, %s31, 1
        %p633 = scmp.lt.s32.totalorder %s32, 1
        %s634 = scalar_select %p633, %s32, 1
        %p635 = scmp.lt.s32.totalorder %s630, 3
        %s636 = scalar_select %p635, %s630, 3
        %s637 = smul.addr %s634, 4
        %s638 = sadd.s32 %s636, %s637
        %s639 = smul.addr %s632, 8
        %s640 = sadd.s32 %s638, %s639
        %s641 = smul.addr %s640, 4
        %s642 = scalar_lea.vmem %s4, %s641
      $region56: #{kosmos2_forward.30} parent=51 // pred_fallthru
        _
    $region52: #{kosmos2_forward.30} parent=5 // pred_fallthru
      _
  $region6: #{kosmos2_forward.30} parent=0 // loop_footer
    %s20 = sadd.s32 1, %s16
  $region7: #{kosmos2_forward.30} parent=0 // loop_footer_branch
    %15 = sbr.rel target = $region3
  $region8: #{kosmos2_forward.30} parent=0 // loop_exit
    _

// kernel: kosmos2_forward.32
$region0: #{kosmos2_forward.32}
  #allocation0 [shape = 'u32[]', space=smem, size = 0x4, offset = 0x4, fixed_abs, tag = 'smem constant byte address 0x4 - core index']
  #allocation1 [shape = 'u32[144,128]{1,0:T(1,128)}', space=vmem, size = 0x12000, scoped, tag = 'internal scratch']
  %s0 = inlined_call_operand.vmem [shape: bf16[64,256], index: 0, kind: input, shape index: {}]
  %s1 = inlined_call_operand.vmem [shape: bf16[1,256], index: 1, kind: input, shape index: {}]
  %s2 = inlined_call_operand.vmem [shape: bf16[1,256], index: 2, kind: input, shape index: {}]
  %s3 = inlined_call_operand.vmem [shape: bf16[256,512], index: 3, kind: input, shape index: {}]
  %s4 = inlined_call_operand.vmem [shape: bf16[1,512], index: 4, kind: input, shape index: {}]
  %s5 = inlined_call_operand.vmem [shape: bf16[512,256], index: 5, kind: input, shape index: {}]
  %s6 = inlined_call_operand.vmem [shape: bf16[1,256], index: 6, kind: input, shape index: {}]
  %s7 = inlined_call_operand.vmem [shape: bf16[64,256], index: 7, kind: output, shape index: {}]
  %s8 = sld [smem:[#allocation0]]
  $region38: #{kosmos2_forward.32} parent=0
    _
  %s10 = ssub.s32 1, %s8
  %s11 = scalar_select 0, %s10, %s8
  // Predicated region
  $region2: #{kosmos2_forward.32} parent=0 // pred_check
    _
  $region3: #{kosmos2_forward.32} parent=0 // pred_check_branch
    %13 = sbr.rel (0) target = $region5
  $region4: #{kosmos2_forward.32} parent=0 // pred_region
    _
  $region5: #{kosmos2_forward.32} parent=0 // pred_fallthru
    _
  // Predicated region
  $region6: #{kosmos2_forward.32} parent=0 // pred_check
    _
  $region7: #{kosmos2_forward.32} parent=0 // pred_check_branch
    %15 = sbr.rel (0) target = $region9
  $region8: #{kosmos2_forward.32} parent=0 // pred_region
    _
  $region9: #{kosmos2_forward.32} parent=0 // pred_fallthru
    _
  // Predicated region
  $region10: #{kosmos2_forward.32} parent=0 // pred_check
    _
  $region11: #{kosmos2_forward.32} parent=0 // pred_check_branch
    %17 = sbr.rel (0) target = $region13
  $region12: #{kosmos2_forward.32} parent=0 // pred_region
    _
  $region13: #{kosmos2_forward.32} parent=0 // pred_fallthru
    _
  // Predicated region
  $region14: #{kosmos2_forward.32} parent=0 // pred_check
    _
  $region15: #{kosmos2_forward.32} parent=0 // pred_check_branch
    %19 = sbr.rel (0) target = $region17
  $region16: #{kosmos2_forward.32} parent=0 // pred_region
    _
  $region17: #{kosmos2_forward.32} parent=0 // pred_fallthru
    _
  // Predicated region
  $region18: #{kosmos2_forward.32} parent=0 // pred_check
    _
  $region19: #{kosmos2_forward.32} parent=0 // pred_check_branch
    %21 = sbr.rel (0) target = $region21
  $region20: #{kosmos2_forward.32} parent=0 // pred_region
    _
  $region21: #{kosmos2_forward.32} parent=0 // pred_fallthru
    _
  // Predicated region
  $region22: #{kosmos2_forward.32} parent=0 // pred_check
    _
  $region23: #{kosmos2_forward.32} parent=0 // pred_check_branch
    %23 = sbr.rel (0) target = $region25
  $region24: #{kosmos2_forward.32} parent=0 // pred_region
    _
  $region25: #{kosmos2_forward.32} parent=0 // pred_fallthru
    _
  // Predicated region
  $region26: #{kosmos2_forward.32} parent=0 // pred_check
    _
  $region27: #{kosmos2_forward.32} parent=0 // pred_check_branch
    %25 = sbr.rel (0) target = $region29
  $region28: #{kosmos2_forward.32} parent=0 // pred_region
    _
  $region29: #{kosmos2_forward.32} parent=0 // pred_fallthru
    _
  %v26 = vld [vmem:[%s0] sm:$0xff]
  %v27 = vld [vmem:[%s0 + $0x8] sm:$0xff]
  %v28 = vld [vmem:[%s0 + $0x10] sm:$0xff]
  %v29 = vld [vmem:[%s0 + $0x18] sm:$0xff]
  %v30 = vld [vmem:[%s0 + $0x20] sm:$0xff]
  %v31 = vld [vmem:[%s0 + $0x28] sm:$0xff]
  %v32 = vld [vmem:[%s0 + $0x30] sm:$0xff]
  %v33 = vld [vmem:[%s0 + $0x38] sm:$0xff]
  %v34 = vunpack.c.l.bf16 %v26
  %v35 = vunpack.c.h.bf16 %v26
  %v36 = vunpack.c.l.bf16 %v27
  %v37 = vunpack.c.h.bf16 %v27
  %v38 = vunpack.c.l.bf16 %v28
  %v39 = vunpack.c.h.bf16 %v28
  %v40 = vunpack.c.l.bf16 %v29
  %v41 = vunpack.c.h.bf16 %v29
  %v42 = vunpack.c.l.bf16 %v30
  %v43 = vunpack.c.h.bf16 %v30
  %v44 = vunpack.c.l.bf16 %v31
  %v45 = vunpack.c.h.bf16 %v31
  %v46 = vunpack.c.l.bf16 %v32
  %v47 = vunpack.c.h.bf16 %v32
  %v48 = vunpack.c.l.bf16 %v33
  %v49 = vunpack.c.h.bf16 %v33
  %v50 = vadd.f32 %v34, %v35
  %51 = vadd.xlane.f32.xlu0 %v50
  %v52 = vpop.xlane.xlu0 %51
  %v53 = vadd.f32 %v36, %v37
  %54 = vadd.xlane.f32.xlu0 %v53
  %v55 = vpop.xlane.xlu0 %54
  %v56 = vadd.f32 %v38, %v39
  %57 = vadd.xlane.f32.xlu0 %v56
  %v58 = vpop.xlane.xlu0 %57
  %v59 = vadd.f32 %v40, %v41
  %60 = vadd.xlane.f32.xlu0 %v59
  %v61 = vpop.xlane.xlu0 %60
  %v62 = vadd.f32 %v42, %v43
  %63 = vadd.xlane.f32.xlu0 %v62
  %v64 = vpop.xlane.xlu0 %63
  %v65 = vadd.f32 %v44, %v45
  %66 = vadd.xlane.f32.xlu0 %v65
  %v67 = vpop.xlane.xlu0 %66
  %v68 = vadd.f32 %v46, %v47
  %69 = vadd.xlane.f32.xlu0 %v68
  %v70 = vpop.xlane.xlu0 %69
  %v71 = vadd.f32 %v48, %v49
  %72 = vadd.xlane.f32.xlu0 %v71
  %v73 = vpop.xlane.xlu0 %72
  %v74 = vrcp.pop 256.0
  %v75 = vmul.f32 %v52, %v74
  %v76 = vmul.f32 %v55, %v74
  %v77 = vmul.f32 %v58, %v74
  %v78 = vmul.f32 %v61, %v74
  %v79 = vmul.f32 %v64, %v74
  %v80 = vmul.f32 %v67, %v74
  %v81 = vmul.f32 %v70, %v74
  %v82 = vmul.f32 %v73, %v74
  %v83 = vsub.f32 %v34, %v75
  %v84 = vsub.f32 %v35, %v75
  %v85 = vsub.f32 %v36, %v76
  %v86 = vsub.f32 %v37, %v76
  %v87 = vsub.f32 %v38, %v77
  %v88 = vsub.f32 %v39, %v77
  %v89 = vsub.f32 %v40, %v78
  %v90 = vsub.f32 %v41, %v78
  %v91 = vsub.f32 %v42, %v79
  %v92 = vsub.f32 %v43, %v79
  %v93 = vsub.f32 %v44, %v80
  %v94 = vsub.f32 %v45, %v80
  %v95 = vsub.f32 %v46, %v81
  %v96 = vsub.f32 %v47, %v81
  %v97 = vsub.f32 %v48, %v82
  %v98 = vsub.f32 %v49, %v82
  %v99 = vmul.f32 %v83, %v83
  %v100 = vmul.f32 %v84, %v84
  %v101 = vmul.f32 %v85, %v85
  %v102 = vmul.f32 %v86, %v86
  %v103 = vmul.f32 %v87, %v87
  %v104 = vmul.f32 %v88, %v88
  %v105 = vmul.f32 %v89, %v89
  %v106 = vmul.f32 %v90, %v90
  %v107 = vmul.f32 %v91, %v91
  %v108 = vmul.f32 %v92, %v92
  %v109 = vmul.f32 %v93, %v93
  %v110 = vmul.f32 %v94, %v94
  %v111 = vmul.f32 %v95, %v95
  %v112 = vmul.f32 %v96, %v96
  %v113 = vmul.f32 %v97, %v97
  %v114 = vmul.f32 %v98, %v98
  %v115 = vadd.f32 %v99, %v100
  %116 = vadd.xlane.f32.xlu0 %v115
  %v117 = vpop.xlane.xlu0 %116
  %v118 = vadd.f32 %v101, %v102
  %119 = vadd.xlane.f32.xlu0 %v118
  %v120 = vpop.xlane.xlu0 %119
  %v121 = vadd.f32 %v103, %v104
  %122 = vadd.xlane.f32.xlu0 %v121
  %v123 = vpop.xlane.xlu0 %122
  %v124 = vadd.f32 %v105, %v106
  %125 = vadd.xlane.f32.xlu0 %v124
  %v126 = vpop.xlane.xlu0 %125
  %v127 = vadd.f32 %v107, %v108
  %128 = vadd.xlane.f32.xlu0 %v127
  %v129 = vpop.xlane.xlu0 %128
  %v130 = vadd.f32 %v109, %v110
  %131 = vadd.xlane.f32.xlu0 %v130
  %v132 = vpop.xlane.xlu0 %131
  %v133 = vadd.f32 %v111, %v112
  %134 = vadd.xlane.f32.xlu0 %v133
  %v135 = vpop.xlane.xlu0 %134
  %v136 = vadd.f32 %v113, %v114
  %137 = vadd.xlane.f32.xlu0 %v136
  %v138 = vpop.xlane.xlu0 %137
  %v139 = vmul.f32 %v117, %v74
  %v140 = vmul.f32 %v120, %v74
  %v141 = vmul.f32 %v123, %v74
  %v142 = vmul.f32 %v126, %v74
  %v143 = vmul.f32 %v129, %v74
  %v144 = vmul.f32 %v132, %v74
  %v145 = vmul.f32 %v135, %v74
  %v146 = vmul.f32 %v138, %v74
  %v147 = vadd.f32 %v139, 1e-05
  %v148 = vadd.f32 %v140, 1e-05
  %v149 = vadd.f32 %v141, 1e-05
  %v150 = vadd.f32 %v142, 1e-05
  %v151 = vadd.f32 %v143, 1e-05
  %v152 = vadd.f32 %v144, 1e-05
  %v153 = vadd.f32 %v145, 1e-05
  %v154 = vadd.f32 %v146, 1e-05
  %v155 = vrsqrt.pop %v147
  %v156 = vrsqrt.pop %v148
  %v157 = vrsqrt.pop %v149
  %v158 = vrsqrt.pop %v150
  %v159 = vrsqrt.pop %v151
  %v160 = vrsqrt.pop %v152
  %v161 = vrsqrt.pop %v153
  %v162 = vrsqrt.pop %v154
  %v163 = vmul.f32 %v83, %v155
  %v164 = vmul.f32 %v84, %v155
  %v165 = vmul.f32 %v85, %v156
  %v166 = vmul.f32 %v86, %v156
  %v167 = vmul.f32 %v87, %v157
  %v168 = vmul.f32 %v88, %v157
  %v169 = vmul.f32 %v89, %v158
  %v170 = vmul.f32 %v90, %v158
  %v171 = vmul.f32 %v91, %v159
  %v172 = vmul.f32 %v92, %v159
  %v173 = vmul.f32 %v93, %v160
  %v174 = vmul.f32 %v94, %v160
  %v175 = vmul.f32 %v95, %v161
  %v176 = vmul.f32 %v96, %v161
  %v177 = vmul.f32 %v97, %v162
  %v178 = vmul.f32 %v98, %v162
  %v179 = vld [vmem:[%s1] sm:$0x3]
  %v180 = vunpack.c.l.bf16 %v179
  %v182 = vlaneseq
  %v183 = vshrl.u32 %v182, 7
  %v184 = vsub.s32 0, %v183
  %v185 = vrot.slane %v180, %v184
  %v186 = vlaneseq
  %v187 = vshrl.u32 %v186, 7
  %v188 = vsub.s32 2, %v187
  %v189 = vrot.slane %v180, %v188
  %v192 = vlaneseq
  %v193 = vshrl.u32 %v192, 7
  %v194 = vsub.s32 0, %v193
  %v195 = vrot.slane %v185, %v194
  %v196 = vlaneseq
  %v197 = vshrl.u32 %v196, 7
  %v198 = vsub.s32 0, %v197
  %v199 = vrot.slane %v189, %v198
  %v200 = vmul.f32 %v163, %v195
  %v201 = vmul.f32 %v164, %v199
  %v202 = vmul.f32 %v165, %v195
  %v203 = vmul.f32 %v166, %v199
  %v204 = vmul.f32 %v167, %v195
  %v205 = vmul.f32 %v168, %v199
  %v206 = vmul.f32 %v169, %v195
  %v207 = vmul.f32 %v170, %v199
  %v208 = vmul.f32 %v171, %v195
  %v209 = vmul.f32 %v172, %v199
  %v210 = vmul.f32 %v173, %v195
  %v211 = vmul.f32 %v174, %v199
  %v212 = vmul.f32 %v175, %v195
  %v213 = vmul.f32 %v176, %v199
  %v214 = vmul.f32 %v177, %v195
  %v215 = vmul.f32 %v178, %v199
  %v216 = vld [vmem:[%s2] sm:$0x3]
  %v217 = vunpack.c.l.bf16 %v216
  %v219 = vlaneseq
  %v220 = vshrl.u32 %v219, 7
  %v221 = vsub.s32 0, %v220
  %v222 = vrot.slane %v217, %v221
  %v223 = vlaneseq
  %v224 = vshrl.u32 %v223, 7
  %v225 = vsub.s32 2, %v224
  %v226 = vrot.slane %v217, %v225
  %v229 = vlaneseq
  %v230 = vshrl.u32 %v229, 7
  %v231 = vsub.s32 0, %v230
  %v232 = vrot.slane %v222, %v231
  %v233 = vlaneseq
  %v234 = vshrl.u32 %v233, 7
  %v235 = vsub.s32 0, %v234
  %v236 = vrot.slane %v226, %v235
  %v237 = vadd.f32 %v200, %v232
  %v238 = vadd.f32 %v201, %v236
  %v239 = vadd.f32 %v202, %v232
  %v240 = vadd.f32 %v203, %v236
  %v241 = vadd.f32 %v204, %v232
  %v242 = vadd.f32 %v205, %v236
  %v243 = vadd.f32 %v206, %v232
  %v244 = vadd.f32 %v207, %v236
  %v245 = vadd.f32 %v208, %v232
  %v246 = vadd.f32 %v209, %v236
  %v247 = vadd.f32 %v210, %v232
  %v248 = vadd.f32 %v211, %v236
  %v249 = vadd.f32 %v212, %v232
  %v250 = vadd.f32 %v213, %v236
  %v251 = vadd.f32 %v214, %v232
  %v252 = vadd.f32 %v215, %v236
  %v253 = vpack.c.bf16 %v239, %v237
  %v254 = vpack.c.bf16 %v240, %v238
  %v255 = vpack.c.bf16 %v243, %v241
  %v256 = vpack.c.bf16 %v244, %v242
  %v257 = vpack.c.bf16 %v247, %v245
  %v258 = vpack.c.bf16 %v248, %v246
  %v259 = vpack.c.bf16 %v251, %v249
  %v260 = vpack.c.bf16 %v252, %v250
  %v261 = vld [vmem:[%s3] sm:$0xff]
  %v262 = vld [vmem:[%s3 + $0x8] sm:$0xff]
  %v263 = vld [vmem:[%s3 + $0x10] sm:$0xff]
  %v264 = vld [vmem:[%s3 + $0x18] sm:$0xff]
  %v265 = vld [vmem:[%s3 + $0x20] sm:$0xff]
  %v266 = vld [vmem:[%s3 + $0x28] sm:$0xff]
  %v267 = vld [vmem:[%s3 + $0x30] sm:$0xff]
  %v268 = vld [vmem:[%s3 + $0x38] sm:$0xff]
  %v269 = vld [vmem:[%s3 + $0x40] sm:$0xff]
  %v270 = vld [vmem:[%s3 + $0x48] sm:$0xff]
  %v271 = vld [vmem:[%s3 + $0x50] sm:$0xff]
  %v272 = vld [vmem:[%s3 + $0x58] sm:$0xff]
  %v273 = vld [vmem:[%s3 + $0x60] sm:$0xff]
  %v274 = vld [vmem:[%s3 + $0x68] sm:$0xff]
  %v275 = vld [vmem:[%s3 + $0x70] sm:$0xff]
  %v276 = vld [vmem:[%s3 + $0x78] sm:$0xff]
  %v277 = vld [vmem:[%s3 + $0x80] sm:$0xff]
  %v278 = vld [vmem:[%s3 + $0x88] sm:$0xff]
  %v279 = vld [vmem:[%s3 + $0x90] sm:$0xff]
  %v280 = vld [vmem:[%s3 + $0x98] sm:$0xff]
  %v281 = vld [vmem:[%s3 + $0xa0] sm:$0xff]
  %v282 = vld [vmem:[%s3 + $0xa8] sm:$0xff]
  %v283 = vld [vmem:[%s3 + $0xb0] sm:$0xff]
  %v284 = vld [vmem:[%s3 + $0xb8] sm:$0xff]
  %v285 = vld [vmem:[%s3 + $0xc0] sm:$0xff]
  %v286 = vld [vmem:[%s3 + $0xc8] sm:$0xff]
  %v287 = vld [vmem:[%s3 + $0xd0] sm:$0xff]
  %v288 = vld [vmem:[%s3 + $0xd8] sm:$0xff]
  %v289 = vld [vmem:[%s3 + $0xe0] sm:$0xff]
  %v290 = vld [vmem:[%s3 + $0xe8] sm:$0xff]
  %v291 = vld [vmem:[%s3 + $0xf0] sm:$0xff]
  %v292 = vld [vmem:[%s3 + $0xf8] sm:$0xff]
  %v293 = vld [vmem:[%s3 + $0x100] sm:$0xff]
  %v294 = vld [vmem:[%s3 + $0x108] sm:$0xff]
  %v295 = vld [vmem:[%s3 + $0x110] sm:$0xff]
  %v296 = vld [vmem:[%s3 + $0x118] sm:$0xff]
  %v297 = vld [vmem:[%s3 + $0x120] sm:$0xff]
  %v298 = vld [vmem:[%s3 + $0x128] sm:$0xff]
  %v299 = vld [vmem:[%s3 + $0x130] sm:$0xff]
  %v300 = vld [vmem:[%s3 + $0x138] sm:$0xff]
  %v301 = vld [vmem:[%s3 + $0x140] sm:$0xff]
  %v302 = vld [vmem:[%s3 + $0x148] sm:$0xff]
  %v303 = vld [vmem:[%s3 + $0x150] sm:$0xff]
  %v304 = vld [vmem:[%s3 + $0x158] sm:$0xff]
  %v305 = vld [vmem:[%s3 + $0x160] sm:$0xff]
  %v306 = vld [vmem:[%s3 + $0x168] sm:$0xff]
  %v307 = vld [vmem:[%s3 + $0x170] sm:$0xff]
  %v308 = vld [vmem:[%s3 + $0x178] sm:$0xff]
  %v309 = vld [vmem:[%s3 + $0x180] sm:$0xff]
  %v310 = vld [vmem:[%s3 + $0x188] sm:$0xff]
  %v311 = vld [vmem:[%s3 + $0x190] sm:$0xff]
  %v312 = vld [vmem:[%s3 + $0x198] sm:$0xff]
  %v313 = vld [vmem:[%s3 + $0x1a0] sm:$0xff]
  %v314 = vld [vmem:[%s3 + $0x1a8] sm:$0xff]
  %v315 = vld [vmem:[%s3 + $0x1b0] sm:$0xff]
  %v316 = vld [vmem:[%s3 + $0x1b8] sm:$0xff]
  %v317 = vld [vmem:[%s3 + $0x1c0] sm:$0xff]
  %v318 = vld [vmem:[%s3 + $0x1c8] sm:$0xff]
  %v319 = vld [vmem:[%s3 + $0x1d0] sm:$0xff]
  %v320 = vld [vmem:[%s3 + $0x1d8] sm:$0xff]
  %v321 = vld [vmem:[%s3 + $0x1e0] sm:$0xff]
  %v322 = vld [vmem:[%s3 + $0x1e8] sm:$0xff]
  %v323 = vld [vmem:[%s3 + $0x1f0] sm:$0xff]
  %v324 = vld [vmem:[%s3 + $0x1f8] sm:$0xff]
  %v325 = vld [vmem:[%s4] sm:$0xf]
  %v326 = vunpack.c.l.bf16 %v325
  %v328 = vlaneseq
  %v329 = vshrl.u32 %v328, 7
  %v330 = vsub.s32 0, %v329
  %v331 = vrot.slane %v326, %v330
  %v332 = vlaneseq
  %v333 = vshrl.u32 %v332, 7
  %v334 = vsub.s32 2, %v333
  %v335 = vrot.slane %v326, %v334
  %v336 = vlaneseq
  %v337 = vshrl.u32 %v336, 7
  %v338 = vsub.s32 4, %v337
  %v339 = vrot.slane %v326, %v338
  %v340 = vlaneseq
  %v341 = vshrl.u32 %v340, 7
  %v342 = vsub.s32 6, %v341
  %v343 = vrot.slane %v326, %v342
  %v348 = vlaneseq
  %v349 = vshrl.u32 %v348, 7
  %v350 = vsub.s32 0, %v349
  %v351 = vrot.slane %v331, %v350
  %v352 = vlaneseq
  %v353 = vshrl.u32 %v352, 7
  %v354 = vsub.s32 0, %v353
  %v355 = vrot.slane %v335, %v354
  %v356 = vlaneseq
  %v357 = vshrl.u32 %v356, 7
  %v358 = vsub.s32 0, %v357
  %v359 = vrot.slane %v339, %v358
  %v360 = vlaneseq
  %v361 = vshrl.u32 %v360, 7
  %v362 = vsub.s32 0, %v361
  %v363 = vrot.slane %v343, %v362
  %v428 = vunpack.c.l.b16 %v261
  %v429 = vunpack.c.h.b16 %v261
  %v430 = vunpack.c.l.b16 %v262
  %v431 = vunpack.c.h.b16 %v262
  %v432 = vunpack.c.l.b16 %v263
  %v433 = vunpack.c.h.b16 %v263
  %v434 = vunpack.c.l.b16 %v264
  %v435 = vunpack.c.h.b16 %v264
  %v436 = vunpack.c.l.b16 %v265
  %v437 = vunpack.c.h.b16 %v265
  %v438 = vunpack.c.l.b16 %v266
  %v439 = vunpack.c.h.b16 %v266
  %v440 = vunpack.c.l.b16 %v267
  %v441 = vunpack.c.h.b16 %v267
  %v442 = vunpack.c.l.b16 %v268
  %v443 = vunpack.c.h.b16 %v268
  %v444 = vunpack.c.l.b16 %v269
  %v445 = vunpack.c.h.b16 %v269
  %v446 = vunpack.c.l.b16 %v270
  %v447 = vunpack.c.h.b16 %v270
  %v448 = vunpack.c.l.b16 %v271
  %v449 = vunpack.c.h.b16 %v271
  %v450 = vunpack.c.l.b16 %v272
  %v451 = vunpack.c.h.b16 %v272
  %v452 = vunpack.c.l.b16 %v273
  %v453 = vunpack.c.h.b16 %v273
  %v454 = vunpack.c.l.b16 %v274
  %v455 = vunpack.c.h.b16 %v274
  %v456 = vunpack.c.l.b16 %v275
  %v457 = vunpack.c.h.b16 %v275
  %v458 = vunpack.c.l.b16 %v276
  %v459 = vunpack.c.h.b16 %v276
  %v460 = vunpack.c.l.b16 %v277
  %v461 = vunpack.c.h.b16 %v277
  %v462 = vunpack.c.l.b16 %v278
  %v463 = vunpack.c.h.b16 %v278
  %v464 = vunpack.c.l.b16 %v279
  %v465 = vunpack.c.h.b16 %v279
  %v466 = vunpack.c.l.b16 %v280
  %v467 = vunpack.c.h.b16 %v280
  %v468 = vunpack.c.l.b16 %v281
  %v469 = vunpack.c.h.b16 %v281
  %v470 = vunpack.c.l.b16 %v282
  %v471 = vunpack.c.h.b16 %v282
  %v472 = vunpack.c.l.b16 %v283
  %v473 = vunpack.c.h.b16 %v283
  %v474 = vunpack.c.l.b16 %v284
  %v475 = vunpack.c.h.b16 %v284
  %v476 = vunpack.c.l.b16 %v285
  %v477 = vunpack.c.h.b16 %v285
  %v478 = vunpack.c.l.b16 %v286
  %v479 = vunpack.c.h.b16 %v286
  %v480 = vunpack.c.l.b16 %v287
  %v481 = vunpack.c.h.b16 %v287
  %v482 = vunpack.c.l.b16 %v288
  %v483 = vunpack.c.h.b16 %v288
  %v484 = vunpack.c.l.b16 %v289
  %v485 = vunpack.c.h.b16 %v289
  %v486 = vunpack.c.l.b16 %v290
  %v487 = vunpack.c.h.b16 %v290
  %v488 = vunpack.c.l.b16 %v291
  %v489 = vunpack.c.h.b16 %v291
  %v490 = vunpack.c.l.b16 %v292
  %v491 = vunpack.c.h.b16 %v292
  %v492 = vunpack.c.l.b16 %v293
  %v493 = vunpack.c.h.b16 %v293
  %v494 = vunpack.c.l.b16 %v294
  %v495 = vunpack.c.h.b16 %v294
  %v496 = vunpack.c.l.b16 %v295
  %v497 = vunpack.c.h.b16 %v295
  %v498 = vunpack.c.l.b16 %v296
  %v499 = vunpack.c.h.b16 %v296
  %v500 = vunpack.c.l.b16 %v297
  %v501 = vunpack.c.h.b16 %v297
  %v502 = vunpack.c.l.b16 %v298
  %v503 = vunpack.c.h.b16 %v298
  %v504 = vunpack.c.l.b16 %v299
  %v505 = vunpack.c.h.b16 %v299
  %v506 = vunpack.c.l.b16 %v300
  %v507 = vunpack.c.h.b16 %v300
  %v508 = vunpack.c.l.b16 %v301
  %v509 = vunpack.c.h.b16 %v301
  %v510 = vunpack.c.l.b16 %v302
  %v511 = vunpack.c.h.b16 %v302
  %v512 = vunpack.c.l.b16 %v303
  %v513 = vunpack.c.h.b16 %v303
  %v514 = vunpack.c.l.b16 %v304
  %v515 = vunpack.c.h.b16 %v304
  %v516 = vunpack.c.l.b16 %v305
  %v517 = vunpack.c.h.b16 %v305
  %v518 = vunpack.c.l.b16 %v306
  %v519 = vunpack.c.h.b16 %v306
  %v520 = vunpack.c.l.b16 %v307
  %v521 = vunpack.c.h.b16 %v307
  %v522 = vunpack.c.l.b16 %v308
  %v523 = vunpack.c.h.b16 %v308
  %v524 = vunpack.c.l.b16 %v309
  %v525 = vunpack.c.h.b16 %v309
  %v526 = vunpack.c.l.b16 %v310
  %v527 = vunpack.c.h.b16 %v310
  %v528 = vunpack.c.l.b16 %v311
  %v529 = vunpack.c.h.b16 %v311
  %v530 = vunpack.c.l.b16 %v312
  %v531 = vunpack.c.h.b16 %v312
  %v532 = vunpack.c.l.b16 %v313
  %v533 = vunpack.c.h.b16 %v313
  %v534 = vunpack.c.l.b16 %v314
  %v535 = vunpack.c.h.b16 %v314
  %v536 = vunpack.c.l.b16 %v315
  %v537 = vunpack.c.h.b16 %v315
  %v538 = vunpack.c.l.b16 %v316
  %v539 = vunpack.c.h.b16 %v316
  %v540 = vunpack.c.l.b16 %v317
  %v541 = vunpack.c.h.b16 %v317
  %v542 = vunpack.c.l.b16 %v318
  %v543 = vunpack.c.h.b16 %v318
  %v544 = vunpack.c.l.b16 %v319
  %v545 = vunpack.c.h.b16 %v319
  %v546 = vunpack.c.l.b16 %v320
  %v547 = vunpack.c.h.b16 %v320
  %v548 = vunpack.c.l.b16 %v321
  %v549 = vunpack.c.h.b16 %v321
  %v550 = vunpack.c.l.b16 %v322
  %v551 = vunpack.c.h.b16 %v322
  %v552 = vunpack.c.l.b16 %v323
  %v553 = vunpack.c.h.b16 %v323
  %v554 = vunpack.c.l.b16 %v324
  %v555 = vunpack.c.h.b16 %v324
  %v556 = vpack.c.b16 %v432, %v428
  %v557 = vpack.c.b16 %v433, %v429
  %v558 = vpack.c.b16 %v434, %v430
  %v559 = vpack.c.b16 %v435, %v431
  %v560 = vpack.c.b16 %v440, %v436
  %v561 = vpack.c.b16 %v441, %v437
  %v562 = vpack.c.b16 %v442, %v438
  %v563 = vpack.c.b16 %v443, %v439
  %v564 = vpack.c.b16 %v448, %v444
  %v565 = vpack.c.b16 %v449, %v445
  %v566 = vpack.c.b16 %v450, %v446
  %v567 = vpack.c.b16 %v451, %v447
  %v568 = vpack.c.b16 %v456, %v452
  %v569 = vpack.c.b16 %v457, %v453
  %v570 = vpack.c.b16 %v458, %v454
  %v571 = vpack.c.b16 %v459, %v455
  %v572 = vpack.c.b16 %v464, %v460
  %v573 = vpack.c.b16 %v465, %v461
  %v574 = vpack.c.b16 %v466, %v462
  %v575 = vpack.c.b16 %v467, %v463
  %v576 = vpack.c.b16 %v472, %v468
  %v577 = vpack.c.b16 %v473, %v469
  %v578 = vpack.c.b16 %v474, %v470
  %v579 = vpack.c.b16 %v475, %v471
  %v580 = vpack.c.b16 %v480, %v476
  %v581 = vpack.c.b16 %v481, %v477
  %v582 = vpack.c.b16 %v482, %v478
  %v583 = vpack.c.b16 %v483, %v479
  %v584 = vpack.c.b16 %v488, %v484
  %v585 = vpack.c.b16 %v489, %v485
  %v586 = vpack.c.b16 %v490, %v486
  %v587 = vpack.c.b16 %v491, %v487
  %v588 = vpack.c.b16 %v496, %v492
  %v589 = vpack.c.b16 %v497, %v493
  %v590 = vpack.c.b16 %v498, %v494
  %v591 = vpack.c.b16 %v499, %v495
  %v592 = vpack.c.b16 %v504, %v500
  %v593 = vpack.c.b16 %v505, %v501
  %v594 = vpack.c.b16 %v506, %v502
  %v595 = vpack.c.b16 %v507, %v503
  %v596 = vpack.c.b16 %v512, %v508
  %v597 = vpack.c.b16 %v513, %v509
  %v598 = vpack.c.b16 %v514, %v510
  %v599 = vpack.c.b16 %v515, %v511
  %v600 = vpack.c.b16 %v520, %v516
  %v601 = vpack.c.b16 %v521, %v517
  %v602 = vpack.c.b16 %v522, %v518
  %v603 = vpack.c.b16 %v523, %v519
  %v604 = vpack.c.b16 %v528, %v524
  %v605 = vpack.c.b16 %v529, %v525
  %v606 = vpack.c.b16 %v530, %v526
  %v607 = vpack.c.b16 %v531, %v527
  %v608 = vpack.c.b16 %v536, %v532
  %v609 = vpack.c.b16 %v537, %v533
  %v610 = vpack.c.b16 %v538, %v534
  %v611 = vpack.c.b16 %v539, %v535
  %v612 = vpack.c.b16 %v544, %v540
  %v613 = vpack.c.b16 %v545, %v541
  %v614 = vpack.c.b16 %v546, %v542
  %v615 = vpack.c.b16 %v547, %v543
  %v616 = vpack.c.b16 %v552, %v548
  %v617 = vpack.c.b16 %v553, %v549
  %v618 = vpack.c.b16 %v554, %v550
  %v619 = vpack.c.b16 %v555, %v551
  %684 = vmatprep.subr.bf16.mxu0 %v557
  %685 = vmatpush1.bf16.msra.mxu0 %v556
  %686 = vmatprep.subr.bf16.mxu0 %v561
  %687 = vmatpush1.bf16.msra.mxu0 %v560
  %688 = vmatprep.subr.bf16.mxu0 %v565
  %689 = vmatpush1.bf16.msra.mxu0 %v564
  %690 = vmatprep.subr.bf16.mxu0 %v569
  %691 = vmatpush1.bf16.msra.mxu0 %v568
  %692 = vmatprep.subr.bf16.mxu0 %v573
  %693 = vmatpush1.bf16.msra.mxu0 %v572
  %694 = vmatprep.subr.bf16.mxu0 %v577
  %695 = vmatpush1.bf16.msra.mxu0 %v576
  %696 = vmatprep.subr.bf16.mxu0 %v581
  %697 = vmatpush1.bf16.msra.mxu0 %v580
  %698 = vmatprep.subr.bf16.mxu0 %v585
  %699 = vmatpush1.bf16.msra.mxu0 %v584
  %700 = vmatprep.subr.bf16.mxu0 %v589
  %701 = vmatpush1.bf16.msra.mxu0 %v588
  %702 = vmatprep.subr.bf16.mxu0 %v593
  %703 = vmatpush1.bf16.msra.mxu0 %v592
  %704 = vmatprep.subr.bf16.mxu0 %v597
  %705 = vmatpush1.bf16.msra.mxu0 %v596
  %706 = vmatprep.subr.bf16.mxu0 %v601
  %707 = vmatpush1.bf16.msra.mxu0 %v600
  %708 = vmatprep.subr.bf16.mxu0 %v605
  %709 = vmatpush1.bf16.msra.mxu0 %v604
  %710 = vmatprep.subr.bf16.mxu0 %v609
  %711 = vmatpush1.bf16.msra.mxu0 %v608
  %712 = vmatprep.subr.bf16.mxu0 %v613
  %713 = vmatpush1.bf16.msra.mxu0 %v612
  %714 = vmatprep.subr.bf16.mxu0 %v617
  %715 = vmatpush1.bf16.msra.mxu0 %v616
  %716 = vmatprep.mubr.bf16.mxu0 %v254
  %717 = vmatmul.mubr.bf16.gmra.mrb[0].mxu0 %v253
  %v718 = vpop.f32.mrb[0].mxu0
  %v719 = vadd.f32 %v351, %v718
  %v720 = vpop.f32.mrb[0].mxu0
  %v721 = vadd.f32 %v355, %v720
  %v722 = vpop.f32.mrb[0].mxu0
  %v723 = vadd.f32 %v351, %v722
  %v724 = vpop.f32.mrb[0].mxu0
  %v725 = vadd.f32 %v355, %v724
  %726 = vmatprep.mubr.bf16.mxu0 %v256
  %727 = vmatmul.mubr.bf16.gmra.mrb[0].mxu0 %v255
  %v728 = vpop.f32.mrb[0].mxu0
  %v729 = vadd.f32 %v351, %v728
  %v730 = vpop.f32.mrb[0].mxu0
  %v731 = vadd.f32 %v355, %v730
  %v732 = vpop.f32.mrb[0].mxu0
  %v733 = vadd.f32 %v351, %v732
  %v734 = vpop.f32.mrb[0].mxu0
  %v735 = vadd.f32 %v355, %v734
  %736 = vmatprep.mubr.bf16.mxu0 %v258
  %737 = vmatmul.mubr.bf16.gmra.mrb[0].mxu0 %v257
  %v738 = vpop.f32.mrb[0].mxu0
  %v739 = vadd.f32 %v351, %v738
  %v740 = vpop.f32.mrb[0].mxu0
  %v741 = vadd.f32 %v355, %v740
  %v742 = vpop.f32.mrb[0].mxu0
  %v743 = vadd.f32 %v351, %v742
  %v744 = vpop.f32.mrb[0].mxu0
  %v745 = vadd.f32 %v355, %v744
  %746 = vmatprep.mubr.bf16.mxu0 %v260
  %747 = vmatmul.mubr.bf16.gmra.mrb[0].mxu0 %v259
  %v748 = vpop.f32.mrb[0].mxu0
  %v749 = vadd.f32 %v351, %v748
  %v750 = vpop.f32.mrb[0].mxu0
  %v751 = vadd.f32 %v355, %v750
  %v752 = vpop.f32.mrb[0].mxu0
  %v753 = vadd.f32 %v351, %v752
  %v754 = vpop.f32.mrb[0].mxu0
  %v755 = vadd.f32 %v355, %v754
  %756 = vdwg.mxu0
  %757 = vmatprep.subr.bf16.mxu0 %v559
  %758 = vmatpush1.bf16.msra.mxu0 %v558
  %759 = vmatprep.subr.bf16.mxu0 %v563
  %760 = vmatpush1.bf16.msra.mxu0 %v562
  %761 = vmatprep.subr.bf16.mxu0 %v567
  %762 = vmatpush1.bf16.msra.mxu0 %v566
  %763 = vmatprep.subr.bf16.mxu0 %v571
  %764 = vmatpush1.bf16.msra.mxu0 %v570
  %765 = vmatprep.subr.bf16.mxu0 %v575
  %766 = vmatpush1.bf16.msra.mxu0 %v574
  %767 = vmatprep.subr.bf16.mxu0 %v579
  %768 = vmatpush1.bf16.msra.mxu0 %v578
  %769 = vmatprep.subr.bf16.mxu0 %v583
  %770 = vmatpush1.bf16.msra.mxu0 %v582
  %771 = vmatprep.subr.bf16.mxu0 %v587
  %772 = vmatpush1.bf16.msra.mxu0 %v586
  %773 = vmatprep.subr.bf16.mxu0 %v591
  %774 = vmatpush1.bf16.msra.mxu0 %v590
  %775 = vmatprep.subr.bf16.mxu0 %v595
  %776 = vmatpush1.bf16.msra.mxu0 %v594
  %777 = vmatprep.subr.bf16.mxu0 %v599
  %778 = vmatpush1.bf16.msra.mxu0 %v598
  %779 = vmatprep.subr.bf16.mxu0 %v603
  %780 = vmatpush1.bf16.msra.mxu0 %v602
  %781 = vmatprep.subr.bf16.mxu0 %v607
  %782 = vmatpush1.bf16.msra.mxu0 %v606
  %783 = vmatprep.subr.bf16.mxu0 %v611
  %784 = vmatpush1.bf16.msra.mxu0 %v610
  %785 = vmatprep.subr.bf16.mxu0 %v615
  %786 = vmatpush1.bf16.msra.mxu0 %v614
  %787 = vmatprep.subr.bf16.mxu0 %v619
  %788 = vmatpush1.bf16.msra.mxu0 %v618
  %789 = vmatprep.mubr.bf16.mxu0 %v254
  %790 = vmatmul.mubr.bf16.gmra.mrb[0].mxu0 %v253
  %v791 = vpop.f32.mrb[0].mxu0
  %v792 = vadd.f32 %v359, %v791
  %v793 = vpop.f32.mrb[0].mxu0
  %v794 = vadd.f32 %v363, %v793
  %v795 = vpop.f32.mrb[0].mxu0
  %v796 = vadd.f32 %v359, %v795
  %v797 = vpop.f32.mrb[0].mxu0
  %v798 = vadd.f32 %v363, %v797
  %799 = vmatprep.mubr.bf16.mxu0 %v256
  %800 = vmatmul.mubr.bf16.gmra.mrb[0].mxu0 %v255
  %v801 = vpop.f32.mrb[0].mxu0
  %v802 = vadd.f32 %v359, %v801
  %v803 = vpop.f32.mrb[0].mxu0
  %v804 = vadd.f32 %v363, %v803
  %v805 = vpop.f32.mrb[0].mxu0
  %v806 = vadd.f32 %v359, %v805
  %v807 = vpop.f32.mrb[0].mxu0
  %v808 = vadd.f32 %v363, %v807
  %809 = vmatprep.mubr.bf16.mxu0 %v258
  %810 = vmatmul.mubr.bf16.gmra.mrb[0].mxu0 %v257
  %v811 = vpop.f32.mrb[0].mxu0
  %v812 = vadd.f32 %v359, %v811
  %v813 = vpop.f32.mrb[0].mxu0
  %v814 = vadd.f32 %v363, %v813
  %v815 = vpop.f32.mrb[0].mxu0
  %v816 = vadd.f32 %v359, %v815
  %v817 = vpop.f32.mrb[0].mxu0
  %v818 = vadd.f32 %v363, %v817
  %819 = vmatprep.mubr.bf16.mxu0 %v260
  %820 = vmatmul.mubr.bf16.gmra.mrb[0].mxu0 %v259
  %v821 = vpop.f32.mrb[0].mxu0
  %v822 = vadd.f32 %v359, %v821
  %v823 = vpop.f32.mrb[0].mxu0
  %v824 = vadd.f32 %v363, %v823
  %v825 = vpop.f32.mrb[0].mxu0
  %v826 = vadd.f32 %v359, %v825
  %v827 = vpop.f32.mrb[0].mxu0
  %v828 = vadd.f32 %v363, %v827
  %829 = vdwg.mxu0
  %v830 = vmul.f32 %v719, %v719
  %v831 = vmul.f32 %v721, %v721
  %v832 = vmul.f32 %v792, %v792
  %v833 = vmul.f32 %v794, %v794
  %v834 = vmul.f32 %v723, %v723
  %v835 = vmul.f32 %v725, %v725
  %v836 = vmul.f32 %v796, %v796
  %v837 = vmul.f32 %v798, %v798
  %v838 = vmul.f32 %v729, %v729
  %v839 = vmul.f32 %v731, %v731
  %v840 = vmul.f32 %v802, %v802
  %v841 = vmul.f32 %v804, %v804
  %v842 = vmul.f32 %v733, %v733
  %v843 = vmul.f32 %v735, %v735
  %v844 = vmul.f32 %v806, %v806
  %v845 = vmul.f32 %v808, %v808
  %v846 = vmul.f32 %v739, %v739
  %v847 = vmul.f32 %v741, %v741
  %v848 = vmul.f32 %v812, %v812
  %v849 = vmul.f32 %v814, %v814
  %v850 = vmul.f32 %v743, %v743
  %v851 = vmul.f32 %v745, %v745
  %v852 = vmul.f32 %v816, %v816
  %v853 = vmul.f32 %v818, %v818
  %v854 = vmul.f32 %v749, %v749
  %v855 = vmul.f32 %v751, %v751
  %v856 = vmul.f32 %v822, %v822
  %v857 = vmul.f32 %v824, %v824
  %v858 = vmul.f32 %v753, %v753
  %v859 = vmul.f32 %v755, %v755
  %v860 = vmul.f32 %v826, %v826
  %v861 = vmul.f32 %v828, %v828
  %v862 = vmul.f32 %v719, %v830
  %v863 = vmul.f32 %v721, %v831
  %v864 = vmul.f32 %v792, %v832
  %v865 = vmul.f32 %v794, %v833
  %v866 = vmul.f32 %v723, %v834
  %v867 = vmul.f32 %v725, %v835
  %v868 = vmul.f32 %v796, %v836
  %v869 = vmul.f32 %v798, %v837
  %v870 = vmul.f32 %v729, %v838
  %v871 = vmul.f32 %v731, %v839
  %v872 = vmul.f32 %v802, %v840
  %v873 = vmul.f32 %v804, %v841
  %v874 = vmul.f32 %v733, %v842
  %v875 = vmul.f32 %v735, %v843
  %v876 = vmul.f32 %v806, %v844
  %v877 = vmul.f32 %v808, %v845
  %v878 = vmul.f32 %v739, %v846
  %v879 = vmul.f32 %v741, %v847
  %v880 = vmul.f32 %v812, %v848
  %v881 = vmul.f32 %v814, %v849
  %v882 = vmul.f32 %v743, %v850
  %v883 = vmul.f32 %v745, %v851
  %v884 = vmul.f32 %v816, %v852
  %v885 = vmul.f32 %v818, %v853
  %v886 = vmul.f32 %v749, %v854
  %v887 = vmul.f32 %v751, %v855
  %v888 = vmul.f32 %v822, %v856
  %v889 = vmul.f32 %v824, %v857
  %v890 = vmul.f32 %v753, %v858
  %v891 = vmul.f32 %v755, %v859
  %v892 = vmul.f32 %v826, %v860
  %v893 = vmul.f32 %v828, %v861
  %v894 = vmul.f32 %v862, 0.044715
  %v895 = vmul.f32 %v863, 0.044715
  %v896 = vmul.f32 %v864, 0.044715
  %v897 = vmul.f32 %v865, 0.044715
  %v898 = vmul.f32 %v866, 0.044715
  %v899 = vmul.f32 %v867, 0.044715
  %v900 = vmul.f32 %v868, 0.044715
  %v901 = vmul.f32 %v869, 0.044715
  %v902 = vmul.f32 %v870, 0.044715
  %v903 = vmul.f32 %v871, 0.044715
  %v904 = vmul.f32 %v872, 0.044715
  %v905 = vmul.f32 %v873, 0.044715
  %v906 = vmul.f32 %v874, 0.044715
  %v907 = vmul.f32 %v875, 0.044715
  %v908 = vmul.f32 %v876, 0.044715
  %v909 = vmul.f32 %v877, 0.044715
  %v910 = vmul.f32 %v878, 0.044715
  %v911 = vmul.f32 %v879, 0.044715
  %v912 = vmul.f32 %v880, 0.044715
  %v913 = vmul.f32 %v881, 0.044715
  %v914 = vmul.f32 %v882, 0.044715
  %v915 = vmul.f32 %v883, 0.044715
  %v916 = vmul.f32 %v884, 0.044715
  %v917 = vmul.f32 %v885, 0.044715
  %v918 = vmul.f32 %v886, 0.044715
  %v919 = vmul.f32 %v887, 0.044715
  %v920 = vmul.f32 %v888, 0.044715
  %v921 = vmul.f32 %v889, 0.044715
  %v922 = vmul.f32 %v890, 0.044715
  %v923 = vmul.f32 %v891, 0.044715
  %v924 = vmul.f32 %v892, 0.044715
  %v925 = vmul.f32 %v893, 0.044715
  %v926 = vadd.f32 %v719, %v894
  %v927 = vadd.f32 %v721, %v895
  %v928 = vadd.f32 %v792, %v896
  %v929 = vadd.f32 %v794, %v897
  %v930 = vadd.f32 %v723, %v898
  %v931 = vadd.f32 %v725, %v899
  %v932 = vadd.f32 %v796, %v900
  %v933 = vadd.f32 %v798, %v901
  %v934 = vadd.f32 %v729, %v902
  %v935 = vadd.f32 %v731, %v903
  %v936 = vadd.f32 %v802, %v904
  %v937 = vadd.f32 %v804, %v905
  %v938 = vadd.f32 %v733, %v906
  %v939 = vadd.f32 %v735, %v907
  %v940 = vadd.f32 %v806, %v908
  %v941 = vadd.f32 %v808, %v909
  %v942 = vadd.f32 %v739, %v910
  %v943 = vadd.f32 %v741, %v911
  %v944 = vadd.f32 %v812, %v912
  %v945 = vadd.f32 %v814, %v913
  %v946 = vadd.f32 %v743, %v914
  %v947 = vadd.f32 %v745, %v915
  %v948 = vadd.f32 %v816, %v916
  %v949 = vadd.f32 %v818, %v917
  %v950 = vadd.f32 %v749, %v918
  %v951 = vadd.f32 %v751, %v919
  %v952 = vadd.f32 %v822, %v920
  %v953 = vadd.f32 %v824, %v921
  %v954 = vadd.f32 %v753, %v922
  %v955 = vadd.f32 %v755, %v923
  %v956 = vadd.f32 %v826, %v924
  %v957 = vadd.f32 %v828, %v925
  %v958 = vmul.f32 %v926, 0.7978846
  %v959 = vmul.f32 %v927, 0.7978846
  %v960 = vmul.f32 %v928, 0.7978846
  %v961 = vmul.f32 %v929, 0.7978846
  %v962 = vmul.f32 %v930, 0.7978846
  %v963 = vmul.f32 %v931, 0.7978846
  %v964 = vmul.f32 %v932, 0.7978846
  %v965 = vmul.f32 %v933, 0.7978846
  %v966 = vmul.f32 %v934, 0.7978846
  %v967 = vmul.f32 %v935, 0.7978846
  %v968 = vmul.f32 %v936, 0.7978846
  %v969 = vmul.f32 %v937, 0.7978846
  %v970 = vmul.f32 %v938, 0.7978846
  %v971 = vmul.f32 %v939, 0.7978846
  %v972 = vmul.f32 %v940, 0.7978846
  %v973 = vmul.f32 %v941, 0.7978846
  %v974 = vmul.f32 %v942, 0.7978846
  %v975 = vmul.f32 %v943, 0.7978846
  %v976 = vmul.f32 %v944, 0.7978846
  %v977 = vmul.f32 %v945, 0.7978846
  %v978 = vmul.f32 %v946, 0.7978846
  %v979 = vmul.f32 %v947, 0.7978846
  %v980 = vmul.f32 %v948, 0.7978846
  %v981 = vmul.f32 %v949, 0.7978846
  %v982 = vmul.f32 %v950, 0.7978846
  %v983 = vmul.f32 %v951, 0.7978846
  %v984 = vmul.f32 %v952, 0.7978846
  %v985 = vmul.f32 %v953, 0.7978846
  %v986 = vmul.f32 %v954, 0.7978846
  %v987 = vmul.f32 %v955, 0.7978846
  %v988 = vmul.f32 %v956, 0.7978846
  %v989 = vmul.f32 %v957, 0.7978846
  %v990 = vtanh.pop %v958
  %v991 = vtanh.pop %v959
  %v992 = vtanh.pop %v960
  %v993 = vtanh.pop %v961
  %v994 = vtanh.pop %v962
  %v995 = vtanh.pop %v963
  %v996 = vtanh.pop %v964
  %v997 = vtanh.pop %v965
  %v998 = vtanh.pop %v966
  %v999 = vtanh.pop %v967
  %v1000 = vtanh.pop %v968
  %v1001 = vtanh.pop %v969
  %v1002 = vtanh.pop %v970
  %v1003 = vtanh.pop %v971
  %v1004 = vtanh.pop %v972
  %v1005 = vtanh.pop %v973
  %v1006 = vtanh.pop %v974
  %v1007 = vtanh.pop %v975
  %v1008 = vtanh.pop %v976
  %v1009 = vtanh.pop %v977
  %v1010 = vtanh.pop %v978
  %v1011 = vtanh.pop %v979
  %v1012 = vtanh.pop %v980
  %v1013 = vtanh.pop %v981
  %v1014 = vtanh.pop %v982
  %v1015 = vtanh.pop %v983
  %v1016 = vtanh.pop %v984
  %v1017 = vtanh.pop %v985
  %v1018 = vtanh.pop %v986
  %v1019 = vtanh.pop %v987
  %v1020 = vtanh.pop %v988
  %v1021 = vtanh.pop %v989
  %v1022 = vadd.f32 %v990, 1.0
  %v1023 = vadd.f32 %v991, 1.0
  %v1024 = vadd.f32 %v992, 1.0
  %v1025 = vadd.f32 %v993, 1.0
  %v1026 = vadd.f32 %v994, 1.0
  %v1027 = vadd.f32 %v995, 1.0
  %v1028 = vadd.f32 %v996, 1.0
  %v1029 = vadd.f32 %v997, 1.0
  %v1030 = vadd.f32 %v998, 1.0
  %v1031 = vadd.f32 %v999, 1.0
  %v1032 = vadd.f32 %v1000, 1.0
  %v1033 = vadd.f32 %v1001, 1.0
  %v1034 = vadd.f32 %v1002, 1.0
  %v1035 = vadd.f32 %v1003, 1.0
  %v1036 = vadd.f32 %v1004, 1.0
  %v1037 = vadd.f32 %v1005, 1.0
  %v1038 = vadd.f32 %v1006, 1.0
  %v1039 = vadd.f32 %v1007, 1.0
  %v1040 = vadd.f32 %v1008, 1.0
  %v1041 = vadd.f32 %v1009, 1.0
  %v1042 = vadd.f32 %v1010, 1.0
  %v1043 = vadd.f32 %v1011, 1.0
  %v1044 = vadd.f32 %v1012, 1.0
  %v1045 = vadd.f32 %v1013, 1.0
  %v1046 = vadd.f32 %v1014, 1.0
  %v1047 = vadd.f32 %v1015, 1.0
  %v1048 = vadd.f32 %v1016, 1.0
  %v1049 = vadd.f32 %v1017, 1.0
  %v1050 = vadd.f32 %v1018, 1.0
  %v1051 = vadd.f32 %v1019, 1.0
  %v1052 = vadd.f32 %v1020, 1.0
  %v1053 = vadd.f32 %v1021, 1.0
  %v1054 = vmul.f32 %v1022, 0.5
  %v1055 = vmul.f32 %v1023, 0.5
  %v1056 = vmul.f32 %v1024, 0.5
  %v1057 = vmul.f32 %v1025, 0.5
  %v1058 = vmul.f32 %v1026, 0.5
  %v1059 = vmul.f32 %v1027, 0.5
  %v1060 = vmul.f32 %v1028, 0.5
  %v1061 = vmul.f32 %v1029, 0.5
  %v1062 = vmul.f32 %v1030, 0.5
  %v1063 = vmul.f32 %v1031, 0.5
  %v1064 = vmul.f32 %v1032, 0.5
  %v1065 = vmul.f32 %v1033, 0.5
  %v1066 = vmul.f32 %v1034, 0.5
  %v1067 = vmul.f32 %v1035, 0.5
  %v1068 = vmul.f32 %v1036, 0.5
  %v1069 = vmul.f32 %v1037, 0.5
  %v1070 = vmul.f32 %v1038, 0.5
  %v1071 = vmul.f32 %v1039, 0.5
  %v1072 = vmul.f32 %v1040, 0.5
  %v1073 = vmul.f32 %v1041, 0.5
  %v1074 = vmul.f32 %v1042, 0.5
  %v1075 = vmul.f32 %v1043, 0.5
  %v1076 = vmul.f32 %v1044, 0.5
  %v1077 = vmul.f32 %v1045, 0.5
  %v1078 = vmul.f32 %v1046, 0.5
  %v1079 = vmul.f32 %v1047, 0.5
  %v1080 = vmul.f32 %v1048, 0.5
  %v1081 = vmul.f32 %v1049, 0.5
  %v1082 = vmul.f32 %v1050, 0.5
  %v1083 = vmul.f32 %v1051, 0.5
  %v1084 = vmul.f32 %v1052, 0.5
  %v1085 = vmul.f32 %v1053, 0.5
  %v1086 = vmul.f32 %v719, %v1054
  %v1087 = vmul.f32 %v721, %v1055
  %v1088 = vmul.f32 %v792, %v1056
  %v1089 = vmul.f32 %v794, %v1057
  %v1090 = vmul.f32 %v723, %v1058
  %v1091 = vmul.f32 %v725, %v1059
  %v1092 = vmul.f32 %v796, %v1060
  %v1093 = vmul.f32 %v798, %v1061
  %v1094 = vmul.f32 %v729, %v1062
  %v1095 = vmul.f32 %v731, %v1063
  %v1096 = vmul.f32 %v802, %v1064
  %v1097 = vmul.f32 %v804, %v1065
  %v1098 = vmul.f32 %v733, %v1066
  %v1099 = vmul.f32 %v735, %v1067
  %v1100 = vmul.f32 %v806, %v1068
  %v1101 = vmul.f32 %v808, %v1069
  %v1102 = vmul.f32 %v739, %v1070
  %v1103 = vmul.f32 %v741, %v1071
  %v1104 = vmul.f32 %v812, %v1072
  %v1105 = vmul.f32 %v814, %v1073
  %v1106 = vmul.f32 %v743, %v1074
  %v1107 = vmul.f32 %v745, %v1075
  %v1108 = vmul.f32 %v816, %v1076
  %v1109 = vmul.f32 %v818, %v1077
  %v1110 = vmul.f32 %v749, %v1078
  %v1111 = vmul.f32 %v751, %v1079
  %v1112 = vmul.f32 %v822, %v1080
  %v1113 = vmul.f32 %v824, %v1081
  %v1114 = vmul.f32 %v753, %v1082
  %v1115 = vmul.f32 %v755, %v1083
  %v1116 = vmul.f32 %v826, %v1084
  %v1117 = vmul.f32 %v828, %v1085
  %v1118 = vpack.c.bf16 %v1090, %v1086
  %v1119 = vpack.c.bf16 %v1091, %v1087
  %v1120 = vpack.c.bf16 %v1092, %v1088
  %v1121 = vpack.c.bf16 %v1093, %v1089
  %v1122 = vpack.c.bf16 %v1098, %v1094
  %v1123 = vpack.c.bf16 %v1099, %v1095
  %v1124 = vpack.c.bf16 %v1100, %v1096
  %v1125 = vpack.c.bf16 %v1101, %v1097
  %v1126 = vpack.c.bf16 %v1106, %v1102
  %v1127 = vpack.c.bf16 %v1107, %v1103
  %v1128 = vpack.c.bf16 %v1108, %v1104
  %v1129 = vpack.c.bf16 %v1109, %v1105
  %v1130 = vpack.c.bf16 %v1114, %v1110
  %v1131 = vpack.c.bf16 %v1115, %v1111
  %v1132 = vpack.c.bf16 %v1116, %v1112
  %v1133 = vpack.c.bf16 %v1117, %v1113
  %v1134 = vld [vmem:[%s5] sm:$0xff]
  %v1135 = vld [vmem:[%s5 + $0x8] sm:$0xff]
  %v1136 = vld [vmem:[%s5 + $0x10] sm:$0xff]
  %v1137 = vld [vmem:[%s5 + $0x18] sm:$0xff]
  %v1138 = vld [vmem:[%s5 + $0x20] sm:$0xff]
  %v1139 = vld [vmem:[%s5 + $0x28] sm:$0xff]
  %v1140 = vld [vmem:[%s5 + $0x30] sm:$0xff]
  %v1141 = vld [vmem:[%s5 + $0x38] sm:$0xff]
  %v1142 = vld [vmem:[%s5 + $0x40] sm:$0xff]
  %v1143 = vld [vmem:[%s5 + $0x48] sm:$0xff]
  %v1144 = vld [vmem:[%s5 + $0x50] sm:$0xff]
  %v1145 = vld [vmem:[%s5 + $0x58] sm:$0xff]
  %v1146 = vld [vmem:[%s5 + $0x60] sm:$0xff]
  %v1147 = vld [vmem:[%s5 + $0x68] sm:$0xff]
  %v1148 = vld [vmem:[%s5 + $0x70] sm:$0xff]
  %v1149 = vld [vmem:[%s5 + $0x78] sm:$0xff]
  %v1150 = vld [vmem:[%s5 + $0x80] sm:$0xff]
  %v1151 = vld [vmem:[%s5 + $0x88] sm:$0xff]
  %v1152 = vld [vmem:[%s5 + $0x90] sm:$0xff]
  %v1153 = vld [vmem:[%s5 + $0x98] sm:$0xff]
  %v1154 = vld [vmem:[%s5 + $0xa0] sm:$0xff]
  %v1155 = vld [vmem:[%s5 + $0xa8] sm:$0xff]
  %v1156 = vld [vmem:[%s5 + $0xb0] sm:$0xff]
  %v1157 = vld [vmem:[%s5 + $0xb8] sm:$0xff]
  %v1158 = vld [vmem:[%s5 + $0xc0] sm:$0xff]
  %v1159 = vld [vmem:[%s5 + $0xc8] sm:$0xff]
  %v1160 = vld [vmem:[%s5 + $0xd0] sm:$0xff]
  %v1161 = vld [vmem:[%s5 + $0xd8] sm:$0xff]
  %v1162 = vld [vmem:[%s5 + $0xe0] sm:$0xff]
  %v1163 = vld [vmem:[%s5 + $0xe8] sm:$0xff]
  %v1164 = vld [vmem:[%s5 + $0xf0] sm:$0xff]
  %v1165 = vld [vmem:[%s5 + $0xf8] sm:$0xff]
  %v1166 = vld [vmem:[%s5 + $0x100] sm:$0xff]
  %v1167 = vld [vmem:[%s5 + $0x108] sm:$0xff]
  %v1168 = vld [vmem:[%s5 + $0x110] sm:$0xff]
  %v1169 = vld [vmem:[%s5 + $0x118] sm:$0xff]
  %v1170 = vld [vmem:[%s5 + $0x120] sm:$0xff]
  %v1171 = vld [vmem:[%s5 + $0x128] sm:$0xff]
  %v1172 = vld [vmem:[%s5 + $0x130] sm:$0xff]
  %v1173 = vld [vmem:[%s5 + $0x138] sm:$0xff]
  %v1174 = vld [vmem:[%s5 + $0x140] sm:$0xff]
  %v1175 = vld [vmem:[%s5 + $0x148] sm:$0xff]
  %v1176 = vld [vmem:[%s5 + $0x150] sm:$0xff]
  %v1177 = vld [vmem:[%s5 + $0x158] sm:$0xff]
  %v1178 = vld [vmem:[%s5 + $0x160] sm:$0xff]
  %v1179 = vld [vmem:[%s5 + $0x168] sm:$0xff]
  %v1180 = vld [vmem:[%s5 + $0x170] sm:$0xff]
  %v1181 = vld [vmem:[%s5 + $0x178] sm:$0xff]
  %v1182 = vld [vmem:[%s5 + $0x180] sm:$0xff]
  %v1183 = vld [vmem:[%s5 + $0x188] sm:$0xff]
  %v1184 = vld [vmem:[%s5 + $0x190] sm:$0xff]
  %v1185 = vld [vmem:[%s5 + $0x198] sm:$0xff]
  %v1186 = vld [vmem:[%s5 + $0x1a0] sm:$0xff]
  %v1187 = vld [vmem:[%s5 + $0x1a8] sm:$0xff]
  %v1188 = vld [vmem:[%s5 + $0x1b0] sm:$0xff]
  %v1189 = vld [vmem:[%s5 + $0x1b8] sm:$0xff]
  %v1190 = vld [vmem:[%s5 + $0x1c0] sm:$0xff]
  %v1191 = vld [vmem:[%s5 + $0x1c8] sm:$0xff]
  %v1192 = vld [vmem:[%s5 + $0x1d0] sm:$0xff]
  %v1193 = vld [vmem:[%s5 + $0x1d8] sm:$0xff]
  %v1194 = vld [vmem:[%s5 + $0x1e0] sm:$0xff]
  %v1195 = vld [vmem:[%s5 + $0x1e8] sm:$0xff]
  %v1196 = vld [vmem:[%s5 + $0x1f0] sm:$0xff]
  %v1197 = vld [vmem:[%s5 + $0x1f8] sm:$0xff]
  %v1198 = vld [vmem:[%s6] sm:$0x3]
  %v1199 = vunpack.c.l.bf16 %v1198
  %v1201 = vlaneseq
  %v1202 = vshrl.u32 %v1201, 7
  %v1203 = vsub.s32 0, %v1202
  %v1204 = vrot.slane %v1199, %v1203
  %v1205 = vlaneseq
  %v1206 = vshrl.u32 %v1205, 7
  %v1207 = vsub.s32 2, %v1206
  %v1208 = vrot.slane %v1199, %v1207
  %v1211 = vlaneseq
  %v1212 = vshrl.u32 %v1211, 7
  %v1213 = vsub.s32 0, %v1212
  %v1214 = vrot.slane %v1204, %v1213
  %v1215 = vlaneseq
  %v1216 = vshrl.u32 %v1215, 7
  %v1217 = vsub.s32 0, %v1216
  %v1218 = vrot.slane %v1208, %v1217
  %v1283 = vunpack.c.l.b16 %v1134
  %v1284 = vunpack.c.h.b16 %v1134
  %v1285 = vunpack.c.l.b16 %v1135
  %v1286 = vunpack.c.h.b16 %v1135
  %v1287 = vunpack.c.l.b16 %v1136
  %v1288 = vunpack.c.h.b16 %v1136
  %v1289 = vunpack.c.l.b16 %v1137
  %v1290 = vunpack.c.h.b16 %v1137
  %v1291 = vunpack.c.l.b16 %v1138
  %v1292 = vunpack.c.h.b16 %v1138
  %v1293 = vunpack.c.l.b16 %v1139
  %v1294 = vunpack.c.h.b16 %v1139
  %v1295 = vunpack.c.l.b16 %v1140
  %v1296 = vunpack.c.h.b16 %v1140
  %v1297 = vunpack.c.l.b16 %v1141
  %v1298 = vunpack.c.h.b16 %v1141
  %v1299 = vunpack.c.l.b16 %v1142
  %v1300 = vunpack.c.h.b16 %v1142
  %v1301 = vunpack.c.l.b16 %v1143
  %v1302 = vunpack.c.h.b16 %v1143
  %v1303 = vunpack.c.l.b16 %v1144
  %v1304 = vunpack.c.h.b16 %v1144
  %v1305 = vunpack.c.l.b16 %v1145
  %v1306 = vunpack.c.h.b16 %v1145
  %v1307 = vunpack.c.l.b16 %v1146
  %v1308 = vunpack.c.h.b16 %v1146
  %v1309 = vunpack.c.l.b16 %v1147
  %v1310 = vunpack.c.h.b16 %v1147
  %v1311 = vunpack.c.l.b16 %v1148
  %v1312 = vunpack.c.h.b16 %v1148
  %v1313 = vunpack.c.l.b16 %v1149
  %v1314 = vunpack.c.h.b16 %v1149
  %v1315 = vunpack.c.l.b16 %v1150
  %v1316 = vunpack.c.h.b16 %v1150
  %v1317 = vunpack.c.l.b16 %v1151
  %v1318 = vunpack.c.h.b16 %v1151
  %v1319 = vunpack.c.l.b16 %v1152
  %v1320 = vunpack.c.h.b16 %v1152
  %v1321 = vunpack.c.l.b16 %v1153
  %v1322 = vunpack.c.h.b16 %v1153
  %v1323 = vunpack.c.l.b16 %v1154
  %v1324 = vunpack.c.h.b16 %v1154
  %v1325 = vunpack.c.l.b16 %v1155
  %v1326 = vunpack.c.h.b16 %v1155
  %v1327 = vunpack.c.l.b16 %v1156
  %v1328 = vunpack.c.h.b16 %v1156
  %v1329 = vunpack.c.l.b16 %v1157
  %v1330 = vunpack.c.h.b16 %v1157
  %v1331 = vunpack.c.l.b16 %v1158
  %v1332 = vunpack.c.h.b16 %v1158
  %v1333 = vunpack.c.l.b16 %v1159
  %v1334 = vunpack.c.h.b16 %v1159
  %v1335 = vunpack.c.l.b16 %v1160
  %v1336 = vunpack.c.h.b16 %v1160
  %v1337 = vunpack.c.l.b16 %v1161
  %v1338 = vunpack.c.h.b16 %v1161
  %v1339 = vunpack.c.l.b16 %v1162
  %v1340 = vunpack.c.h.b16 %v1162
  %v1341 = vunpack.c.l.b16 %v1163
  %v1342 = vunpack.c.h.b16 %v1163
  %v1343 = vunpack.c.l.b16 %v1164
  %v1344 = vunpack.c.h.b16 %v1164
  %v1345 = vunpack.c.l.b16 %v1165
  %v1346 = vunpack.c.h.b16 %v1165
  %v1347 = vunpack.c.l.b16 %v1166
  %v1348 = vunpack.c.h.b16 %v1166
  %v1349 = vunpack.c.l.b16 %v1167
  %v1350 = vunpack.c.h.b16 %v1167
  %v1351 = vunpack.c.l.b16 %v1168
  %v1352 = vunpack.c.h.b16 %v1168
  %v1353 = vunpack.c.l.b16 %v1169
  %v1354 = vunpack.c.h.b16 %v1169
  %v1355 = vunpack.c.l.b16 %v1170
  %v1356 = vunpack.c.h.b16 %v1170
  %v1357 = vunpack.c.l.b16 %v1171
  %v1358 = vunpack.c.h.b16 %v1171
  %v1359 = vunpack.c.l.b16 %v1172
  %v1360 = vunpack.c.h.b16 %v1172
  %v1361 = vunpack.c.l.b16 %v1173
  %v1362 = vunpack.c.h.b16 %v1173
  %v1363 = vunpack.c.l.b16 %v1174
  %v1364 = vunpack.c.h.b16 %v1174
  %v1365 = vunpack.c.l.b16 %v1175
  %v1366 = vunpack.c.h.b16 %v1175
  %v1367 = vunpack.c.l.b16 %v1176
  %v1368 = vunpack.c.h.b16 %v1176
  %v1369 = vunpack.c.l.b16 %v1177
  %v1370 = vunpack.c.h.b16 %v1177
  %v1371 = vunpack.c.l.b16 %v1178
  %v1372 = vunpack.c.h.b16 %v1178
  %v1373 = vunpack.c.l.b16 %v1179
  %v1374 = vunpack.c.h.b16 %v1179
  %v1375 = vunpack.c.l.b16 %v1180
  %v1376 = vunpack.c.h.b16 %v1180
  %v1377 = vunpack.c.l.b16 %v1181
  %v1378 = vunpack.c.h.b16 %v1181
  %v1379 = vunpack.c.l.b16 %v1182
  %v1380 = vunpack.c.h.b16 %v1182
  %v1381 = vunpack.c.l.b16 %v1183
  %v1382 = vunpack.c.h.b16 %v1183
  %v1383 = vunpack.c.l.b16 %v1184
  %v1384 = vunpack.c.h.b16 %v1184
  %v1385 = vunpack.c.l.b16 %v1185
  %v1386 = vunpack.c.h.b16 %v1185
  %v1387 = vunpack.c.l.b16 %v1186
  %v1388 = vunpack.c.h.b16 %v1186
  %v1389 = vunpack.c.l.b16 %v1187
  %v1390 = vunpack.c.h.b16 %v1187
  %v1391 = vunpack.c.l.b16 %v1188
  %v1392 = vunpack.c.h.b16 %v1188
  %v1393 = vunpack.c.l.b16 %v1189
  %v1394 = vunpack.c.h.b16 %v1189
  %v1395 = vunpack.c.l.b16 %v1190
  %v1396 = vunpack.c.h.b16 %v1190
  %v1397 = vunpack.c.l.b16 %v1191
  %v1398 = vunpack.c.h.b16 %v1191
  %v1399 = vunpack.c.l.b16 %v1192
  %v1400 = vunpack.c.h.b16 %v1192
  %v1401 = vunpack.c.l.b16 %v1193
  %v1402 = vunpack.c.h.b16 %v1193
  %v1403 = vunpack.c.l.b16 %v1194
  %v1404 = vunpack.c.h.b16 %v1194
  %v1405 = vunpack.c.l.b16 %v1195
  %v1406 = vunpack.c.h.b16 %v1195
  %v1407 = vunpack.c.l.b16 %v1196
  %v1408 = vunpack.c.h.b16 %v1196
  %v1409 = vunpack.c.l.b16 %v1197
  %v1410 = vunpack.c.h.b16 %v1197
  %v1411 = vpack.c.b16 %v1285, %v1283
  %v1412 = vpack.c.b16 %v1286, %v1284
  %v1413 = vpack.c.b16 %v1289, %v1287
  %v1414 = vpack.c.b16 %v1290, %v1288
  %v1415 = vpack.c.b16 %v1293, %v1291
  %v1416 = vpack.c.b16 %v1294, %v1292
  %v1417 = vpack.c.b16 %v1297, %v1295
  %v1418 = vpack.c.b16 %v1298, %v1296
  %v1419 = vpack.c.b16 %v1301, %v1299
  %v1420 = vpack.c.b16 %v1302, %v1300
  %v1421 = vpack.c.b16 %v1305, %v1303
  %v1422 = vpack.c.b16 %v1306, %v1304
  %v1423 = vpack.c.b16 %v1309, %v1307
  %v1424 = vpack.c.b16 %v1310, %v1308
  %v1425 = vpack.c.b16 %v1313, %v1311
  %v1426 = vpack.c.b16 %v1314, %v1312
  %v1427 = vpack.c.b16 %v1317, %v1315
  %v1428 = vpack.c.b16 %v1318, %v1316
  %v1429 = vpack.c.b16 %v1321, %v1319
  %v1430 = vpack.c.b16 %v1322, %v1320
  %v1431 = vpack.c.b16 %v1325, %v1323
  %v1432 = vpack.c.b16 %v1326, %v1324
  %v1433 = vpack.c.b16 %v1329, %v1327
  %v1434 = vpack.c.b16 %v1330, %v1328
  %v1435 = vpack.c.b16 %v1333, %v1331
  %v1436 = vpack.c.b16 %v1334, %v1332
  %v1437 = vpack.c.b16 %v1337, %v1335
  %v1438 = vpack.c.b16 %v1338, %v1336
  %v1439 = vpack.c.b16 %v1341, %v1339
  %v1440 = vpack.c.b16 %v1342, %v1340
  %v1441 = vpack.c.b16 %v1345, %v1343
  %v1442 = vpack.c.b16 %v1346, %v1344
  %v1443 = vpack.c.b16 %v1349, %v1347
  %v1444 = vpack.c.b16 %v1350, %v1348
  %v1445 = vpack.c.b16 %v1353, %v1351
  %v1446 = vpack.c.b16 %v1354, %v1352
  %v1447 = vpack.c.b16 %v1357, %v1355
  %v1448 = vpack.c.b16 %v1358, %v1356
  %v1449 = vpack.c.b16 %v1361, %v1359
  %v1450 = vpack.c.b16 %v1362, %v1360
  %v1451 = vpack.c.b16 %v1365, %v1363
  %v1452 = vpack.c.b16 %v1366, %v1364
  %v1453 = vpack.c.b16 %v1369, %v1367
  %v1454 = vpack.c.b16 %v1370, %v1368
  %v1455 = vpack.c.b16 %v1373, %v1371
  %v1456 = vpack.c.b16 %v1374, %v1372
  %v1457 = vpack.c.b16 %v1377, %v1375
  %v1458 = vpack.c.b16 %v1378, %v1376
  %v1459 = vpack.c.b16 %v1381, %v1379
  %v1460 = vpack.c.b16 %v1382, %v1380
  %v1461 = vpack.c.b16 %v1385, %v1383
  %v1462 = vpack.c.b16 %v1386, %v1384
  %v1463 = vpack.c.b16 %v1389, %v1387
  %v1464 = vpack.c.b16 %v1390, %v1388
  %v1465 = vpack.c.b16 %v1393, %v1391
  %v1466 = vpack.c.b16 %v1394, %v1392
  %v1467 = vpack.c.b16 %v1397, %v1395
  %v1468 = vpack.c.b16 %v1398, %v1396
  %v1469 = vpack.c.b16 %v1401, %v1399
  %v1470 = vpack.c.b16 %v1402, %v1400
  %v1471 = vpack.c.b16 %v1405, %v1403
  %v1472 = vpack.c.b16 %v1406, %v1404
  %v1473 = vpack.c.b16 %v1409, %v1407
  %v1474 = vpack.c.b16 %v1410, %v1408
  %1539 = vmatprep.subr.bf16.mxu0 %v1412
  %1540 = vmatpush1.bf16.msra.mxu0 %v1411
  %1541 = vmatprep.subr.bf16.mxu0 %v1414
  %1542 = vmatpush1.bf16.msra.mxu0 %v1413
  %1543 = vmatprep.subr.bf16.mxu0 %v1416
  %1544 = vmatpush1.bf16.msra.mxu0 %v1415
  %1545 = vmatprep.subr.bf16.mxu0 %v1418
  %1546 = vmatpush1.bf16.msra.mxu0 %v1417
  %1547 = vmatprep.subr.bf16.mxu0 %v1420
  %1548 = vmatpush1.bf16.msra.mxu0 %v1419
  %1549 = vmatprep.subr.bf16.mxu0 %v1422
  %1550 = vmatpush1.bf16.msra.mxu0 %v1421
  %1551 = vmatprep.subr.bf16.mxu0 %v1424
  %1552 = vmatpush1.bf16.msra.mxu0 %v1423
  %1553 = vmatprep.subr.bf16.mxu0 %v1426
  %1554 = vmatpush1.bf16.msra.mxu0 %v1425
  %1555 = vmatprep.subr.bf16.mxu0 %v1428
  %1556 = vmatpush1.bf16.msra.mxu0 %v1427
  %1557 = vmatprep.subr.bf16.mxu0 %v1430
  %1558 = vmatpush1.bf16.msra.mxu0 %v1429
  %1559 = vmatprep.subr.bf16.mxu0 %v1432
  %1560 = vmatpush1.bf16.msra.mxu0 %v1431
  %1561 = vmatprep.subr.bf16.mxu0 %v1434
  %1562 = vmatpush1.bf16.msra.mxu0 %v1433
  %1563 = vmatprep.subr.bf16.mxu0 %v1436
  %1564 = vmatpush1.bf16.msra.mxu0 %v1435
  %1565 = vmatprep.subr.bf16.mxu0 %v1438
  %1566 = vmatpush1.bf16.msra.mxu0 %v1437
  %1567 = vmatprep.subr.bf16.mxu0 %v1440
  %1568 = vmatpush1.bf16.msra.mxu0 %v1439
  %1569 = vmatprep.subr.bf16.mxu0 %v1442
  %1570 = vmatpush1.bf16.msra.mxu0 %v1441
  %1571 = vmatprep.mubr.bf16.mxu0 %v1119
  %1572 = vmatmul.mubr.bf16.gmra.mrb[0].mxu0 %v1118
  %v1573 = vpop.f32.mrb[0].mxu0
  %v1574 = vadd.f32 %v1214, %v1573
  %v1575 = vpop.f32.mrb[0].mxu0
  %v1576 = vadd.f32 %v1218, %v1575
  %v1577 = vpop.f32.mrb[0].mxu0
  %v1578 = vadd.f32 %v1214, %v1577
  %v1579 = vpop.f32.mrb[0].mxu0
  %v1580 = vadd.f32 %v1218, %v1579
  %1581 = vmatprep.mubr.bf16.mxu0 %v1123
  %1582 = vmatmul.mubr.bf16.gmra.mrb[0].mxu0 %v1122
  %v1583 = vpop.f32.mrb[0].mxu0
  %v1584 = vadd.f32 %v1214, %v1583
  %v1585 = vpop.f32.mrb[0].mxu0
  %v1586 = vadd.f32 %v1218, %v1585
  %v1587 = vpop.f32.mrb[0].mxu0
  %v1588 = vadd.f32 %v1214, %v1587
  %v1589 = vpop.f32.mrb[0].mxu0
  %v1590 = vadd.f32 %v1218, %v1589
  %1591 = vmatprep.mubr.bf16.mxu0 %v1127
  %1592 = vmatmul.mubr.bf16.gmra.mrb[0].mxu0 %v1126
  %v1593 = vpop.f32.mrb[0].mxu0
  %v1594 = vadd.f32 %v1214, %v1593
  %v1595 = vpop.f32.mrb[0].mxu0
  %v1596 = vadd.f32 %v1218, %v1595
  %v1597 = vpop.f32.mrb[0].mxu0
  %v1598 = vadd.f32 %v1214, %v1597
  %v1599 = vpop.f32.mrb[0].mxu0
  %v1600 = vadd.f32 %v1218, %v1599
  %1601 = vmatprep.mubr.bf16.mxu0 %v1131
  %1602 = vmatmul.mubr.bf16.gmra.mrb[0].mxu0 %v1130
  %v1603 = vpop.f32.mrb[0].mxu0
  %v1604 = vadd.f32 %v1214, %v1603
  %v1605 = vpop.f32.mrb[0].mxu0
  %v1606 = vadd.f32 %v1218, %v1605
  %v1607 = vpop.f32.mrb[0].mxu0
  %v1608 = vadd.f32 %v1214, %v1607
  %v1609 = vpop.f32.mrb[0].mxu0
  %v1610 = vadd.f32 %v1218, %v1609
  %1611 = vdwg.mxu0
  %1612 = vmatprep.subr.bf16.mxu0 %v1444
  %1613 = vmatpush1.bf16.msra.mxu0 %v1443
  %1614 = vmatprep.subr.bf16.mxu0 %v1446
  %1615 = vmatpush1.bf16.msra.mxu0 %v1445
  %1616 = vmatprep.subr.bf16.mxu0 %v1448
  %1617 = vmatpush1.bf16.msra.mxu0 %v1447
  %1618 = vmatprep.subr.bf16.mxu0 %v1450
  %1619 = vmatpush1.bf16.msra.mxu0 %v1449
  %1620 = vmatprep.subr.bf16.mxu0 %v1452
  %1621 = vmatpush1.bf16.msra.mxu0 %v1451
  %1622 = vmatprep.subr.bf16.mxu0 %v1454
  %1623 = vmatpush1.bf16.msra.mxu0 %v1453
  %1624 = vmatprep.subr.bf16.mxu0 %v1456
  %1625 = vmatpush1.bf16.msra.mxu0 %v1455
  %1626 = vmatprep.subr.bf16.mxu0 %v1458
  %1627 = vmatpush1.bf16.msra.mxu0 %v1457
  %1628 = vmatprep.subr.bf16.mxu0 %v1460
  %1629 = vmatpush1.bf16.msra.mxu0 %v1459
  %1630 = vmatprep.subr.bf16.mxu0 %v1462
  %1631 = vmatpush1.bf16.msra.mxu0 %v1461
  %1632 = vmatprep.subr.bf16.mxu0 %v1464
  %1633 = vmatpush1.bf16.msra.mxu0 %v1463
  %1634 = vmatprep.subr.bf16.mxu0 %v1466
  %1635 = vmatpush1.bf16.msra.mxu0 %v1465
  %1636 = vmatprep.subr.bf16.mxu0 %v1468
  %1637 = vmatpush1.bf16.msra.mxu0 %v1467
  %1638 = vmatprep.subr.bf16.mxu0 %v1470
  %1639 = vmatpush1.bf16.msra.mxu0 %v1469
  %1640 = vmatprep.subr.bf16.mxu0 %v1472
  %1641 = vmatpush1.bf16.msra.mxu0 %v1471
  %1642 = vmatprep.subr.bf16.mxu0 %v1474
  %1643 = vmatpush1.bf16.msra.mxu0 %v1473
  %1644 = vmatprep.mubr.bf16.mxu0 %v1121
  %1645 = vmatmul.mubr.bf16.gmra.mrb[0].mxu0 %v1120
  %v1646 = vpop.f32.mrb[0].mxu0
  %v1647 = vadd.f32 %v1574, %v1646
  %v1648 = vpop.f32.mrb[0].mxu0
  %v1649 = vadd.f32 %v1576, %v1648
  %v1650 = vpop.f32.mrb[0].mxu0
  %v1651 = vadd.f32 %v1578, %v1650
  %v1652 = vpop.f32.mrb[0].mxu0
  %v1653 = vadd.f32 %v1580, %v1652
  %1654 = vmatprep.mubr.bf16.mxu0 %v1125
  %1655 = vmatmul.mubr.bf16.gmra.mrb[0].mxu0 %v1124
  %v1656 = vpop.f32.mrb[0].mxu0
  %v1657 = vadd.f32 %v1584, %v1656
  %v1658 = vpop.f32.mrb[0].mxu0
  %v1659 = vadd.f32 %v1586, %v1658
  %v1660 = vpop.f32.mrb[0].mxu0
  %v1661 = vadd.f32 %v1588, %v1660
  %v1662 = vpop.f32.mrb[0].mxu0
  %v1663 = vadd.f32 %v1590, %v1662
  %1664 = vmatprep.mubr.bf16.mxu0 %v1129
  %1665 = vmatmul.mubr.bf16.gmra.mrb[0].mxu0 %v1128
  %v1666 = vpop.f32.mrb[0].mxu0
  %v1667 = vadd.f32 %v1594, %v1666
  %v1668 = vpop.f32.mrb[0].mxu0
  %v1669 = vadd.f32 %v1596, %v1668
  %v1670 = vpop.f32.mrb[0].mxu0
  %v1671 = vadd.f32 %v1598, %v1670
  %v1672 = vpop.f32.mrb[0].mxu0
  %v1673 = vadd.f32 %v1600, %v1672
  %1674 = vmatprep.mubr.bf16.mxu0 %v1133
  %1675 = vmatmul.mubr.bf16.gmra.mrb[0].mxu0 %v1132
  %v1676 = vpop.f32.mrb[0].mxu0
  %v1677 = vadd.f32 %v1604, %v1676
  %v1678 = vpop.f32.mrb[0].mxu0
  %v1679 = vadd.f32 %v1606, %v1678
  %v1680 = vpop.f32.mrb[0].mxu0
  %v1681 = vadd.f32 %v1608, %v1680
  %v1682 = vpop.f32.mrb[0].mxu0
  %v1683 = vadd.f32 %v1610, %v1682
  %1684 = vdwg.mxu0
  %v1685 = vadd.f32 %v34, %v1647
  %v1686 = vadd.f32 %v35, %v1649
  %v1687 = vadd.f32 %v36, %v1651
  %v1688 = vadd.f32 %v37, %v1653
  %v1689 = vadd.f32 %v38, %v1657
  %v1690 = vadd.f32 %v39, %v1659
  %v1691 = vadd.f32 %v40, %v1661
  %v1692 = vadd.f32 %v41, %v1663
  %v1693 = vadd.f32 %v42, %v1667
  %v1694 = vadd.f32 %v43, %v1669
  %v1695 = vadd.f32 %v44, %v1671
  %v1696 = vadd.f32 %v45, %v1673
  %v1697 = vadd.f32 %v46, %v1677
  %v1698 = vadd.f32 %v47, %v1679
  %v1699 = vadd.f32 %v48, %v1681
  %v1700 = vadd.f32 %v49, %v1683
  %v1701 = vpack.c.bf16 %v1687, %v1685
  %v1702 = vpack.c.bf16 %v1688, %v1686
  %v1703 = vpack.c.bf16 %v1691, %v1689
  %v1704 = vpack.c.bf16 %v1692, %v1690
  %v1705 = vpack.c.bf16 %v1695, %v1693
  %v1706 = vpack.c.bf16 %v1696, %v1694
  %v1707 = vpack.c.bf16 %v1699, %v1697
  %v1708 = vpack.c.bf16 %v1700, %v1698
  %v1717 = vunpack.c.l.b16 %v1701
  %v1718 = vunpack.c.l.b16 %v1702
  %v1719 = vunpack.c.h.b16 %v1701
  %v1720 = vunpack.c.h.b16 %v1702
  %v1721 = vunpack.c.l.b16 %v1703
  %v1722 = vunpack.c.l.b16 %v1704
  %v1723 = vunpack.c.h.b16 %v1703
  %v1724 = vunpack.c.h.b16 %v1704
  %v1725 = vunpack.c.l.b16 %v1705
  %v1726 = vunpack.c.l.b16 %v1706
  %v1727 = vunpack.c.h.b16 %v1705
  %v1728 = vunpack.c.h.b16 %v1706
  %v1729 = vunpack.c.l.b16 %v1707
  %v1730 = vunpack.c.l.b16 %v1708
  %v1731 = vunpack.c.h.b16 %v1707
  %v1732 = vunpack.c.h.b16 %v1708
  %v1733 = vpack.c.b16 %v1718, %v1717
  %v1734 = vpack.c.b16 %v1720, %v1719
  %v1735 = vpack.c.b16 %v1722, %v1721
  %v1736 = vpack.c.b16 %v1724, %v1723
  %v1737 = vpack.c.b16 %v1726, %v1725
  %v1738 = vpack.c.b16 %v1728, %v1727
  %v1739 = vpack.c.b16 %v1730, %v1729
  %v1740 = vpack.c.b16 %v1732, %v1731
  %1749 = vst [vmem:[%s7] sm:$0xff] %v1733
  %1750 = vst [vmem:[%s7 + $0x8] sm:$0xff] %v1734
  %1751 = vst [vmem:[%s7 + $0x10] sm:$0xff] %v1735
  %1752 = vst [vmem:[%s7 + $0x18] sm:$0xff] %v1736
  %1753 = vst [vmem:[%s7 + $0x20] sm:$0xff] %v1737
  %1754 = vst [vmem:[%s7 + $0x28] sm:$0xff] %v1738
  %1755 = vst [vmem:[%s7 + $0x30] sm:$0xff] %v1739
  %1756 = vst [vmem:[%s7 + $0x38] sm:$0xff] %v1740
  // Predicated region
  $region30: #{kosmos2_forward.32} parent=0 // pred_check
    _
  $region31: #{kosmos2_forward.32} parent=0 // pred_check_branch
    %1758 = sbr.rel (0) target = $region33
  $region32: #{kosmos2_forward.32} parent=0 // pred_region
    _
  $region33: #{kosmos2_forward.32} parent=0 // pred_fallthru
    _
  // Predicated region
  $region34: #{kosmos2_forward.32} parent=0 // pred_check
    _
  $region35: #{kosmos2_forward.32} parent=0 // pred_check_branch
    %1760 = sbr.rel (0) target = $region37
  $region36: #{kosmos2_forward.32} parent=0 // pred_region
    _
  $region37: #{kosmos2_forward.32} parent=0 // pred_fallthru
    _

// kernel: kosmos2_forward.37
$region0: #{kosmos2_forward.37}
  #allocation0 [shape = 'u32[]', space=smem, size = 0x4, offset = 0x4, fixed_abs, tag = 'smem constant byte address 0x4 - core index']
  #allocation1 [shape = 'u32[144,128]{1,0:T(1,128)}', space=vmem, size = 0x12000, scoped, tag = 'internal scratch']
  #allocation2 [shape = 'bf16[64,256]{1,0:T(16,128)(2,1)}', space=vmem, size = 0x8000, scoped, tag = 'scratch operand']
  #allocation3 [shape = 'f32[64,1]{1,0:T(8,128)}', space=vmem, size = 0x8000, scoped, tag = 'scratch operand']
  #allocation4 [shape = 'f32[64,1]{1,0:T(8,128)}', space=vmem, size = 0x8000, scoped, tag = 'scratch operand']
  #allocation5 [shape = 'f32[64,1]{1,0:T(8,128)}', space=vmem, size = 0x8000, scoped, tag = 'scratch operand']
  %s0 = inlined_call_operand.vmem [shape: bf16[64,256], index: 0, kind: input, shape index: {}]
  %s1 = inlined_call_operand.vmem [shape: bf16[1,256], index: 1, kind: input, shape index: {}]
  %s2 = inlined_call_operand.vmem [shape: bf16[1,256], index: 2, kind: input, shape index: {}]
  %s3 = inlined_call_operand.vmem [shape: bf16[256,512], index: 3, kind: input, shape index: {}]
  %s4 = inlined_call_operand.vmem [shape: s32[64,1], index: 4, kind: input, shape index: {}]
  %s5 = inlined_call_operand.hbm [shape: bf16[64,512], index: 5, kind: output, shape index: {0}]
  %s6 = inlined_call_operand.vmem [shape: f32[64,1], index: 6, kind: output, shape index: {1}]
  %7 = xla_tuple %s5, %s6
  %s8 = sld [smem:[#allocation0]]
  $region107: #{kosmos2_forward.37} parent=0
    _
  %s10 = ssub.s32 1, %s8
  %s11 = scalar_select 0, %s10, %s8
  $region1: #{kosmos2_forward.37} parent=0
    #allocation6 [shape = 'u8[262144]{0}', space=vmem, size = 0x40000, scoped, tag = 'input window, operand 3']
    #allocation7 [shape = 'u8[65536]{0}', space=vmem, size = 0x10000, scoped, tag = 'output window, operand 0']
    #allocation8 [shape = 's32[2]{0}', space=sflag, size = 0x8, scoped, tag = 'scoped memory for kosmos2_forward.37']
    %12 = vsyncpa [#allocation8], 0
    %s13 = scalar_lea.sflag [#allocation8], 1
    %14 = vsyncpa %s13, 0
    loop: start=0, step=1, limit=4
    $region2: #{kosmos2_forward.37} parent=1 // loop_pre_header
      _
    $region3: #{kosmos2_forward.37} parent=1 // loop_header
      %s16 = sphi 0, %s20
      %p17 = scmp.ge.s32.totalorder %s16, 4
      %s23 = sphi 0, %s35
      %s24 = sphi 0, %s31
      %s25 = sphi 0, %s23
      %s26 = sphi 0, %s24
      %s27 = sphi 0, %s25
      %s28 = sphi 0, %s26
      %s38 = sphi 0, %s40
      %s41 = sphi 0, %s38
      %s42 = sphi 0, %s41
      %s58 = sphi 0, %s42
      %s62 = sphi 0, %s62
      %s64 = sphi 0, %s62
      %s65 = sphi 0, %s64
      %s79 = sphi 0, %s65
      %s83 = sphi 0, %s83
      %s85 = sphi 0, %s83
      %s86 = sphi 0, %s85
      %s100 = sphi 0, %s86
      %s106 = sphi 0, %s108
      %s109 = sphi 0, %s106
      %s110 = sphi 0, %s109
      %s126 = sphi 0, %s110
      %s132 = sphi 0, %s134
      %s135 = sphi 0, %s132
      %s136 = sphi 0, %s135
      %s152 = sphi 0, %s136
      %s160 = sphi 0, %s162
      %s163 = sphi 0, %s160
      %s164 = sphi 0, %s163
      %s180 = sphi 0, %s164
      %s186 = sphi 0, %s188
      %s189 = sphi 0, %s186
      %s190 = sphi 0, %s189
      %s206 = sphi 0, %s190
    $region4: #{kosmos2_forward.37} parent=1 // loop_header_branch
      %19 = sbr.rel (%p17) target = $region8
    $region5: #{kosmos2_forward.37} parent=1 // loop_body
      %s21 = ssub.s32 %s16, 1
      %s22 = ssub.s32 %s16, 2
      %s29 = sadd.s32 1, %s24
      %p30 = scmp.ge.s32.totalorder %s29, 2
      %s31 = scalar_select %p30, 0, %s29
      %s32 = sadd.s32 1, %s23
      %s33 = scalar_select %p30, %s32, %s23
      %p34 = scmp.ge.s32.totalorder %s33, 1
      %s35 = scalar_select %p34, 0, %s33
      %s36 = ssub.s32 %s23, %s35
      %p37 = scmp.eq.s32.totalorder %s36, 0
      %s39 = sadd.s32 %s38, 1
      %s40 = scalar_select %p37, %s38, %s39
      %p43 = pneg %p37
      %p44 = scmp.eq.s32.totalorder %s16, 1
      %p45 = por %p43, %p44
      %p46 = scmp.ne.s32.totalorder %s38, %s41
      %p47 = scmp.eq.s32.totalorder %s16, 0
      %p48 = por %p46, %p47
      %p49 = scmp.ne.s32.totalorder %s38, %s41
      %p50 = scmp.eq.s32.totalorder %s21, 1
      %p51 = por %p49, %p50
      %p52 = scmp.ne.s32.totalorder %s41, %s42
      %p53 = scmp.eq.s32.totalorder %s21, 0
      %p54 = por %p52, %p53
      %p55 = scmp.ne.s32.totalorder %s41, %s42
      %p56 = scmp.eq.s32.totalorder %s22, 1
      %p57 = por %p55, %p56
      %p59 = scmp.ne.s32.totalorder %s42, %s58
      %p60 = scmp.eq.s32.totalorder %s22, 0
      %p61 = por %p59, %p60
      %s63 = sadd.s32 %s62, 1
      %p66 = scmp.eq.s32.totalorder %s16, 1
      %p67 = scmp.ne.s32.totalorder %s62, %s64
      %p68 = scmp.eq.s32.totalorder %s16, 0
      %p69 = por %p67, %p68
      %p70 = scmp.ne.s32.totalorder %s62, %s64
      %p71 = scmp.eq.s32.totalorder %s21, 1
      %p72 = por %p70, %p71
      %p73 = scmp.ne.s32.totalorder %s64, %s65
      %p74 = scmp.eq.s32.totalorder %s21, 0
      %p75 = por %p73, %p74
      %p76 = scmp.ne.s32.totalorder %s64, %s65
      %p77 = scmp.eq.s32.totalorder %s22, 1
      %p78 = por %p76, %p77
      %p80 = scmp.ne.s32.totalorder %s65, %s79
      %p81 = scmp.eq.s32.totalorder %s22, 0
      %p82 = por %p80, %p81
      %s84 = sadd.s32 %s83, 1
      %p87 = scmp.eq.s32.totalorder %s16, 1
      %p88 = scmp.ne.s32.totalorder %s83, %s85
      %p89 = scmp.eq.s32.totalorder %s16, 0
      %p90 = por %p88, %p89
      %p91 = scmp.ne.s32.totalorder %s83, %s85
      %p92 = scmp.eq.s32.totalorder %s21, 1
      %p93 = por %p91, %p92
      %p94 = scmp.ne.s32.totalorder %s85, %s86
      %p95 = scmp.eq.s32.totalorder %s21, 0
      %p96 = por %p94, %p95
      %p97 = scmp.ne.s32.totalorder %s85, %s86
      %p98 = scmp.eq.s32.totalorder %s22, 1
      %p99 = por %p97, %p98
      %p101 = scmp.ne.s32.totalorder %s86, %s100
      %p102 = scmp.eq.s32.totalorder %s22, 0
      %p103 = por %p101, %p102
      %s104 = ssub.s32 %s24, %s31
      %p105 = scmp.eq.s32.totalorder %s104, 0
      %s107 = sadd.s32 %s106, 1
      %s108 = scalar_select %p105, %s106, %s107
      %p111 = pneg %p105
      %p112 = scmp.eq.s32.totalorder %s16, 1
      %p113 = por %p111, %p112
      %p114 = scmp.ne.s32.totalorder %s106, %s109
      %p115 = scmp.eq.s32.totalorder %s16, 0
      %p116 = por %p114, %p115
      %p117 = scmp.ne.s32.totalorder %s106, %s109
      %p118 = scmp.eq.s32.totalorder %s21, 1
      %p119 = por %p117, %p118
      %p120 = scmp.ne.s32.totalorder %s109, %s110
      %p121 = scmp.eq.s32.totalorder %s21, 0
      %p122 = por %p120, %p121
      %p123 = scmp.ne.s32.totalorder %s109, %s110
      %p124 = scmp.eq.s32.totalorder %s22, 1
      %p125 = por %p123, %p124
      %p127 = scmp.ne.s32.totalorder %s110, %s126
      %p128 = scmp.eq.s32.totalorder %s22, 0
      %p129 = por %p127, %p128
      %s130 = ssub.s32 %s23, %s35
      %p131 = scmp.eq.s32.totalorder %s130, 0
      %s133 = sadd.s32 %s132, 1
      %s134 = scalar_select %p131, %s132, %s133
      %p137 = pneg %p131
      %p138 = scmp.eq.s32.totalorder %s16, 1
      %p139 = por %p137, %p138
      %p140 = scmp.ne.s32.totalorder %s132, %s135
      %p141 = scmp.eq.s32.totalorder %s16, 0
      %p142 = por %p140, %p141
      %p143 = scmp.ne.s32.totalorder %s132, %s135
      %p144 = scmp.eq.s32.totalorder %s21, 1
      %p145 = por %p143, %p144
      %p146 = scmp.ne.s32.totalorder %s135, %s136
      %p147 = scmp.eq.s32.totalorder %s21, 0
      %p148 = por %p146, %p147
      %p149 = scmp.ne.s32.totalorder %s135, %s136
      %p150 = scmp.eq.s32.totalorder %s22, 1
      %p151 = por %p149, %p150
      %p153 = scmp.ne.s32.totalorder %s136, %s152
      %p154 = scmp.eq.s32.totalorder %s22, 0
      %p155 = por %p153, %p154
      %s156 = ssub.s32 %s23, %s35
      %s157 = ssub.s32 %s24, %s31
      %s158 = sor.u32 %s156, %s157
      %p159 = scmp.eq.s32.totalorder %s158, 0
      %s161 = sadd.s32 %s160, 1
      %s162 = scalar_select %p159, %s160, %s161
      %p165 = pneg %p159
      %p166 = scmp.eq.s32.totalorder %s16, 1
      %p167 = por %p165, %p166
      %p168 = scmp.ne.s32.totalorder %s160, %s163
      %p169 = scmp.eq.s32.totalorder %s16, 0
      %p170 = por %p168, %p169
      %p171 = scmp.ne.s32.totalorder %s160, %s163
      %p172 = scmp.eq.s32.totalorder %s21, 1
      %p173 = por %p171, %p172
      %p174 = scmp.ne.s32.totalorder %s163, %s164
      %p175 = scmp.eq.s32.totalorder %s21, 0
      %p176 = por %p174, %p175
      %p177 = scmp.ne.s32.totalorder %s163, %s164
      %p178 = scmp.eq.s32.totalorder %s22, 1
      %p179 = por %p177, %p178
      %p181 = scmp.ne.s32.totalorder %s164, %s180
      %p182 = scmp.eq.s32.totalorder %s22, 0
      %p183 = por %p181, %p182
      %s184 = ssub.s32 %s23, %s35
      %p185 = scmp.eq.s32.totalorder %s184, 0
      %s187 = sadd.s32 %s186, 1
      %s188 = scalar_select %p185, %s186, %s187
      %p191 = pneg %p185
      %p192 = scmp.eq.s32.totalorder %s16, 1
      %p193 = por %p191, %p192
      %p194 = scmp.ne.s32.totalorder %s186, %s189
      %p195 = scmp.eq.s32.totalorder %s16, 0
      %p196 = por %p194, %p195
      %p197 = scmp.ne.s32.totalorder %s186, %s189
      %p198 = scmp.eq.s32.totalorder %s21, 1
      %p199 = por %p197, %p198
      %p200 = scmp.ne.s32.totalorder %s189, %s190
      %p201 = scmp.eq.s32.totalorder %s21, 0
      %p202 = por %p200, %p201
      %p203 = scmp.ne.s32.totalorder %s189, %s190
      %p204 = scmp.eq.s32.totalorder %s22, 1
      %p205 = por %p203, %p204
      %p207 = scmp.ne.s32.totalorder %s190, %s206
      %p208 = scmp.eq.s32.totalorder %s22, 0
      %p209 = por %p207, %p208
      %p210 = scmp.le.s32.totalorder 1, %s16
      %p211 = scmp.lt.s32.totalorder %s16, 3
      %p212 = pnand %p210, %p211
      %p213 = pneg %p212
      // Predicated region
      $region9: #{kosmos2_forward.37} parent=5 // pred_check
        _
      $region10: #{kosmos2_forward.37} parent=5 // pred_check_branch
        %215 = sbr.rel (%p212) target = $region12
      $region11: #{kosmos2_forward.37} parent=5 // pred_region
        %s216 = ssub.s32 %s16, 1
        // Predicated region
        $region13: #{kosmos2_forward.37} parent=11 // pred_check
          %p217 = pneg %p54
        $region14: #{kosmos2_forward.37} parent=11 // pred_check_branch
          %219 = sbr.rel (%p217) target = $region16
        $region15: #{kosmos2_forward.37} parent=11 // pred_region
          %s220 = smul.u32 8, %s25
          %p221 = scmp.lt.s32.totalorder %s220, 7
          %s222 = scalar_select %p221, %s220, 7
          %s223 = smul.addr %s222, 2
          %s224 = smul.addr %s223, 4
          %s225 = scalar_lea.vmem %s0, %s224
          %s226 = smul.u32 8, %s25
        $region16: #{kosmos2_forward.37} parent=11 // pred_fallthru
          _
        // Predicated region
        $region17: #{kosmos2_forward.37} parent=11 // pred_check
          %p227 = pneg %p75
        $region18: #{kosmos2_forward.37} parent=11 // pred_check_branch
          %229 = sbr.rel (%p227) target = $region20
        $region19: #{kosmos2_forward.37} parent=11 // pred_region
          _
        $region20: #{kosmos2_forward.37} parent=11 // pred_fallthru
          _
        // Predicated region
        $region21: #{kosmos2_forward.37} parent=11 // pred_check
          %p230 = pneg %p96
        $region22: #{kosmos2_forward.37} parent=11 // pred_check_branch
          %232 = sbr.rel (%p230) target = $region24
        $region23: #{kosmos2_forward.37} parent=11 // pred_region
          _
        $region24: #{kosmos2_forward.37} parent=11 // pred_fallthru
          _
        // Predicated region
        $region25: #{kosmos2_forward.37} parent=11 // pred_check
          %p233 = pneg %p148
        $region26: #{kosmos2_forward.37} parent=11 // pred_check_branch
          %235 = sbr.rel (%p233) target = $region28
        $region27: #{kosmos2_forward.37} parent=11 // pred_region
          %s236 = smul.u32 8, %s25
          %p237 = scmp.lt.s32.totalorder %s236, 7
          %s238 = scalar_select %p237, %s236, 7
          %s239 = smul.addr %s238, 8
          %s240 = scalar_lea.vmem %s4, %s239
          %s241 = smul.u32 8, %s25
        $region28: #{kosmos2_forward.37} parent=11 // pred_fallthru
          _
      $region12: #{kosmos2_forward.37} parent=5 // pred_fallthru
        _
      %p242 = scmp.lt.s32.totalorder %s16, 2
      // Predicated region
      $region29: #{kosmos2_forward.37} parent=5 // pred_check
        %p243 = pneg %p242
      $region30: #{kosmos2_forward.37} parent=5 // pred_check_branch
        %245 = sbr.rel (%p243) target = $region32
      $region31: #{kosmos2_forward.37} parent=5 // pred_region
        // Predicated region
        $region33: #{kosmos2_forward.37} parent=31 // pred_check
          %p246 = pneg %p116
        $region34: #{kosmos2_forward.37} parent=31 // pred_check_branch
          %248 = sbr.rel (%p246) target = $region36
        $region35: #{kosmos2_forward.37} parent=31 // pred_region
          %s249 = sand.u32 %s106, 1
          %s250 = sand.u32 %s106, 1
          %s251 = smul.addr %s250, 256
          %s252 = scalar_lea.vmem [#allocation6], %s251
          %s253 = smul.u32 2, %s24
          %s254 = smul.addr %s253, 4
          %s255 = scalar_lea.vmem %s3, %s254
          // Predicated region
          $region37: #{kosmos2_forward.37} parent=35 // pred_check
            _
          $region38: #{kosmos2_forward.37} parent=35 // pred_check_branch
            %257 = sbr.rel (0) target = $region40
          $region39: #{kosmos2_forward.37} parent=35 // pred_region
            // Predicated region
            $region41: #{kosmos2_forward.37} parent=39 // pred_check
              _
            $region42: #{kosmos2_forward.37} parent=39 // pred_check_branch
              %259 = sbr.rel (0) target = $region44
            $region43: #{kosmos2_forward.37} parent=39 // pred_region
              // Predicated region
              $region56: #{kosmos2_forward.37} parent=43 // pred_check
                _
              $region57: #{kosmos2_forward.37} parent=43 // pred_check_branch
                %336 = sbr.rel (0) target = $region59
              $region58: #{kosmos2_forward.37} parent=43 // pred_region
                loop: start=0, step=1, limit=1
                $region60: #{kosmos2_forward.37} parent=58 // loop_pre_header
                  _
                $region61: #{kosmos2_forward.37} parent=58 // loop_header
                  %s338 = sphi 0, %s342
                  %p339 = scmp.ge.s32.totalorder %s338, 1
                  %s343 = sphi %s255, %s255
                  %s344 = sphi %s252, %s252
                $region62: #{kosmos2_forward.37} parent=58 // loop_header_branch
                  %341 = sbr.rel (%p339) target = $region66
                $region63: #{kosmos2_forward.37} parent=58 // loop_body
                  %v345 = vld [vmem:[%s343] sm:$0xff]
                  %346 = vst [vmem:[%s344] sm:$0xff] %v345
                  %v347 = vld [vmem:[%s343 + $0x10] sm:$0xff]
                  %348 = vst [vmem:[%s344 + $0x8] sm:$0xff] %v347
                  %v349 = vld [vmem:[%s343 + $0x20] sm:$0xff]
                  %350 = vst [vmem:[%s344 + $0x10] sm:$0xff] %v349
                  %v351 = vld [vmem:[%s343 + $0x30] sm:$0xff]
                  %352 = vst [vmem:[%s344 + $0x18] sm:$0xff] %v351
                  %v353 = vld [vmem:[%s343 + $0x40] sm:$0xff]
                  %354 = vst [vmem:[%s344 + $0x20] sm:$0xff] %v353
                  %v355 = vld [vmem:[%s343 + $0x50] sm:$0xff]
                  %356 = vst [vmem:[%s344 + $0x28] sm:$0xff] %v355
                  %v357 = vld [vmem:[%s343 + $0x60] sm:$0xff]
                  %358 = vst [vmem:[%s344 + $0x30] sm:$0xff] %v357
                  %v359 = vld [vmem:[%s343 + $0x70] sm:$0xff]
                  %360 = vst [vmem:[%s344 + $0x38] sm:$0xff] %v359
                  %v361 = vld [vmem:[%s343 + $0x80] sm:$0xff]
                  %362 = vst [vmem:[%s344 + $0x40] sm:$0xff] %v361
                  %v363 = vld [vmem:[%s343 + $0x90] sm:$0xff]
                  %364 = vst [vmem:[%s344 + $0x48] sm:$0xff] %v363
                  %v365 = vld [vmem:[%s343 + $0xa0] sm:$0xff]
                  %366 = vst [vmem:[%s344 + $0x50] sm:$0xff] %v365
                  %v367 = vld [vmem:[%s343 + $0xb0] sm:$0xff]
                  %368 = vst [vmem:[%s344 + $0x58] sm:$0xff] %v367
                  %v369 = vld [vmem:[%s343 + $0xc0] sm:$0xff]
                  %370 = vst [vmem:[%s344 + $0x60] sm:$0xff] %v369
                  %v371 = vld [vmem:[%s343 + $0xd0] sm:$0xff]
                  %372 = vst [vmem:[%s344 + $0x68] sm:$0xff] %v371
                  %v373 = vld [vmem:[%s343 + $0xe0] sm:$0xff]
                  %374 = vst [vmem:[%s344 + $0x70] sm:$0xff] %v373
                  %v375 = vld [vmem:[%s343 + $0xf0] sm:$0xff]
                  %376 = vst [vmem:[%s344 + $0x78] sm:$0xff] %v375
                  %v377 = vld [vmem:[%s343 + $0x100] sm:$0xff]
                  %378 = vst [vmem:[%s344 + $0x80] sm:$0xff] %v377
                  %v379 = vld [vmem:[%s343 + $0x110] sm:$0xff]
                  %380 = vst [vmem:[%s344 + $0x88] sm:$0xff] %v379
                  %v381 = vld [vmem:[%s343 + $0x120] sm:$0xff]
                  %382 = vst [vmem:[%s344 + $0x90] sm:$0xff] %v381
                  %v383 = vld [vmem:[%s343 + $0x130] sm:$0xff]
                  %384 = vst [vmem:[%s344 + $0x98] sm:$0xff] %v383
                  %v385 = vld [vmem:[%s343 + $0x140] sm:$0xff]
                  %386 = vst [vmem:[%s344 + $0xa0] sm:$0xff] %v385
                  %v387 = vld [vmem:[%s343 + $0x150] sm:$0xff]
                  %388 = vst [vmem:[%s344 + $0xa8] sm:$0xff] %v387
                  %v389 = vld [vmem:[%s343 + $0x160] sm:$0xff]
                  %390 = vst [vmem:[%s344 + $0xb0] sm:$0xff] %v389
                  %v391 = vld [vmem:[%s343 + $0x170] sm:$0xff]
                  %392 = vst [vmem:[%s344 + $0xb8] sm:$0xff] %v391
                  %v393 = vld [vmem:[%s343 + $0x180] sm:$0xff]
                  %394 = vst [vmem:[%s344 + $0xc0] sm:$0xff] %v393
                  %v395 = vld [vmem:[%s343 + $0x190] sm:$0xff]
                  %396 = vst [vmem:[%s344 + $0xc8] sm:$0xff] %v395
                  %v397 = vld [vmem:[%s343 + $0x1a0] sm:$0xff]
                  %398 = vst [vmem:[%s344 + $0xd0] sm:$0xff] %v397
                  %v399 = vld [vmem:[%s343 + $0x1b0] sm:$0xff]
                  %400 = vst [vmem:[%s344 + $0xd8] sm:$0xff] %v399
                  %v401 = vld [vmem:[%s343 + $0x1c0] sm:$0xff]
                  %402 = vst [vmem:[%s344 + $0xe0] sm:$0xff] %v401
                  %v403 = vld [vmem:[%s343 + $0x1d0] sm:$0xff]
                  %404 = vst [vmem:[%s344 + $0xe8] sm:$0xff] %v403
                  %v405 = vld [vmem:[%s343 + $0x1e0] sm:$0xff]
                  %406 = vst [vmem:[%s344 + $0xf0] sm:$0xff] %v405
                  %v407 = vld [vmem:[%s343 + $0x1f0] sm:$0xff]
                  %408 = vst [vmem:[%s344 + $0xf8] sm:$0xff] %v407
                $region64: #{kosmos2_forward.37} parent=58 // loop_footer
                  %s342 = sadd.s32 1, %s338
                $region65: #{kosmos2_forward.37} parent=58 // loop_footer_branch
                  %337 = sbr.rel target = $region61
                $region66: #{kosmos2_forward.37} parent=58 // loop_exit
                  _
              $region59: #{kosmos2_forward.37} parent=43 // pred_fallthru
                _
              // Predicated region
              $region67: #{kosmos2_forward.37} parent=43 // pred_check
                _
              $region68: #{kosmos2_forward.37} parent=43 // pred_check_branch
                %410 = sbr.rel target = $region70
              $region69: #{kosmos2_forward.37} parent=43 // pred_region
                _
              $region70: #{kosmos2_forward.37} parent=43 // pred_fallthru
                _
            $region44: #{kosmos2_forward.37} parent=39 // pred_fallthru
              _
            // Predicated region
            $region45: #{kosmos2_forward.37} parent=39 // pred_check
              _
            $region46: #{kosmos2_forward.37} parent=39 // pred_check_branch
              %261 = sbr.rel target = $region48
            $region47: #{kosmos2_forward.37} parent=39 // pred_region
              loop: start=0, step=1, limit=1
              $region49: #{kosmos2_forward.37} parent=47 // loop_pre_header
                _
              $region50: #{kosmos2_forward.37} parent=47 // loop_header
                %s264 = sphi 0, %s268
                %p265 = scmp.ge.s32.totalorder %s264, 1
                %s269 = sphi %s255, %s255
                %s270 = sphi %s252, %s252
              $region51: #{kosmos2_forward.37} parent=47 // loop_header_branch
                %267 = sbr.rel (%p265) target = $region55
              $region52: #{kosmos2_forward.37} parent=47 // loop_body
                %v271 = vld [vmem:[%s269] sm:$0xff]
                %272 = vst [vmem:[%s270] sm:$0xff] %v271
                %v273 = vld [vmem:[%s269 + $0x10] sm:$0xff]
                %274 = vst [vmem:[%s270 + $0x8] sm:$0xff] %v273
                %v275 = vld [vmem:[%s269 + $0x20] sm:$0xff]
                %276 = vst [vmem:[%s270 + $0x10] sm:$0xff] %v275
                %v277 = vld [vmem:[%s269 + $0x30] sm:$0xff]
                %278 = vst [vmem:[%s270 + $0x18] sm:$0xff] %v277
                %v279 = vld [vmem:[%s269 + $0x40] sm:$0xff]
                %280 = vst [vmem:[%s270 + $0x20] sm:$0xff] %v279
                %v281 = vld [vmem:[%s269 + $0x50] sm:$0xff]
                %282 = vst [vmem:[%s270 + $0x28] sm:$0xff] %v281
                %v283 = vld [vmem:[%s269 + $0x60] sm:$0xff]
                %284 = vst [vmem:[%s270 + $0x30] sm:$0xff] %v283
                %v285 = vld [vmem:[%s269 + $0x70] sm:$0xff]
                %286 = vst [vmem:[%s270 + $0x38] sm:$0xff] %v285
                %v287 = vld [vmem:[%s269 + $0x80] sm:$0xff]
                %288 = vst [vmem:[%s270 + $0x40] sm:$0xff] %v287
                %v289 = vld [vmem:[%s269 + $0x90] sm:$0xff]
                %290 = vst [vmem:[%s270 + $0x48] sm:$0xff] %v289
                %v291 = vld [vmem:[%s269 + $0xa0] sm:$0xff]
                %292 = vst [vmem:[%s270 + $0x50] sm:$0xff] %v291
                %v293 = vld [vmem:[%s269 + $0xb0] sm:$0xff]
                %294 = vst [vmem:[%s270 + $0x58] sm:$0xff] %v293
                %v295 = vld [vmem:[%s269 + $0xc0] sm:$0xff]
                %296 = vst [vmem:[%s270 + $0x60] sm:$0xff] %v295
                %v297 = vld [vmem:[%s269 + $0xd0] sm:$0xff]
                %298 = vst [vmem:[%s270 + $0x68] sm:$0xff] %v297
                %v299 = vld [vmem:[%s269 + $0xe0] sm:$0xff]
                %300 = vst [vmem:[%s270 + $0x70] sm:$0xff] %v299
                %v301 = vld [vmem:[%s269 + $0xf0] sm:$0xff]
                %302 = vst [vmem:[%s270 + $0x78] sm:$0xff] %v301
                %v303 = vld [vmem:[%s269 + $0x100] sm:$0xff]
                %304 = vst [vmem:[%s270 + $0x80] sm:$0xff] %v303
                %v305 = vld [vmem:[%s269 + $0x110] sm:$0xff]
                %306 = vst [vmem:[%s270 + $0x88] sm:$0xff] %v305
                %v307 = vld [vmem:[%s269 + $0x120] sm:$0xff]
                %308 = vst [vmem:[%s270 + $0x90] sm:$0xff] %v307
                %v309 = vld [vmem:[%s269 + $0x130] sm:$0xff]
                %310 = vst [vmem:[%s270 + $0x98] sm:$0xff] %v309
                %v311 = vld [vmem:[%s269 + $0x140] sm:$0xff]
                %312 = vst [vmem:[%s270 + $0xa0] sm:$0xff] %v311
                %v313 = vld [vmem:[%s269 + $0x150] sm:$0xff]
                %314 = vst [vmem:[%s270 + $0xa8] sm:$0xff] %v313
                %v315 = vld [vmem:[%s269 + $0x160] sm:$0xff]
                %316 = vst [vmem:[%s270 + $0xb0] sm:$0xff] %v315
                %v317 = vld [vmem:[%s269 + $0x170] sm:$0xff]
                %318 = vst [vmem:[%s270 + $0xb8] sm:$0xff] %v317
                %v319 = vld [vmem:[%s269 + $0x180] sm:$0xff]
                %320 = vst [vmem:[%s270 + $0xc0] sm:$0xff] %v319
                %v321 = vld [vmem:[%s269 + $0x190] sm:$0xff]
                %322 = vst [vmem:[%s270 + $0xc8] sm:$0xff] %v321
                %v323 = vld [vmem:[%s269 + $0x1a0] sm:$0xff]
                %324 = vst [vmem:[%s270 + $0xd0] sm:$0xff] %v323
                %v325 = vld [vmem:[%s269 + $0x1b0] sm:$0xff]
                %326 = vst [vmem:[%s270 + $0xd8] sm:$0xff] %v325
                %v327 = vld [vmem:[%s269 + $0x1c0] sm:$0xff]
                %328 = vst [vmem:[%s270 + $0xe0] sm:$0xff] %v327
                %v329 = vld [vmem:[%s269 + $0x1d0] sm:$0xff]
                %330 = vst [vmem:[%s270 + $0xe8] sm:$0xff] %v329
                %v331 = vld [vmem:[%s269 + $0x1e0] sm:$0xff]
                %332 = vst [vmem:[%s270 + $0xf0] sm:$0xff] %v331
                %v333 = vld [vmem:[%s269 + $0x1f0] sm:$0xff]
                %334 = vst [vmem:[%s270 + $0xf8] sm:$0xff] %v333
              $region53: #{kosmos2_forward.37} parent=47 // loop_footer
                %s268 = sadd.s32 1, %s264
              $region54: #{kosmos2_forward.37} parent=47 // loop_footer_branch
                %263 = sbr.rel target = $region50
              $region55: #{kosmos2_forward.37} parent=47 // loop_exit
                _
            $region48: #{kosmos2_forward.37} parent=39 // pred_fallthru
              _
          $region40: #{kosmos2_forward.37} parent=35 // pred_fallthru
            _
          %411 = vnop
        $region36: #{kosmos2_forward.37} parent=31 // pred_fallthru
          _
      $region32: #{kosmos2_forward.37} parent=5 // pred_fallthru
        _
      %p412 = scmp.le.s32.totalorder 1, %s16
      %p413 = scmp.lt.s32.totalorder %s16, 3
      %p414 = pnand %p412, %p413
      %p415 = pneg %p414
      // Predicated region
      $region71: #{kosmos2_forward.37} parent=5 // pred_check
        _
      $region72: #{kosmos2_forward.37} parent=5 // pred_check_branch
        %417 = sbr.rel (%p414) target = $region74
      $region73: #{kosmos2_forward.37} parent=5 // pred_region
        %s418 = ssub.s32 %s16, 1
        %s419 = sand.u32 %s109, 1
        %s420 = sand.u32 %s109, 1
        %s421 = smul.addr %s420, 256
        %s422 = scalar_lea.vmem [#allocation6], %s421
        // Predicated region
        $region75: #{kosmos2_forward.37} parent=73 // pred_check
          %p423 = pneg %p122
        $region76: #{kosmos2_forward.37} parent=73 // pred_check_branch
          %425 = sbr.rel (%p423) target = $region78
        $region77: #{kosmos2_forward.37} parent=73 // pred_region
          _
        $region78: #{kosmos2_forward.37} parent=73 // pred_fallthru
          _
        %s426 = smul.u32 8, %s25
        %p427 = scmp.lt.s32.totalorder %s426, 7
        %s428 = scalar_select %p427, %s426, 7
        %s429 = smul.addr %s428, 2
        %s430 = smul.addr %s429, 4
        %s431 = scalar_lea.vmem %s0, %s430
        %p432 = pneg %p54
        %p433 = pneg %p51
        %p434 = pneg %p75
        %p435 = pneg %p72
        %p436 = pneg %p96
        %p437 = pneg %p93
        %s438 = sand.u32 %s109, 1
        %s439 = sand.u32 %s109, 1
        %s440 = smul.addr %s439, 256
        %s441 = scalar_lea.vmem [#allocation6], %s440
        %p442 = pneg %p122
        %p443 = pneg %p119
        %s444 = smul.u32 8, %s25
        %p445 = scmp.lt.s32.totalorder %s444, 7
        %s446 = scalar_select %p445, %s444, 7
        %s447 = smul.addr %s446, 8
        %s448 = scalar_lea.vmem %s4, %s447
        %p449 = pneg %p148
        %p450 = pneg %p145
        %p451 = pneg %p176
        %p452 = pneg %p173
        %s453 = sand.u32 %s163, 1
        %s454 = scalar_lea.sflag [#allocation8], %s453
        %s455 = sand.u32 %s163, 1
        %s456 = smul.addr %s455, 64
        %s457 = scalar_lea.vmem [#allocation7], %s456
        %p458 = pneg %p202
        %p459 = pneg %p199
        %s460 = smul.u32 8, %s25
        %p461 = scmp.lt.s32.totalorder %s460, 7
        %s462 = scalar_select %p461, %s460, 7
        %s463 = smul.addr %s462, 8
        %s464 = scalar_lea.vmem %s6, %s463
        %s465 = smul.u32 8, %s25
        %p466 = scmp.lt.s32.totalorder %s465, 7
        %s467 = scalar_select %p466, %s465, 7
        %s468 = smul.addr %s467, 2
        %s469 = smul.addr %s468, 4
        %s470 = scalar_lea.vmem %s0, %s469
        %s471 = smul.u32 8, %s25
        %s472 = smul.u32 2, %s26
        %s473 = smul.u32 8, %s25
        %p474 = scmp.lt.s32.totalorder %s473, 7
        %s475 = scalar_select %p474, %s473, 7
        %s476 = smul.addr %s475, 8
        %s477 = scalar_lea.vmem %s4, %s476
        %s478 = smul.u32 8, %s25
        %s479 = smul.u32 8, %s25
        %s480 = smul.u32 2, %s26
        %s481 = smul.u32 8, %s25
        %p482 = scmp.lt.s32.totalorder %s481, 7
        %s483 = scalar_select %p482, %s481, 7
        %s484 = smul.addr %s483, 8
        %s485 = scalar_lea.vmem %s6, %s484
        %s486 = smul.u32 8, %s25
        %p487 = scmp.eq.s32.totalorder %s26, 0
        // Predicated region
        $region79: #{kosmos2_forward.37} parent=73 // pred_check
          %p488 = pneg %p487
        $region80: #{kosmos2_forward.37} parent=73 // pred_check_branch
          %490 = sbr.rel (%p488) target = $region82
        $region81: #{kosmos2_forward.37} parent=73 // pred_region
          %v491 = vld [vmem:[%s470] sm:$0xff]
          %v492 = vld [vmem:[%s470 + $0x8] sm:$0xff]
          %v493 = vld [vmem:[%s470 + $0x10] sm:$0xff]
          %v494 = vld [vmem:[%s470 + $0x18] sm:$0xff]
          %v495 = vld [vmem:[%s470 + $0x20] sm:$0xff]
          %v496 = vld [vmem:[%s470 + $0x28] sm:$0xff]
          %v497 = vld [vmem:[%s470 + $0x30] sm:$0xff]
          %v498 = vld [vmem:[%s470 + $0x38] sm:$0xff]
          %v499 = vunpack.c.l.bf16 %v491
          %v500 = vunpack.c.h.bf16 %v491
          %v501 = vunpack.c.l.bf16 %v492
          %v502 = vunpack.c.h.bf16 %v492
          %v503 = vunpack.c.l.bf16 %v493
          %v504 = vunpack.c.h.bf16 %v493
          %v505 = vunpack.c.l.bf16 %v494
          %v506 = vunpack.c.h.bf16 %v494
          %v507 = vunpack.c.l.bf16 %v495
          %v508 = vunpack.c.h.bf16 %v495
          %v509 = vunpack.c.l.bf16 %v496
          %v510 = vunpack.c.h.bf16 %v496
          %v511 = vunpack.c.l.bf16 %v497
          %v512 = vunpack.c.h.bf16 %v497
          %v513 = vunpack.c.l.bf16 %v498
          %v514 = vunpack.c.h.bf16 %v498
          %v515 = vadd.f32 %v499, %v500
          %516 = vadd.xlane.f32.xlu0 %v515
          %v517 = vpop.xlane.xlu0 %516
          %v518 = vadd.f32 %v501, %v502
          %519 = vadd.xlane.f32.xlu0 %v518
          %v520 = vpop.xlane.xlu0 %519
          %v521 = vadd.f32 %v503, %v504
          %522 = vadd.xlane.f32.xlu0 %v521
          %v523 = vpop.xlane.xlu0 %522
          %v524 = vadd.f32 %v505, %v506
          %525 = vadd.xlane.f32.xlu0 %v524
          %v526 = vpop.xlane.xlu0 %525
          %v527 = vadd.f32 %v507, %v508
          %528 = vadd.xlane.f32.xlu0 %v527
          %v529 = vpop.xlane.xlu0 %528
          %v530 = vadd.f32 %v509, %v510
          %531 = vadd.xlane.f32.xlu0 %v530
          %v532 = vpop.xlane.xlu0 %531
          %v533 = vadd.f32 %v511, %v512
          %534 = vadd.xlane.f32.xlu0 %v533
          %v535 = vpop.xlane.xlu0 %534
          %v536 = vadd.f32 %v513, %v514
          %537 = vadd.xlane.f32.xlu0 %v536
          %v538 = vpop.xlane.xlu0 %537
          %v539 = vrcp.pop 256.0
          %v540 = vmul.f32 %v517, %v539
          %v541 = vmul.f32 %v520, %v539
          %v542 = vmul.f32 %v523, %v539
          %v543 = vmul.f32 %v526, %v539
          %v544 = vmul.f32 %v529, %v539
          %v545 = vmul.f32 %v532, %v539
          %v546 = vmul.f32 %v535, %v539
          %v547 = vmul.f32 %v538, %v539
          %v548 = vsub.f32 %v499, %v540
          %v549 = vsub.f32 %v500, %v540
          %v550 = vsub.f32 %v501, %v541
          %v551 = vsub.f32 %v502, %v541
          %v552 = vsub.f32 %v503, %v542
          %v553 = vsub.f32 %v504, %v542
          %v554 = vsub.f32 %v505, %v543
          %v555 = vsub.f32 %v506, %v543
          %v556 = vsub.f32 %v507, %v544
          %v557 = vsub.f32 %v508, %v544
          %v558 = vsub.f32 %v509, %v545
          %v559 = vsub.f32 %v510, %v545
          %v560 = vsub.f32 %v511, %v546
          %v561 = vsub.f32 %v512, %v546
          %v562 = vsub.f32 %v513, %v547
          %v563 = vsub.f32 %v514, %v547
          %v564 = vmul.f32 %v548, %v548
          %v565 = vmul.f32 %v549, %v549
          %v566 = vmul.f32 %v550, %v550
          %v567 = vmul.f32 %v551, %v551
          %v568 = vmul.f32 %v552, %v552
          %v569 = vmul.f32 %v553, %v553
          %v570 = vmul.f32 %v554, %v554
          %v571 = vmul.f32 %v555, %v555
          %v572 = vmul.f32 %v556, %v556
          %v573 = vmul.f32 %v557, %v557
          %v574 = vmul.f32 %v558, %v558
          %v575 = vmul.f32 %v559, %v559
          %v576 = vmul.f32 %v560, %v560
          %v577 = vmul.f32 %v561, %v561
          %v578 = vmul.f32 %v562, %v562
          %v579 = vmul.f32 %v563, %v563
          %v580 = vadd.f32 %v564, %v565
          %581 = vadd.xlane.f32.xlu0 %v580
          %v582 = vpop.xlane.xlu0 %581
          %v583 = vadd.f32 %v566, %v567
          %584 = vadd.xlane.f32.xlu0 %v583
          %v585 = vpop.xlane.xlu0 %584
          %v586 = vadd.f32 %v568, %v569
          %587 = vadd.xlane.f32.xlu0 %v586
          %v588 = vpop.xlane.xlu0 %587
          %v589 = vadd.f32 %v570, %v571
          %590 = vadd.xlane.f32.xlu0 %v589
          %v591 = vpop.xlane.xlu0 %590
          %v592 = vadd.f32 %v572, %v573
          %593 = vadd.xlane.f32.xlu0 %v592
          %v594 = vpop.xlane.xlu0 %593
          %v595 = vadd.f32 %v574, %v575
          %596 = vadd.xlane.f32.xlu0 %v595
          %v597 = vpop.xlane.xlu0 %596
          %v598 = vadd.f32 %v576, %v577
          %599 = vadd.xlane.f32.xlu0 %v598
          %v600 = vpop.xlane.xlu0 %599
          %v601 = vadd.f32 %v578, %v579
          %602 = vadd.xlane.f32.xlu0 %v601
          %v603 = vpop.xlane.xlu0 %602
          %v604 = vmul.f32 %v582, %v539
          %v605 = vmul.f32 %v585, %v539
          %v606 = vmul.f32 %v588, %v539
          %v607 = vmul.f32 %v591, %v539
          %v608 = vmul.f32 %v594, %v539
          %v609 = vmul.f32 %v597, %v539
          %v610 = vmul.f32 %v600, %v539
          %v611 = vmul.f32 %v603, %v539
          %v612 = vadd.f32 %v604, 1e-05
          %v613 = vadd.f32 %v605, 1e-05
          %v614 = vadd.f32 %v606, 1e-05
          %v615 = vadd.f32 %v607, 1e-05
          %v616 = vadd.f32 %v608, 1e-05
          %v617 = vadd.f32 %v609, 1e-05
          %v618 = vadd.f32 %v610, 1e-05
          %v619 = vadd.f32 %v611, 1e-05
          %v620 = vrsqrt.pop %v612
          %v621 = vrsqrt.pop %v613
          %v622 = vrsqrt.pop %v614
          %v623 = vrsqrt.pop %v615
          %v624 = vrsqrt.pop %v616
          %v625 = vrsqrt.pop %v617
          %v626 = vrsqrt.pop %v618
          %v627 = vrsqrt.pop %v619
          %v628 = vmul.f32 %v548, %v620
          %v629 = vmul.f32 %v549, %v620
          %v630 = vmul.f32 %v550, %v621
          %v631 = vmul.f32 %v551, %v621
          %v632 = vmul.f32 %v552, %v622
          %v633 = vmul.f32 %v553, %v622
          %v634 = vmul.f32 %v554, %v623
          %v635 = vmul.f32 %v555, %v623
          %v636 = vmul.f32 %v556, %v624
          %v637 = vmul.f32 %v557, %v624
          %v638 = vmul.f32 %v558, %v625
          %v639 = vmul.f32 %v559, %v625
          %v640 = vmul.f32 %v560, %v626
          %v641 = vmul.f32 %v561, %v626
          %v642 = vmul.f32 %v562, %v627
          %v643 = vmul.f32 %v563, %v627
          %v644 = vld [vmem:[%s1] sm:$0x3]
          %v645 = vunpack.c.l.bf16 %v644
          %v647 = vlaneseq
          %v648 = vshrl.u32 %v647, 7
          %v649 = vsub.s32 0, %v648
          %v650 = vrot.slane %v645, %v649
          %v651 = vlaneseq
          %v652 = vshrl.u32 %v651, 7
          %v653 = vsub.s32 2, %v652
          %v654 = vrot.slane %v645, %v653
          %v657 = vlaneseq
          %v658 = vshrl.u32 %v657, 7
          %v659 = vsub.s32 0, %v658
          %v660 = vrot.slane %v650, %v659
          %v661 = vlaneseq
          %v662 = vshrl.u32 %v661, 7
          %v663 = vsub.s32 0, %v662
          %v664 = vrot.slane %v654, %v663
          %v665 = vmul.f32 %v628, %v660
          %v666 = vmul.f32 %v629, %v664
          %v667 = vmul.f32 %v630, %v660
          %v668 = vmul.f32 %v631, %v664
          %v669 = vmul.f32 %v632, %v660
          %v670 = vmul.f32 %v633, %v664
          %v671 = vmul.f32 %v634, %v660
          %v672 = vmul.f32 %v635, %v664
          %v673 = vmul.f32 %v636, %v660
          %v674 = vmul.f32 %v637, %v664
          %v675 = vmul.f32 %v638, %v660
          %v676 = vmul.f32 %v639, %v664
          %v677 = vmul.f32 %v640, %v660
          %v678 = vmul.f32 %v641, %v664
          %v679 = vmul.f32 %v642, %v660
          %v680 = vmul.f32 %v643, %v664
          %v681 = vld [vmem:[%s2] sm:$0x3]
          %v682 = vunpack.c.l.bf16 %v681
          %v684 = vlaneseq
          %v685 = vshrl.u32 %v684, 7
          %v686 = vsub.s32 0, %v685
          %v687 = vrot.slane %v682, %v686
          %v688 = vlaneseq
          %v689 = vshrl.u32 %v688, 7
          %v690 = vsub.s32 2, %v689
          %v691 = vrot.slane %v682, %v690
          %v694 = vlaneseq
          %v695 = vshrl.u32 %v694, 7
          %v696 = vsub.s32 0, %v695
          %v697 = vrot.slane %v687, %v696
          %v698 = vlaneseq
          %v699 = vshrl.u32 %v698, 7
          %v700 = vsub.s32 0, %v699
          %v701 = vrot.slane %v691, %v700
          %v702 = vadd.f32 %v665, %v697
          %v703 = vadd.f32 %v666, %v701
          %v704 = vadd.f32 %v667, %v697
          %v705 = vadd.f32 %v668, %v701
          %v706 = vadd.f32 %v669, %v697
          %v707 = vadd.f32 %v670, %v701
          %v708 = vadd.f32 %v671, %v697
          %v709 = vadd.f32 %v672, %v701
          %v710 = vadd.f32 %v673, %v697
          %v711 = vadd.f32 %v674, %v701
          %v712 = vadd.f32 %v675, %v697
          %v713 = vadd.f32 %v676, %v701
          %v714 = vadd.f32 %v677, %v697
          %v715 = vadd.f32 %v678, %v701
          %v716 = vadd.f32 %v679, %v697
          %v717 = vadd.f32 %v680, %v701
          %v718 = vpack.c.bf16 %v704, %v702
          %v719 = vpack.c.bf16 %v705, %v703
          %v720 = vpack.c.bf16 %v708, %v706
          %v721 = vpack.c.bf16 %v709, %v707
          %v722 = vpack.c.bf16 %v712, %v710
          %v723 = vpack.c.bf16 %v713, %v711
          %v724 = vpack.c.bf16 %v716, %v714
          %v725 = vpack.c.bf16 %v717, %v715
          %726 = vst [vmem:[#allocation2] sm:$0xff] %v718
          %727 = vst [vmem:[#allocation2 + $0x8] sm:$0xff] %v719
          %728 = vst [vmem:[#allocation2 + $0x10] sm:$0xff] %v720
          %729 = vst [vmem:[#allocation2 + $0x18] sm:$0xff] %v721
          %730 = vst [vmem:[#allocation2 + $0x20] sm:$0xff] %v722
          %731 = vst [vmem:[#allocation2 + $0x28] sm:$0xff] %v723
          %732 = vst [vmem:[#allocation2 + $0x30] sm:$0xff] %v724
          %733 = vst [vmem:[#allocation2 + $0x38] sm:$0xff] %v725
          %vm734 = vcmask 7168
          %735 = vst.msk [vmem:[#allocation3] sm:$0xff] %vm734, -1e+30
          %736 = vst.msk [vmem:[#allocation3 + $0x8] sm:$0xff] %vm734, -1e+30
          %737 = vst.msk [vmem:[#allocation3 + $0x10] sm:$0xff] %vm734, -1e+30
          %738 = vst.msk [vmem:[#allocation3 + $0x18] sm:$0xff] %vm734, -1e+30
          %739 = vst.msk [vmem:[#allocation3 + $0x20] sm:$0xff] %vm734, -1e+30
          %740 = vst.msk [vmem:[#allocation3 + $0x28] sm:$0xff] %vm734, -1e+30
          %741 = vst.msk [vmem:[#allocation3 + $0x30] sm:$0xff] %vm734, -1e+30
          %742 = vst.msk [vmem:[#allocation3 + $0x38] sm:$0xff] %vm734, -1e+30
          %743 = vst.msk [vmem:[#allocation4] sm:$0xff] %vm734, 0.0
          %744 = vst.msk [vmem:[#allocation4 + $0x8] sm:$0xff] %vm734, 0.0
          %745 = vst.msk [vmem:[#allocation4 + $0x10] sm:$0xff] %vm734, 0.0
          %746 = vst.msk [vmem:[#allocation4 + $0x18] sm:$0xff] %vm734, 0.0
          %747 = vst.msk [vmem:[#allocation4 + $0x20] sm:$0xff] %vm734, 0.0
          %748 = vst.msk [vmem:[#allocation4 + $0x28] sm:$0xff] %vm734, 0.0
          %749 = vst.msk [vmem:[#allocation4 + $0x30] sm:$0xff] %vm734, 0.0
          %750 = vst.msk [vmem:[#allocation4 + $0x38] sm:$0xff] %vm734, 0.0
          %751 = vst.msk [vmem:[#allocation5] sm:$0xff] %vm734, 0.0
          %752 = vst.msk [vmem:[#allocation5 + $0x8] sm:$0xff] %vm734, 0.0
          %753 = vst.msk [vmem:[#allocation5 + $0x10] sm:$0xff] %vm734, 0.0
          %754 = vst.msk [vmem:[#allocation5 + $0x18] sm:$0xff] %vm734, 0.0
          %755 = vst.msk [vmem:[#allocation5 + $0x20] sm:$0xff] %vm734, 0.0
          %756 = vst.msk [vmem:[#allocation5 + $0x28] sm:$0xff] %vm734, 0.0
          %757 = vst.msk [vmem:[#allocation5 + $0x30] sm:$0xff] %vm734, 0.0
          %758 = vst.msk [vmem:[#allocation5 + $0x38] sm:$0xff] %vm734, 0.0
        $region82: #{kosmos2_forward.37} parent=73 // pred_fallthru
          _
        %v759 = vld [vmem:[#allocation2] sm:$0xff]
        %v760 = vld [vmem:[#allocation2 + $0x8] sm:$0xff]
        %v761 = vld [vmem:[#allocation2 + $0x10] sm:$0xff]
        %v762 = vld [vmem:[#allocation2 + $0x18] sm:$0xff]
        %v763 = vld [vmem:[#allocation2 + $0x20] sm:$0xff]
        %v764 = vld [vmem:[#allocation2 + $0x28] sm:$0xff]
        %v765 = vld [vmem:[#allocation2 + $0x30] sm:$0xff]
        %v766 = vld [vmem:[#allocation2 + $0x38] sm:$0xff]
        %v767 = vld [vmem:[%s422] sm:$0xff]
        %v768 = vld [vmem:[%s422 + $0x8] sm:$0xff]
        %v769 = vld [vmem:[%s422 + $0x10] sm:$0xff]
        %v770 = vld [vmem:[%s422 + $0x18] sm:$0xff]
        %v771 = vld [vmem:[%s422 + $0x20] sm:$0xff]
        %v772 = vld [vmem:[%s422 + $0x28] sm:$0xff]
        %v773 = vld [vmem:[%s422 + $0x30] sm:$0xff]
        %v774 = vld [vmem:[%s422 + $0x38] sm:$0xff]
        %v775 = vld [vmem:[%s422 + $0x40] sm:$0xff]
        %v776 = vld [vmem:[%s422 + $0x48] sm:$0xff]
        %v777 = vld [vmem:[%s422 + $0x50] sm:$0xff]
        %v778 = vld [vmem:[%s422 + $0x58] sm:$0xff]
        %v779 = vld [vmem:[%s422 + $0x60] sm:$0xff]
        %v780 = vld [vmem:[%s422 + $0x68] sm:$0xff]
        %v781 = vld [vmem:[%s422 + $0x70] sm:$0xff]
        %v782 = vld [vmem:[%s422 + $0x78] sm:$0xff]
        %v783 = vld [vmem:[%s422 + $0x80] sm:$0xff]
        %v784 = vld [vmem:[%s422 + $0x88] sm:$0xff]
        %v785 = vld [vmem:[%s422 + $0x90] sm:$0xff]
        %v786 = vld [vmem:[%s422 + $0x98] sm:$0xff]
        %v787 = vld [vmem:[%s422 + $0xa0] sm:$0xff]
        %v788 = vld [vmem:[%s422 + $0xa8] sm:$0xff]
        %v789 = vld [vmem:[%s422 + $0xb0] sm:$0xff]
        %v790 = vld [vmem:[%s422 + $0xb8] sm:$0xff]
        %v791 = vld [vmem:[%s422 + $0xc0] sm:$0xff]
        %v792 = vld [vmem:[%s422 + $0xc8] sm:$0xff]
        %v793 = vld [vmem:[%s422 + $0xd0] sm:$0xff]
        %v794 = vld [vmem:[%s422 + $0xd8] sm:$0xff]
        %v795 = vld [vmem:[%s422 + $0xe0] sm:$0xff]
        %v796 = vld [vmem:[%s422 + $0xe8] sm:$0xff]
        %v797 = vld [vmem:[%s422 + $0xf0] sm:$0xff]
        %v798 = vld [vmem:[%s422 + $0xf8] sm:$0xff]
        %v831 = vunpack.c.l.b16 %v767
        %v832 = vunpack.c.h.b16 %v767
        %v833 = vunpack.c.l.b16 %v768
        %v834 = vunpack.c.h.b16 %v768
        %v835 = vunpack.c.l.b16 %v769
        %v836 = vunpack.c.h.b16 %v769
        %v837 = vunpack.c.l.b16 %v770
        %v838 = vunpack.c.h.b16 %v770
        %v839 = vunpack.c.l.b16 %v771
        %v840 = vunpack.c.h.b16 %v771
        %v841 = vunpack.c.l.b16 %v772
        %v842 = vunpack.c.h.b16 %v772
        %v843 = vunpack.c.l.b16 %v773
        %v844 = vunpack.c.h.b16 %v773
        %v845 = vunpack.c.l.b16 %v774
        %v846 = vunpack.c.h.b16 %v774
        %v847 = vunpack.c.l.b16 %v775
        %v848 = vunpack.c.h.b16 %v775
        %v849 = vunpack.c.l.b16 %v776
        %v850 = vunpack.c.h.b16 %v776
        %v851 = vunpack.c.l.b16 %v777
        %v852 = vunpack.c.h.b16 %v777
        %v853 = vunpack.c.l.b16 %v778
        %v854 = vunpack.c.h.b16 %v778
        %v855 = vunpack.c.l.b16 %v779
        %v856 = vunpack.c.h.b16 %v779
        %v857 = vunpack.c.l.b16 %v780
        %v858 = vunpack.c.h.b16 %v780
        %v859 = vunpack.c.l.b16 %v781
        %v860 = vunpack.c.h.b16 %v781
        %v861 = vunpack.c.l.b16 %v782
        %v862 = vunpack.c.h.b16 %v782
        %v863 = vunpack.c.l.b16 %v783
        %v864 = vunpack.c.h.b16 %v783
        %v865 = vunpack.c.l.b16 %v784
        %v866 = vunpack.c.h.b16 %v784
        %v867 = vunpack.c.l.b16 %v785
        %v868 = vunpack.c.h.b16 %v785
        %v869 = vunpack.c.l.b16 %v786
        %v870 = vunpack.c.h.b16 %v786
        %v871 = vunpack.c.l.b16 %v787
        %v872 = vunpack.c.h.b16 %v787
        %v873 = vunpack.c.l.b16 %v788
        %v874 = vunpack.c.h.b16 %v788
        %v875 = vunpack.c.l.b16 %v789
        %v876 = vunpack.c.h.b16 %v789
        %v877 = vunpack.c.l.b16 %v790
        %v878 = vunpack.c.h.b16 %v790
        %v879 = vunpack.c.l.b16 %v791
        %v880 = vunpack.c.h.b16 %v791
        %v881 = vunpack.c.l.b16 %v792
        %v882 = vunpack.c.h.b16 %v792
        %v883 = vunpack.c.l.b16 %v793
        %v884 = vunpack.c.h.b16 %v793
        %v885 = vunpack.c.l.b16 %v794
        %v886 = vunpack.c.h.b16 %v794
        %v887 = vunpack.c.l.b16 %v795
        %v888 = vunpack.c.h.b16 %v795
        %v889 = vunpack.c.l.b16 %v796
        %v890 = vunpack.c.h.b16 %v796
        %v891 = vunpack.c.l.b16 %v797
        %v892 = vunpack.c.h.b16 %v797
        %v893 = vunpack.c.l.b16 %v798
        %v894 = vunpack.c.h.b16 %v798
        %v895 = vpack.c.b16 %v833, %v831
        %v896 = vpack.c.b16 %v834, %v832
        %v897 = vpack.c.b16 %v837, %v835
        %v898 = vpack.c.b16 %v838, %v836
        %v899 = vpack.c.b16 %v841, %v839
        %v900 = vpack.c.b16 %v842, %v840
        %v901 = vpack.c.b16 %v845, %v843
        %v902 = vpack.c.b16 %v846, %v844
        %v903 = vpack.c.b16 %v849, %v847
        %v904 = vpack.c.b16 %v850, %v848
        %v905 = vpack.c.b16 %v853, %v851
        %v906 = vpack.c.b16 %v854, %v852
        %v907 = vpack.c.b16 %v857, %v855
        %v908 = vpack.c.b16 %v858, %v856
        %v909 = vpack.c.b16 %v861, %v859
        %v910 = vpack.c.b16 %v862, %v860
        %v911 = vpack.c.b16 %v865, %v863
        %v912 = vpack.c.b16 %v866, %v864
        %v913 = vpack.c.b16 %v869, %v867
        %v914 = vpack.c.b16 %v870, %v868
        %v915 = vpack.c.b16 %v873, %v871
        %v916 = vpack.c.b16 %v874, %v872
        %v917 = vpack.c.b16 %v877, %v875
        %v918 = vpack.c.b16 %v878, %v876
        %v919 = vpack.c.b16 %v881, %v879
        %v920 = vpack.c.b16 %v882, %v880
        %v921 = vpack.c.b16 %v885, %v883
        %v922 = vpack.c.b16 %v886, %v884
        %v923 = vpack.c.b16 %v889, %v887
        %v924 = vpack.c.b16 %v890, %v888
        %v925 = vpack.c.b16 %v893, %v891
        %v926 = vpack.c.b16 %v894, %v892
        %959 = vmatprep.subr.bf16.mxu0 %v896
        %960 = vmatpush1.bf16.msra.mxu0 %v895
        %961 = vmatprep.subr.bf16.mxu0 %v898
        %962 = vmatpush1.bf16.msra.mxu0 %v897
        %963 = vmatprep.subr.bf16.mxu0 %v900
        %964 = vmatpush1.bf16.msra.mxu0 %v899
        %965 = vmatprep.subr.bf16.mxu0 %v902
        %966 = vmatpush1.bf16.msra.mxu0 %v901
        %967 = vmatprep.subr.bf16.mxu0 %v904
        %968 = vmatpush1.bf16.msra.mxu0 %v903
        %969 = vmatprep.subr.bf16.mxu0 %v906
        %970 = vmatpush1.bf16.msra.mxu0 %v905
        %971 = vmatprep.subr.bf16.mxu0 %v908
        %972 = vmatpush1.bf16.msra.mxu0 %v907
        %973 = vmatprep.subr.bf16.mxu0 %v910
        %974 = vmatpush1.bf16.msra.mxu0 %v909
        %975 = vmatprep.subr.bf16.mxu0 %v912
        %976 = vmatpush1.bf16.msra.mxu0 %v911
        %977 = vmatprep.subr.bf16.mxu0 %v914
        %978 = vmatpush1.bf16.msra.mxu0 %v913
        %979 = vmatprep.subr.bf16.mxu0 %v916
        %980 = vmatpush1.bf16.msra.mxu0 %v915
        %981 = vmatprep.subr.bf16.mxu0 %v918
        %982 = vmatpush1.bf16.msra.mxu0 %v917
        %983 = vmatprep.subr.bf16.mxu0 %v920
        %984 = vmatpush1.bf16.msra.mxu0 %v919
        %985 = vmatprep.subr.bf16.mxu0 %v922
        %986 = vmatpush1.bf16.msra.mxu0 %v921
        %987 = vmatprep.subr.bf16.mxu0 %v924
        %988 = vmatpush1.bf16.msra.mxu0 %v923
        %989 = vmatprep.subr.bf16.mxu0 %v926
        %990 = vmatpush1.bf16.msra.mxu0 %v925
        %991 = vmatprep.mubr.bf16.mxu0 %v760
        %992 = vmatmul.mubr.bf16.gmra.mrb[0].mxu0 %v759
        %v993 = vpop.f32.mrb[0].mxu0
        %v994 = vadd.f32 0.0, %v993
        %v995 = vpop.f32.mrb[0].mxu0
        %v996 = vadd.f32 0.0, %v995
        %v997 = vpop.f32.mrb[0].mxu0
        %v998 = vadd.f32 0.0, %v997
        %v999 = vpop.f32.mrb[0].mxu0
        %v1000 = vadd.f32 0.0, %v999
        %1001 = vmatprep.mubr.bf16.mxu0 %v762
        %1002 = vmatmul.mubr.bf16.gmra.mrb[0].mxu0 %v761
        %v1003 = vpop.f32.mrb[0].mxu0
        %v1004 = vadd.f32 0.0, %v1003
        %v1005 = vpop.f32.mrb[0].mxu0
        %v1006 = vadd.f32 0.0, %v1005
        %v1007 = vpop.f32.mrb[0].mxu0
        %v1008 = vadd.f32 0.0, %v1007
        %v1009 = vpop.f32.mrb[0].mxu0
        %v1010 = vadd.f32 0.0, %v1009
        %1011 = vmatprep.mubr.bf16.mxu0 %v764
        %1012 = vmatmul.mubr.bf16.gmra.mrb[0].mxu0 %v763
        %v1013 = vpop.f32.mrb[0].mxu0
        %v1014 = vadd.f32 0.0, %v1013
        %v1015 = vpop.f32.mrb[0].mxu0
        %v1016 = vadd.f32 0.0, %v1015
        %v1017 = vpop.f32.mrb[0].mxu0
        %v1018 = vadd.f32 0.0, %v1017
        %v1019 = vpop.f32.mrb[0].mxu0
        %v1020 = vadd.f32 0.0, %v1019
        %1021 = vmatprep.mubr.bf16.mxu0 %v766
        %1022 = vmatmul.mubr.bf16.gmra.mrb[0].mxu0 %v765
        %v1023 = vpop.f32.mrb[0].mxu0
        %v1024 = vadd.f32 0.0, %v1023
        %v1025 = vpop.f32.mrb[0].mxu0
        %v1026 = vadd.f32 0.0, %v1025
        %v1027 = vpop.f32.mrb[0].mxu0
        %v1028 = vadd.f32 0.0, %v1027
        %v1029 = vpop.f32.mrb[0].mxu0
        %v1030 = vadd.f32 0.0, %v1029
        %1031 = vdwg.mxu0
        %v1032 = vpack.c.bf16 %v998, %v994
        %v1033 = vpack.c.bf16 %v1000, %v996
        %v1034 = vpack.c.bf16 %v1008, %v1004
        %v1035 = vpack.c.bf16 %v1010, %v1006
        %v1036 = vpack.c.bf16 %v1018, %v1014
        %v1037 = vpack.c.bf16 %v1020, %v1016
        %v1038 = vpack.c.bf16 %v1028, %v1024
        %v1039 = vpack.c.bf16 %v1030, %v1026
        %v1048 = vunpack.c.l.b16 %v1032
        %v1049 = vunpack.c.l.b16 %v1033
        %v1050 = vunpack.c.h.b16 %v1032
        %v1051 = vunpack.c.h.b16 %v1033
        %v1052 = vunpack.c.l.b16 %v1034
        %v1053 = vunpack.c.l.b16 %v1035
        %v1054 = vunpack.c.h.b16 %v1034
        %v1055 = vunpack.c.h.b16 %v1035
        %v1056 = vunpack.c.l.b16 %v1036
        %v1057 = vunpack.c.l.b16 %v1037
        %v1058 = vunpack.c.h.b16 %v1036
        %v1059 = vunpack.c.h.b16 %v1037
        %v1060 = vunpack.c.l.b16 %v1038
        %v1061 = vunpack.c.l.b16 %v1039
        %v1062 = vunpack.c.h.b16 %v1038
        %v1063 = vunpack.c.h.b16 %v1039
        %v1064 = vpack.c.b16 %v1049, %v1048
        %v1065 = vpack.c.b16 %v1051, %v1050
        %v1066 = vpack.c.b16 %v1053, %v1052
        %v1067 = vpack.c.b16 %v1055, %v1054
        %v1068 = vpack.c.b16 %v1057, %v1056
        %v1069 = vpack.c.b16 %v1059, %v1058
        %v1070 = vpack.c.b16 %v1061, %v1060
        %v1071 = vpack.c.b16 %v1063, %v1062
        %1080 = vst [vmem:[%s457] sm:$0xff] %v1064
        %1081 = vst [vmem:[%s457 + $0x8] sm:$0xff] %v1065
        %1082 = vst [vmem:[%s457 + $0x10] sm:$0xff] %v1066
        %1083 = vst [vmem:[%s457 + $0x18] sm:$0xff] %v1067
        %1084 = vst [vmem:[%s457 + $0x20] sm:$0xff] %v1068
        %1085 = vst [vmem:[%s457 + $0x28] sm:$0xff] %v1069
        %1086 = vst [vmem:[%s457 + $0x30] sm:$0xff] %v1070
        %1087 = vst [vmem:[%s457 + $0x38] sm:$0xff] %v1071
        %s1088 = smul.u32 %s26, 256
        %v1089 = vlaneseq
        %v1090 = vand.u32 %v1089, 127
        %v1091 = vadd.s32 %v1090, 128
        %v1092 = vstv %s1088
        %v1093 = vadd.s32 %v1092, %v1090
        %v1094 = vadd.s32 %v1092, %v1091
        %v1095 = vld [vmem:[%s477] sm:$0xff]
        %v1096 = vld [vmem:[%s477 + $0x8] sm:$0xff]
        %v1097 = vld [vmem:[%s477 + $0x10] sm:$0xff]
        %v1098 = vld [vmem:[%s477 + $0x18] sm:$0xff]
        %v1099 = vld [vmem:[%s477 + $0x20] sm:$0xff]
        %v1100 = vld [vmem:[%s477 + $0x28] sm:$0xff]
        %v1101 = vld [vmem:[%s477 + $0x30] sm:$0xff]
        %v1102 = vld [vmem:[%s477 + $0x38] sm:$0xff]
        %v1103 = vld [vmem:[#allocation5] sm:$0xff]
        %v1104 = vld [vmem:[#allocation5 + $0x8] sm:$0xff]
        %v1105 = vld [vmem:[#allocation5 + $0x10] sm:$0xff]
        %v1106 = vld [vmem:[#allocation5 + $0x18] sm:$0xff]
        %v1107 = vld [vmem:[#allocation5 + $0x20] sm:$0xff]
        %v1108 = vld [vmem:[#allocation5 + $0x28] sm:$0xff]
        %v1109 = vld [vmem:[#allocation5 + $0x30] sm:$0xff]
        %v1110 = vld [vmem:[#allocation5 + $0x38] sm:$0xff]
        %1111 = vset.pattern.permute.xlu0 0
        %1112 = vperm.xlu0 %1111, %v1095
        %v1113 = vpop.permute.xlu0 %1112
        %1114 = vset.pattern.permute.xlu0 0
        %1115 = vperm.xlu0 %1114, %v1096
        %v1116 = vpop.permute.xlu0 %1115
        %1117 = vset.pattern.permute.xlu0 0
        %1118 = vperm.xlu0 %1117, %v1097
        %v1119 = vpop.permute.xlu0 %1118
        %1120 = vset.pattern.permute.xlu0 0
        %1121 = vperm.xlu0 %1120, %v1098
        %v1122 = vpop.permute.xlu0 %1121
        %1123 = vset.pattern.permute.xlu0 0
        %1124 = vperm.xlu0 %1123, %v1099
        %v1125 = vpop.permute.xlu0 %1124
        %1126 = vset.pattern.permute.xlu0 0
        %1127 = vperm.xlu0 %1126, %v1100
        %v1128 = vpop.permute.xlu0 %1127
        %1129 = vset.pattern.permute.xlu0 0
        %1130 = vperm.xlu0 %1129, %v1101
        %v1131 = vpop.permute.xlu0 %1130
        %1132 = vset.pattern.permute.xlu0 0
        %1133 = vperm.xlu0 %1132, %v1102
        %v1134 = vpop.permute.xlu0 %1133
        %vm1135 = vcmp.eq.s32.totalorder %v1093, %v1113
        %vm1136 = vcmp.eq.s32.totalorder %v1094, %v1113
        %vm1137 = vcmp.eq.s32.totalorder %v1093, %v1116
        %vm1138 = vcmp.eq.s32.totalorder %v1094, %v1116
        %vm1139 = vcmp.eq.s32.totalorder %v1093, %v1119
        %vm1140 = vcmp.eq.s32.totalorder %v1094, %v1119
        %vm1141 = vcmp.eq.s32.totalorder %v1093, %v1122
        %vm1142 = vcmp.eq.s32.totalorder %v1094, %v1122
        %vm1143 = vcmp.eq.s32.totalorder %v1093, %v1125
        %vm1144 = vcmp.eq.s32.totalorder %v1094, %v1125
        %vm1145 = vcmp.eq.s32.totalorder %v1093, %v1128
        %vm1146 = vcmp.eq.s32.totalorder %v1094, %v1128
        %vm1147 = vcmp.eq.s32.totalorder %v1093, %v1131
        %vm1148 = vcmp.eq.s32.totalorder %v1094, %v1131
        %vm1149 = vcmp.eq.s32.totalorder %v1093, %v1134
        %vm1150 = vcmp.eq.s32.totalorder %v1094, %v1134
        %v1151 = vsel %vm1135, %v994, 0.0
        %v1152 = vsel %vm1136, %v996, 0.0
        %v1153 = vsel %vm1137, %v998, 0.0
        %v1154 = vsel %vm1138, %v1000, 0.0
        %v1155 = vsel %vm1139, %v1004, 0.0
        %v1156 = vsel %vm1140, %v1006, 0.0
        %v1157 = vsel %vm1141, %v1008, 0.0
        %v1158 = vsel %vm1142, %v1010, 0.0
        %v1159 = vsel %vm1143, %v1014, 0.0
        %v1160 = vsel %vm1144, %v1016, 0.0
        %v1161 = vsel %vm1145, %v1018, 0.0
        %v1162 = vsel %vm1146, %v1020, 0.0
        %v1163 = vsel %vm1147, %v1024, 0.0
        %v1164 = vsel %vm1148, %v1026, 0.0
        %v1165 = vsel %vm1149, %v1028, 0.0
        %v1166 = vsel %vm1150, %v1030, 0.0
        %v1167 = vadd.f32 %v1151, %v1152
        %1168 = vadd.xlane.f32.xlu0 %v1167
        %v1169 = vpop.xlane.xlu0 %1168
        %v1170 = vadd.f32 %v1153, %v1154
        %1171 = vadd.xlane.f32.xlu0 %v1170
        %v1172 = vpop.xlane.xlu0 %1171
        %v1173 = vadd.f32 %v1155, %v1156
        %1174 = vadd.xlane.f32.xlu0 %v1173
        %v1175 = vpop.xlane.xlu0 %1174
        %v1176 = vadd.f32 %v1157, %v1158
        %1177 = vadd.xlane.f32.xlu0 %v1176
        %v1178 = vpop.xlane.xlu0 %1177
        %v1179 = vadd.f32 %v1159, %v1160
        %1180 = vadd.xlane.f32.xlu0 %v1179
        %v1181 = vpop.xlane.xlu0 %1180
        %v1182 = vadd.f32 %v1161, %v1162
        %1183 = vadd.xlane.f32.xlu0 %v1182
        %v1184 = vpop.xlane.xlu0 %1183
        %v1185 = vadd.f32 %v1163, %v1164
        %1186 = vadd.xlane.f32.xlu0 %v1185
        %v1187 = vpop.xlane.xlu0 %1186
        %v1188 = vadd.f32 %v1165, %v1166
        %1189 = vadd.xlane.f32.xlu0 %v1188
        %v1190 = vpop.xlane.xlu0 %1189
        %v1191 = vadd.f32 %v1103, %v1169
        %v1192 = vadd.f32 %v1104, %v1172
        %v1193 = vadd.f32 %v1105, %v1175
        %v1194 = vadd.f32 %v1106, %v1178
        %v1195 = vadd.f32 %v1107, %v1181
        %v1196 = vadd.f32 %v1108, %v1184
        %v1197 = vadd.f32 %v1109, %v1187
        %v1198 = vadd.f32 %v1110, %v1190
        %vm1199 = vcmask 7168
        %1200 = vst.msk [vmem:[#allocation5] sm:$0xff] %vm1199, %v1191
        %1201 = vst.msk [vmem:[#allocation5 + $0x8] sm:$0xff] %vm1199, %v1192
        %1202 = vst.msk [vmem:[#allocation5 + $0x10] sm:$0xff] %vm1199, %v1193
        %1203 = vst.msk [vmem:[#allocation5 + $0x18] sm:$0xff] %vm1199, %v1194
        %1204 = vst.msk [vmem:[#allocation5 + $0x20] sm:$0xff] %vm1199, %v1195
        %1205 = vst.msk [vmem:[#allocation5 + $0x28] sm:$0xff] %vm1199, %v1196
        %1206 = vst.msk [vmem:[#allocation5 + $0x30] sm:$0xff] %vm1199, %v1197
        %1207 = vst.msk [vmem:[#allocation5 + $0x38] sm:$0xff] %vm1199, %v1198
        %v1208 = vld [vmem:[#allocation3] sm:$0xff]
        %v1209 = vld [vmem:[#allocation3 + $0x8] sm:$0xff]
        %v1210 = vld [vmem:[#allocation3 + $0x10] sm:$0xff]
        %v1211 = vld [vmem:[#allocation3 + $0x18] sm:$0xff]
        %v1212 = vld [vmem:[#allocation3 + $0x20] sm:$0xff]
        %v1213 = vld [vmem:[#allocation3 + $0x28] sm:$0xff]
        %v1214 = vld [vmem:[#allocation3 + $0x30] sm:$0xff]
        %v1215 = vld [vmem:[#allocation3 + $0x38] sm:$0xff]
        %v1216 = vmax.f32 %v994, %v996
        %1217 = vmax.xlane.f32.xlu0 %v1216
        %v1218 = vpop.xlane.xlu0 %1217
        %v1219 = vmax.f32 %v998, %v1000
        %1220 = vmax.xlane.f32.xlu0 %v1219
        %v1221 = vpop.xlane.xlu0 %1220
        %v1222 = vmax.f32 %v1004, %v1006
        %1223 = vmax.xlane.f32.xlu0 %v1222
        %v1224 = vpop.xlane.xlu0 %1223
        %v1225 = vmax.f32 %v1008, %v1010
        %1226 = vmax.xlane.f32.xlu0 %v1225
        %v1227 = vpop.xlane.xlu0 %1226
        %v1228 = vmax.f32 %v1014, %v1016
        %1229 = vmax.xlane.f32.xlu0 %v1228
        %v1230 = vpop.xlane.xlu0 %1229
        %v1231 = vmax.f32 %v1018, %v1020
        %1232 = vmax.xlane.f32.xlu0 %v1231
        %v1233 = vpop.xlane.xlu0 %1232
        %v1234 = vmax.f32 %v1024, %v1026
        %1235 = vmax.xlane.f32.xlu0 %v1234
        %v1236 = vpop.xlane.xlu0 %1235
        %v1237 = vmax.f32 %v1028, %v1030
        %1238 = vmax.xlane.f32.xlu0 %v1237
        %v1239 = vpop.xlane.xlu0 %1238
        %v1240 = vmax.f32 %v1208, %v1218
        %v1241 = vmax.f32 %v1209, %v1221
        %v1242 = vmax.f32 %v1210, %v1224
        %v1243 = vmax.f32 %v1211, %v1227
        %v1244 = vmax.f32 %v1212, %v1230
        %v1245 = vmax.f32 %v1213, %v1233
        %v1246 = vmax.f32 %v1214, %v1236
        %v1247 = vmax.f32 %v1215, %v1239
        %v1248 = vld [vmem:[#allocation4] sm:$0xff]
        %v1249 = vld [vmem:[#allocation4 + $0x8] sm:$0xff]
        %v1250 = vld [vmem:[#allocation4 + $0x10] sm:$0xff]
        %v1251 = vld [vmem:[#allocation4 + $0x18] sm:$0xff]
        %v1252 = vld [vmem:[#allocation4 + $0x20] sm:$0xff]
        %v1253 = vld [vmem:[#allocation4 + $0x28] sm:$0xff]
        %v1254 = vld [vmem:[#allocation4 + $0x30] sm:$0xff]
        %v1255 = vld [vmem:[#allocation4 + $0x38] sm:$0xff]
        %v1256 = vsub.f32 %v1208, %v1240
        %v1257 = vsub.f32 %v1209, %v1241
        %v1258 = vsub.f32 %v1210, %v1242
        %v1259 = vsub.f32 %v1211, %v1243
        %v1260 = vsub.f32 %v1212, %v1244
        %v1261 = vsub.f32 %v1213, %v1245
        %v1262 = vsub.f32 %v1214, %v1246
        %v1263 = vsub.f32 %v1215, %v1247
        %v1264 = vmul.f32 %v1256, 1.442695
        %v1265 = vpow.pop %v1264
        %v1266 = vmul.f32 %v1257, 1.442695
        %v1267 = vpow.pop %v1266
        %v1268 = vmul.f32 %v1258, 1.442695
        %v1269 = vpow.pop %v1268
        %v1270 = vmul.f32 %v1259, 1.442695
        %v1271 = vpow.pop %v1270
        %v1272 = vmul.f32 %v1260, 1.442695
        %v1273 = vpow.pop %v1272
        %v1274 = vmul.f32 %v1261, 1.442695
        %v1275 = vpow.pop %v1274
        %v1276 = vmul.f32 %v1262, 1.442695
        %v1277 = vpow.pop %v1276
        %v1278 = vmul.f32 %v1263, 1.442695
        %v1279 = vpow.pop %v1278
        %v1280 = vmul.f32 %v1248, %v1265
        %v1281 = vmul.f32 %v1249, %v1267
        %v1282 = vmul.f32 %v1250, %v1269
        %v1283 = vmul.f32 %v1251, %v1271
        %v1284 = vmul.f32 %v1252, %v1273
        %v1285 = vmul.f32 %v1253, %v1275
        %v1286 = vmul.f32 %v1254, %v1277
        %v1287 = vmul.f32 %v1255, %v1279
        %1289 = vset.pattern.permute.xlu0 0
        %1290 = vperm.xlu0 %1289, %v1240
        %v1291 = vpop.permute.xlu0 %1290
        %1294 = vset.pattern.permute.xlu0 0
        %1295 = vperm.xlu0 %1294, %v1241
        %v1296 = vpop.permute.xlu0 %1295
        %1299 = vset.pattern.permute.xlu0 0
        %1300 = vperm.xlu0 %1299, %v1242
        %v1301 = vpop.permute.xlu0 %1300
        %1304 = vset.pattern.permute.xlu0 0
        %1305 = vperm.xlu0 %1304, %v1243
        %v1306 = vpop.permute.xlu0 %1305
        %1309 = vset.pattern.permute.xlu0 0
        %1310 = vperm.xlu0 %1309, %v1244
        %v1311 = vpop.permute.xlu0 %1310
        %1314 = vset.pattern.permute.xlu0 0
        %1315 = vperm.xlu0 %1314, %v1245
        %v1316 = vpop.permute.xlu0 %1315
        %1319 = vset.pattern.permute.xlu0 0
        %1320 = vperm.xlu0 %1319, %v1246
        %v1321 = vpop.permute.xlu0 %1320
        %1324 = vset.pattern.permute.xlu0 0
        %1325 = vperm.xlu0 %1324, %v1247
        %v1326 = vpop.permute.xlu0 %1325
        %v1328 = vsub.f32 %v994, %v1291
        %v1329 = vsub.f32 %v996, %v1291
        %v1330 = vsub.f32 %v998, %v1296
        %v1331 = vsub.f32 %v1000, %v1296
        %v1332 = vsub.f32 %v1004, %v1301
        %v1333 = vsub.f32 %v1006, %v1301
        %v1334 = vsub.f32 %v1008, %v1306
        %v1335 = vsub.f32 %v1010, %v1306
        %v1336 = vsub.f32 %v1014, %v1311
        %v1337 = vsub.f32 %v1016, %v1311
        %v1338 = vsub.f32 %v1018, %v1316
        %v1339 = vsub.f32 %v1020, %v1316
        %v1340 = vsub.f32 %v1024, %v1321
        %v1341 = vsub.f32 %v1026, %v1321
        %v1342 = vsub.f32 %v1028, %v1326
        %v1343 = vsub.f32 %v1030, %v1326
        %v1344 = vmul.f32 %v1328, 1.442695
        %v1345 = vpow.pop %v1344
        %v1346 = vmul.f32 %v1329, 1.442695
        %v1347 = vpow.pop %v1346
        %v1348 = vmul.f32 %v1330, 1.442695
        %v1349 = vpow.pop %v1348
        %v1350 = vmul.f32 %v1331, 1.442695
        %v1351 = vpow.pop %v1350
        %v1352 = vmul.f32 %v1332, 1.442695
        %v1353 = vpow.pop %v1352
        %v1354 = vmul.f32 %v1333, 1.442695
        %v1355 = vpow.pop %v1354
        %v1356 = vmul.f32 %v1334, 1.442695
        %v1357 = vpow.pop %v1356
        %v1358 = vmul.f32 %v1335, 1.442695
        %v1359 = vpow.pop %v1358
        %v1360 = vmul.f32 %v1336, 1.442695
        %v1361 = vpow.pop %v1360
        %v1362 = vmul.f32 %v1337, 1.442695
        %v1363 = vpow.pop %v1362
        %v1364 = vmul.f32 %v1338, 1.442695
        %v1365 = vpow.pop %v1364
        %v1366 = vmul.f32 %v1339, 1.442695
        %v1367 = vpow.pop %v1366
        %v1368 = vmul.f32 %v1340, 1.442695
        %v1369 = vpow.pop %v1368
        %v1370 = vmul.f32 %v1341, 1.442695
        %v1371 = vpow.pop %v1370
        %v1372 = vmul.f32 %v1342, 1.442695
        %v1373 = vpow.pop %v1372
        %v1374 = vmul.f32 %v1343, 1.442695
        %v1375 = vpow.pop %v1374
        %v1376 = vadd.f32 %v1345, %v1347
        %1377 = vadd.xlane.f32.xlu0 %v1376
        %v1378 = vpop.xlane.xlu0 %1377
        %v1379 = vadd.f32 %v1349, %v1351
        %1380 = vadd.xlane.f32.xlu0 %v1379
        %v1381 = vpop.xlane.xlu0 %1380
        %v1382 = vadd.f32 %v1353, %v1355
        %1383 = vadd.xlane.f32.xlu0 %v1382
        %v1384 = vpop.xlane.xlu0 %1383
        %v1385 = vadd.f32 %v1357, %v1359
        %1386 = vadd.xlane.f32.xlu0 %v1385
        %v1387 = vpop.xlane.xlu0 %1386
        %v1388 = vadd.f32 %v1361, %v1363
        %1389 = vadd.xlane.f32.xlu0 %v1388
        %v1390 = vpop.xlane.xlu0 %1389
        %v1391 = vadd.f32 %v1365, %v1367
        %1392 = vadd.xlane.f32.xlu0 %v1391
        %v1393 = vpop.xlane.xlu0 %1392
        %v1394 = vadd.f32 %v1369, %v1371
        %1395 = vadd.xlane.f32.xlu0 %v1394
        %v1396 = vpop.xlane.xlu0 %1395
        %v1397 = vadd.f32 %v1373, %v1375
        %1398 = vadd.xlane.f32.xlu0 %v1397
        %v1399 = vpop.xlane.xlu0 %1398
        %v1400 = vadd.f32 %v1280, %v1378
        %v1401 = vadd.f32 %v1281, %v1381
        %v1402 = vadd.f32 %v1282, %v1384
        %v1403 = vadd.f32 %v1283, %v1387
        %v1404 = vadd.f32 %v1284, %v1390
        %v1405 = vadd.f32 %v1285, %v1393
        %v1406 = vadd.f32 %v1286, %v1396
        %v1407 = vadd.f32 %v1287, %v1399
        %1408 = vst.msk [vmem:[#allocation4] sm:$0xff] %vm1199, %v1400
        %1409 = vst.msk [vmem:[#allocation4 + $0x8] sm:$0xff] %vm1199, %v1401
        %1410 = vst.msk [vmem:[#allocation4 + $0x10] sm:$0xff] %vm1199, %v1402
        %1411 = vst.msk [vmem:[#allocation4 + $0x18] sm:$0xff] %vm1199, %v1403
        %1412 = vst.msk [vmem:[#allocation4 + $0x20] sm:$0xff] %vm1199, %v1404
        %1413 = vst.msk [vmem:[#allocation4 + $0x28] sm:$0xff] %vm1199, %v1405
        %1414 = vst.msk [vmem:[#allocation4 + $0x30] sm:$0xff] %vm1199, %v1406
        %1415 = vst.msk [vmem:[#allocation4 + $0x38] sm:$0xff] %vm1199, %v1407
        %1416 = vst.msk [vmem:[#allocation3] sm:$0xff] %vm1199, %v1240
        %1417 = vst.msk [vmem:[#allocation3 + $0x8] sm:$0xff] %vm1199, %v1241
        %1418 = vst.msk [vmem:[#allocation3 + $0x10] sm:$0xff] %vm1199, %v1242
        %1419 = vst.msk [vmem:[#allocation3 + $0x18] sm:$0xff] %vm1199, %v1243
        %1420 = vst.msk [vmem:[#allocation3 + $0x20] sm:$0xff] %vm1199, %v1244
        %1421 = vst.msk [vmem:[#allocation3 + $0x28] sm:$0xff] %vm1199, %v1245
        %1422 = vst.msk [vmem:[#allocation3 + $0x30] sm:$0xff] %vm1199, %v1246
        %1423 = vst.msk [vmem:[#allocation3 + $0x38] sm:$0xff] %vm1199, %v1247
        %p1424 = scmp.eq.s32.totalorder %s26, 1
        // Predicated region
        $region83: #{kosmos2_forward.37} parent=73 // pred_check
          %p1425 = pneg %p1424
        $region84: #{kosmos2_forward.37} parent=73 // pred_check_branch
          %1427 = sbr.rel (%p1425) target = $region86
        $region85: #{kosmos2_forward.37} parent=73 // pred_region
          %v1428 = vld [vmem:[%s477] sm:$0xff]
          %v1429 = vld [vmem:[%s477 + $0x8] sm:$0xff]
          %v1430 = vld [vmem:[%s477 + $0x10] sm:$0xff]
          %v1431 = vld [vmem:[%s477 + $0x18] sm:$0xff]
          %v1432 = vld [vmem:[%s477 + $0x20] sm:$0xff]
          %v1433 = vld [vmem:[%s477 + $0x28] sm:$0xff]
          %v1434 = vld [vmem:[%s477 + $0x30] sm:$0xff]
          %v1435 = vld [vmem:[%s477 + $0x38] sm:$0xff]
          %vm1436 = vcmp.ne.s32.totalorder %v1428, 4294967196
          %vm1437 = vcmp.ne.s32.totalorder %v1429, 4294967196
          %vm1438 = vcmp.ne.s32.totalorder %v1430, 4294967196
          %vm1439 = vcmp.ne.s32.totalorder %v1431, 4294967196
          %vm1440 = vcmp.ne.s32.totalorder %v1432, 4294967196
          %vm1441 = vcmp.ne.s32.totalorder %v1433, 4294967196
          %vm1442 = vcmp.ne.s32.totalorder %v1434, 4294967196
          %vm1443 = vcmp.ne.s32.totalorder %v1435, 4294967196
          %v1444 = vsel %vm1436, 1, 0
          %v1445 = vsel %vm1437, 1, 0
          %v1446 = vsel %vm1438, 1, 0
          %v1447 = vsel %vm1439, 1, 0
          %v1448 = vsel %vm1440, 1, 0
          %v1449 = vsel %vm1441, 1, 0
          %v1450 = vsel %vm1442, 1, 0
          %v1451 = vsel %vm1443, 1, 0
          %v1452 = vcvt.s32.f32 %v1444
          %v1453 = vcvt.s32.f32 %v1445
          %v1454 = vcvt.s32.f32 %v1446
          %v1455 = vcvt.s32.f32 %v1447
          %v1456 = vcvt.s32.f32 %v1448
          %v1457 = vcvt.s32.f32 %v1449
          %v1458 = vcvt.s32.f32 %v1450
          %v1459 = vcvt.s32.f32 %v1451
          %v1460 = vld [vmem:[#allocation3] sm:$0xff]
          %v1461 = vld [vmem:[#allocation3 + $0x8] sm:$0xff]
          %v1462 = vld [vmem:[#allocation3 + $0x10] sm:$0xff]
          %v1463 = vld [vmem:[#allocation3 + $0x18] sm:$0xff]
          %v1464 = vld [vmem:[#allocation3 + $0x20] sm:$0xff]
          %v1465 = vld [vmem:[#allocation3 + $0x28] sm:$0xff]
          %v1466 = vld [vmem:[#allocation3 + $0x30] sm:$0xff]
          %v1467 = vld [vmem:[#allocation3 + $0x38] sm:$0xff]
          %v1468 = vld [vmem:[#allocation4] sm:$0xff]
          %v1469 = vld [vmem:[#allocation4 + $0x8] sm:$0xff]
          %v1470 = vld [vmem:[#allocation4 + $0x10] sm:$0xff]
          %v1471 = vld [vmem:[#allocation4 + $0x18] sm:$0xff]
          %v1472 = vld [vmem:[#allocation4 + $0x20] sm:$0xff]
          %v1473 = vld [vmem:[#allocation4 + $0x28] sm:$0xff]
          %v1474 = vld [vmem:[#allocation4 + $0x30] sm:$0xff]
          %v1475 = vld [vmem:[#allocation4 + $0x38] sm:$0xff]
          %v1476 = vlog2.pop %v1468
          %v1477 = vmul.f32 %v1476, 0.6931472
          %v1478 = vlog2.pop %v1469
          %v1479 = vmul.f32 %v1478, 0.6931472
          %v1480 = vlog2.pop %v1470
          %v1481 = vmul.f32 %v1480, 0.6931472
          %v1482 = vlog2.pop %v1471
          %v1483 = vmul.f32 %v1482, 0.6931472
          %v1484 = vlog2.pop %v1472
          %v1485 = vmul.f32 %v1484, 0.6931472
          %v1486 = vlog2.pop %v1473
          %v1487 = vmul.f32 %v1486, 0.6931472
          %v1488 = vlog2.pop %v1474
          %v1489 = vmul.f32 %v1488, 0.6931472
          %v1490 = vlog2.pop %v1475
          %v1491 = vmul.f32 %v1490, 0.6931472
          %v1492 = vadd.f32 %v1460, %v1477
          %v1493 = vadd.f32 %v1461, %v1479
          %v1494 = vadd.f32 %v1462, %v1481
          %v1495 = vadd.f32 %v1463, %v1483
          %v1496 = vadd.f32 %v1464, %v1485
          %v1497 = vadd.f32 %v1465, %v1487
          %v1498 = vadd.f32 %v1466, %v1489
          %v1499 = vadd.f32 %v1467, %v1491
          %v1500 = vld [vmem:[#allocation5] sm:$0xff]
          %v1501 = vld [vmem:[#allocation5 + $0x8] sm:$0xff]
          %v1502 = vld [vmem:[#allocation5 + $0x10] sm:$0xff]
          %v1503 = vld [vmem:[#allocation5 + $0x18] sm:$0xff]
          %v1504 = vld [vmem:[#allocation5 + $0x20] sm:$0xff]
          %v1505 = vld [vmem:[#allocation5 + $0x28] sm:$0xff]
          %v1506 = vld [vmem:[#allocation5 + $0x30] sm:$0xff]
          %v1507 = vld [vmem:[#allocation5 + $0x38] sm:$0xff]
          %v1508 = vsub.f32 %v1492, %v1500
          %v1509 = vsub.f32 %v1493, %v1501
          %v1510 = vsub.f32 %v1494, %v1502
          %v1511 = vsub.f32 %v1495, %v1503
          %v1512 = vsub.f32 %v1496, %v1504
          %v1513 = vsub.f32 %v1497, %v1505
          %v1514 = vsub.f32 %v1498, %v1506
          %v1515 = vsub.f32 %v1499, %v1507
          %v1516 = vmul.f32 %v1508, %v1452
          %v1517 = vmul.f32 %v1509, %v1453
          %v1518 = vmul.f32 %v1510, %v1454
          %v1519 = vmul.f32 %v1511, %v1455
          %v1520 = vmul.f32 %v1512, %v1456
          %v1521 = vmul.f32 %v1513, %v1457
          %v1522 = vmul.f32 %v1514, %v1458
          %v1523 = vmul.f32 %v1515, %v1459
          %1524 = vst.msk [vmem:[%s485] sm:$0xff] %vm1199, %v1516
          %1525 = vst.msk [vmem:[%s485 + $0x8] sm:$0xff] %vm1199, %v1517
          %1526 = vst.msk [vmem:[%s485 + $0x10] sm:$0xff] %vm1199, %v1518
          %1527 = vst.msk [vmem:[%s485 + $0x18] sm:$0xff] %vm1199, %v1519
          %1528 = vst.msk [vmem:[%s485 + $0x20] sm:$0xff] %vm1199, %v1520
          %1529 = vst.msk [vmem:[%s485 + $0x28] sm:$0xff] %vm1199, %v1521
          %1530 = vst.msk [vmem:[%s485 + $0x30] sm:$0xff] %vm1199, %v1522
          %1531 = vst.msk [vmem:[%s485 + $0x38] sm:$0xff] %vm1199, %v1523
        $region86: #{kosmos2_forward.37} parent=73 // pred_fallthru
          _
        %s1532 = sand.u32 %s163, 1
        %s1533 = scalar_lea.sflag [#allocation8], %s1532
        %s1534 = sand.u32 %s163, 1
        %s1535 = smul.addr %s1534, 64
        %s1536 = scalar_lea.vmem [#allocation7], %s1535
        %s1537 = smul.u32 8, %s25
        %p1538 = scmp.lt.s32.totalorder %s1537, 7
        %s1539 = scalar_select %p1538, %s1537, 7
        %s1540 = smul.addr %s1539, 8
        %s1541 = scalar_lea.vmem %s6, %s1540
        // Predicated region
        $region87: #{kosmos2_forward.37} parent=73 // pred_check
          %p1542 = pneg %p173
        $region88: #{kosmos2_forward.37} parent=73 // pred_check_branch
          %1544 = sbr.rel (%p1542) target = $region90
        $region89: #{kosmos2_forward.37} parent=73 // pred_region
          %s1545 = smul.u32 8, %s25
          %s1546 = smul.u32 2, %s26
          %s1548 = ssub.s32 1024, 1024
          %1549 = vsyncadd %s1533, %s1548
          %s1550 = smul.addr %s1545, 4
          %s1551 = sadd.s32 %s1546, %s1550
          %s1552 = smul.addr %s1551, 64
          %s1553 = scalar_lea.hbm %s5, %s1552
          %s1554 = sshll.u32 %s1536, 4
          %s1555 = int_to_ptr.vmem [resolvable:$true] %s1554
          %1560 = dma.vmem_to_hbm [thread:$0]  %s1555, 1024, %s1553, %s1533, 128, 256, 8
        $region90: #{kosmos2_forward.37} parent=73 // pred_fallthru
          _
        // Predicated region
        $region91: #{kosmos2_forward.37} parent=73 // pred_check
          %p1561 = pneg %p199
        $region92: #{kosmos2_forward.37} parent=73 // pred_check_branch
          %1563 = sbr.rel (%p1561) target = $region94
        $region93: #{kosmos2_forward.37} parent=73 // pred_region
          %s1564 = smul.u32 8, %s25
        $region94: #{kosmos2_forward.37} parent=73 // pred_fallthru
          _
        // Predicated region
        $region95: #{kosmos2_forward.37} parent=73 // pred_check
          %p1565 = pneg %p199
        $region96: #{kosmos2_forward.37} parent=73 // pred_check_branch
          %1567 = sbr.rel (%p1565) target = $region98
        $region97: #{kosmos2_forward.37} parent=73 // pred_region
          %s1568 = smul.u32 8, %s25
          %p1569 = scmp.lt.s32.totalorder %s1568, 7
          %s1570 = scalar_select %p1569, %s1568, 7
          %s1571 = smul.addr %s1570, 8
          %s1572 = scalar_lea.vmem %s6, %s1571
        $region98: #{kosmos2_forward.37} parent=73 // pred_fallthru
          _
      $region74: #{kosmos2_forward.37} parent=5 // pred_fallthru
        _
      %p1573 = scmp.le.s32.totalorder 2, %s16
      // Predicated region
      $region99: #{kosmos2_forward.37} parent=5 // pred_check
        %p1574 = pneg %p1573
      $region100: #{kosmos2_forward.37} parent=5 // pred_check_branch
        %1576 = sbr.rel (%p1574) target = $region102
      $region101: #{kosmos2_forward.37} parent=5 // pred_region
        %s1577 = ssub.s32 %s16, 2
        // Predicated region
        $region103: #{kosmos2_forward.37} parent=101 // pred_check
          %p1578 = pneg %p179
        $region104: #{kosmos2_forward.37} parent=101 // pred_check_branch
          %1580 = sbr.rel (%p1578) target = $region106
        $region105: #{kosmos2_forward.37} parent=101 // pred_region
          %s1581 = sand.u32 %s164, 1
          %s1582 = scalar_lea.sflag [#allocation8], %s1581
          %s1583 = sand.u32 %s164, 1
          %s1584 = smul.addr %s1583, 64
          %s1585 = scalar_lea.vmem [#allocation7], %s1584
          %1586 = dma.done %s1582, 1024
        $region106: #{kosmos2_forward.37} parent=101 // pred_fallthru
          _
      $region102: #{kosmos2_forward.37} parent=5 // pred_fallthru
        _
    $region6: #{kosmos2_forward.37} parent=1 // loop_footer
      %s20 = sadd.s32 1, %s16
    $region7: #{kosmos2_forward.37} parent=1 // loop_footer_branch
      %15 = sbr.rel target = $region3
    $region8: #{kosmos2_forward.37} parent=1 // loop_exit
      _
    %1587 = vsyncpa [#allocation8], 1
    %s1588 = scalar_lea.sflag [#allocation8], 1
    %1589 = vsyncpa %s1588, 1

</llo_original>
